<compile_context>
chip_gen: v7x
topology: tpu7x:2x2x1
jax: 0.10.0
libtpu: 0.0.40
codegen_flags: <defaults>
</compile_context>

<pallas_src>
import functools
import math

import numpy as np
import jax
import jax.numpy as jnp
from jax.experimental import pallas as pl
from jax.experimental.pallas import tpu as pltpu  # noqa: F401  (TPU backend)

# MXU operand dtype: bf16 operands + f32 accumulation (v6e/v7x native).
# Set to jnp.float32 for bit-closer parity with a float32 PyTorch reference.
_MXU_DTYPE = jnp.bfloat16
_PROJ_PAD = 128   # lane-dense width for the final projection output store


# --------------------------- in-kernel helpers ------------------------------

def _bf(x):
    return x.astype(_MXU_DTYPE)


def _mm(a, b):
    """MXU matmul with f32 accumulation (operands already in _MXU_DTYPE)."""
    return jnp.dot(a, b, preferred_element_type=jnp.float32)


def _gelu(x):
    # exact (erf-based) gelu, matching torch.nn.functional.gelu default
    return 0.5 * x * (1.0 + jax.lax.erf(x * (1.0 / math.sqrt(2.0))))


def _layer_norm(x, g, b, eps=1e-5):
    mean = jnp.mean(x, axis=-1, keepdims=True)
    var = jnp.mean(jnp.square(x - mean), axis=-1, keepdims=True)
    return (x - mean) * jax.lax.rsqrt(var + eps) * g + b


def _attention(q, k, v, wo, bo, bias, n_heads):
    """Multi-head attention over batch-flattened rows.

    q: (Nq, D) f32; k, v: (Nk, D) f32; wo: (D, D) MXU dtype; bo: (1, D) f32.
    bias: (Nq, Nk) f32 additive mask (0 inside the own-batch block, -1e30 for
    cross-batch entries and, for causal self-attention, above the diagonal).
    Per-head score/PV matmuls are statically unrolled; the output projection
    is fused into one (Nq, D) @ (D, D) matmul.
    """
    d = q.shape[-1]
    dh = d // n_heads
    scale = 1.0 / math.sqrt(dh)
    qb, kb, vb = _bf(q), _bf(k), _bf(v)

    heads = []
    for h in range(n_heads):                       # static unroll, n_heads small
        lo, hi = h * dh, (h + 1) * dh
        s = jax.lax.dot_general(qb[:, lo:hi], kb[:, lo:hi],
                                (((1,), (1,)), ((), ())),
                                preferred_element_type=jnp.float32)
        s = s * scale + bias                       # finite mask, no inf-inf
        m = jnp.max(s, axis=-1, keepdims=True)
        p = jnp.exp(s - m)
        # EUP reciprocal (separate slot); ~1e-3-class rel. error vs exact div.
        p = p * pl.reciprocal(jnp.sum(p, axis=-1, keepdims=True), approx=True)
        heads.append(_mm(_bf(p), vb[:, lo:hi]))    # (Nq, dh)
    o = jnp.concatenate(heads, axis=-1)            # (Nq, D)
    return _mm(_bf(o), wo) + bo


# ----------------------------- fused Pallas kernel ---------------------------

def _trans_kernel(*refs, d, n_heads, e_layers, d_layers):
    it = iter(refs[:-1])
    o_ref = refs[-1]

    def nxt():
        return next(it)

    # embeddings
    win_e, add_e, wtok_e = nxt(), nxt(), nxt()
    win_d, add_d, wtok_d = nxt(), nxt(), nxt()
    # attention bias masks (block-diagonal over batch, + causal for dec self)
    enc_bias, dec_bias, cross_bias = nxt(), nxt(), nxt()
    # encoder layers (stacked on leading layer axis)
    e_wqkv, e_bqkv, e_wo, e_bo = nxt(), nxt(), nxt(), nxt()
    e_ln1g, e_ln1b = nxt(), nxt()
    e_w1, e_b1, e_w2, e_b2 = nxt(), nxt(), nxt(), nxt()
    e_ln2g, e_ln2b = nxt(), nxt()
    encng, encnb = nxt(), nxt()
    # decoder layers (stacked)
    s_wqkv, s_bqkv, s_wo, s_bo = nxt(), nxt(), nxt(), nxt()
    d_ln1g, d_ln1b = nxt(), nxt()
    c_wq, c_bq, c_wkv, c_bkv, c_wo, c_bo = nxt(), nxt(), nxt(), nxt(), nxt(), nxt()
    d_ln2g, d_ln2b = nxt(), nxt()
    d_w1, d_b1, d_w2, d_b2 = nxt(), nxt(), nxt(), nxt()
    d_ln3g, d_ln3b = nxt(), nxt()
    decng, decnb = nxt(), nxt()
    projw, projb = nxt(), nxt()

    # ---------------- encoder ----------------
    # token conv (unfolded matmul) + positional/temporal add, whole batch
    x = _mm(win_e[...], wtok_e[...]) + add_e[...]              # (B*Le, D) f32
    eb = enc_bias[...]
    for l in range(e_layers):                                   # static unroll
        qkv = _mm(_bf(x), e_wqkv[l]) + e_bqkv[l]                # (B*Le, 3D)
        attn = _attention(qkv[:, :d], qkv[:, d:2 * d], qkv[:, 2 * d:],
                          e_wo[l], e_bo[l], eb, n_heads)
        x = _layer_norm(x + attn, e_ln1g[l], e_ln1b[l])
        y = _gelu(_mm(_bf(x), e_w1[l]) + e_b1[l])               # Conv1d k=1 pair
        y = _mm(_bf(y), e_w2[l]) + e_b2[l]
        x = _layer_norm(x + y, e_ln2g[l], e_ln2b[l])
    enc_out = _layer_norm(x, encng[...], encnb[...])            # encoder final LN
    enc_out_b = _bf(enc_out)

    # ---------------- decoder ----------------
    x = _mm(win_d[...], wtok_d[...]) + add_d[...]               # (B*Ld, D) f32
    db = dec_bias[...]
    cb = cross_bias[...]
    for l in range(d_layers):                                    # static unroll
        # causal self-attention
        qkv = _mm(_bf(x), s_wqkv[l]) + s_bqkv[l]
        attn = _attention(qkv[:, :d], qkv[:, d:2 * d], qkv[:, 2 * d:],
                          s_wo[l], s_bo[l], db, n_heads)
        x = _layer_norm(x + attn, d_ln1g[l], d_ln1b[l])
        # cross-attention (fused KV projection)
        q = _mm(_bf(x), c_wq[l]) + c_bq[l]
        kv = _mm(enc_out_b, c_wkv[l]) + c_bkv[l]
        attn = _attention(q, kv[:, :d], kv[:, d:], c_wo[l], c_bo[l], cb, n_heads)
        x = _layer_norm(x + attn, d_ln2g[l], d_ln2b[l])
        # feed-forward
        y = _gelu(_mm(_bf(x), d_w1[l]) + d_b1[l])
        y = _mm(_bf(y), d_w2[l]) + d_b2[l]
        x = _layer_norm(x + y, d_ln3g[l], d_ln3b[l])
    x = _layer_norm(x, decng[...], decnb[...])                   # decoder final LN
    # lane-dense (128-wide, zero-padded) projection output store
    o_ref[...] = _mm(_bf(x), projw[...]) + projb[...]


# ------------------------------ XLA-side glue ---------------------------------

def _token_windows(x):
    """Circular k=3 conv unfold: (B, L, C) -> (B*L, 3C) bf16.

    Column order is [c@t-1 | c@t | c@t+1]; imported PyTorch Conv1d weights
    (d_model, c_in, 3) must be permuted to match this order.
    """
    b, l, c = x.shape
    x_pad = jnp.concatenate([x[:, -1:, :], x, x[:, :1, :]], axis=1)      # (B, L+2, C)
    win = jnp.concatenate([x_pad[:, 0:l], x_pad[:, 1:l + 1], x_pad[:, 2:l + 2]],
                          axis=-1)                                        # (B, L, 3C)
    return win.reshape(b * l, 3 * c).astype(_MXU_DTYPE)


def _embed_add(x_mark, pos_table, temp_tables):
    """PositionalEmbedding + fixed TemporalEmbedding (freq='h'), summed -> (B*L, D)."""
    b, l, _ = x_mark.shape
    d = pos_table.shape[-1]
    marks = x_mark.astype(jnp.int32)
    add = jnp.broadcast_to(pos_table[:l][None], (b, l, d))
    # column order matches TemporalEmbedding: month(0), day(1), weekday(2), hour(3)
    for i, tab in enumerate(temp_tables):
        add = add + jnp.take(tab, marks[:, :, i], axis=0)
    return add.reshape(b * l, d)


def _block_diag_bias(b, lq, lk, causal):
    """Additive attention bias for batch-flattened rows: 0 in the own-batch
    block, -1e30 elsewhere (and above the diagonal when causal)."""
    rq = np.arange(b * lq)
    rk = np.arange(b * lk)
    masked = (rq[:, None] // lq) != (rk[None, :] // lk)
    if causal:
        masked = masked | ((rk[None, :] % lk) > (rq[:, None] % lq))
    return jnp.asarray(np.where(masked, -1e30, 0.0).astype(np.float32))


def trans_model_forward(params, cfg, x_enc, x_mark_enc, x_dec, x_mark_dec):
    d = cfg["d_model"]
    n_heads = cfg["n_heads"]
    e_layers = cfg["e_layers"]
    d_layers = cfg["d_layers"]
    pred_len = cfg["pred_len"]
    c_out = cfg["c_out"]
    b, le, _ = x_enc.shape
    ld = x_dec.shape[1]

    # embedding glue (unfold / gathers) stays in XLA; cheap at these sizes
    win_e = _token_windows(x_enc)
    add_e = _embed_add(x_mark_enc, params["pos_table"], params["temp_tables"])
    win_d = _token_windows(x_dec)
    add_d = _embed_add(x_mark_dec, params["pos_table"], params["temp_tables"])

    enc_bias = _block_diag_bias(b, le, le, causal=False)
    dec_bias = _block_diag_bias(b, ld, ld, causal=True)
    cross_bias = _block_diag_bias(b, ld, le, causal=False)

    enc, dec = params["enc"], params["dec"]
    args = [
        win_e, add_e, params["w_tok_enc"],
        win_d, add_d, params["w_tok_dec"],
        enc_bias, dec_bias, cross_bias,
        enc["wqkv"], enc["bqkv"], enc["wo"], enc["bo"],
        enc["ln1_g"], enc["ln1_b"],
        enc["w1"], enc["b1"], enc["w2"], enc["b2"],
        enc["ln2_g"], enc["ln2_b"],
        params["enc_norm_g"], params["enc_norm_b"],
        dec["s_wqkv"], dec["s_bqkv"], dec["s_wo"], dec["s_bo"],
        dec["ln1_g"], dec["ln1_b"],
        dec["c_wq"], dec["c_bq"], dec["c_wkv"], dec["c_bkv"], dec["c_wo"], dec["c_bo"],
        dec["ln2_g"], dec["ln2_b"],
        dec["w1"], dec["b1"], dec["w2"], dec["b2"],
        dec["ln3_g"], dec["ln3_b"],
        params["dec_norm_g"], params["dec_norm_b"],
        params["proj_w"], params["proj_b"],
    ]

    kern = functools.partial(_trans_kernel, d=d, n_heads=n_heads,
                             e_layers=e_layers, d_layers=d_layers)
    # Single invocation (grid=()); every operand is a full-array VMEM block.
    out = pl.pallas_call(
        kern,
        out_shape=jax.ShapeDtypeStruct((b * ld, _PROJ_PAD), jnp.float32),
    )(*args)
    return out.reshape(b, ld, _PROJ_PAD)[:, -pred_len:, :c_out]


# ------------------------------ fixed tables ---------------------------------

def sinusoid_table(n, d):
    """Same formula as PositionalEmbedding / FixedEmbedding in the PyTorch code."""
    tab = np.zeros((n, d), dtype=np.float32)
    pos = np.arange(n, dtype=np.float32)[:, None]
    div = np.exp(np.arange(0, d, 2, dtype=np.float32) * -(math.log(10000.0) / d))
    tab[:, 0::2] = np.sin(pos * div)
    tab[:, 1::2] = np.cos(pos * div)
    return jnp.asarray(tab)


# ------------------------------ parameter init -------------------------------

def init_params(key, cfg, mxu_dtype=_MXU_DTYPE):
    d_model, d_ff = cfg["d_model"], cfg["d_ff"]
    enc_in, dec_in, c_out = cfg["enc_in"], cfg["dec_in"], cfg["c_out"]
    E, DL = cfg["e_layers"], cfg["d_layers"]
    keys = iter(jax.random.split(key, 64))

    def w(shape):
        # matmul weights are stored pre-cast to the MXU operand dtype
        return (0.02 * jax.random.normal(next(keys), shape, jnp.float32)).astype(mxu_dtype)

    def zeros(shape):
        return jnp.zeros(shape, jnp.float32)

    def ones(shape):
        return jnp.ones(shape, jnp.float32)

    # encoder layers, stacked on a leading layer axis.
    # fused QKV weight columns ordered [Q | K | V] (concat Wq.T, Wk.T, Wv.T to import).
    enc = dict(
        wqkv=w((E, d_model, 3 * d_model)), bqkv=zeros((E, 1, 3 * d_model)),
        wo=w((E, d_model, d_model)), bo=zeros((E, 1, d_model)),
        ln1_g=ones((E, 1, d_model)), ln1_b=zeros((E, 1, d_model)),
        w1=w((E, d_model, d_ff)), b1=zeros((E, 1, d_ff)),
        w2=w((E, d_ff, d_model)), b2=zeros((E, 1, d_model)),
        ln2_g=ones((E, 1, d_model)), ln2_b=zeros((E, 1, d_model)),
    )
    # decoder layers, stacked; cross-attn fused KV columns ordered [K | V].
    dec = dict(
        s_wqkv=w((DL, d_model, 3 * d_model)), s_bqkv=zeros((DL, 1, 3 * d_model)),
        s_wo=w((DL, d_model, d_model)), s_bo=zeros((DL, 1, d_model)),
        ln1_g=ones((DL, 1, d_model)), ln1_b=zeros((DL, 1, d_model)),
        c_wq=w((DL, d_model, d_model)), c_bq=zeros((DL, 1, d_model)),
        c_wkv=w((DL, d_model, 2 * d_model)), c_bkv=zeros((DL, 1, 2 * d_model)),
        c_wo=w((DL, d_model, d_model)), c_bo=zeros((DL, 1, d_model)),
        ln2_g=ones((DL, 1, d_model)), ln2_b=zeros((DL, 1, d_model)),
        w1=w((DL, d_model, d_ff)), b1=zeros((DL, 1, d_ff)),
        w2=w((DL, d_ff, d_model)), b2=zeros((DL, 1, d_model)),
        ln3_g=ones((DL, 1, d_model)), ln3_b=zeros((DL, 1, d_model)),
    )
    # output projection, zero-padded to a lane-dense 128-wide output buffer
    pw = 0.02 * jax.random.normal(next(keys), (d_model, c_out), jnp.float32)
    proj_w = jnp.zeros((d_model, _PROJ_PAD), jnp.float32).at[:, :c_out].set(pw)

    return dict(
        w_tok_enc=w((3 * enc_in, d_model)),   # TokenEmbedding conv weight (unfolded)
        w_tok_dec=w((3 * dec_in, d_model)),
        enc=enc, dec=dec,
        enc_norm_g=ones((1, d_model)), enc_norm_b=zeros((1, d_model)),
        dec_norm_g=ones((1, d_model)), dec_norm_b=zeros((1, d_model)),
        proj_w=proj_w.astype(mxu_dtype), proj_b=zeros((1, _PROJ_PAD)),
        # fixed sinusoidal tables (positional + 'fixed' temporal, freq='h')
        pos_table=sinusoid_table(5000, d_model),
        temp_tables=[sinusoid_table(13, d_model),   # month
                     sinusoid_table(32, d_model),   # day
                     sinusoid_table(7, d_model),    # weekday
                     sinusoid_table(24, d_model)],  # hour
    )


# ---------------------------------- main --------------------------------------

if __name__ == "__main__":
    cfg = dict(
        enc_in=4, dec_in=4, c_out=4,
        seq_len=16, label_len=8, pred_len=8,
        d_model=32, n_heads=4, d_ff=32,
        e_layers=2, d_layers=1,
    )

    key = jax.random.PRNGKey(0)
    kp, kx, km1, km2, km3, km4, km5, km6, km7, km8 = jax.random.split(key, 10)
    params = init_params(kp, cfg)

    B = 2
    L_enc = cfg["seq_len"]
    L_dec = cfg["label_len"] + cfg["pred_len"]

    x_enc = jax.random.normal(kx, (B, L_enc, cfg["enc_in"]), dtype=jnp.float32)
    # decoder input: last label_len of x_enc + zeros for prediction part
    x_dec = jnp.concatenate(
        [x_enc[:, -cfg["label_len"]:, :],
         jnp.zeros((B, cfg["pred_len"], cfg["dec_in"]), jnp.float32)], axis=1)

    def make_marks(k0, k1, k2, k3, L):
        month = jax.random.randint(k0, (B, L), 0, 13)
        day = jax.random.randint(k1, (B, L), 0, 32)
        weekday = jax.random.randint(k2, (B, L), 0, 7)
        hour = jax.random.randint(k3, (B, L), 0, 24)
        return jnp.stack([month, day, weekday, hour], axis=-1).astype(jnp.float32)

    x_mark_enc = make_marks(km1, km2, km3, km4, L_enc)
    x_mark_dec = make_marks(km5, km6, km7, km8, L_dec)

    fwd = jax.jit(lambda p, xe, me, xd, md: trans_model_forward(p, cfg, xe, me, xd, md))
    out = fwd(params, x_enc, x_mark_enc, x_dec, x_mark_dec)
    out = jax.block_until_ready(out)

    assert out.shape == (B, cfg["pred_len"], cfg["c_out"]), out.shape
    assert bool(jnp.all(jnp.isfinite(out)))
    print("KERNEL_OK")
</pallas_src>

<mosaic_0001>
module attributes {stable_mosaic.version = 11 : i64} {
  func.func @_trans_kernel(%arg0: memref<32x12xbf16, #tpu.memory_space<vmem>>, %arg1: memref<32x32xf32, #tpu.memory_space<vmem>>, %arg2: memref<12x32xbf16, #tpu.memory_space<vmem>>, %arg3: memref<32x12xbf16, #tpu.memory_space<vmem>>, %arg4: memref<32x32xf32, #tpu.memory_space<vmem>>, %arg5: memref<12x32xbf16, #tpu.memory_space<vmem>>, %arg6: memref<32x32xf32, #tpu.memory_space<vmem>>, %arg7: memref<32x32xf32, #tpu.memory_space<vmem>>, %arg8: memref<32x32xf32, #tpu.memory_space<vmem>>, %arg9: memref<2x32x96xbf16, #tpu.memory_space<vmem>>, %arg10: memref<2x1x96xf32, #tpu.memory_space<vmem>>, %arg11: memref<2x32x32xbf16, #tpu.memory_space<vmem>>, %arg12: memref<2x1x32xf32, #tpu.memory_space<vmem>>, %arg13: memref<2x1x32xf32, #tpu.memory_space<vmem>>, %arg14: memref<2x1x32xf32, #tpu.memory_space<vmem>>, %arg15: memref<2x32x32xbf16, #tpu.memory_space<vmem>>, %arg16: memref<2x1x32xf32, #tpu.memory_space<vmem>>, %arg17: memref<2x32x32xbf16, #tpu.memory_space<vmem>>, %arg18: memref<2x1x32xf32, #tpu.memory_space<vmem>>, %arg19: memref<2x1x32xf32, #tpu.memory_space<vmem>>, %arg20: memref<2x1x32xf32, #tpu.memory_space<vmem>>, %arg21: memref<1x32xf32, #tpu.memory_space<vmem>>, %arg22: memref<1x32xf32, #tpu.memory_space<vmem>>, %arg23: memref<1x32x96xbf16, #tpu.memory_space<vmem>>, %arg24: memref<1x1x96xf32, #tpu.memory_space<vmem>>, %arg25: memref<1x32x32xbf16, #tpu.memory_space<vmem>>, %arg26: memref<1x1x32xf32, #tpu.memory_space<vmem>>, %arg27: memref<1x1x32xf32, #tpu.memory_space<vmem>>, %arg28: memref<1x1x32xf32, #tpu.memory_space<vmem>>, %arg29: memref<1x32x32xbf16, #tpu.memory_space<vmem>>, %arg30: memref<1x1x32xf32, #tpu.memory_space<vmem>>, %arg31: memref<1x32x64xbf16, #tpu.memory_space<vmem>>, %arg32: memref<1x1x64xf32, #tpu.memory_space<vmem>>, %arg33: memref<1x32x32xbf16, #tpu.memory_space<vmem>>, %arg34: memref<1x1x32xf32, #tpu.memory_space<vmem>>, %arg35: memref<1x1x32xf32, #tpu.memory_space<vmem>>, %arg36: memref<1x1x32xf32, #tpu.memory_space<vmem>>, %arg37: memref<1x32x32xbf16, #tpu.memory_space<vmem>>, %arg38: memref<1x1x32xf32, #tpu.memory_space<vmem>>, %arg39: memref<1x32x32xbf16, #tpu.memory_space<vmem>>, %arg40: memref<1x1x32xf32, #tpu.memory_space<vmem>>, %arg41: memref<1x1x32xf32, #tpu.memory_space<vmem>>, %arg42: memref<1x1x32xf32, #tpu.memory_space<vmem>>, %arg43: memref<1x32xf32, #tpu.memory_space<vmem>>, %arg44: memref<1x32xf32, #tpu.memory_space<vmem>>, %arg45: memref<32x128xbf16, #tpu.memory_space<vmem>>, %arg46: memref<1x128xf32, #tpu.memory_space<vmem>>, %arg47: memref<32x128xf32, #tpu.memory_space<vmem>>) attributes {dimension_semantics = [], scalar_prefetch = 0 : i64, scratch_operands = 0 : i64, tpu.core_type = #tpu.core_type<tc>} {
    %c0 = arith.constant 0 : index
    %c0_0 = arith.constant 0 : index
    %0 = vector.load %arg0[%c0, %c0_0] : memref<32x12xbf16, #tpu.memory_space<vmem>>, vector<32x12xbf16>
    %c0_1 = arith.constant 0 : index
    %c0_2 = arith.constant 0 : index
    %1 = vector.load %arg2[%c0_1, %c0_2] : memref<12x32xbf16, #tpu.memory_space<vmem>>, vector<12x32xbf16>
    %cst = arith.constant dense<0.000000e+00> : vector<32x32xf32>
    %2 = tpu.matmul %0, %1, %cst {dimension_numbers = #tpu.dot_dimension_numbers<[1], [0], [0], [1], [0, 0, 1, 1], [], []>} : vector<32x12xbf16>, vector<12x32xbf16>, vector<32x32xf32> -> vector<32x32xf32>
    %c0_3 = arith.constant 0 : index
    %c0_4 = arith.constant 0 : index
    %3 = vector.load %arg1[%c0_3, %c0_4] : memref<32x32xf32, #tpu.memory_space<vmem>>, vector<32x32xf32>
    %4 = arith.addf %2, %3 : vector<32x32xf32>
    %c0_5 = arith.constant 0 : index
    %c0_6 = arith.constant 0 : index
    %5 = vector.load %arg6[%c0_5, %c0_6] : memref<32x32xf32, #tpu.memory_space<vmem>>, vector<32x32xf32>
    %6 = arith.truncf %4 : vector<32x32xf32> to vector<32x32xbf16>
    %c0_7 = arith.constant 0 : index
    %c0_8 = arith.constant 0 : index
    %c0_9 = arith.constant 0 : index
    %7 = vector.load %arg9[%c0_7, %c0_8, %c0_9] : memref<2x32x96xbf16, #tpu.memory_space<vmem>>, vector<1x32x96xbf16>
    %8 = vector.shape_cast %7 : vector<1x32x96xbf16> to vector<32x96xbf16>
    %cst_10 = arith.constant dense<0.000000e+00> : vector<32x96xf32>
    %9 = tpu.matmul %6, %8, %cst_10 {dimension_numbers = #tpu.dot_dimension_numbers<[1], [0], [0], [1], [0, 0, 1, 1], [], []>} : vector<32x32xbf16>, vector<32x96xbf16>, vector<32x96xf32> -> vector<32x96xf32>
    %c0_11 = arith.constant 0 : index
    %c0_12 = arith.constant 0 : index
    %c0_13 = arith.constant 0 : index
    %10 = vector.load %arg10[%c0_11, %c0_12, %c0_13] : memref<2x1x96xf32, #tpu.memory_space<vmem>>, vector<1x1x96xf32>
    %11 = vector.shape_cast %10 : vector<1x1x96xf32> to vector<1x96xf32>
    %12 = vector.broadcast %11 : vector<1x96xf32> to vector<32x96xf32>
    %13 = arith.addf %9, %12 : vector<32x96xf32>
    %14 = vector.extract_strided_slice %13 {offsets = [0, 0], sizes = [32, 32], strides = [1, 1]} : vector<32x96xf32> to vector<32x32xf32>
    %15 = vector.extract_strided_slice %13 {offsets = [0, 32], sizes = [32, 32], strides = [1, 1]} : vector<32x96xf32> to vector<32x32xf32>
    %16 = vector.extract_strided_slice %13 {offsets = [0, 64], sizes = [32, 32], strides = [1, 1]} : vector<32x96xf32> to vector<32x32xf32>
    %c0_14 = arith.constant 0 : index
    %c0_15 = arith.constant 0 : index
    %c0_16 = arith.constant 0 : index
    %17 = vector.load %arg11[%c0_14, %c0_15, %c0_16] : memref<2x32x32xbf16, #tpu.memory_space<vmem>>, vector<1x32x32xbf16>
    %18 = vector.shape_cast %17 : vector<1x32x32xbf16> to vector<32x32xbf16>
    %c0_17 = arith.constant 0 : index
    %c0_18 = arith.constant 0 : index
    %c0_19 = arith.constant 0 : index
    %19 = vector.load %arg12[%c0_17, %c0_18, %c0_19] : memref<2x1x32xf32, #tpu.memory_space<vmem>>, vector<1x1x32xf32>
    %20 = vector.shape_cast %19 : vector<1x1x32xf32> to vector<1x32xf32>
    %21 = arith.truncf %14 : vector<32x32xf32> to vector<32x32xbf16>
    %22 = arith.truncf %15 : vector<32x32xf32> to vector<32x32xbf16>
    %23 = arith.truncf %16 : vector<32x32xf32> to vector<32x32xbf16>
    %24 = vector.extract_strided_slice %21 {offsets = [0, 0], sizes = [32, 8], strides = [1, 1]} : vector<32x32xbf16> to vector<32x8xbf16>
    %25 = vector.extract_strided_slice %22 {offsets = [0, 0], sizes = [32, 8], strides = [1, 1]} : vector<32x32xbf16> to vector<32x8xbf16>
    %cst_20 = arith.constant dense<0.000000e+00> : vector<32x32xf32>
    %26 = tpu.matmul %24, %25, %cst_20 {dimension_numbers = #tpu.dot_dimension_numbers<[1], [1], [0], [0], [0, 0, 1, 0], [], []>} : vector<32x8xbf16>, vector<32x8xbf16>, vector<32x32xf32> -> vector<32x32xf32>
    %cst_21 = arith.constant 0.353553385 : f32
    %27 = vector.broadcast %cst_21 : f32 to vector<32x32xf32>
    %28 = arith.mulf %26, %27 : vector<32x32xf32>
    %29 = arith.addf %28, %5 : vector<32x32xf32>
    %cst_22 = arith.constant dense<0xFF800000> : vector<32xf32>
    %30 = vector.multi_reduction <maximumf>, %29, %cst_22 [1] : vector<32x32xf32> to vector<32xf32>
    %31 = vector.shape_cast %30 : vector<32xf32> to vector<32x1xf32>
    %32 = vector.broadcast %31 : vector<32x1xf32> to vector<32x32xf32>
    %33 = arith.subf %29, %32 : vector<32x32xf32>
    %34 = math.exp %33 : vector<32x32xf32>
    %cst_23 = arith.constant dense<0.000000e+00> : vector<32xf32>
    %35 = vector.multi_reduction <add>, %34, %cst_23 [1] : vector<32x32xf32> to vector<32xf32>
    %36 = vector.shape_cast %35 : vector<32xf32> to vector<32x1xf32>
    %37 = tpu.reciprocal %36 {approx = true} : vector<32x1xf32> -> vector<32x1xf32>
    %38 = vector.broadcast %37 : vector<32x1xf32> to vector<32x32xf32>
    %39 = arith.mulf %34, %38 : vector<32x32xf32>
    %40 = arith.truncf %39 : vector<32x32xf32> to vector<32x32xbf16>
    %41 = vector.extract_strided_slice %23 {offsets = [0, 0], sizes = [32, 8], strides = [1, 1]} : vector<32x32xbf16> to vector<32x8xbf16>
    %cst_24 = arith.constant dense<0.000000e+00> : vector<32x8xf32>
    %42 = tpu.matmul %40, %41, %cst_24 {dimension_numbers = #tpu.dot_dimension_numbers<[1], [0], [0], [1], [0, 0, 1, 1], [], []>} : vector<32x32xbf16>, vector<32x8xbf16>, vector<32x8xf32> -> vector<32x8xf32>
    %43 = vector.extract_strided_slice %21 {offsets = [0, 8], sizes = [32, 8], strides = [1, 1]} : vector<32x32xbf16> to vector<32x8xbf16>
    %44 = vector.extract_strided_slice %22 {offsets = [0, 8], sizes = [32, 8], strides = [1, 1]} : vector<32x32xbf16> to vector<32x8xbf16>
    %cst_25 = arith.constant dense<0.000000e+00> : vector<32x32xf32>
    %45 = tpu.matmul %43, %44, %cst_25 {dimension_numbers = #tpu.dot_dimension_numbers<[1], [1], [0], [0], [0, 0, 1, 0], [], []>} : vector<32x8xbf16>, vector<32x8xbf16>, vector<32x32xf32> -> vector<32x32xf32>
    %cst_26 = arith.constant 0.353553385 : f32
    %46 = vector.broadcast %cst_26 : f32 to vector<32x32xf32>
    %47 = arith.mulf %45, %46 : vector<32x32xf32>
    %48 = arith.addf %47, %5 : vector<32x32xf32>
    %cst_27 = arith.constant dense<0xFF800000> : vector<32xf32>
    %49 = vector.multi_reduction <maximumf>, %48, %cst_27 [1] : vector<32x32xf32> to vector<32xf32>
    %50 = vector.shape_cast %49 : vector<32xf32> to vector<32x1xf32>
    %51 = vector.broadcast %50 : vector<32x1xf32> to vector<32x32xf32>
    %52 = arith.subf %48, %51 : vector<32x32xf32>
    %53 = math.exp %52 : vector<32x32xf32>
    %cst_28 = arith.constant dense<0.000000e+00> : vector<32xf32>
    %54 = vector.multi_reduction <add>, %53, %cst_28 [1] : vector<32x32xf32> to vector<32xf32>
    %55 = vector.shape_cast %54 : vector<32xf32> to vector<32x1xf32>
    %56 = tpu.reciprocal %55 {approx = true} : vector<32x1xf32> -> vector<32x1xf32>
    %57 = vector.broadcast %56 : vector<32x1xf32> to vector<32x32xf32>
    %58 = arith.mulf %53, %57 : vector<32x32xf32>
    %59 = arith.truncf %58 : vector<32x32xf32> to vector<32x32xbf16>
    %60 = vector.extract_strided_slice %23 {offsets = [0, 8], sizes = [32, 8], strides = [1, 1]} : vector<32x32xbf16> to vector<32x8xbf16>
    %cst_29 = arith.constant dense<0.000000e+00> : vector<32x8xf32>
    %61 = tpu.matmul %59, %60, %cst_29 {dimension_numbers = #tpu.dot_dimension_numbers<[1], [0], [0], [1], [0, 0, 1, 1], [], []>} : vector<32x32xbf16>, vector<32x8xbf16>, vector<32x8xf32> -> vector<32x8xf32>
    %62 = vector.extract_strided_slice %21 {offsets = [0, 16], sizes = [32, 8], strides = [1, 1]} : vector<32x32xbf16> to vector<32x8xbf16>
    %63 = vector.extract_strided_slice %22 {offsets = [0, 16], sizes = [32, 8], strides = [1, 1]} : vector<32x32xbf16> to vector<32x8xbf16>
    %cst_30 = arith.constant dense<0.000000e+00> : vector<32x32xf32>
    %64 = tpu.matmul %62, %63, %cst_30 {dimension_numbers = #tpu.dot_dimension_numbers<[1], [1], [0], [0], [0, 0, 1, 0], [], []>} : vector<32x8xbf16>, vector<32x8xbf16>, vector<32x32xf32> -> vector<32x32xf32>
    %cst_31 = arith.constant 0.353553385 : f32
    %65 = vector.broadcast %cst_31 : f32 to vector<32x32xf32>
    %66 = arith.mulf %64, %65 : vector<32x32xf32>
    %67 = arith.addf %66, %5 : vector<32x32xf32>
    %cst_32 = arith.constant dense<0xFF800000> : vector<32xf32>
    %68 = vector.multi_reduction <maximumf>, %67, %cst_32 [1] : vector<32x32xf32> to vector<32xf32>
    %69 = vector.shape_cast %68 : vector<32xf32> to vector<32x1xf32>
    %70 = vector.broadcast %69 : vector<32x1xf32> to vector<32x32xf32>
    %71 = arith.subf %67, %70 : vector<32x32xf32>
    %72 = math.exp %71 : vector<32x32xf32>
    %cst_33 = arith.constant dense<0.000000e+00> : vector<32xf32>
    %73 = vector.multi_reduction <add>, %72, %cst_33 [1] : vector<32x32xf32> to vector<32xf32>
    %74 = vector.shape_cast %73 : vector<32xf32> to vector<32x1xf32>
    %75 = tpu.reciprocal %74 {approx = true} : vector<32x1xf32> -> vector<32x1xf32>
    %76 = vector.broadcast %75 : vector<32x1xf32> to vector<32x32xf32>
    %77 = arith.mulf %72, %76 : vector<32x32xf32>
    %78 = arith.truncf %77 : vector<32x32xf32> to vector<32x32xbf16>
    %79 = vector.extract_strided_slice %23 {offsets = [0, 16], sizes = [32, 8], strides = [1, 1]} : vector<32x32xbf16> to vector<32x8xbf16>
    %cst_34 = arith.constant dense<0.000000e+00> : vector<32x8xf32>
    %80 = tpu.matmul %78, %79, %cst_34 {dimension_numbers = #tpu.dot_dimension_numbers<[1], [0], [0], [1], [0, 0, 1, 1], [], []>} : vector<32x32xbf16>, vector<32x8xbf16>, vector<32x8xf32> -> vector<32x8xf32>
    %81 = vector.extract_strided_slice %21 {offsets = [0, 24], sizes = [32, 8], strides = [1, 1]} : vector<32x32xbf16> to vector<32x8xbf16>
    %82 = vector.extract_strided_slice %22 {offsets = [0, 24], sizes = [32, 8], strides = [1, 1]} : vector<32x32xbf16> to vector<32x8xbf16>
    %cst_35 = arith.constant dense<0.000000e+00> : vector<32x32xf32>
    %83 = tpu.matmul %81, %82, %cst_35 {dimension_numbers = #tpu.dot_dimension_numbers<[1], [1], [0], [0], [0, 0, 1, 0], [], []>} : vector<32x8xbf16>, vector<32x8xbf16>, vector<32x32xf32> -> vector<32x32xf32>
    %cst_36 = arith.constant 0.353553385 : f32
    %84 = vector.broadcast %cst_36 : f32 to vector<32x32xf32>
    %85 = arith.mulf %83, %84 : vector<32x32xf32>
    %86 = arith.addf %85, %5 : vector<32x32xf32>
    %cst_37 = arith.constant dense<0xFF800000> : vector<32xf32>
    %87 = vector.multi_reduction <maximumf>, %86, %cst_37 [1] : vector<32x32xf32> to vector<32xf32>
    %88 = vector.shape_cast %87 : vector<32xf32> to vector<32x1xf32>
    %89 = vector.broadcast %88 : vector<32x1xf32> to vector<32x32xf32>
    %90 = arith.subf %86, %89 : vector<32x32xf32>
    %91 = math.exp %90 : vector<32x32xf32>
    %cst_38 = arith.constant dense<0.000000e+00> : vector<32xf32>
    %92 = vector.multi_reduction <add>, %91, %cst_38 [1] : vector<32x32xf32> to vector<32xf32>
    %93 = vector.shape_cast %92 : vector<32xf32> to vector<32x1xf32>
    %94 = tpu.reciprocal %93 {approx = true} : vector<32x1xf32> -> vector<32x1xf32>
    %95 = vector.broadcast %94 : vector<32x1xf32> to vector<32x32xf32>
    %96 = arith.mulf %91, %95 : vector<32x32xf32>
    %97 = arith.truncf %96 : vector<32x32xf32> to vector<32x32xbf16>
    %98 = vector.extract_strided_slice %23 {offsets = [0, 24], sizes = [32, 8], strides = [1, 1]} : vector<32x32xbf16> to vector<32x8xbf16>
    %cst_39 = arith.constant dense<0.000000e+00> : vector<32x8xf32>
    %99 = tpu.matmul %97, %98, %cst_39 {dimension_numbers = #tpu.dot_dimension_numbers<[1], [0], [0], [1], [0, 0, 1, 1], [], []>} : vector<32x32xbf16>, vector<32x8xbf16>, vector<32x8xf32> -> vector<32x8xf32>
    %100 = tpu.concatenate %42, %61, %80, %99 in 1 : vector<32x8xf32>, vector<32x8xf32>, vector<32x8xf32>, vector<32x8xf32> -> vector<32x32xf32>
    %101 = arith.truncf %100 : vector<32x32xf32> to vector<32x32xbf16>
    %cst_40 = arith.constant dense<0.000000e+00> : vector<32x32xf32>
    %102 = tpu.matmul %101, %18, %cst_40 {dimension_numbers = #tpu.dot_dimension_numbers<[1], [0], [0], [1], [0, 0, 1, 1], [], []>} : vector<32x32xbf16>, vector<32x32xbf16>, vector<32x32xf32> -> vector<32x32xf32>
    %103 = vector.broadcast %20 : vector<1x32xf32> to vector<32x32xf32>
    %104 = arith.addf %102, %103 : vector<32x32xf32>
    %105 = arith.addf %4, %104 : vector<32x32xf32>
    %c0_41 = arith.constant 0 : index
    %c0_42 = arith.constant 0 : index
    %c0_43 = arith.constant 0 : index
    %106 = vector.load %arg13[%c0_41, %c0_42, %c0_43] : memref<2x1x32xf32, #tpu.memory_space<vmem>>, vector<1x1x32xf32>
    %107 = vector.shape_cast %106 : vector<1x1x32xf32> to vector<1x32xf32>
    %c0_44 = arith.constant 0 : index
    %c0_45 = arith.constant 0 : index
    %c0_46 = arith.constant 0 : index
    %108 = vector.load %arg14[%c0_44, %c0_45, %c0_46] : memref<2x1x32xf32, #tpu.memory_space<vmem>>, vector<1x1x32xf32>
    %109 = vector.shape_cast %108 : vector<1x1x32xf32> to vector<1x32xf32>
    %cst_47 = arith.constant dense<0.000000e+00> : vector<32xf32>
    %110 = vector.multi_reduction <add>, %105, %cst_47 [1] : vector<32x32xf32> to vector<32xf32>
    %111 = vector.shape_cast %110 : vector<32xf32> to vector<32x1xf32>
    %cst_48 = arith.constant 3.200000e+01 : f32
    %112 = vector.broadcast %cst_48 : f32 to vector<32x1xf32>
    %113 = arith.divf %111, %112 : vector<32x1xf32>
    %114 = vector.broadcast %113 : vector<32x1xf32> to vector<32x32xf32>
    %115 = arith.subf %105, %114 : vector<32x32xf32>
    %116 = arith.mulf %115, %115 : vector<32x32xf32>
    %cst_49 = arith.constant dense<0.000000e+00> : vector<32xf32>
    %117 = vector.multi_reduction <add>, %116, %cst_49 [1] : vector<32x32xf32> to vector<32xf32>
    %118 = vector.shape_cast %117 : vector<32xf32> to vector<32x1xf32>
    %cst_50 = arith.constant 3.200000e+01 : f32
    %119 = vector.broadcast %cst_50 : f32 to vector<32x1xf32>
    %120 = arith.divf %118, %119 : vector<32x1xf32>
    %121 = vector.broadcast %113 : vector<32x1xf32> to vector<32x32xf32>
    %122 = arith.subf %105, %121 : vector<32x32xf32>
    %cst_51 = arith.constant 9.99999974E-6 : f32
    %123 = vector.broadcast %cst_51 : f32 to vector<32x1xf32>
    %124 = arith.addf %120, %123 : vector<32x1xf32>
    %125 = math.rsqrt %124 : vector<32x1xf32>
    %126 = vector.broadcast %125 : vector<32x1xf32> to vector<32x32xf32>
    %127 = arith.mulf %122, %126 : vector<32x32xf32>
    %128 = vector.broadcast %107 : vector<1x32xf32> to vector<32x32xf32>
    %129 = arith.mulf %127, %128 : vector<32x32xf32>
    %130 = vector.broadcast %109 : vector<1x32xf32> to vector<32x32xf32>
    %131 = arith.addf %129, %130 : vector<32x32xf32>
    %132 = arith.truncf %131 : vector<32x32xf32> to vector<32x32xbf16>
    %c0_52 = arith.constant 0 : index
    %c0_53 = arith.constant 0 : index
    %c0_54 = arith.constant 0 : index
    %133 = vector.load %arg15[%c0_52, %c0_53, %c0_54] : memref<2x32x32xbf16, #tpu.memory_space<vmem>>, vector<1x32x32xbf16>
    %134 = vector.shape_cast %133 : vector<1x32x32xbf16> to vector<32x32xbf16>
    %cst_55 = arith.constant dense<0.000000e+00> : vector<32x32xf32>
    %135 = tpu.matmul %132, %134, %cst_55 {dimension_numbers = #tpu.dot_dimension_numbers<[1], [0], [0], [1], [0, 0, 1, 1], [], []>} : vector<32x32xbf16>, vector<32x32xbf16>, vector<32x32xf32> -> vector<32x32xf32>
    %c0_56 = arith.constant 0 : index
    %c0_57 = arith.constant 0 : index
    %c0_58 = arith.constant 0 : index
    %136 = vector.load %arg16[%c0_56, %c0_57, %c0_58] : memref<2x1x32xf32, #tpu.memory_space<vmem>>, vector<1x1x32xf32>
    %137 = vector.shape_cast %136 : vector<1x1x32xf32> to vector<1x32xf32>
    %138 = vector.broadcast %137 : vector<1x32xf32> to vector<32x32xf32>
    %139 = arith.addf %135, %138 : vector<32x32xf32>
    %cst_59 = arith.constant 5.000000e-01 : f32
    %140 = vector.broadcast %cst_59 : f32 to vector<32x32xf32>
    %141 = arith.mulf %140, %139 : vector<32x32xf32>
    %cst_60 = arith.constant 0.707106769 : f32
    %142 = vector.broadcast %cst_60 : f32 to vector<32x32xf32>
    %143 = arith.mulf %139, %142 : vector<32x32xf32>
    %144 = math.erf %143 : vector<32x32xf32>
    %cst_61 = arith.constant 1.000000e+00 : f32
    %145 = vector.broadcast %cst_61 : f32 to vector<32x32xf32>
    %146 = arith.addf %145, %144 : vector<32x32xf32>
    %147 = arith.mulf %141, %146 : vector<32x32xf32>
    %148 = arith.truncf %147 : vector<32x32xf32> to vector<32x32xbf16>
    %c0_62 = arith.constant 0 : index
    %c0_63 = arith.constant 0 : index
    %c0_64 = arith.constant 0 : index
    %149 = vector.load %arg17[%c0_62, %c0_63, %c0_64] : memref<2x32x32xbf16, #tpu.memory_space<vmem>>, vector<1x32x32xbf16>
    %150 = vector.shape_cast %149 : vector<1x32x32xbf16> to vector<32x32xbf16>
    %cst_65 = arith.constant dense<0.000000e+00> : vector<32x32xf32>
    %151 = tpu.matmul %148, %150, %cst_65 {dimension_numbers = #tpu.dot_dimension_numbers<[1], [0], [0], [1], [0, 0, 1, 1], [], []>} : vector<32x32xbf16>, vector<32x32xbf16>, vector<32x32xf32> -> vector<32x32xf32>
    %c0_66 = arith.constant 0 : index
    %c0_67 = arith.constant 0 : index
    %c0_68 = arith.constant 0 : index
    %152 = vector.load %arg18[%c0_66, %c0_67, %c0_68] : memref<2x1x32xf32, #tpu.memory_space<vmem>>, vector<1x1x32xf32>
    %153 = vector.shape_cast %152 : vector<1x1x32xf32> to vector<1x32xf32>
    %154 = vector.broadcast %153 : vector<1x32xf32> to vector<32x32xf32>
    %155 = arith.addf %151, %154 : vector<32x32xf32>
    %156 = arith.addf %131, %155 : vector<32x32xf32>
    %c0_69 = arith.constant 0 : index
    %c0_70 = arith.constant 0 : index
    %c0_71 = arith.constant 0 : index
    %157 = vector.load %arg19[%c0_69, %c0_70, %c0_71] : memref<2x1x32xf32, #tpu.memory_space<vmem>>, vector<1x1x32xf32>
    %158 = vector.shape_cast %157 : vector<1x1x32xf32> to vector<1x32xf32>
    %c0_72 = arith.constant 0 : index
    %c0_73 = arith.constant 0 : index
    %c0_74 = arith.constant 0 : index
    %159 = vector.load %arg20[%c0_72, %c0_73, %c0_74] : memref<2x1x32xf32, #tpu.memory_space<vmem>>, vector<1x1x32xf32>
    %160 = vector.shape_cast %159 : vector<1x1x32xf32> to vector<1x32xf32>
    %cst_75 = arith.constant dense<0.000000e+00> : vector<32xf32>
    %161 = vector.multi_reduction <add>, %156, %cst_75 [1] : vector<32x32xf32> to vector<32xf32>
    %162 = vector.shape_cast %161 : vector<32xf32> to vector<32x1xf32>
    %cst_76 = arith.constant 3.200000e+01 : f32
    %163 = vector.broadcast %cst_76 : f32 to vector<32x1xf32>
    %164 = arith.divf %162, %163 : vector<32x1xf32>
    %165 = vector.broadcast %164 : vector<32x1xf32> to vector<32x32xf32>
    %166 = arith.subf %156, %165 : vector<32x32xf32>
    %167 = arith.mulf %166, %166 : vector<32x32xf32>
    %cst_77 = arith.constant dense<0.000000e+00> : vector<32xf32>
    %168 = vector.multi_reduction <add>, %167, %cst_77 [1] : vector<32x32xf32> to vector<32xf32>
    %169 = vector.shape_cast %168 : vector<32xf32> to vector<32x1xf32>
    %cst_78 = arith.constant 3.200000e+01 : f32
    %170 = vector.broadcast %cst_78 : f32 to vector<32x1xf32>
    %171 = arith.divf %169, %170 : vector<32x1xf32>
    %172 = vector.broadcast %164 : vector<32x1xf32> to vector<32x32xf32>
    %173 = arith.subf %156, %172 : vector<32x32xf32>
    %cst_79 = arith.constant 9.99999974E-6 : f32
    %174 = vector.broadcast %cst_79 : f32 to vector<32x1xf32>
    %175 = arith.addf %171, %174 : vector<32x1xf32>
    %176 = math.rsqrt %175 : vector<32x1xf32>
    %177 = vector.broadcast %176 : vector<32x1xf32> to vector<32x32xf32>
    %178 = arith.mulf %173, %177 : vector<32x32xf32>
    %179 = vector.broadcast %158 : vector<1x32xf32> to vector<32x32xf32>
    %180 = arith.mulf %178, %179 : vector<32x32xf32>
    %181 = vector.broadcast %160 : vector<1x32xf32> to vector<32x32xf32>
    %182 = arith.addf %180, %181 : vector<32x32xf32>
    %183 = arith.truncf %182 : vector<32x32xf32> to vector<32x32xbf16>
    %c1 = arith.constant 1 : index
    %c0_80 = arith.constant 0 : index
    %c0_81 = arith.constant 0 : index
    %184 = vector.load %arg9[%c1, %c0_80, %c0_81] : memref<2x32x96xbf16, #tpu.memory_space<vmem>>, vector<1x32x96xbf16>
    %185 = vector.shape_cast %184 : vector<1x32x96xbf16> to vector<32x96xbf16>
    %cst_82 = arith.constant dense<0.000000e+00> : vector<32x96xf32>
    %186 = tpu.matmul %183, %185, %cst_82 {dimension_numbers = #tpu.dot_dimension_numbers<[1], [0], [0], [1], [0, 0, 1, 1], [], []>} : vector<32x32xbf16>, vector<32x96xbf16>, vector<32x96xf32> -> vector<32x96xf32>
    %c1_83 = arith.constant 1 : index
    %c0_84 = arith.constant 0 : index
    %c0_85 = arith.constant 0 : index
    %187 = vector.load %arg10[%c1_83, %c0_84, %c0_85] : memref<2x1x96xf32, #tpu.memory_space<vmem>>, vector<1x1x96xf32>
    %188 = vector.shape_cast %187 : vector<1x1x96xf32> to vector<1x96xf32>
    %189 = vector.broadcast %188 : vector<1x96xf32> to vector<32x96xf32>
    %190 = arith.addf %186, %189 : vector<32x96xf32>
    %191 = vector.extract_strided_slice %190 {offsets = [0, 0], sizes = [32, 32], strides = [1, 1]} : vector<32x96xf32> to vector<32x32xf32>
    %192 = vector.extract_strided_slice %190 {offsets = [0, 32], sizes = [32, 32], strides = [1, 1]} : vector<32x96xf32> to vector<32x32xf32>
    %193 = vector.extract_strided_slice %190 {offsets = [0, 64], sizes = [32, 32], strides = [1, 1]} : vector<32x96xf32> to vector<32x32xf32>
    %c1_86 = arith.constant 1 : index
    %c0_87 = arith.constant 0 : index
    %c0_88 = arith.constant 0 : index
    %194 = vector.load %arg11[%c1_86, %c0_87, %c0_88] : memref<2x32x32xbf16, #tpu.memory_space<vmem>>, vector<1x32x32xbf16>
    %195 = vector.shape_cast %194 : vector<1x32x32xbf16> to vector<32x32xbf16>
    %c1_89 = arith.constant 1 : index
    %c0_90 = arith.constant 0 : index
    %c0_91 = arith.constant 0 : index
    %196 = vector.load %arg12[%c1_89, %c0_90, %c0_91] : memref<2x1x32xf32, #tpu.memory_space<vmem>>, vector<1x1x32xf32>
    %197 = vector.shape_cast %196 : vector<1x1x32xf32> to vector<1x32xf32>
    %198 = arith.truncf %191 : vector<32x32xf32> to vector<32x32xbf16>
    %199 = arith.truncf %192 : vector<32x32xf32> to vector<32x32xbf16>
    %200 = arith.truncf %193 : vector<32x32xf32> to vector<32x32xbf16>
    %201 = vector.extract_strided_slice %198 {offsets = [0, 0], sizes = [32, 8], strides = [1, 1]} : vector<32x32xbf16> to vector<32x8xbf16>
    %202 = vector.extract_strided_slice %199 {offsets = [0, 0], sizes = [32, 8], strides = [1, 1]} : vector<32x32xbf16> to vector<32x8xbf16>
    %cst_92 = arith.constant dense<0.000000e+00> : vector<32x32xf32>
    %203 = tpu.matmul %201, %202, %cst_92 {dimension_numbers = #tpu.dot_dimension_numbers<[1], [1], [0], [0], [0, 0, 1, 0], [], []>} : vector<32x8xbf16>, vector<32x8xbf16>, vector<32x32xf32> -> vector<32x32xf32>
    %cst_93 = arith.constant 0.353553385 : f32
    %204 = vector.broadcast %cst_93 : f32 to vector<32x32xf32>
    %205 = arith.mulf %203, %204 : vector<32x32xf32>
    %206 = arith.addf %205, %5 : vector<32x32xf32>
    %cst_94 = arith.constant dense<0xFF800000> : vector<32xf32>
    %207 = vector.multi_reduction <maximumf>, %206, %cst_94 [1] : vector<32x32xf32> to vector<32xf32>
    %208 = vector.shape_cast %207 : vector<32xf32> to vector<32x1xf32>
    %209 = vector.broadcast %208 : vector<32x1xf32> to vector<32x32xf32>
    %210 = arith.subf %206, %209 : vector<32x32xf32>
    %211 = math.exp %210 : vector<32x32xf32>
    %cst_95 = arith.constant dense<0.000000e+00> : vector<32xf32>
    %212 = vector.multi_reduction <add>, %211, %cst_95 [1] : vector<32x32xf32> to vector<32xf32>
    %213 = vector.shape_cast %212 : vector<32xf32> to vector<32x1xf32>
    %214 = tpu.reciprocal %213 {approx = true} : vector<32x1xf32> -> vector<32x1xf32>
    %215 = vector.broadcast %214 : vector<32x1xf32> to vector<32x32xf32>
    %216 = arith.mulf %211, %215 : vector<32x32xf32>
    %217 = arith.truncf %216 : vector<32x32xf32> to vector<32x32xbf16>
    %218 = vector.extract_strided_slice %200 {offsets = [0, 0], sizes = [32, 8], strides = [1, 1]} : vector<32x32xbf16> to vector<32x8xbf16>
    %cst_96 = arith.constant dense<0.000000e+00> : vector<32x8xf32>
    %219 = tpu.matmul %217, %218, %cst_96 {dimension_numbers = #tpu.dot_dimension_numbers<[1], [0], [0], [1], [0, 0, 1, 1], [], []>} : vector<32x32xbf16>, vector<32x8xbf16>, vector<32x8xf32> -> vector<32x8xf32>
    %220 = vector.extract_strided_slice %198 {offsets = [0, 8], sizes = [32, 8], strides = [1, 1]} : vector<32x32xbf16> to vector<32x8xbf16>
    %221 = vector.extract_strided_slice %199 {offsets = [0, 8], sizes = [32, 8], strides = [1, 1]} : vector<32x32xbf16> to vector<32x8xbf16>
    %cst_97 = arith.constant dense<0.000000e+00> : vector<32x32xf32>
    %222 = tpu.matmul %220, %221, %cst_97 {dimension_numbers = #tpu.dot_dimension_numbers<[1], [1], [0], [0], [0, 0, 1, 0], [], []>} : vector<32x8xbf16>, vector<32x8xbf16>, vector<32x32xf32> -> vector<32x32xf32>
    %cst_98 = arith.constant 0.353553385 : f32
    %223 = vector.broadcast %cst_98 : f32 to vector<32x32xf32>
    %224 = arith.mulf %222, %223 : vector<32x32xf32>
    %225 = arith.addf %224, %5 : vector<32x32xf32>
    %cst_99 = arith.constant dense<0xFF800000> : vector<32xf32>
    %226 = vector.multi_reduction <maximumf>, %225, %cst_99 [1] : vector<32x32xf32> to vector<32xf32>
    %227 = vector.shape_cast %226 : vector<32xf32> to vector<32x1xf32>
    %228 = vector.broadcast %227 : vector<32x1xf32> to vector<32x32xf32>
    %229 = arith.subf %225, %228 : vector<32x32xf32>
    %230 = math.exp %229 : vector<32x32xf32>
    %cst_100 = arith.constant dense<0.000000e+00> : vector<32xf32>
    %231 = vector.multi_reduction <add>, %230, %cst_100 [1] : vector<32x32xf32> to vector<32xf32>
    %232 = vector.shape_cast %231 : vector<32xf32> to vector<32x1xf32>
    %233 = tpu.reciprocal %232 {approx = true} : vector<32x1xf32> -> vector<32x1xf32>
    %234 = vector.broadcast %233 : vector<32x1xf32> to vector<32x32xf32>
    %235 = arith.mulf %230, %234 : vector<32x32xf32>
    %236 = arith.truncf %235 : vector<32x32xf32> to vector<32x32xbf16>
    %237 = vector.extract_strided_slice %200 {offsets = [0, 8], sizes = [32, 8], strides = [1, 1]} : vector<32x32xbf16> to vector<32x8xbf16>
    %cst_101 = arith.constant dense<0.000000e+00> : vector<32x8xf32>
    %238 = tpu.matmul %236, %237, %cst_101 {dimension_numbers = #tpu.dot_dimension_numbers<[1], [0], [0], [1], [0, 0, 1, 1], [], []>} : vector<32x32xbf16>, vector<32x8xbf16>, vector<32x8xf32> -> vector<32x8xf32>
    %239 = vector.extract_strided_slice %198 {offsets = [0, 16], sizes = [32, 8], strides = [1, 1]} : vector<32x32xbf16> to vector<32x8xbf16>
    %240 = vector.extract_strided_slice %199 {offsets = [0, 16], sizes = [32, 8], strides = [1, 1]} : vector<32x32xbf16> to vector<32x8xbf16>
    %cst_102 = arith.constant dense<0.000000e+00> : vector<32x32xf32>
    %241 = tpu.matmul %239, %240, %cst_102 {dimension_numbers = #tpu.dot_dimension_numbers<[1], [1], [0], [0], [0, 0, 1, 0], [], []>} : vector<32x8xbf16>, vector<32x8xbf16>, vector<32x32xf32> -> vector<32x32xf32>
    %cst_103 = arith.constant 0.353553385 : f32
    %242 = vector.broadcast %cst_103 : f32 to vector<32x32xf32>
    %243 = arith.mulf %241, %242 : vector<32x32xf32>
    %244 = arith.addf %243, %5 : vector<32x32xf32>
    %cst_104 = arith.constant dense<0xFF800000> : vector<32xf32>
    %245 = vector.multi_reduction <maximumf>, %244, %cst_104 [1] : vector<32x32xf32> to vector<32xf32>
    %246 = vector.shape_cast %245 : vector<32xf32> to vector<32x1xf32>
    %247 = vector.broadcast %246 : vector<32x1xf32> to vector<32x32xf32>
    %248 = arith.subf %244, %247 : vector<32x32xf32>
    %249 = math.exp %248 : vector<32x32xf32>
    %cst_105 = arith.constant dense<0.000000e+00> : vector<32xf32>
    %250 = vector.multi_reduction <add>, %249, %cst_105 [1] : vector<32x32xf32> to vector<32xf32>
    %251 = vector.shape_cast %250 : vector<32xf32> to vector<32x1xf32>
    %252 = tpu.reciprocal %251 {approx = true} : vector<32x1xf32> -> vector<32x1xf32>
    %253 = vector.broadcast %252 : vector<32x1xf32> to vector<32x32xf32>
    %254 = arith.mulf %249, %253 : vector<32x32xf32>
    %255 = arith.truncf %254 : vector<32x32xf32> to vector<32x32xbf16>
    %256 = vector.extract_strided_slice %200 {offsets = [0, 16], sizes = [32, 8], strides = [1, 1]} : vector<32x32xbf16> to vector<32x8xbf16>
    %cst_106 = arith.constant dense<0.000000e+00> : vector<32x8xf32>
    %257 = tpu.matmul %255, %256, %cst_106 {dimension_numbers = #tpu.dot_dimension_numbers<[1], [0], [0], [1], [0, 0, 1, 1], [], []>} : vector<32x32xbf16>, vector<32x8xbf16>, vector<32x8xf32> -> vector<32x8xf32>
    %258 = vector.extract_strided_slice %198 {offsets = [0, 24], sizes = [32, 8], strides = [1, 1]} : vector<32x32xbf16> to vector<32x8xbf16>
    %259 = vector.extract_strided_slice %199 {offsets = [0, 24], sizes = [32, 8], strides = [1, 1]} : vector<32x32xbf16> to vector<32x8xbf16>
    %cst_107 = arith.constant dense<0.000000e+00> : vector<32x32xf32>
    %260 = tpu.matmul %258, %259, %cst_107 {dimension_numbers = #tpu.dot_dimension_numbers<[1], [1], [0], [0], [0, 0, 1, 0], [], []>} : vector<32x8xbf16>, vector<32x8xbf16>, vector<32x32xf32> -> vector<32x32xf32>
    %cst_108 = arith.constant 0.353553385 : f32
    %261 = vector.broadcast %cst_108 : f32 to vector<32x32xf32>
    %262 = arith.mulf %260, %261 : vector<32x32xf32>
    %263 = arith.addf %262, %5 : vector<32x32xf32>
    %cst_109 = arith.constant dense<0xFF800000> : vector<32xf32>
    %264 = vector.multi_reduction <maximumf>, %263, %cst_109 [1] : vector<32x32xf32> to vector<32xf32>
    %265 = vector.shape_cast %264 : vector<32xf32> to vector<32x1xf32>
    %266 = vector.broadcast %265 : vector<32x1xf32> to vector<32x32xf32>
    %267 = arith.subf %263, %266 : vector<32x32xf32>
    %268 = math.exp %267 : vector<32x32xf32>
    %cst_110 = arith.constant dense<0.000000e+00> : vector<32xf32>
    %269 = vector.multi_reduction <add>, %268, %cst_110 [1] : vector<32x32xf32> to vector<32xf32>
    %270 = vector.shape_cast %269 : vector<32xf32> to vector<32x1xf32>
    %271 = tpu.reciprocal %270 {approx = true} : vector<32x1xf32> -> vector<32x1xf32>
    %272 = vector.broadcast %271 : vector<32x1xf32> to vector<32x32xf32>
    %273 = arith.mulf %268, %272 : vector<32x32xf32>
    %274 = arith.truncf %273 : vector<32x32xf32> to vector<32x32xbf16>
    %275 = vector.extract_strided_slice %200 {offsets = [0, 24], sizes = [32, 8], strides = [1, 1]} : vector<32x32xbf16> to vector<32x8xbf16>
    %cst_111 = arith.constant dense<0.000000e+00> : vector<32x8xf32>
    %276 = tpu.matmul %274, %275, %cst_111 {dimension_numbers = #tpu.dot_dimension_numbers<[1], [0], [0], [1], [0, 0, 1, 1], [], []>} : vector<32x32xbf16>, vector<32x8xbf16>, vector<32x8xf32> -> vector<32x8xf32>
    %277 = tpu.concatenate %219, %238, %257, %276 in 1 : vector<32x8xf32>, vector<32x8xf32>, vector<32x8xf32>, vector<32x8xf32> -> vector<32x32xf32>
    %278 = arith.truncf %277 : vector<32x32xf32> to vector<32x32xbf16>
    %cst_112 = arith.constant dense<0.000000e+00> : vector<32x32xf32>
    %279 = tpu.matmul %278, %195, %cst_112 {dimension_numbers = #tpu.dot_dimension_numbers<[1], [0], [0], [1], [0, 0, 1, 1], [], []>} : vector<32x32xbf16>, vector<32x32xbf16>, vector<32x32xf32> -> vector<32x32xf32>
    %280 = vector.broadcast %197 : vector<1x32xf32> to vector<32x32xf32>
    %281 = arith.addf %279, %280 : vector<32x32xf32>
    %282 = arith.addf %182, %281 : vector<32x32xf32>
    %c1_113 = arith.constant 1 : index
    %c0_114 = arith.constant 0 : index
    %c0_115 = arith.constant 0 : index
    %283 = vector.load %arg13[%c1_113, %c0_114, %c0_115] : memref<2x1x32xf32, #tpu.memory_space<vmem>>, vector<1x1x32xf32>
    %284 = vector.shape_cast %283 : vector<1x1x32xf32> to vector<1x32xf32>
    %c1_116 = arith.constant 1 : index
    %c0_117 = arith.constant 0 : index
    %c0_118 = arith.constant 0 : index
    %285 = vector.load %arg14[%c1_116, %c0_117, %c0_118] : memref<2x1x32xf32, #tpu.memory_space<vmem>>, vector<1x1x32xf32>
    %286 = vector.shape_cast %285 : vector<1x1x32xf32> to vector<1x32xf32>
    %cst_119 = arith.constant dense<0.000000e+00> : vector<32xf32>
    %287 = vector.multi_reduction <add>, %282, %cst_119 [1] : vector<32x32xf32> to vector<32xf32>
    %288 = vector.shape_cast %287 : vector<32xf32> to vector<32x1xf32>
    %cst_120 = arith.constant 3.200000e+01 : f32
    %289 = vector.broadcast %cst_120 : f32 to vector<32x1xf32>
    %290 = arith.divf %288, %289 : vector<32x1xf32>
    %291 = vector.broadcast %290 : vector<32x1xf32> to vector<32x32xf32>
    %292 = arith.subf %282, %291 : vector<32x32xf32>
    %293 = arith.mulf %292, %292 : vector<32x32xf32>
    %cst_121 = arith.constant dense<0.000000e+00> : vector<32xf32>
    %294 = vector.multi_reduction <add>, %293, %cst_121 [1] : vector<32x32xf32> to vector<32xf32>
    %295 = vector.shape_cast %294 : vector<32xf32> to vector<32x1xf32>
    %cst_122 = arith.constant 3.200000e+01 : f32
    %296 = vector.broadcast %cst_122 : f32 to vector<32x1xf32>
    %297 = arith.divf %295, %296 : vector<32x1xf32>
    %298 = vector.broadcast %290 : vector<32x1xf32> to vector<32x32xf32>
    %299 = arith.subf %282, %298 : vector<32x32xf32>
    %cst_123 = arith.constant 9.99999974E-6 : f32
    %300 = vector.broadcast %cst_123 : f32 to vector<32x1xf32>
    %301 = arith.addf %297, %300 : vector<32x1xf32>
    %302 = math.rsqrt %301 : vector<32x1xf32>
    %303 = vector.broadcast %302 : vector<32x1xf32> to vector<32x32xf32>
    %304 = arith.mulf %299, %303 : vector<32x32xf32>
    %305 = vector.broadcast %284 : vector<1x32xf32> to vector<32x32xf32>
    %306 = arith.mulf %304, %305 : vector<32x32xf32>
    %307 = vector.broadcast %286 : vector<1x32xf32> to vector<32x32xf32>
    %308 = arith.addf %306, %307 : vector<32x32xf32>
    %309 = arith.truncf %308 : vector<32x32xf32> to vector<32x32xbf16>
    %c1_124 = arith.constant 1 : index
    %c0_125 = arith.constant 0 : index
    %c0_126 = arith.constant 0 : index
    %310 = vector.load %arg15[%c1_124, %c0_125, %c0_126] : memref<2x32x32xbf16, #tpu.memory_space<vmem>>, vector<1x32x32xbf16>
    %311 = vector.shape_cast %310 : vector<1x32x32xbf16> to vector<32x32xbf16>
    %cst_127 = arith.constant dense<0.000000e+00> : vector<32x32xf32>
    %312 = tpu.matmul %309, %311, %cst_127 {dimension_numbers = #tpu.dot_dimension_numbers<[1], [0], [0], [1], [0, 0, 1, 1], [], []>} : vector<32x32xbf16>, vector<32x32xbf16>, vector<32x32xf32> -> vector<32x32xf32>
    %c1_128 = arith.constant 1 : index
    %c0_129 = arith.constant 0 : index
    %c0_130 = arith.constant 0 : index
    %313 = vector.load %arg16[%c1_128, %c0_129, %c0_130] : memref<2x1x32xf32, #tpu.memory_space<vmem>>, vector<1x1x32xf32>
    %314 = vector.shape_cast %313 : vector<1x1x32xf32> to vector<1x32xf32>
    %315 = vector.broadcast %314 : vector<1x32xf32> to vector<32x32xf32>
    %316 = arith.addf %312, %315 : vector<32x32xf32>
    %cst_131 = arith.constant 5.000000e-01 : f32
    %317 = vector.broadcast %cst_131 : f32 to vector<32x32xf32>
    %318 = arith.mulf %317, %316 : vector<32x32xf32>
    %cst_132 = arith.constant 0.707106769 : f32
    %319 = vector.broadcast %cst_132 : f32 to vector<32x32xf32>
    %320 = arith.mulf %316, %319 : vector<32x32xf32>
    %321 = math.erf %320 : vector<32x32xf32>
    %cst_133 = arith.constant 1.000000e+00 : f32
    %322 = vector.broadcast %cst_133 : f32 to vector<32x32xf32>
    %323 = arith.addf %322, %321 : vector<32x32xf32>
    %324 = arith.mulf %318, %323 : vector<32x32xf32>
    %325 = arith.truncf %324 : vector<32x32xf32> to vector<32x32xbf16>
    %c1_134 = arith.constant 1 : index
    %c0_135 = arith.constant 0 : index
    %c0_136 = arith.constant 0 : index
    %326 = vector.load %arg17[%c1_134, %c0_135, %c0_136] : memref<2x32x32xbf16, #tpu.memory_space<vmem>>, vector<1x32x32xbf16>
    %327 = vector.shape_cast %326 : vector<1x32x32xbf16> to vector<32x32xbf16>
    %cst_137 = arith.constant dense<0.000000e+00> : vector<32x32xf32>
    %328 = tpu.matmul %325, %327, %cst_137 {dimension_numbers = #tpu.dot_dimension_numbers<[1], [0], [0], [1], [0, 0, 1, 1], [], []>} : vector<32x32xbf16>, vector<32x32xbf16>, vector<32x32xf32> -> vector<32x32xf32>
    %c1_138 = arith.constant 1 : index
    %c0_139 = arith.constant 0 : index
    %c0_140 = arith.constant 0 : index
    %329 = vector.load %arg18[%c1_138, %c0_139, %c0_140] : memref<2x1x32xf32, #tpu.memory_space<vmem>>, vector<1x1x32xf32>
    %330 = vector.shape_cast %329 : vector<1x1x32xf32> to vector<1x32xf32>
    %331 = vector.broadcast %330 : vector<1x32xf32> to vector<32x32xf32>
    %332 = arith.addf %328, %331 : vector<32x32xf32>
    %333 = arith.addf %308, %332 : vector<32x32xf32>
    %c1_141 = arith.constant 1 : index
    %c0_142 = arith.constant 0 : index
    %c0_143 = arith.constant 0 : index
    %334 = vector.load %arg19[%c1_141, %c0_142, %c0_143] : memref<2x1x32xf32, #tpu.memory_space<vmem>>, vector<1x1x32xf32>
    %335 = vector.shape_cast %334 : vector<1x1x32xf32> to vector<1x32xf32>
    %c1_144 = arith.constant 1 : index
    %c0_145 = arith.constant 0 : index
    %c0_146 = arith.constant 0 : index
    %336 = vector.load %arg20[%c1_144, %c0_145, %c0_146] : memref<2x1x32xf32, #tpu.memory_space<vmem>>, vector<1x1x32xf32>
    %337 = vector.shape_cast %336 : vector<1x1x32xf32> to vector<1x32xf32>
    %cst_147 = arith.constant dense<0.000000e+00> : vector<32xf32>
    %338 = vector.multi_reduction <add>, %333, %cst_147 [1] : vector<32x32xf32> to vector<32xf32>
    %339 = vector.shape_cast %338 : vector<32xf32> to vector<32x1xf32>
    %cst_148 = arith.constant 3.200000e+01 : f32
    %340 = vector.broadcast %cst_148 : f32 to vector<32x1xf32>
    %341 = arith.divf %339, %340 : vector<32x1xf32>
    %342 = vector.broadcast %341 : vector<32x1xf32> to vector<32x32xf32>
    %343 = arith.subf %333, %342 : vector<32x32xf32>
    %344 = arith.mulf %343, %343 : vector<32x32xf32>
    %cst_149 = arith.constant dense<0.000000e+00> : vector<32xf32>
    %345 = vector.multi_reduction <add>, %344, %cst_149 [1] : vector<32x32xf32> to vector<32xf32>
    %346 = vector.shape_cast %345 : vector<32xf32> to vector<32x1xf32>
    %cst_150 = arith.constant 3.200000e+01 : f32
    %347 = vector.broadcast %cst_150 : f32 to vector<32x1xf32>
    %348 = arith.divf %346, %347 : vector<32x1xf32>
    %349 = vector.broadcast %341 : vector<32x1xf32> to vector<32x32xf32>
    %350 = arith.subf %333, %349 : vector<32x32xf32>
    %cst_151 = arith.constant 9.99999974E-6 : f32
    %351 = vector.broadcast %cst_151 : f32 to vector<32x1xf32>
    %352 = arith.addf %348, %351 : vector<32x1xf32>
    %353 = math.rsqrt %352 : vector<32x1xf32>
    %354 = vector.broadcast %353 : vector<32x1xf32> to vector<32x32xf32>
    %355 = arith.mulf %350, %354 : vector<32x32xf32>
    %356 = vector.broadcast %335 : vector<1x32xf32> to vector<32x32xf32>
    %357 = arith.mulf %355, %356 : vector<32x32xf32>
    %358 = vector.broadcast %337 : vector<1x32xf32> to vector<32x32xf32>
    %359 = arith.addf %357, %358 : vector<32x32xf32>
    %c0_152 = arith.constant 0 : index
    %c0_153 = arith.constant 0 : index
    %360 = vector.load %arg21[%c0_152, %c0_153] : memref<1x32xf32, #tpu.memory_space<vmem>>, vector<1x32xf32>
    %c0_154 = arith.constant 0 : index
    %c0_155 = arith.constant 0 : index
    %361 = vector.load %arg22[%c0_154, %c0_155] : memref<1x32xf32, #tpu.memory_space<vmem>>, vector<1x32xf32>
    %cst_156 = arith.constant dense<0.000000e+00> : vector<32xf32>
    %362 = vector.multi_reduction <add>, %359, %cst_156 [1] : vector<32x32xf32> to vector<32xf32>
    %363 = vector.shape_cast %362 : vector<32xf32> to vector<32x1xf32>
    %cst_157 = arith.constant 3.200000e+01 : f32
    %364 = vector.broadcast %cst_157 : f32 to vector<32x1xf32>
    %365 = arith.divf %363, %364 : vector<32x1xf32>
    %366 = vector.broadcast %365 : vector<32x1xf32> to vector<32x32xf32>
    %367 = arith.subf %359, %366 : vector<32x32xf32>
    %368 = arith.mulf %367, %367 : vector<32x32xf32>
    %cst_158 = arith.constant dense<0.000000e+00> : vector<32xf32>
    %369 = vector.multi_reduction <add>, %368, %cst_158 [1] : vector<32x32xf32> to vector<32xf32>
    %370 = vector.shape_cast %369 : vector<32xf32> to vector<32x1xf32>
    %cst_159 = arith.constant 3.200000e+01 : f32
    %371 = vector.broadcast %cst_159 : f32 to vector<32x1xf32>
    %372 = arith.divf %370, %371 : vector<32x1xf32>
    %373 = vector.broadcast %365 : vector<32x1xf32> to vector<32x32xf32>
    %374 = arith.subf %359, %373 : vector<32x32xf32>
    %cst_160 = arith.constant 9.99999974E-6 : f32
    %375 = vector.broadcast %cst_160 : f32 to vector<32x1xf32>
    %376 = arith.addf %372, %375 : vector<32x1xf32>
    %377 = math.rsqrt %376 : vector<32x1xf32>
    %378 = vector.broadcast %377 : vector<32x1xf32> to vector<32x32xf32>
    %379 = arith.mulf %374, %378 : vector<32x32xf32>
    %380 = vector.broadcast %360 : vector<1x32xf32> to vector<32x32xf32>
    %381 = arith.mulf %379, %380 : vector<32x32xf32>
    %382 = vector.broadcast %361 : vector<1x32xf32> to vector<32x32xf32>
    %383 = arith.addf %381, %382 : vector<32x32xf32>
    %384 = arith.truncf %383 : vector<32x32xf32> to vector<32x32xbf16>
    %c0_161 = arith.constant 0 : index
    %c0_162 = arith.constant 0 : index
    %385 = vector.load %arg3[%c0_161, %c0_162] : memref<32x12xbf16, #tpu.memory_space<vmem>>, vector<32x12xbf16>
    %c0_163 = arith.constant 0 : index
    %c0_164 = arith.constant 0 : index
    %386 = vector.load %arg5[%c0_163, %c0_164] : memref<12x32xbf16, #tpu.memory_space<vmem>>, vector<12x32xbf16>
    %cst_165 = arith.constant dense<0.000000e+00> : vector<32x32xf32>
    %387 = tpu.matmul %385, %386, %cst_165 {dimension_numbers = #tpu.dot_dimension_numbers<[1], [0], [0], [1], [0, 0, 1, 1], [], []>} : vector<32x12xbf16>, vector<12x32xbf16>, vector<32x32xf32> -> vector<32x32xf32>
    %c0_166 = arith.constant 0 : index
    %c0_167 = arith.constant 0 : index
    %388 = vector.load %arg4[%c0_166, %c0_167] : memref<32x32xf32, #tpu.memory_space<vmem>>, vector<32x32xf32>
    %389 = arith.addf %387, %388 : vector<32x32xf32>
    %c0_168 = arith.constant 0 : index
    %c0_169 = arith.constant 0 : index
    %390 = vector.load %arg7[%c0_168, %c0_169] : memref<32x32xf32, #tpu.memory_space<vmem>>, vector<32x32xf32>
    %c0_170 = arith.constant 0 : index
    %c0_171 = arith.constant 0 : index
    %391 = vector.load %arg8[%c0_170, %c0_171] : memref<32x32xf32, #tpu.memory_space<vmem>>, vector<32x32xf32>
    %392 = arith.truncf %389 : vector<32x32xf32> to vector<32x32xbf16>
    %c0_172 = arith.constant 0 : index
    %c0_173 = arith.constant 0 : index
    %c0_174 = arith.constant 0 : index
    %393 = vector.load %arg23[%c0_172, %c0_173, %c0_174] : memref<1x32x96xbf16, #tpu.memory_space<vmem>>, vector<1x32x96xbf16>
    %394 = vector.shape_cast %393 : vector<1x32x96xbf16> to vector<32x96xbf16>
    %cst_175 = arith.constant dense<0.000000e+00> : vector<32x96xf32>
    %395 = tpu.matmul %392, %394, %cst_175 {dimension_numbers = #tpu.dot_dimension_numbers<[1], [0], [0], [1], [0, 0, 1, 1], [], []>} : vector<32x32xbf16>, vector<32x96xbf16>, vector<32x96xf32> -> vector<32x96xf32>
    %c0_176 = arith.constant 0 : index
    %c0_177 = arith.constant 0 : index
    %c0_178 = arith.constant 0 : index
    %396 = vector.load %arg24[%c0_176, %c0_177, %c0_178] : memref<1x1x96xf32, #tpu.memory_space<vmem>>, vector<1x1x96xf32>
    %397 = vector.shape_cast %396 : vector<1x1x96xf32> to vector<1x96xf32>
    %398 = vector.broadcast %397 : vector<1x96xf32> to vector<32x96xf32>
    %399 = arith.addf %395, %398 : vector<32x96xf32>
    %400 = vector.extract_strided_slice %399 {offsets = [0, 0], sizes = [32, 32], strides = [1, 1]} : vector<32x96xf32> to vector<32x32xf32>
    %401 = vector.extract_strided_slice %399 {offsets = [0, 32], sizes = [32, 32], strides = [1, 1]} : vector<32x96xf32> to vector<32x32xf32>
    %402 = vector.extract_strided_slice %399 {offsets = [0, 64], sizes = [32, 32], strides = [1, 1]} : vector<32x96xf32> to vector<32x32xf32>
    %c0_179 = arith.constant 0 : index
    %c0_180 = arith.constant 0 : index
    %c0_181 = arith.constant 0 : index
    %403 = vector.load %arg25[%c0_179, %c0_180, %c0_181] : memref<1x32x32xbf16, #tpu.memory_space<vmem>>, vector<1x32x32xbf16>
    %404 = vector.shape_cast %403 : vector<1x32x32xbf16> to vector<32x32xbf16>
    %c0_182 = arith.constant 0 : index
    %c0_183 = arith.constant 0 : index
    %c0_184 = arith.constant 0 : index
    %405 = vector.load %arg26[%c0_182, %c0_183, %c0_184] : memref<1x1x32xf32, #tpu.memory_space<vmem>>, vector<1x1x32xf32>
    %406 = vector.shape_cast %405 : vector<1x1x32xf32> to vector<1x32xf32>
    %407 = arith.truncf %400 : vector<32x32xf32> to vector<32x32xbf16>
    %408 = arith.truncf %401 : vector<32x32xf32> to vector<32x32xbf16>
    %409 = arith.truncf %402 : vector<32x32xf32> to vector<32x32xbf16>
    %410 = vector.extract_strided_slice %407 {offsets = [0, 0], sizes = [32, 8], strides = [1, 1]} : vector<32x32xbf16> to vector<32x8xbf16>
    %411 = vector.extract_strided_slice %408 {offsets = [0, 0], sizes = [32, 8], strides = [1, 1]} : vector<32x32xbf16> to vector<32x8xbf16>
    %cst_185 = arith.constant dense<0.000000e+00> : vector<32x32xf32>
    %412 = tpu.matmul %410, %411, %cst_185 {dimension_numbers = #tpu.dot_dimension_numbers<[1], [1], [0], [0], [0, 0, 1, 0], [], []>} : vector<32x8xbf16>, vector<32x8xbf16>, vector<32x32xf32> -> vector<32x32xf32>
    %cst_186 = arith.constant 0.353553385 : f32
    %413 = vector.broadcast %cst_186 : f32 to vector<32x32xf32>
    %414 = arith.mulf %412, %413 : vector<32x32xf32>
    %415 = arith.addf %414, %390 : vector<32x32xf32>
    %cst_187 = arith.constant dense<0xFF800000> : vector<32xf32>
    %416 = vector.multi_reduction <maximumf>, %415, %cst_187 [1] : vector<32x32xf32> to vector<32xf32>
    %417 = vector.shape_cast %416 : vector<32xf32> to vector<32x1xf32>
    %418 = vector.broadcast %417 : vector<32x1xf32> to vector<32x32xf32>
    %419 = arith.subf %415, %418 : vector<32x32xf32>
    %420 = math.exp %419 : vector<32x32xf32>
    %cst_188 = arith.constant dense<0.000000e+00> : vector<32xf32>
    %421 = vector.multi_reduction <add>, %420, %cst_188 [1] : vector<32x32xf32> to vector<32xf32>
    %422 = vector.shape_cast %421 : vector<32xf32> to vector<32x1xf32>
    %423 = tpu.reciprocal %422 {approx = true} : vector<32x1xf32> -> vector<32x1xf32>
    %424 = vector.broadcast %423 : vector<32x1xf32> to vector<32x32xf32>
    %425 = arith.mulf %420, %424 : vector<32x32xf32>
    %426 = arith.truncf %425 : vector<32x32xf32> to vector<32x32xbf16>
    %427 = vector.extract_strided_slice %409 {offsets = [0, 0], sizes = [32, 8], strides = [1, 1]} : vector<32x32xbf16> to vector<32x8xbf16>
    %cst_189 = arith.constant dense<0.000000e+00> : vector<32x8xf32>
    %428 = tpu.matmul %426, %427, %cst_189 {dimension_numbers = #tpu.dot_dimension_numbers<[1], [0], [0], [1], [0, 0, 1, 1], [], []>} : vector<32x32xbf16>, vector<32x8xbf16>, vector<32x8xf32> -> vector<32x8xf32>
    %429 = vector.extract_strided_slice %407 {offsets = [0, 8], sizes = [32, 8], strides = [1, 1]} : vector<32x32xbf16> to vector<32x8xbf16>
    %430 = vector.extract_strided_slice %408 {offsets = [0, 8], sizes = [32, 8], strides = [1, 1]} : vector<32x32xbf16> to vector<32x8xbf16>
    %cst_190 = arith.constant dense<0.000000e+00> : vector<32x32xf32>
    %431 = tpu.matmul %429, %430, %cst_190 {dimension_numbers = #tpu.dot_dimension_numbers<[1], [1], [0], [0], [0, 0, 1, 0], [], []>} : vector<32x8xbf16>, vector<32x8xbf16>, vector<32x32xf32> -> vector<32x32xf32>
    %cst_191 = arith.constant 0.353553385 : f32
    %432 = vector.broadcast %cst_191 : f32 to vector<32x32xf32>
    %433 = arith.mulf %431, %432 : vector<32x32xf32>
    %434 = arith.addf %433, %390 : vector<32x32xf32>
    %cst_192 = arith.constant dense<0xFF800000> : vector<32xf32>
    %435 = vector.multi_reduction <maximumf>, %434, %cst_192 [1] : vector<32x32xf32> to vector<32xf32>
    %436 = vector.shape_cast %435 : vector<32xf32> to vector<32x1xf32>
    %437 = vector.broadcast %436 : vector<32x1xf32> to vector<32x32xf32>
    %438 = arith.subf %434, %437 : vector<32x32xf32>
    %439 = math.exp %438 : vector<32x32xf32>
    %cst_193 = arith.constant dense<0.000000e+00> : vector<32xf32>
    %440 = vector.multi_reduction <add>, %439, %cst_193 [1] : vector<32x32xf32> to vector<32xf32>
    %441 = vector.shape_cast %440 : vector<32xf32> to vector<32x1xf32>
    %442 = tpu.reciprocal %441 {approx = true} : vector<32x1xf32> -> vector<32x1xf32>
    %443 = vector.broadcast %442 : vector<32x1xf32> to vector<32x32xf32>
    %444 = arith.mulf %439, %443 : vector<32x32xf32>
    %445 = arith.truncf %444 : vector<32x32xf32> to vector<32x32xbf16>
    %446 = vector.extract_strided_slice %409 {offsets = [0, 8], sizes = [32, 8], strides = [1, 1]} : vector<32x32xbf16> to vector<32x8xbf16>
    %cst_194 = arith.constant dense<0.000000e+00> : vector<32x8xf32>
    %447 = tpu.matmul %445, %446, %cst_194 {dimension_numbers = #tpu.dot_dimension_numbers<[1], [0], [0], [1], [0, 0, 1, 1], [], []>} : vector<32x32xbf16>, vector<32x8xbf16>, vector<32x8xf32> -> vector<32x8xf32>
    %448 = vector.extract_strided_slice %407 {offsets = [0, 16], sizes = [32, 8], strides = [1, 1]} : vector<32x32xbf16> to vector<32x8xbf16>
    %449 = vector.extract_strided_slice %408 {offsets = [0, 16], sizes = [32, 8], strides = [1, 1]} : vector<32x32xbf16> to vector<32x8xbf16>
    %cst_195 = arith.constant dense<0.000000e+00> : vector<32x32xf32>
    %450 = tpu.matmul %448, %449, %cst_195 {dimension_numbers = #tpu.dot_dimension_numbers<[1], [1], [0], [0], [0, 0, 1, 0], [], []>} : vector<32x8xbf16>, vector<32x8xbf16>, vector<32x32xf32> -> vector<32x32xf32>
    %cst_196 = arith.constant 0.353553385 : f32
    %451 = vector.broadcast %cst_196 : f32 to vector<32x32xf32>
    %452 = arith.mulf %450, %451 : vector<32x32xf32>
    %453 = arith.addf %452, %390 : vector<32x32xf32>
    %cst_197 = arith.constant dense<0xFF800000> : vector<32xf32>
    %454 = vector.multi_reduction <maximumf>, %453, %cst_197 [1] : vector<32x32xf32> to vector<32xf32>
    %455 = vector.shape_cast %454 : vector<32xf32> to vector<32x1xf32>
    %456 = vector.broadcast %455 : vector<32x1xf32> to vector<32x32xf32>
    %457 = arith.subf %453, %456 : vector<32x32xf32>
    %458 = math.exp %457 : vector<32x32xf32>
    %cst_198 = arith.constant dense<0.000000e+00> : vector<32xf32>
    %459 = vector.multi_reduction <add>, %458, %cst_198 [1] : vector<32x32xf32> to vector<32xf32>
    %460 = vector.shape_cast %459 : vector<32xf32> to vector<32x1xf32>
    %461 = tpu.reciprocal %460 {approx = true} : vector<32x1xf32> -> vector<32x1xf32>
    %462 = vector.broadcast %461 : vector<32x1xf32> to vector<32x32xf32>
    %463 = arith.mulf %458, %462 : vector<32x32xf32>
    %464 = arith.truncf %463 : vector<32x32xf32> to vector<32x32xbf16>
    %465 = vector.extract_strided_slice %409 {offsets = [0, 16], sizes = [32, 8], strides = [1, 1]} : vector<32x32xbf16> to vector<32x8xbf16>
    %cst_199 = arith.constant dense<0.000000e+00> : vector<32x8xf32>
    %466 = tpu.matmul %464, %465, %cst_199 {dimension_numbers = #tpu.dot_dimension_numbers<[1], [0], [0], [1], [0, 0, 1, 1], [], []>} : vector<32x32xbf16>, vector<32x8xbf16>, vector<32x8xf32> -> vector<32x8xf32>
    %467 = vector.extract_strided_slice %407 {offsets = [0, 24], sizes = [32, 8], strides = [1, 1]} : vector<32x32xbf16> to vector<32x8xbf16>
    %468 = vector.extract_strided_slice %408 {offsets = [0, 24], sizes = [32, 8], strides = [1, 1]} : vector<32x32xbf16> to vector<32x8xbf16>
    %cst_200 = arith.constant dense<0.000000e+00> : vector<32x32xf32>
    %469 = tpu.matmul %467, %468, %cst_200 {dimension_numbers = #tpu.dot_dimension_numbers<[1], [1], [0], [0], [0, 0, 1, 0], [], []>} : vector<32x8xbf16>, vector<32x8xbf16>, vector<32x32xf32> -> vector<32x32xf32>
    %cst_201 = arith.constant 0.353553385 : f32
    %470 = vector.broadcast %cst_201 : f32 to vector<32x32xf32>
    %471 = arith.mulf %469, %470 : vector<32x32xf32>
    %472 = arith.addf %471, %390 : vector<32x32xf32>
    %cst_202 = arith.constant dense<0xFF800000> : vector<32xf32>
    %473 = vector.multi_reduction <maximumf>, %472, %cst_202 [1] : vector<32x32xf32> to vector<32xf32>
    %474 = vector.shape_cast %473 : vector<32xf32> to vector<32x1xf32>
    %475 = vector.broadcast %474 : vector<32x1xf32> to vector<32x32xf32>
    %476 = arith.subf %472, %475 : vector<32x32xf32>
    %477 = math.exp %476 : vector<32x32xf32>
    %cst_203 = arith.constant dense<0.000000e+00> : vector<32xf32>
    %478 = vector.multi_reduction <add>, %477, %cst_203 [1] : vector<32x32xf32> to vector<32xf32>
    %479 = vector.shape_cast %478 : vector<32xf32> to vector<32x1xf32>
    %480 = tpu.reciprocal %479 {approx = true} : vector<32x1xf32> -> vector<32x1xf32>
    %481 = vector.broadcast %480 : vector<32x1xf32> to vector<32x32xf32>
    %482 = arith.mulf %477, %481 : vector<32x32xf32>
    %483 = arith.truncf %482 : vector<32x32xf32> to vector<32x32xbf16>
    %484 = vector.extract_strided_slice %409 {offsets = [0, 24], sizes = [32, 8], strides = [1, 1]} : vector<32x32xbf16> to vector<32x8xbf16>
    %cst_204 = arith.constant dense<0.000000e+00> : vector<32x8xf32>
    %485 = tpu.matmul %483, %484, %cst_204 {dimension_numbers = #tpu.dot_dimension_numbers<[1], [0], [0], [1], [0, 0, 1, 1], [], []>} : vector<32x32xbf16>, vector<32x8xbf16>, vector<32x8xf32> -> vector<32x8xf32>
    %486 = tpu.concatenate %428, %447, %466, %485 in 1 : vector<32x8xf32>, vector<32x8xf32>, vector<32x8xf32>, vector<32x8xf32> -> vector<32x32xf32>
    %487 = arith.truncf %486 : vector<32x32xf32> to vector<32x32xbf16>
    %cst_205 = arith.constant dense<0.000000e+00> : vector<32x32xf32>
    %488 = tpu.matmul %487, %404, %cst_205 {dimension_numbers = #tpu.dot_dimension_numbers<[1], [0], [0], [1], [0, 0, 1, 1], [], []>} : vector<32x32xbf16>, vector<32x32xbf16>, vector<32x32xf32> -> vector<32x32xf32>
    %489 = vector.broadcast %406 : vector<1x32xf32> to vector<32x32xf32>
    %490 = arith.addf %488, %489 : vector<32x32xf32>
    %491 = arith.addf %389, %490 : vector<32x32xf32>
    %c0_206 = arith.constant 0 : index
    %c0_207 = arith.constant 0 : index
    %c0_208 = arith.constant 0 : index
    %492 = vector.load %arg27[%c0_206, %c0_207, %c0_208] : memref<1x1x32xf32, #tpu.memory_space<vmem>>, vector<1x1x32xf32>
    %493 = vector.shape_cast %492 : vector<1x1x32xf32> to vector<1x32xf32>
    %c0_209 = arith.constant 0 : index
    %c0_210 = arith.constant 0 : index
    %c0_211 = arith.constant 0 : index
    %494 = vector.load %arg28[%c0_209, %c0_210, %c0_211] : memref<1x1x32xf32, #tpu.memory_space<vmem>>, vector<1x1x32xf32>
    %495 = vector.shape_cast %494 : vector<1x1x32xf32> to vector<1x32xf32>
    %cst_212 = arith.constant dense<0.000000e+00> : vector<32xf32>
    %496 = vector.multi_reduction <add>, %491, %cst_212 [1] : vector<32x32xf32> to vector<32xf32>
    %497 = vector.shape_cast %496 : vector<32xf32> to vector<32x1xf32>
    %cst_213 = arith.constant 3.200000e+01 : f32
    %498 = vector.broadcast %cst_213 : f32 to vector<32x1xf32>
    %499 = arith.divf %497, %498 : vector<32x1xf32>
    %500 = vector.broadcast %499 : vector<32x1xf32> to vector<32x32xf32>
    %501 = arith.subf %491, %500 : vector<32x32xf32>
    %502 = arith.mulf %501, %501 : vector<32x32xf32>
    %cst_214 = arith.constant dense<0.000000e+00> : vector<32xf32>
    %503 = vector.multi_reduction <add>, %502, %cst_214 [1] : vector<32x32xf32> to vector<32xf32>
    %504 = vector.shape_cast %503 : vector<32xf32> to vector<32x1xf32>
    %cst_215 = arith.constant 3.200000e+01 : f32
    %505 = vector.broadcast %cst_215 : f32 to vector<32x1xf32>
    %506 = arith.divf %504, %505 : vector<32x1xf32>
    %507 = vector.broadcast %499 : vector<32x1xf32> to vector<32x32xf32>
    %508 = arith.subf %491, %507 : vector<32x32xf32>
    %cst_216 = arith.constant 9.99999974E-6 : f32
    %509 = vector.broadcast %cst_216 : f32 to vector<32x1xf32>
    %510 = arith.addf %506, %509 : vector<32x1xf32>
    %511 = math.rsqrt %510 : vector<32x1xf32>
    %512 = vector.broadcast %511 : vector<32x1xf32> to vector<32x32xf32>
    %513 = arith.mulf %508, %512 : vector<32x32xf32>
    %514 = vector.broadcast %493 : vector<1x32xf32> to vector<32x32xf32>
    %515 = arith.mulf %513, %514 : vector<32x32xf32>
    %516 = vector.broadcast %495 : vector<1x32xf32> to vector<32x32xf32>
    %517 = arith.addf %515, %516 : vector<32x32xf32>
    %518 = arith.truncf %517 : vector<32x32xf32> to vector<32x32xbf16>
    %c0_217 = arith.constant 0 : index
    %c0_218 = arith.constant 0 : index
    %c0_219 = arith.constant 0 : index
    %519 = vector.load %arg29[%c0_217, %c0_218, %c0_219] : memref<1x32x32xbf16, #tpu.memory_space<vmem>>, vector<1x32x32xbf16>
    %520 = vector.shape_cast %519 : vector<1x32x32xbf16> to vector<32x32xbf16>
    %cst_220 = arith.constant dense<0.000000e+00> : vector<32x32xf32>
    %521 = tpu.matmul %518, %520, %cst_220 {dimension_numbers = #tpu.dot_dimension_numbers<[1], [0], [0], [1], [0, 0, 1, 1], [], []>} : vector<32x32xbf16>, vector<32x32xbf16>, vector<32x32xf32> -> vector<32x32xf32>
    %c0_221 = arith.constant 0 : index
    %c0_222 = arith.constant 0 : index
    %c0_223 = arith.constant 0 : index
    %522 = vector.load %arg30[%c0_221, %c0_222, %c0_223] : memref<1x1x32xf32, #tpu.memory_space<vmem>>, vector<1x1x32xf32>
    %523 = vector.shape_cast %522 : vector<1x1x32xf32> to vector<1x32xf32>
    %524 = vector.broadcast %523 : vector<1x32xf32> to vector<32x32xf32>
    %525 = arith.addf %521, %524 : vector<32x32xf32>
    %c0_224 = arith.constant 0 : index
    %c0_225 = arith.constant 0 : index
    %c0_226 = arith.constant 0 : index
    %526 = vector.load %arg31[%c0_224, %c0_225, %c0_226] : memref<1x32x64xbf16, #tpu.memory_space<vmem>>, vector<1x32x64xbf16>
    %527 = vector.shape_cast %526 : vector<1x32x64xbf16> to vector<32x64xbf16>
    %cst_227 = arith.constant dense<0.000000e+00> : vector<32x64xf32>
    %528 = tpu.matmul %384, %527, %cst_227 {dimension_numbers = #tpu.dot_dimension_numbers<[1], [0], [0], [1], [0, 0, 1, 1], [], []>} : vector<32x32xbf16>, vector<32x64xbf16>, vector<32x64xf32> -> vector<32x64xf32>
    %c0_228 = arith.constant 0 : index
    %c0_229 = arith.constant 0 : index
    %c0_230 = arith.constant 0 : index
    %529 = vector.load %arg32[%c0_228, %c0_229, %c0_230] : memref<1x1x64xf32, #tpu.memory_space<vmem>>, vector<1x1x64xf32>
    %530 = vector.shape_cast %529 : vector<1x1x64xf32> to vector<1x64xf32>
    %531 = vector.broadcast %530 : vector<1x64xf32> to vector<32x64xf32>
    %532 = arith.addf %528, %531 : vector<32x64xf32>
    %533 = vector.extract_strided_slice %532 {offsets = [0, 0], sizes = [32, 32], strides = [1, 1]} : vector<32x64xf32> to vector<32x32xf32>
    %534 = vector.extract_strided_slice %532 {offsets = [0, 32], sizes = [32, 32], strides = [1, 1]} : vector<32x64xf32> to vector<32x32xf32>
    %c0_231 = arith.constant 0 : index
    %c0_232 = arith.constant 0 : index
    %c0_233 = arith.constant 0 : index
    %535 = vector.load %arg33[%c0_231, %c0_232, %c0_233] : memref<1x32x32xbf16, #tpu.memory_space<vmem>>, vector<1x32x32xbf16>
    %536 = vector.shape_cast %535 : vector<1x32x32xbf16> to vector<32x32xbf16>
    %c0_234 = arith.constant 0 : index
    %c0_235 = arith.constant 0 : index
    %c0_236 = arith.constant 0 : index
    %537 = vector.load %arg34[%c0_234, %c0_235, %c0_236] : memref<1x1x32xf32, #tpu.memory_space<vmem>>, vector<1x1x32xf32>
    %538 = vector.shape_cast %537 : vector<1x1x32xf32> to vector<1x32xf32>
    %539 = arith.truncf %525 : vector<32x32xf32> to vector<32x32xbf16>
    %540 = arith.truncf %533 : vector<32x32xf32> to vector<32x32xbf16>
    %541 = arith.truncf %534 : vector<32x32xf32> to vector<32x32xbf16>
    %542 = vector.extract_strided_slice %539 {offsets = [0, 0], sizes = [32, 8], strides = [1, 1]} : vector<32x32xbf16> to vector<32x8xbf16>
    %543 = vector.extract_strided_slice %540 {offsets = [0, 0], sizes = [32, 8], strides = [1, 1]} : vector<32x32xbf16> to vector<32x8xbf16>
    %cst_237 = arith.constant dense<0.000000e+00> : vector<32x32xf32>
    %544 = tpu.matmul %542, %543, %cst_237 {dimension_numbers = #tpu.dot_dimension_numbers<[1], [1], [0], [0], [0, 0, 1, 0], [], []>} : vector<32x8xbf16>, vector<32x8xbf16>, vector<32x32xf32> -> vector<32x32xf32>
    %cst_238 = arith.constant 0.353553385 : f32
    %545 = vector.broadcast %cst_238 : f32 to vector<32x32xf32>
    %546 = arith.mulf %544, %545 : vector<32x32xf32>
    %547 = arith.addf %546, %391 : vector<32x32xf32>
    %cst_239 = arith.constant dense<0xFF800000> : vector<32xf32>
    %548 = vector.multi_reduction <maximumf>, %547, %cst_239 [1] : vector<32x32xf32> to vector<32xf32>
    %549 = vector.shape_cast %548 : vector<32xf32> to vector<32x1xf32>
    %550 = vector.broadcast %549 : vector<32x1xf32> to vector<32x32xf32>
    %551 = arith.subf %547, %550 : vector<32x32xf32>
    %552 = math.exp %551 : vector<32x32xf32>
    %cst_240 = arith.constant dense<0.000000e+00> : vector<32xf32>
    %553 = vector.multi_reduction <add>, %552, %cst_240 [1] : vector<32x32xf32> to vector<32xf32>
    %554 = vector.shape_cast %553 : vector<32xf32> to vector<32x1xf32>
    %555 = tpu.reciprocal %554 {approx = true} : vector<32x1xf32> -> vector<32x1xf32>
    %556 = vector.broadcast %555 : vector<32x1xf32> to vector<32x32xf32>
    %557 = arith.mulf %552, %556 : vector<32x32xf32>
    %558 = arith.truncf %557 : vector<32x32xf32> to vector<32x32xbf16>
    %559 = vector.extract_strided_slice %541 {offsets = [0, 0], sizes = [32, 8], strides = [1, 1]} : vector<32x32xbf16> to vector<32x8xbf16>
    %cst_241 = arith.constant dense<0.000000e+00> : vector<32x8xf32>
    %560 = tpu.matmul %558, %559, %cst_241 {dimension_numbers = #tpu.dot_dimension_numbers<[1], [0], [0], [1], [0, 0, 1, 1], [], []>} : vector<32x32xbf16>, vector<32x8xbf16>, vector<32x8xf32> -> vector<32x8xf32>
    %561 = vector.extract_strided_slice %539 {offsets = [0, 8], sizes = [32, 8], strides = [1, 1]} : vector<32x32xbf16> to vector<32x8xbf16>
    %562 = vector.extract_strided_slice %540 {offsets = [0, 8], sizes = [32, 8], strides = [1, 1]} : vector<32x32xbf16> to vector<32x8xbf16>
    %cst_242 = arith.constant dense<0.000000e+00> : vector<32x32xf32>
    %563 = tpu.matmul %561, %562, %cst_242 {dimension_numbers = #tpu.dot_dimension_numbers<[1], [1], [0], [0], [0, 0, 1, 0], [], []>} : vector<32x8xbf16>, vector<32x8xbf16>, vector<32x32xf32> -> vector<32x32xf32>
    %cst_243 = arith.constant 0.353553385 : f32
    %564 = vector.broadcast %cst_243 : f32 to vector<32x32xf32>
    %565 = arith.mulf %563, %564 : vector<32x32xf32>
    %566 = arith.addf %565, %391 : vector<32x32xf32>
    %cst_244 = arith.constant dense<0xFF800000> : vector<32xf32>
    %567 = vector.multi_reduction <maximumf>, %566, %cst_244 [1] : vector<32x32xf32> to vector<32xf32>
    %568 = vector.shape_cast %567 : vector<32xf32> to vector<32x1xf32>
    %569 = vector.broadcast %568 : vector<32x1xf32> to vector<32x32xf32>
    %570 = arith.subf %566, %569 : vector<32x32xf32>
    %571 = math.exp %570 : vector<32x32xf32>
    %cst_245 = arith.constant dense<0.000000e+00> : vector<32xf32>
    %572 = vector.multi_reduction <add>, %571, %cst_245 [1] : vector<32x32xf32> to vector<32xf32>
    %573 = vector.shape_cast %572 : vector<32xf32> to vector<32x1xf32>
    %574 = tpu.reciprocal %573 {approx = true} : vector<32x1xf32> -> vector<32x1xf32>
    %575 = vector.broadcast %574 : vector<32x1xf32> to vector<32x32xf32>
    %576 = arith.mulf %571, %575 : vector<32x32xf32>
    %577 = arith.truncf %576 : vector<32x32xf32> to vector<32x32xbf16>
    %578 = vector.extract_strided_slice %541 {offsets = [0, 8], sizes = [32, 8], strides = [1, 1]} : vector<32x32xbf16> to vector<32x8xbf16>
    %cst_246 = arith.constant dense<0.000000e+00> : vector<32x8xf32>
    %579 = tpu.matmul %577, %578, %cst_246 {dimension_numbers = #tpu.dot_dimension_numbers<[1], [0], [0], [1], [0, 0, 1, 1], [], []>} : vector<32x32xbf16>, vector<32x8xbf16>, vector<32x8xf32> -> vector<32x8xf32>
    %580 = vector.extract_strided_slice %539 {offsets = [0, 16], sizes = [32, 8], strides = [1, 1]} : vector<32x32xbf16> to vector<32x8xbf16>
    %581 = vector.extract_strided_slice %540 {offsets = [0, 16], sizes = [32, 8], strides = [1, 1]} : vector<32x32xbf16> to vector<32x8xbf16>
    %cst_247 = arith.constant dense<0.000000e+00> : vector<32x32xf32>
    %582 = tpu.matmul %580, %581, %cst_247 {dimension_numbers = #tpu.dot_dimension_numbers<[1], [1], [0], [0], [0, 0, 1, 0], [], []>} : vector<32x8xbf16>, vector<32x8xbf16>, vector<32x32xf32> -> vector<32x32xf32>
    %cst_248 = arith.constant 0.353553385 : f32
    %583 = vector.broadcast %cst_248 : f32 to vector<32x32xf32>
    %584 = arith.mulf %582, %583 : vector<32x32xf32>
    %585 = arith.addf %584, %391 : vector<32x32xf32>
    %cst_249 = arith.constant dense<0xFF800000> : vector<32xf32>
    %586 = vector.multi_reduction <maximumf>, %585, %cst_249 [1] : vector<32x32xf32> to vector<32xf32>
    %587 = vector.shape_cast %586 : vector<32xf32> to vector<32x1xf32>
    %588 = vector.broadcast %587 : vector<32x1xf32> to vector<32x32xf32>
    %589 = arith.subf %585, %588 : vector<32x32xf32>
    %590 = math.exp %589 : vector<32x32xf32>
    %cst_250 = arith.constant dense<0.000000e+00> : vector<32xf32>
    %591 = vector.multi_reduction <add>, %590, %cst_250 [1] : vector<32x32xf32> to vector<32xf32>
    %592 = vector.shape_cast %591 : vector<32xf32> to vector<32x1xf32>
    %593 = tpu.reciprocal %592 {approx = true} : vector<32x1xf32> -> vector<32x1xf32>
    %594 = vector.broadcast %593 : vector<32x1xf32> to vector<32x32xf32>
    %595 = arith.mulf %590, %594 : vector<32x32xf32>
    %596 = arith.truncf %595 : vector<32x32xf32> to vector<32x32xbf16>
    %597 = vector.extract_strided_slice %541 {offsets = [0, 16], sizes = [32, 8], strides = [1, 1]} : vector<32x32xbf16> to vector<32x8xbf16>
    %cst_251 = arith.constant dense<0.000000e+00> : vector<32x8xf32>
    %598 = tpu.matmul %596, %597, %cst_251 {dimension_numbers = #tpu.dot_dimension_numbers<[1], [0], [0], [1], [0, 0, 1, 1], [], []>} : vector<32x32xbf16>, vector<32x8xbf16>, vector<32x8xf32> -> vector<32x8xf32>
    %599 = vector.extract_strided_slice %539 {offsets = [0, 24], sizes = [32, 8], strides = [1, 1]} : vector<32x32xbf16> to vector<32x8xbf16>
    %600 = vector.extract_strided_slice %540 {offsets = [0, 24], sizes = [32, 8], strides = [1, 1]} : vector<32x32xbf16> to vector<32x8xbf16>
    %cst_252 = arith.constant dense<0.000000e+00> : vector<32x32xf32>
    %601 = tpu.matmul %599, %600, %cst_252 {dimension_numbers = #tpu.dot_dimension_numbers<[1], [1], [0], [0], [0, 0, 1, 0], [], []>} : vector<32x8xbf16>, vector<32x8xbf16>, vector<32x32xf32> -> vector<32x32xf32>
    %cst_253 = arith.constant 0.353553385 : f32
    %602 = vector.broadcast %cst_253 : f32 to vector<32x32xf32>
    %603 = arith.mulf %601, %602 : vector<32x32xf32>
    %604 = arith.addf %603, %391 : vector<32x32xf32>
    %cst_254 = arith.constant dense<0xFF800000> : vector<32xf32>
    %605 = vector.multi_reduction <maximumf>, %604, %cst_254 [1] : vector<32x32xf32> to vector<32xf32>
    %606 = vector.shape_cast %605 : vector<32xf32> to vector<32x1xf32>
    %607 = vector.broadcast %606 : vector<32x1xf32> to vector<32x32xf32>
    %608 = arith.subf %604, %607 : vector<32x32xf32>
    %609 = math.exp %608 : vector<32x32xf32>
    %cst_255 = arith.constant dense<0.000000e+00> : vector<32xf32>
    %610 = vector.multi_reduction <add>, %609, %cst_255 [1] : vector<32x32xf32> to vector<32xf32>
    %611 = vector.shape_cast %610 : vector<32xf32> to vector<32x1xf32>
    %612 = tpu.reciprocal %611 {approx = true} : vector<32x1xf32> -> vector<32x1xf32>
    %613 = vector.broadcast %612 : vector<32x1xf32> to vector<32x32xf32>
    %614 = arith.mulf %609, %613 : vector<32x32xf32>
    %615 = arith.truncf %614 : vector<32x32xf32> to vector<32x32xbf16>
    %616 = vector.extract_strided_slice %541 {offsets = [0, 24], sizes = [32, 8], strides = [1, 1]} : vector<32x32xbf16> to vector<32x8xbf16>
    %cst_256 = arith.constant dense<0.000000e+00> : vector<32x8xf32>
    %617 = tpu.matmul %615, %616, %cst_256 {dimension_numbers = #tpu.dot_dimension_numbers<[1], [0], [0], [1], [0, 0, 1, 1], [], []>} : vector<32x32xbf16>, vector<32x8xbf16>, vector<32x8xf32> -> vector<32x8xf32>
    %618 = tpu.concatenate %560, %579, %598, %617 in 1 : vector<32x8xf32>, vector<32x8xf32>, vector<32x8xf32>, vector<32x8xf32> -> vector<32x32xf32>
    %619 = arith.truncf %618 : vector<32x32xf32> to vector<32x32xbf16>
    %cst_257 = arith.constant dense<0.000000e+00> : vector<32x32xf32>
    %620 = tpu.matmul %619, %536, %cst_257 {dimension_numbers = #tpu.dot_dimension_numbers<[1], [0], [0], [1], [0, 0, 1, 1], [], []>} : vector<32x32xbf16>, vector<32x32xbf16>, vector<32x32xf32> -> vector<32x32xf32>
    %621 = vector.broadcast %538 : vector<1x32xf32> to vector<32x32xf32>
    %622 = arith.addf %620, %621 : vector<32x32xf32>
    %623 = arith.addf %517, %622 : vector<32x32xf32>
    %c0_258 = arith.constant 0 : index
    %c0_259 = arith.constant 0 : index
    %c0_260 = arith.constant 0 : index
    %624 = vector.load %arg35[%c0_258, %c0_259, %c0_260] : memref<1x1x32xf32, #tpu.memory_space<vmem>>, vector<1x1x32xf32>
    %625 = vector.shape_cast %624 : vector<1x1x32xf32> to vector<1x32xf32>
    %c0_261 = arith.constant 0 : index
    %c0_262 = arith.constant 0 : index
    %c0_263 = arith.constant 0 : index
    %626 = vector.load %arg36[%c0_261, %c0_262, %c0_263] : memref<1x1x32xf32, #tpu.memory_space<vmem>>, vector<1x1x32xf32>
    %627 = vector.shape_cast %626 : vector<1x1x32xf32> to vector<1x32xf32>
    %cst_264 = arith.constant dense<0.000000e+00> : vector<32xf32>
    %628 = vector.multi_reduction <add>, %623, %cst_264 [1] : vector<32x32xf32> to vector<32xf32>
    %629 = vector.shape_cast %628 : vector<32xf32> to vector<32x1xf32>
    %cst_265 = arith.constant 3.200000e+01 : f32
    %630 = vector.broadcast %cst_265 : f32 to vector<32x1xf32>
    %631 = arith.divf %629, %630 : vector<32x1xf32>
    %632 = vector.broadcast %631 : vector<32x1xf32> to vector<32x32xf32>
    %633 = arith.subf %623, %632 : vector<32x32xf32>
    %634 = arith.mulf %633, %633 : vector<32x32xf32>
    %cst_266 = arith.constant dense<0.000000e+00> : vector<32xf32>
    %635 = vector.multi_reduction <add>, %634, %cst_266 [1] : vector<32x32xf32> to vector<32xf32>
    %636 = vector.shape_cast %635 : vector<32xf32> to vector<32x1xf32>
    %cst_267 = arith.constant 3.200000e+01 : f32
    %637 = vector.broadcast %cst_267 : f32 to vector<32x1xf32>
    %638 = arith.divf %636, %637 : vector<32x1xf32>
    %639 = vector.broadcast %631 : vector<32x1xf32> to vector<32x32xf32>
    %640 = arith.subf %623, %639 : vector<32x32xf32>
    %cst_268 = arith.constant 9.99999974E-6 : f32
    %641 = vector.broadcast %cst_268 : f32 to vector<32x1xf32>
    %642 = arith.addf %638, %641 : vector<32x1xf32>
    %643 = math.rsqrt %642 : vector<32x1xf32>
    %644 = vector.broadcast %643 : vector<32x1xf32> to vector<32x32xf32>
    %645 = arith.mulf %640, %644 : vector<32x32xf32>
    %646 = vector.broadcast %625 : vector<1x32xf32> to vector<32x32xf32>
    %647 = arith.mulf %645, %646 : vector<32x32xf32>
    %648 = vector.broadcast %627 : vector<1x32xf32> to vector<32x32xf32>
    %649 = arith.addf %647, %648 : vector<32x32xf32>
    %650 = arith.truncf %649 : vector<32x32xf32> to vector<32x32xbf16>
    %c0_269 = arith.constant 0 : index
    %c0_270 = arith.constant 0 : index
    %c0_271 = arith.constant 0 : index
    %651 = vector.load %arg37[%c0_269, %c0_270, %c0_271] : memref<1x32x32xbf16, #tpu.memory_space<vmem>>, vector<1x32x32xbf16>
    %652 = vector.shape_cast %651 : vector<1x32x32xbf16> to vector<32x32xbf16>
    %cst_272 = arith.constant dense<0.000000e+00> : vector<32x32xf32>
    %653 = tpu.matmul %650, %652, %cst_272 {dimension_numbers = #tpu.dot_dimension_numbers<[1], [0], [0], [1], [0, 0, 1, 1], [], []>} : vector<32x32xbf16>, vector<32x32xbf16>, vector<32x32xf32> -> vector<32x32xf32>
    %c0_273 = arith.constant 0 : index
    %c0_274 = arith.constant 0 : index
    %c0_275 = arith.constant 0 : index
    %654 = vector.load %arg38[%c0_273, %c0_274, %c0_275] : memref<1x1x32xf32, #tpu.memory_space<vmem>>, vector<1x1x32xf32>
    %655 = vector.shape_cast %654 : vector<1x1x32xf32> to vector<1x32xf32>
    %656 = vector.broadcast %655 : vector<1x32xf32> to vector<32x32xf32>
    %657 = arith.addf %653, %656 : vector<32x32xf32>
    %cst_276 = arith.constant 5.000000e-01 : f32
    %658 = vector.broadcast %cst_276 : f32 to vector<32x32xf32>
    %659 = arith.mulf %658, %657 : vector<32x32xf32>
    %cst_277 = arith.constant 0.707106769 : f32
    %660 = vector.broadcast %cst_277 : f32 to vector<32x32xf32>
    %661 = arith.mulf %657, %660 : vector<32x32xf32>
    %662 = math.erf %661 : vector<32x32xf32>
    %cst_278 = arith.constant 1.000000e+00 : f32
    %663 = vector.broadcast %cst_278 : f32 to vector<32x32xf32>
    %664 = arith.addf %663, %662 : vector<32x32xf32>
    %665 = arith.mulf %659, %664 : vector<32x32xf32>
    %666 = arith.truncf %665 : vector<32x32xf32> to vector<32x32xbf16>
    %c0_279 = arith.constant 0 : index
    %c0_280 = arith.constant 0 : index
    %c0_281 = arith.constant 0 : index
    %667 = vector.load %arg39[%c0_279, %c0_280, %c0_281] : memref<1x32x32xbf16, #tpu.memory_space<vmem>>, vector<1x32x32xbf16>
    %668 = vector.shape_cast %667 : vector<1x32x32xbf16> to vector<32x32xbf16>
    %cst_282 = arith.constant dense<0.000000e+00> : vector<32x32xf32>
    %669 = tpu.matmul %666, %668, %cst_282 {dimension_numbers = #tpu.dot_dimension_numbers<[1], [0], [0], [1], [0, 0, 1, 1], [], []>} : vector<32x32xbf16>, vector<32x32xbf16>, vector<32x32xf32> -> vector<32x32xf32>
    %c0_283 = arith.constant 0 : index
    %c0_284 = arith.constant 0 : index
    %c0_285 = arith.constant 0 : index
    %670 = vector.load %arg40[%c0_283, %c0_284, %c0_285] : memref<1x1x32xf32, #tpu.memory_space<vmem>>, vector<1x1x32xf32>
    %671 = vector.shape_cast %670 : vector<1x1x32xf32> to vector<1x32xf32>
    %672 = vector.broadcast %671 : vector<1x32xf32> to vector<32x32xf32>
    %673 = arith.addf %669, %672 : vector<32x32xf32>
    %674 = arith.addf %649, %673 : vector<32x32xf32>
    %c0_286 = arith.constant 0 : index
    %c0_287 = arith.constant 0 : index
    %c0_288 = arith.constant 0 : index
    %675 = vector.load %arg41[%c0_286, %c0_287, %c0_288] : memref<1x1x32xf32, #tpu.memory_space<vmem>>, vector<1x1x32xf32>
    %676 = vector.shape_cast %675 : vector<1x1x32xf32> to vector<1x32xf32>
    %c0_289 = arith.constant 0 : index
    %c0_290 = arith.constant 0 : index
    %c0_291 = arith.constant 0 : index
    %677 = vector.load %arg42[%c0_289, %c0_290, %c0_291] : memref<1x1x32xf32, #tpu.memory_space<vmem>>, vector<1x1x32xf32>
    %678 = vector.shape_cast %677 : vector<1x1x32xf32> to vector<1x32xf32>
    %cst_292 = arith.constant dense<0.000000e+00> : vector<32xf32>
    %679 = vector.multi_reduction <add>, %674, %cst_292 [1] : vector<32x32xf32> to vector<32xf32>
    %680 = vector.shape_cast %679 : vector<32xf32> to vector<32x1xf32>
    %cst_293 = arith.constant 3.200000e+01 : f32
    %681 = vector.broadcast %cst_293 : f32 to vector<32x1xf32>
    %682 = arith.divf %680, %681 : vector<32x1xf32>
    %683 = vector.broadcast %682 : vector<32x1xf32> to vector<32x32xf32>
    %684 = arith.subf %674, %683 : vector<32x32xf32>
    %685 = arith.mulf %684, %684 : vector<32x32xf32>
    %cst_294 = arith.constant dense<0.000000e+00> : vector<32xf32>
    %686 = vector.multi_reduction <add>, %685, %cst_294 [1] : vector<32x32xf32> to vector<32xf32>
    %687 = vector.shape_cast %686 : vector<32xf32> to vector<32x1xf32>
    %cst_295 = arith.constant 3.200000e+01 : f32
    %688 = vector.broadcast %cst_295 : f32 to vector<32x1xf32>
    %689 = arith.divf %687, %688 : vector<32x1xf32>
    %690 = vector.broadcast %682 : vector<32x1xf32> to vector<32x32xf32>
    %691 = arith.subf %674, %690 : vector<32x32xf32>
    %cst_296 = arith.constant 9.99999974E-6 : f32
    %692 = vector.broadcast %cst_296 : f32 to vector<32x1xf32>
    %693 = arith.addf %689, %692 : vector<32x1xf32>
    %694 = math.rsqrt %693 : vector<32x1xf32>
    %695 = vector.broadcast %694 : vector<32x1xf32> to vector<32x32xf32>
    %696 = arith.mulf %691, %695 : vector<32x32xf32>
    %697 = vector.broadcast %676 : vector<1x32xf32> to vector<32x32xf32>
    %698 = arith.mulf %696, %697 : vector<32x32xf32>
    %699 = vector.broadcast %678 : vector<1x32xf32> to vector<32x32xf32>
    %700 = arith.addf %698, %699 : vector<32x32xf32>
    %c0_297 = arith.constant 0 : index
    %c0_298 = arith.constant 0 : index
    %701 = vector.load %arg43[%c0_297, %c0_298] : memref<1x32xf32, #tpu.memory_space<vmem>>, vector<1x32xf32>
    %c0_299 = arith.constant 0 : index
    %c0_300 = arith.constant 0 : index
    %702 = vector.load %arg44[%c0_299, %c0_300] : memref<1x32xf32, #tpu.memory_space<vmem>>, vector<1x32xf32>
    %cst_301 = arith.constant dense<0.000000e+00> : vector<32xf32>
    %703 = vector.multi_reduction <add>, %700, %cst_301 [1] : vector<32x32xf32> to vector<32xf32>
    %704 = vector.shape_cast %703 : vector<32xf32> to vector<32x1xf32>
    %cst_302 = arith.constant 3.200000e+01 : f32
    %705 = vector.broadcast %cst_302 : f32 to vector<32x1xf32>
    %706 = arith.divf %704, %705 : vector<32x1xf32>
    %707 = vector.broadcast %706 : vector<32x1xf32> to vector<32x32xf32>
    %708 = arith.subf %700, %707 : vector<32x32xf32>
    %709 = arith.mulf %708, %708 : vector<32x32xf32>
    %cst_303 = arith.constant dense<0.000000e+00> : vector<32xf32>
    %710 = vector.multi_reduction <add>, %709, %cst_303 [1] : vector<32x32xf32> to vector<32xf32>
    %711 = vector.shape_cast %710 : vector<32xf32> to vector<32x1xf32>
    %cst_304 = arith.constant 3.200000e+01 : f32
    %712 = vector.broadcast %cst_304 : f32 to vector<32x1xf32>
    %713 = arith.divf %711, %712 : vector<32x1xf32>
    %714 = vector.broadcast %706 : vector<32x1xf32> to vector<32x32xf32>
    %715 = arith.subf %700, %714 : vector<32x32xf32>
    %cst_305 = arith.constant 9.99999974E-6 : f32
    %716 = vector.broadcast %cst_305 : f32 to vector<32x1xf32>
    %717 = arith.addf %713, %716 : vector<32x1xf32>
    %718 = math.rsqrt %717 : vector<32x1xf32>
    %719 = vector.broadcast %718 : vector<32x1xf32> to vector<32x32xf32>
    %720 = arith.mulf %715, %719 : vector<32x32xf32>
    %721 = vector.broadcast %701 : vector<1x32xf32> to vector<32x32xf32>
    %722 = arith.mulf %720, %721 : vector<32x32xf32>
    %723 = vector.broadcast %702 : vector<1x32xf32> to vector<32x32xf32>
    %724 = arith.addf %722, %723 : vector<32x32xf32>
    %725 = arith.truncf %724 : vector<32x32xf32> to vector<32x32xbf16>
    %c0_306 = arith.constant 0 : index
    %c0_307 = arith.constant 0 : index
    %726 = vector.load %arg45[%c0_306, %c0_307] : memref<32x128xbf16, #tpu.memory_space<vmem>>, vector<32x128xbf16>
    %cst_308 = arith.constant dense<0.000000e+00> : vector<32x128xf32>
    %727 = tpu.matmul %725, %726, %cst_308 {dimension_numbers = #tpu.dot_dimension_numbers<[1], [0], [0], [1], [0, 0, 1, 1], [], []>} : vector<32x32xbf16>, vector<32x128xbf16>, vector<32x128xf32> -> vector<32x128xf32>
    %c0_309 = arith.constant 0 : index
    %c0_310 = arith.constant 0 : index
    %728 = vector.load %arg46[%c0_309, %c0_310] : memref<1x128xf32, #tpu.memory_space<vmem>>, vector<1x128xf32>
    %729 = vector.broadcast %728 : vector<1x128xf32> to vector<32x128xf32>
    %730 = arith.addf %727, %729 : vector<32x128xf32>
    %c0_311 = arith.constant 0 : index
    %c0_312 = arith.constant 0 : index
    %731 = vector.load %arg47[%c0_311, %c0_312] : memref<32x128xf32, #tpu.memory_space<vmem>>, vector<32x128xf32>
    tpu.vector_store %arg47[%c0_311, %c0_312], %730 {strides = array<i32>} : memref<32x128xf32, #tpu.memory_space<vmem>>, vector<32x128xf32>,
    return
  }
}

</mosaic_0001>

<llo_original>
// kernel: _lambda_.1
$region0: #{_lambda_.1}
  #allocation0 [shape = 'u32[]', space=smem, size = 0x4, offset = 0x4, fixed_abs, tag = 'smem constant byte address 0x4 - core index']
  #allocation1 [shape = 'u32[144,128]{1,0:T(1,128)}', space=vmem, size = 0x12000, scoped, tag = 'internal scratch']
  %s0 = inlined_call_operand.smem [shape: u32[48], index: -1, kind: input, shape index: {}]
  %s1 = sld [smem:[%s0]]
  %s2 = scalar_lea.smem %s0, 1
  %s3 = sld [smem:[%s2]]
  %s4 = scalar_lea.smem %s0, 2
  %s5 = sld [smem:[%s4]]
  %s6 = scalar_lea.smem %s0, 3
  %s7 = sld [smem:[%s6]]
  %s8 = scalar_lea.smem %s0, 4
  %s9 = sld [smem:[%s8]]
  %s10 = scalar_lea.smem %s0, 5
  %s11 = sld [smem:[%s10]]
  %s12 = scalar_lea.smem %s0, 6
  %s13 = sld [smem:[%s12]]
  %s14 = scalar_lea.smem %s0, 7
  %s15 = sld [smem:[%s14]]
  %s16 = scalar_lea.smem %s0, 8
  %s17 = sld [smem:[%s16]]
  %s18 = scalar_lea.smem %s0, 9
  %s19 = sld [smem:[%s18]]
  %s20 = scalar_lea.smem %s0, 10
  %s21 = sld [smem:[%s20]]
  %s22 = scalar_lea.smem %s0, 11
  %s23 = sld [smem:[%s22]]
  %s24 = scalar_lea.smem %s0, 12
  %s25 = sld [smem:[%s24]]
  %s26 = scalar_lea.smem %s0, 13
  %s27 = sld [smem:[%s26]]
  %s28 = scalar_lea.smem %s0, 14
  %s29 = sld [smem:[%s28]]
  %s30 = scalar_lea.smem %s0, 15
  %s31 = sld [smem:[%s30]]
  %s32 = scalar_lea.smem %s0, 16
  %s33 = sld [smem:[%s32]]
  %s34 = scalar_lea.smem %s0, 17
  %s35 = sld [smem:[%s34]]
  %s36 = scalar_lea.smem %s0, 18
  %s37 = sld [smem:[%s36]]
  %s38 = scalar_lea.smem %s0, 19
  %s39 = sld [smem:[%s38]]
  %s40 = scalar_lea.smem %s0, 20
  %s41 = sld [smem:[%s40]]
  %s42 = scalar_lea.smem %s0, 21
  %s43 = sld [smem:[%s42]]
  %s44 = scalar_lea.smem %s0, 22
  %s45 = sld [smem:[%s44]]
  %s46 = scalar_lea.smem %s0, 23
  %s47 = sld [smem:[%s46]]
  %s48 = scalar_lea.smem %s0, 24
  %s49 = sld [smem:[%s48]]
  %s50 = scalar_lea.smem %s0, 25
  %s51 = sld [smem:[%s50]]
  %s52 = scalar_lea.smem %s0, 26
  %s53 = sld [smem:[%s52]]
  %s54 = scalar_lea.smem %s0, 27
  %s55 = sld [smem:[%s54]]
  %s56 = scalar_lea.smem %s0, 28
  %s57 = sld [smem:[%s56]]
  %s58 = scalar_lea.smem %s0, 29
  %s59 = sld [smem:[%s58]]
  %s60 = scalar_lea.smem %s0, 30
  %s61 = sld [smem:[%s60]]
  %s62 = scalar_lea.smem %s0, 31
  %s63 = sld [smem:[%s62]]
  %s64 = scalar_lea.smem %s0, 32
  %s65 = sld [smem:[%s64]]
  %s66 = scalar_lea.smem %s0, 33
  %s67 = sld [smem:[%s66]]
  %s68 = scalar_lea.smem %s0, 34
  %s69 = sld [smem:[%s68]]
  %s70 = scalar_lea.smem %s0, 35
  %s71 = sld [smem:[%s70]]
  %s72 = scalar_lea.smem %s0, 36
  %s73 = sld [smem:[%s72]]
  %s74 = scalar_lea.smem %s0, 37
  %s75 = sld [smem:[%s74]]
  %s76 = scalar_lea.smem %s0, 38
  %s77 = sld [smem:[%s76]]
  %s78 = scalar_lea.smem %s0, 39
  %s79 = sld [smem:[%s78]]
  %s80 = scalar_lea.smem %s0, 40
  %s81 = sld [smem:[%s80]]
  %s82 = scalar_lea.smem %s0, 41
  %s83 = sld [smem:[%s82]]
  %s84 = scalar_lea.smem %s0, 42
  %s85 = sld [smem:[%s84]]
  %s86 = scalar_lea.smem %s0, 43
  %s87 = sld [smem:[%s86]]
  %s88 = scalar_lea.smem %s0, 44
  %s89 = sld [smem:[%s88]]
  %s90 = scalar_lea.smem %s0, 45
  %s91 = sld [smem:[%s90]]
  %s92 = scalar_lea.smem %s0, 46
  %s93 = sld [smem:[%s92]]
  %s94 = scalar_lea.smem %s0, 47
  %s95 = sld [smem:[%s94]]
  %s96 = sld [smem:[#allocation0]]
  $region218: #{_lambda_.1} parent=0
    _
  %s98 = ssub.s32 1, %s96
  %s99 = scalar_select 0, %s98, %s96
  $region1: #{_lambda_.1} parent=0
    #allocation2 [shape = 'u8[512]{0}', space=vmem, size = 0x400, scoped, tag = 'input window, operand 41, single buffered']
    #allocation3 [shape = 's32[1]{0}', space=sflag, size = 0x4, scoped, tag = 'scoped memory for _lambda_.1']
    #allocation4 [shape = 'u8[512]{0}', space=vmem, size = 0x400, scoped, tag = 'input window, operand 42, single buffered']
    #allocation5 [shape = 's32[1]{0}', space=sflag, size = 0x4, scoped, tag = 'scoped memory for _lambda_.1']
    #allocation6 [shape = 'u8[512]{0}', space=vmem, size = 0x400, scoped, tag = 'input window, operand 43, single buffered']
    #allocation7 [shape = 'u8[512]{0}', space=vmem, size = 0x400, scoped, tag = 'input window, operand 44, single buffered']
    #allocation8 [shape = 's32[1]{0}', space=sflag, size = 0x4, scoped, tag = 'scoped memory for _lambda_.1']
    #allocation9 [shape = 'u8[512]{0}', space=vmem, size = 0x400, scoped, tag = 'input window, operand 46, single buffered']
    %100 = vsyncpa [#allocation3], 0
    %101 = vsyncpa [#allocation5], 0
    %102 = vsyncpa [#allocation8], 0
    // Predicated region
    $region2: #{_lambda_.1} parent=1 // pred_check
      _
    $region3: #{_lambda_.1} parent=1 // pred_check_branch
      %104 = sbr.rel (0) target = $region5
    $region4: #{_lambda_.1} parent=1 // pred_region
      _
    $region5: #{_lambda_.1} parent=1 // pred_fallthru
      _
    // Predicated region
    $region6: #{_lambda_.1} parent=1 // pred_check
      _
    $region7: #{_lambda_.1} parent=1 // pred_check_branch
      %106 = sbr.rel (0) target = $region9
    $region8: #{_lambda_.1} parent=1 // pred_region
      _
    $region9: #{_lambda_.1} parent=1 // pred_fallthru
      _
    // Predicated region
    $region10: #{_lambda_.1} parent=1 // pred_check
      _
    $region11: #{_lambda_.1} parent=1 // pred_check_branch
      %108 = sbr.rel (0) target = $region13
    $region12: #{_lambda_.1} parent=1 // pred_region
      _
    $region13: #{_lambda_.1} parent=1 // pred_fallthru
      _
    // Predicated region
    $region14: #{_lambda_.1} parent=1 // pred_check
      _
    $region15: #{_lambda_.1} parent=1 // pred_check_branch
      %110 = sbr.rel (0) target = $region17
    $region16: #{_lambda_.1} parent=1 // pred_region
      _
    $region17: #{_lambda_.1} parent=1 // pred_fallthru
      _
    // Predicated region
    $region18: #{_lambda_.1} parent=1 // pred_check
      _
    $region19: #{_lambda_.1} parent=1 // pred_check_branch
      %112 = sbr.rel (0) target = $region21
    $region20: #{_lambda_.1} parent=1 // pred_region
      _
    $region21: #{_lambda_.1} parent=1 // pred_fallthru
      _
    // Predicated region
    $region22: #{_lambda_.1} parent=1 // pred_check
      _
    $region23: #{_lambda_.1} parent=1 // pred_check_branch
      %114 = sbr.rel (0) target = $region25
    $region24: #{_lambda_.1} parent=1 // pred_region
      _
    $region25: #{_lambda_.1} parent=1 // pred_fallthru
      _
    // Predicated region
    $region26: #{_lambda_.1} parent=1 // pred_check
      _
    $region27: #{_lambda_.1} parent=1 // pred_check_branch
      %116 = sbr.rel (0) target = $region29
    $region28: #{_lambda_.1} parent=1 // pred_region
      _
    $region29: #{_lambda_.1} parent=1 // pred_fallthru
      _
    // Predicated region
    $region30: #{_lambda_.1} parent=1 // pred_check
      _
    $region31: #{_lambda_.1} parent=1 // pred_check_branch
      %118 = sbr.rel (0) target = $region33
    $region32: #{_lambda_.1} parent=1 // pred_region
      _
    $region33: #{_lambda_.1} parent=1 // pred_fallthru
      _
    // Predicated region
    $region34: #{_lambda_.1} parent=1 // pred_check
      _
    $region35: #{_lambda_.1} parent=1 // pred_check_branch
      %120 = sbr.rel (0) target = $region37
    $region36: #{_lambda_.1} parent=1 // pred_region
      _
    $region37: #{_lambda_.1} parent=1 // pred_fallthru
      _
    // Predicated region
    $region38: #{_lambda_.1} parent=1 // pred_check
      _
    $region39: #{_lambda_.1} parent=1 // pred_check_branch
      %122 = sbr.rel (0) target = $region41
    $region40: #{_lambda_.1} parent=1 // pred_region
      _
    $region41: #{_lambda_.1} parent=1 // pred_fallthru
      _
    // Predicated region
    $region42: #{_lambda_.1} parent=1 // pred_check
      _
    $region43: #{_lambda_.1} parent=1 // pred_check_branch
      %124 = sbr.rel (0) target = $region45
    $region44: #{_lambda_.1} parent=1 // pred_region
      _
    $region45: #{_lambda_.1} parent=1 // pred_fallthru
      _
    // Predicated region
    $region46: #{_lambda_.1} parent=1 // pred_check
      _
    $region47: #{_lambda_.1} parent=1 // pred_check_branch
      %126 = sbr.rel (0) target = $region49
    $region48: #{_lambda_.1} parent=1 // pred_region
      _
    $region49: #{_lambda_.1} parent=1 // pred_fallthru
      _
    // Predicated region
    $region50: #{_lambda_.1} parent=1 // pred_check
      _
    $region51: #{_lambda_.1} parent=1 // pred_check_branch
      %128 = sbr.rel (0) target = $region53
    $region52: #{_lambda_.1} parent=1 // pred_region
      _
    $region53: #{_lambda_.1} parent=1 // pred_fallthru
      _
    // Predicated region
    $region54: #{_lambda_.1} parent=1 // pred_check
      _
    $region55: #{_lambda_.1} parent=1 // pred_check_branch
      %130 = sbr.rel (0) target = $region57
    $region56: #{_lambda_.1} parent=1 // pred_region
      _
    $region57: #{_lambda_.1} parent=1 // pred_fallthru
      _
    // Predicated region
    $region58: #{_lambda_.1} parent=1 // pred_check
      _
    $region59: #{_lambda_.1} parent=1 // pred_check_branch
      %132 = sbr.rel (0) target = $region61
    $region60: #{_lambda_.1} parent=1 // pred_region
      _
    $region61: #{_lambda_.1} parent=1 // pred_fallthru
      _
    // Predicated region
    $region62: #{_lambda_.1} parent=1 // pred_check
      _
    $region63: #{_lambda_.1} parent=1 // pred_check_branch
      %134 = sbr.rel (0) target = $region65
    $region64: #{_lambda_.1} parent=1 // pred_region
      _
    $region65: #{_lambda_.1} parent=1 // pred_fallthru
      _
    // Predicated region
    $region66: #{_lambda_.1} parent=1 // pred_check
      _
    $region67: #{_lambda_.1} parent=1 // pred_check_branch
      %136 = sbr.rel (0) target = $region69
    $region68: #{_lambda_.1} parent=1 // pred_region
      _
    $region69: #{_lambda_.1} parent=1 // pred_fallthru
      _
    // Predicated region
    $region70: #{_lambda_.1} parent=1 // pred_check
      _
    $region71: #{_lambda_.1} parent=1 // pred_check_branch
      %138 = sbr.rel (0) target = $region73
    $region72: #{_lambda_.1} parent=1 // pred_region
      _
    $region73: #{_lambda_.1} parent=1 // pred_fallthru
      _
    // Predicated region
    $region74: #{_lambda_.1} parent=1 // pred_check
      _
    $region75: #{_lambda_.1} parent=1 // pred_check_branch
      %140 = sbr.rel (0) target = $region77
    $region76: #{_lambda_.1} parent=1 // pred_region
      _
    $region77: #{_lambda_.1} parent=1 // pred_fallthru
      _
    // Predicated region
    $region78: #{_lambda_.1} parent=1 // pred_check
      _
    $region79: #{_lambda_.1} parent=1 // pred_check_branch
      %142 = sbr.rel (0) target = $region81
    $region80: #{_lambda_.1} parent=1 // pred_region
      _
    $region81: #{_lambda_.1} parent=1 // pred_fallthru
      _
    // Predicated region
    $region82: #{_lambda_.1} parent=1 // pred_check
      _
    $region83: #{_lambda_.1} parent=1 // pred_check_branch
      %144 = sbr.rel (0) target = $region85
    $region84: #{_lambda_.1} parent=1 // pred_region
      _
    $region85: #{_lambda_.1} parent=1 // pred_fallthru
      _
    // Predicated region
    $region86: #{_lambda_.1} parent=1 // pred_check
      _
    $region87: #{_lambda_.1} parent=1 // pred_check_branch
      %146 = sbr.rel (0) target = $region89
    $region88: #{_lambda_.1} parent=1 // pred_region
      _
    $region89: #{_lambda_.1} parent=1 // pred_fallthru
      _
    // Predicated region
    $region90: #{_lambda_.1} parent=1 // pred_check
      _
    $region91: #{_lambda_.1} parent=1 // pred_check_branch
      %148 = sbr.rel (0) target = $region93
    $region92: #{_lambda_.1} parent=1 // pred_region
      _
    $region93: #{_lambda_.1} parent=1 // pred_fallthru
      _
    // Predicated region
    $region94: #{_lambda_.1} parent=1 // pred_check
      _
    $region95: #{_lambda_.1} parent=1 // pred_check_branch
      %150 = sbr.rel (0) target = $region97
    $region96: #{_lambda_.1} parent=1 // pred_region
      _
    $region97: #{_lambda_.1} parent=1 // pred_fallthru
      _
    // Predicated region
    $region98: #{_lambda_.1} parent=1 // pred_check
      _
    $region99: #{_lambda_.1} parent=1 // pred_check_branch
      %152 = sbr.rel (0) target = $region101
    $region100: #{_lambda_.1} parent=1 // pred_region
      _
    $region101: #{_lambda_.1} parent=1 // pred_fallthru
      _
    // Predicated region
    $region102: #{_lambda_.1} parent=1 // pred_check
      _
    $region103: #{_lambda_.1} parent=1 // pred_check_branch
      %154 = sbr.rel (0) target = $region105
    $region104: #{_lambda_.1} parent=1 // pred_region
      _
    $region105: #{_lambda_.1} parent=1 // pred_fallthru
      _
    // Predicated region
    $region106: #{_lambda_.1} parent=1 // pred_check
      _
    $region107: #{_lambda_.1} parent=1 // pred_check_branch
      %156 = sbr.rel (0) target = $region109
    $region108: #{_lambda_.1} parent=1 // pred_region
      _
    $region109: #{_lambda_.1} parent=1 // pred_fallthru
      _
    // Predicated region
    $region110: #{_lambda_.1} parent=1 // pred_check
      _
    $region111: #{_lambda_.1} parent=1 // pred_check_branch
      %158 = sbr.rel (0) target = $region113
    $region112: #{_lambda_.1} parent=1 // pred_region
      _
    $region113: #{_lambda_.1} parent=1 // pred_fallthru
      _
    // Predicated region
    $region114: #{_lambda_.1} parent=1 // pred_check
      _
    $region115: #{_lambda_.1} parent=1 // pred_check_branch
      %160 = sbr.rel (0) target = $region117
    $region116: #{_lambda_.1} parent=1 // pred_region
      _
    $region117: #{_lambda_.1} parent=1 // pred_fallthru
      _
    // Predicated region
    $region118: #{_lambda_.1} parent=1 // pred_check
      _
    $region119: #{_lambda_.1} parent=1 // pred_check_branch
      %162 = sbr.rel (0) target = $region121
    $region120: #{_lambda_.1} parent=1 // pred_region
      _
    $region121: #{_lambda_.1} parent=1 // pred_fallthru
      _
    // Predicated region
    $region122: #{_lambda_.1} parent=1 // pred_check
      _
    $region123: #{_lambda_.1} parent=1 // pred_check_branch
      %164 = sbr.rel (0) target = $region125
    $region124: #{_lambda_.1} parent=1 // pred_region
      _
    $region125: #{_lambda_.1} parent=1 // pred_fallthru
      _
    // Predicated region
    $region126: #{_lambda_.1} parent=1 // pred_check
      _
    $region127: #{_lambda_.1} parent=1 // pred_check_branch
      %166 = sbr.rel (0) target = $region129
    $region128: #{_lambda_.1} parent=1 // pred_region
      _
    $region129: #{_lambda_.1} parent=1 // pred_fallthru
      _
    // Predicated region
    $region130: #{_lambda_.1} parent=1 // pred_check
      _
    $region131: #{_lambda_.1} parent=1 // pred_check_branch
      %168 = sbr.rel (0) target = $region133
    $region132: #{_lambda_.1} parent=1 // pred_region
      _
    $region133: #{_lambda_.1} parent=1 // pred_fallthru
      _
    // Predicated region
    $region134: #{_lambda_.1} parent=1 // pred_check
      _
    $region135: #{_lambda_.1} parent=1 // pred_check_branch
      %170 = sbr.rel (0) target = $region137
    $region136: #{_lambda_.1} parent=1 // pred_region
      _
    $region137: #{_lambda_.1} parent=1 // pred_fallthru
      _
    // Predicated region
    $region138: #{_lambda_.1} parent=1 // pred_check
      _
    $region139: #{_lambda_.1} parent=1 // pred_check_branch
      %172 = sbr.rel (0) target = $region141
    $region140: #{_lambda_.1} parent=1 // pred_region
      _
    $region141: #{_lambda_.1} parent=1 // pred_fallthru
      _
    // Predicated region
    $region142: #{_lambda_.1} parent=1 // pred_check
      _
    $region143: #{_lambda_.1} parent=1 // pred_check_branch
      %174 = sbr.rel (0) target = $region145
    $region144: #{_lambda_.1} parent=1 // pred_region
      _
    $region145: #{_lambda_.1} parent=1 // pred_fallthru
      _
    // Predicated region
    $region146: #{_lambda_.1} parent=1 // pred_check
      _
    $region147: #{_lambda_.1} parent=1 // pred_check_branch
      %176 = sbr.rel (0) target = $region149
    $region148: #{_lambda_.1} parent=1 // pred_region
      _
    $region149: #{_lambda_.1} parent=1 // pred_fallthru
      _
    // Predicated region
    $region150: #{_lambda_.1} parent=1 // pred_check
      _
    $region151: #{_lambda_.1} parent=1 // pred_check_branch
      %178 = sbr.rel (0) target = $region153
    $region152: #{_lambda_.1} parent=1 // pred_region
      _
    $region153: #{_lambda_.1} parent=1 // pred_fallthru
      _
    // Predicated region
    $region154: #{_lambda_.1} parent=1 // pred_check
      _
    $region155: #{_lambda_.1} parent=1 // pred_check_branch
      %180 = sbr.rel (0) target = $region157
    $region156: #{_lambda_.1} parent=1 // pred_region
      _
    $region157: #{_lambda_.1} parent=1 // pred_fallthru
      _
    // Predicated region
    $region158: #{_lambda_.1} parent=1 // pred_check
      _
    $region159: #{_lambda_.1} parent=1 // pred_check_branch
      %182 = sbr.rel (0) target = $region161
    $region160: #{_lambda_.1} parent=1 // pred_region
      _
    $region161: #{_lambda_.1} parent=1 // pred_fallthru
      _
    // Predicated region
    $region162: #{_lambda_.1} parent=1 // pred_check
      _
    $region163: #{_lambda_.1} parent=1 // pred_check_branch
      %184 = sbr.rel (0) target = $region165
    $region164: #{_lambda_.1} parent=1 // pred_region
      _
    $region165: #{_lambda_.1} parent=1 // pred_fallthru
      _
    // Predicated region
    $region166: #{_lambda_.1} parent=1 // pred_check
      _
    $region167: #{_lambda_.1} parent=1 // pred_check_branch
      %186 = sbr.rel (0) target = $region169
    $region168: #{_lambda_.1} parent=1 // pred_region
      %s188 = ssub.s32 16, 16
      %189 = vsyncadd [#allocation3], %s188
      %s191 = sshll.u32 [#allocation2], 4
      %s192 = int_to_ptr.vmem [resolvable:$true] %s191
      %194 = dma.hbm_to_vmem [thread:$0]  %s83, 16, %s192, [#allocation3]
    $region169: #{_lambda_.1} parent=1 // pred_fallthru
      _
    // Predicated region
    $region170: #{_lambda_.1} parent=1 // pred_check
      _
    $region171: #{_lambda_.1} parent=1 // pred_check_branch
      %196 = sbr.rel (0) target = $region173
    $region172: #{_lambda_.1} parent=1 // pred_region
      %s198 = ssub.s32 16, 16
      %199 = vsyncadd [#allocation5], %s198
      %s201 = sshll.u32 [#allocation4], 4
      %s202 = int_to_ptr.vmem [resolvable:$true] %s201
      %204 = dma.hbm_to_vmem [thread:$0]  %s85, 16, %s202, [#allocation5]
    $region173: #{_lambda_.1} parent=1 // pred_fallthru
      _
    // Predicated region
    $region174: #{_lambda_.1} parent=1 // pred_check
      _
    $region175: #{_lambda_.1} parent=1 // pred_check_branch
      %206 = sbr.rel (0) target = $region177
    $region176: #{_lambda_.1} parent=1 // pred_region
      %s208 = ssub.s32 16, 16
      %209 = vsyncadd [#allocation5], %s208
      %s211 = sshll.u32 [#allocation6], 4
      %s212 = int_to_ptr.vmem [resolvable:$true] %s211
      %214 = dma.hbm_to_vmem [thread:$0]  %s87, 16, %s212, [#allocation5]
    $region177: #{_lambda_.1} parent=1 // pred_fallthru
      _
    // Predicated region
    $region178: #{_lambda_.1} parent=1 // pred_check
      _
    $region179: #{_lambda_.1} parent=1 // pred_check_branch
      %216 = sbr.rel (0) target = $region181
    $region180: #{_lambda_.1} parent=1 // pred_region
      %s218 = ssub.s32 16, 16
      %219 = vsyncadd [#allocation8], %s218
      %s221 = sshll.u32 [#allocation7], 4
      %s222 = int_to_ptr.vmem [resolvable:$true] %s221
      %224 = dma.hbm_to_vmem [thread:$0]  %s89, 16, %s222, [#allocation8]
    $region181: #{_lambda_.1} parent=1 // pred_fallthru
      _
    // Predicated region
    $region182: #{_lambda_.1} parent=1 // pred_check
      _
    $region183: #{_lambda_.1} parent=1 // pred_check_branch
      %226 = sbr.rel (0) target = $region185
    $region184: #{_lambda_.1} parent=1 // pred_region
      _
    $region185: #{_lambda_.1} parent=1 // pred_fallthru
      _
    // Predicated region
    $region186: #{_lambda_.1} parent=1 // pred_check
      _
    $region187: #{_lambda_.1} parent=1 // pred_check_branch
      %228 = sbr.rel (0) target = $region189
    $region188: #{_lambda_.1} parent=1 // pred_region
      %s230 = ssub.s32 16, 16
      %231 = vsyncadd [#allocation8], %s230
      %s233 = sshll.u32 [#allocation9], 4
      %s234 = int_to_ptr.vmem [resolvable:$true] %s233
      %236 = dma.hbm_to_vmem [thread:$0]  %s93, 16, %s234, [#allocation8]
    $region189: #{_lambda_.1} parent=1 // pred_fallthru
      _
    // Predicated region
    $region190: #{_lambda_.1} parent=1 // pred_check
      _
    $region191: #{_lambda_.1} parent=1 // pred_check_branch
      %238 = sbr.rel (0) target = $region193
    $region192: #{_lambda_.1} parent=1 // pred_region
      %239 = dma.done [#allocation3], 16
    $region193: #{_lambda_.1} parent=1 // pred_fallthru
      _
    // Predicated region
    $region194: #{_lambda_.1} parent=1 // pred_check
      _
    $region195: #{_lambda_.1} parent=1 // pred_check_branch
      %241 = sbr.rel (0) target = $region197
    $region196: #{_lambda_.1} parent=1 // pred_region
      %242 = dma.done [#allocation5], 16
    $region197: #{_lambda_.1} parent=1 // pred_fallthru
      _
    // Predicated region
    $region198: #{_lambda_.1} parent=1 // pred_check
      _
    $region199: #{_lambda_.1} parent=1 // pred_check_branch
      %244 = sbr.rel (0) target = $region201
    $region200: #{_lambda_.1} parent=1 // pred_region
      %245 = dma.done [#allocation5], 16
    $region201: #{_lambda_.1} parent=1 // pred_fallthru
      _
    // Predicated region
    $region202: #{_lambda_.1} parent=1 // pred_check
      _
    $region203: #{_lambda_.1} parent=1 // pred_check_branch
      %247 = sbr.rel (0) target = $region205
    $region204: #{_lambda_.1} parent=1 // pred_region
      %248 = dma.done [#allocation8], 16
    $region205: #{_lambda_.1} parent=1 // pred_fallthru
      _
    // Predicated region
    $region206: #{_lambda_.1} parent=1 // pred_check
      _
    $region207: #{_lambda_.1} parent=1 // pred_check_branch
      %250 = sbr.rel (0) target = $region209
    $region208: #{_lambda_.1} parent=1 // pred_region
      %251 = dma.done [#allocation8], 16
    $region209: #{_lambda_.1} parent=1 // pred_fallthru
      _
    %v253 = vld [vmem:[%s1] sm:$0xf]
    %v254 = vld [vmem:[%s1 + $0x4] sm:$0xf]
    %v255 = vld [vmem:[%s1 + $0x8] sm:$0xf]
    %v256 = vld [vmem:[%s1 + $0xc] sm:$0xf]
    %v257 = vld [vmem:[%s5] sm:$0xf]
    %v258 = vld [vmem:[%s5 + $0x4] sm:$0x3]
    %v259 = vld [vmem:[%s3] sm:$0xff]
    %v260 = vld [vmem:[%s3 + $0x8] sm:$0xff]
    %v261 = vld [vmem:[%s3 + $0x10] sm:$0xff]
    %v262 = vld [vmem:[%s3 + $0x18] sm:$0xff]
    %v267 = vunpack.c.l.b16 %v253
    %v268 = vunpack.c.l.b16 %v254
    %v269 = vunpack.c.l.b16 %v255
    %v270 = vunpack.c.l.b16 %v256
    %v271 = vpack.c.b16 %v268, %v267
    %v272 = vpack.c.b16 %v270, %v269
    %v275 = vunpack.c.l.b16 %v257
    %v276 = vunpack.c.l.b16 %v258
    %v277 = vpack.c.b16 %v276, %v275
    %vm278 = vcmask 97280
    %v280 = vsel %vm278, %v271, 0
    %v283 = vsel %vm278, %v272, 0
    %vm285 = vcmask 1045504
    %v287 = vsel %vm285, %v277, 0
    %289 = vmatprep.subr.bf16.mxu0 0
    %290 = vmatpush1.bf16.msra.mxu0 %v287
    %291 = vmatprep.subr.bf16.mxu0 0
    %292 = vmatpush1.bf16.msra.mxu0 0
    %293 = vmatprep.subr.bf16.mxu0 0
    %294 = vmatpush1.bf16.msra.mxu0 0
    %295 = vmatprep.subr.bf16.mxu0 0
    %296 = vmatpush1.bf16.msra.mxu0 0
    %297 = vmatprep.subr.bf16.mxu0 0
    %298 = vmatpush1.bf16.msra.mxu0 0
    %299 = vmatprep.subr.bf16.mxu0 0
    %300 = vmatpush1.bf16.msra.mxu0 0
    %301 = vmatprep.subr.bf16.mxu0 0
    %302 = vmatpush1.bf16.msra.mxu0 0
    %303 = vmatprep.subr.bf16.mxu0 0
    %304 = vmatpush1.bf16.msra.mxu0 0
    %305 = vmatprep.subr.bf16.mxu0 0
    %306 = vmatpush1.bf16.msra.mxu0 0
    %307 = vmatprep.subr.bf16.mxu0 0
    %308 = vmatpush1.bf16.msra.mxu0 0
    %309 = vmatprep.subr.bf16.mxu0 0
    %310 = vmatpush1.bf16.msra.mxu0 0
    %311 = vmatprep.subr.bf16.mxu0 0
    %312 = vmatpush1.bf16.msra.mxu0 0
    %313 = vmatprep.subr.bf16.mxu0 0
    %314 = vmatpush1.bf16.msra.mxu0 0
    %315 = vmatprep.subr.bf16.mxu0 0
    %316 = vmatpush1.bf16.msra.mxu0 0
    %317 = vmatprep.subr.bf16.mxu0 0
    %318 = vmatpush1.bf16.msra.mxu0 0
    %319 = vmatprep.subr.bf16.mxu0 0
    %320 = vmatpush1.bf16.msra.mxu0 0
    %321 = vmatprep.mubr.bf16.mxu0 0
    %322 = vmatmul.mubr.bf16.gmra.mrb[0].mxu0 %v280
    %v323 = vpop.f32.mrb[0].mxu0
    %v324 = vadd.f32 %v259, %v323
    %v325 = vpop.f32.mrb[0].mxu0
    %v326 = vpop.f32.mrb[0].mxu0
    %v327 = vadd.f32 %v260, %v326
    %v328 = vpop.f32.mrb[0].mxu0
    %329 = vmatprep.mubr.bf16.mxu0 0
    %330 = vmatmul.mubr.bf16.gmra.mrb[0].mxu0 %v283
    %v331 = vpop.f32.mrb[0].mxu0
    %v332 = vadd.f32 %v261, %v331
    %v333 = vpop.f32.mrb[0].mxu0
    %v334 = vpop.f32.mrb[0].mxu0
    %v335 = vadd.f32 %v262, %v334
    %v336 = vpop.f32.mrb[0].mxu0
    %337 = vdwg.mxu0
    %v338 = vld [vmem:[%s13] sm:$0xff]
    %v339 = vld [vmem:[%s13 + $0x8] sm:$0xff]
    %v340 = vld [vmem:[%s13 + $0x10] sm:$0xff]
    %v341 = vld [vmem:[%s13 + $0x18] sm:$0xff]
    %v342 = vpack.c.bf16 %v327, %v324
    %v343 = vpack.c.bf16 %v335, %v332
    %v344 = vld [vmem:[%s19] sm:$0xf]
    %v345 = vld [vmem:[%s19 + $0x4] sm:$0xf]
    %v346 = vld [vmem:[%s19 + $0x8] sm:$0xf]
    %v347 = vld [vmem:[%s19 + $0xc] sm:$0xf]
    %v348 = vld [vmem:[%s21] sm:$0x1]
    %v350 = vlaneseq
    %v351 = vshrl.u32 %v350, 7
    %v352 = vsub.s32 0, %v351
    %v353 = vrot.slane %v348, %v352
    %v359 = vunpack.c.l.b16 %v344
    %v360 = vunpack.c.l.b16 %v345
    %v361 = vunpack.c.l.b16 %v346
    %v362 = vunpack.c.l.b16 %v347
    %v363 = vpack.c.b16 %v360, %v359
    %v364 = vpack.c.b16 %v362, %v361
    %vm367 = vcmask 261120
    %v369 = vsel %vm367, %v342, 0
    %v372 = vsel %vm367, %v343, 0
    %374 = vmatprep.subr.bf16.mxu0 0
    %375 = vmatpush1.bf16.msra.mxu0 %v363
    %376 = vmatprep.subr.bf16.mxu0 0
    %377 = vmatpush1.bf16.msra.mxu0 %v364
    %378 = vmatprep.subr.bf16.mxu0 0
    %379 = vmatpush1.bf16.msra.mxu0 0
    %380 = vmatprep.subr.bf16.mxu0 0
    %381 = vmatpush1.bf16.msra.mxu0 0
    %382 = vmatprep.subr.bf16.mxu0 0
    %383 = vmatpush1.bf16.msra.mxu0 0
    %384 = vmatprep.subr.bf16.mxu0 0
    %385 = vmatpush1.bf16.msra.mxu0 0
    %386 = vmatprep.subr.bf16.mxu0 0
    %387 = vmatpush1.bf16.msra.mxu0 0
    %388 = vmatprep.subr.bf16.mxu0 0
    %389 = vmatpush1.bf16.msra.mxu0 0
    %390 = vmatprep.subr.bf16.mxu0 0
    %391 = vmatpush1.bf16.msra.mxu0 0
    %392 = vmatprep.subr.bf16.mxu0 0
    %393 = vmatpush1.bf16.msra.mxu0 0
    %394 = vmatprep.subr.bf16.mxu0 0
    %395 = vmatpush1.bf16.msra.mxu0 0
    %396 = vmatprep.subr.bf16.mxu0 0
    %397 = vmatpush1.bf16.msra.mxu0 0
    %398 = vmatprep.subr.bf16.mxu0 0
    %399 = vmatpush1.bf16.msra.mxu0 0
    %400 = vmatprep.subr.bf16.mxu0 0
    %401 = vmatpush1.bf16.msra.mxu0 0
    %402 = vmatprep.subr.bf16.mxu0 0
    %403 = vmatpush1.bf16.msra.mxu0 0
    %404 = vmatprep.subr.bf16.mxu0 0
    %405 = vmatpush1.bf16.msra.mxu0 0
    %406 = vmatprep.mubr.bf16.mxu0 0
    %407 = vmatmul.mubr.bf16.gmra.mrb[0].mxu0 %v369
    %v408 = vpop.f32.mrb[0].mxu0
    %v409 = vadd.f32 %v353, %v408
    %v410 = vpop.f32.mrb[0].mxu0
    %v411 = vpop.f32.mrb[0].mxu0
    %v412 = vadd.f32 %v353, %v411
    %v413 = vpop.f32.mrb[0].mxu0
    %414 = vmatprep.mubr.bf16.mxu0 0
    %415 = vmatmul.mubr.bf16.gmra.mrb[0].mxu0 %v372
    %v416 = vpop.f32.mrb[0].mxu0
    %v417 = vadd.f32 %v353, %v416
    %v418 = vpop.f32.mrb[0].mxu0
    %v419 = vpop.f32.mrb[0].mxu0
    %v420 = vadd.f32 %v353, %v419
    %v421 = vpop.f32.mrb[0].mxu0
    %422 = vdwg.mxu0
    %v423 = vld [vmem:[%s23] sm:$0xf]
    %v424 = vld [vmem:[%s23 + $0x4] sm:$0xf]
    %v425 = vld [vmem:[%s23 + $0x8] sm:$0xf]
    %v426 = vld [vmem:[%s23 + $0xc] sm:$0xf]
    %v427 = vld [vmem:[%s25] sm:$0x1]
    %v428 = vpack.c.bf16 %v412, %v409
    %v429 = vpack.c.bf16 %v420, %v417
    %432 = vrot.lane.b32.xlu0 %v428, 96
    %v433 = vpop.permute.xlu0 %432
    %434 = vrot.lane.b32.xlu0 %v429, 96
    %v435 = vpop.permute.xlu0 %434
    %vm436 = vcmask 64512
    %v438 = vsel %vm436, %v428, 0
    %v441 = vsel %vm436, %v429, 0
    %v444 = vsel %vm436, %v433, 0
    %v447 = vsel %vm436, %v435, 0
    %449 = vmatprep.subr.bf16.mxu0 0
    %450 = vmatpush1.bf16.xpose.msra.mxu0 %v444
    %451 = vmatprep.subr.bf16.mxu0 0
    %452 = vmatpush1.bf16.xpose.msra.mxu0 %v447
    %453 = vmatprep.subr.bf16.mxu0 0
    %454 = vmatpush1.bf16.xpose.msra.mxu0 0
    %455 = vmatprep.subr.bf16.mxu0 0
    %456 = vmatpush1.bf16.xpose.msra.mxu0 0
    %457 = vmatprep.subr.bf16.mxu0 0
    %458 = vmatpush1.bf16.xpose.msra.mxu0 0
    %459 = vmatprep.subr.bf16.mxu0 0
    %460 = vmatpush1.bf16.xpose.msra.mxu0 0
    %461 = vmatprep.subr.bf16.mxu0 0
    %462 = vmatpush1.bf16.xpose.msra.mxu0 0
    %463 = vmatprep.subr.bf16.mxu0 0
    %464 = vmatpush1.bf16.xpose.msra.mxu0 0
    %465 = vmatprep.subr.bf16.mxu0 0
    %466 = vmatpush1.bf16.xpose.msra.mxu0 0
    %467 = vmatprep.subr.bf16.mxu0 0
    %468 = vmatpush1.bf16.xpose.msra.mxu0 0
    %469 = vmatprep.subr.bf16.mxu0 0
    %470 = vmatpush1.bf16.xpose.msra.mxu0 0
    %471 = vmatprep.subr.bf16.mxu0 0
    %472 = vmatpush1.bf16.xpose.msra.mxu0 0
    %473 = vmatprep.subr.bf16.mxu0 0
    %474 = vmatpush1.bf16.xpose.msra.mxu0 0
    %475 = vmatprep.subr.bf16.mxu0 0
    %476 = vmatpush1.bf16.xpose.msra.mxu0 0
    %477 = vmatprep.subr.bf16.mxu0 0
    %478 = vmatpush1.bf16.xpose.msra.mxu0 0
    %479 = vmatprep.subr.bf16.mxu0 0
    %480 = vmatpush1.bf16.xpose.msra.mxu0 0
    %481 = vmatprep.mubr.bf16.mxu0 0
    %482 = vmatmul.mubr.bf16.gmra.mrb[0].mxu0 %v438
    %v483 = vpop.f32.mrb[0].mxu0
    %v484 = vadd.f32 0.0, %v483
    %v485 = vpop.f32.mrb[0].mxu0
    %v486 = vpop.f32.mrb[0].mxu0
    %v487 = vadd.f32 0.0, %v486
    %v488 = vpop.f32.mrb[0].mxu0
    %489 = vmatprep.mubr.bf16.mxu0 0
    %490 = vmatmul.mubr.bf16.gmra.mrb[0].mxu0 %v441
    %v491 = vpop.f32.mrb[0].mxu0
    %v492 = vadd.f32 0.0, %v491
    %v493 = vpop.f32.mrb[0].mxu0
    %v494 = vpop.f32.mrb[0].mxu0
    %v495 = vadd.f32 0.0, %v494
    %v496 = vpop.f32.mrb[0].mxu0
    %497 = vdwg.mxu0
    %v498 = vmul.f32 %v484, 0.35355338
    %v499 = vmul.f32 %v487, 0.35355338
    %v500 = vmul.f32 %v492, 0.35355338
    %v501 = vmul.f32 %v495, 0.35355338
    %v502 = vadd.f32 %v498, %v338
    %v503 = vadd.f32 %v499, %v339
    %v504 = vadd.f32 %v500, %v340
    %v505 = vadd.f32 %v501, %v341
    %v506 = vsel %vm367, %v502, -inf
    %507 = vmax.xlane.f32.xlu0 %v506
    %v508 = vpop.xlane.xlu0 %507
    %v509 = vsel %vm367, %v503, -inf
    %510 = vmax.xlane.f32.xlu0 %v509
    %v511 = vpop.xlane.xlu0 %510
    %v512 = vsel %vm367, %v504, -inf
    %513 = vmax.xlane.f32.xlu0 %v512
    %v514 = vpop.xlane.xlu0 %513
    %v515 = vsel %vm367, %v505, -inf
    %516 = vmax.xlane.f32.xlu0 %v515
    %v517 = vpop.xlane.xlu0 %516
    %v518 = vsub.f32 %v502, %v508
    %v519 = vsub.f32 %v503, %v511
    %v520 = vsub.f32 %v504, %v514
    %v521 = vsub.f32 %v505, %v517
    %v522 = vmul.f32 %v518, 1.442695
    %v523 = vpow.pop %v522
    %v524 = vmul.f32 %v519, 1.442695
    %v525 = vpow.pop %v524
    %v526 = vmul.f32 %v520, 1.442695
    %v527 = vpow.pop %v526
    %v528 = vmul.f32 %v521, 1.442695
    %v529 = vpow.pop %v528
    %v530 = vsel %vm367, %v523, 0.0
    %531 = vadd.xlane.f32.xlu0 %v530
    %v532 = vpop.xlane.xlu0 %531
    %v533 = vsel %vm367, %v525, 0.0
    %534 = vadd.xlane.f32.xlu0 %v533
    %v535 = vpop.xlane.xlu0 %534
    %v536 = vsel %vm367, %v527, 0.0
    %537 = vadd.xlane.f32.xlu0 %v536
    %v538 = vpop.xlane.xlu0 %537
    %v539 = vsel %vm367, %v529, 0.0
    %540 = vadd.xlane.f32.xlu0 %v539
    %v541 = vpop.xlane.xlu0 %540
    %v542 = vrcp.pop %v532
    %v543 = vrcp.pop %v535
    %v544 = vrcp.pop %v538
    %v545 = vrcp.pop %v541
    %v546 = vmul.f32 %v523, %v542
    %v547 = vmul.f32 %v525, %v543
    %v548 = vmul.f32 %v527, %v544
    %v549 = vmul.f32 %v529, %v545
    %v550 = vpack.c.bf16 %v547, %v546
    %v551 = vpack.c.bf16 %v549, %v548
    %552 = vrot.lane.b32.xlu0 %v428, 64
    %v553 = vpop.permute.xlu0 %552
    %554 = vrot.lane.b32.xlu0 %v429, 64
    %v555 = vpop.permute.xlu0 %554
    %v559 = vsel %vm367, %v550, 0
    %v562 = vsel %vm367, %v551, 0
    %564 = vmatprep.subr.bf16.mxu0 0
    %565 = vmatpush1.bf16.msra.mxu0 %v553
    %566 = vmatprep.subr.bf16.mxu0 0
    %567 = vmatpush1.bf16.msra.mxu0 %v555
    %568 = vmatprep.subr.bf16.mxu0 0
    %569 = vmatpush1.bf16.msra.mxu0 0
    %570 = vmatprep.subr.bf16.mxu0 0
    %571 = vmatpush1.bf16.msra.mxu0 0
    %572 = vmatprep.subr.bf16.mxu0 0
    %573 = vmatpush1.bf16.msra.mxu0 0
    %574 = vmatprep.subr.bf16.mxu0 0
    %575 = vmatpush1.bf16.msra.mxu0 0
    %576 = vmatprep.subr.bf16.mxu0 0
    %577 = vmatpush1.bf16.msra.mxu0 0
    %578 = vmatprep.subr.bf16.mxu0 0
    %579 = vmatpush1.bf16.msra.mxu0 0
    %580 = vmatprep.subr.bf16.mxu0 0
    %581 = vmatpush1.bf16.msra.mxu0 0
    %582 = vmatprep.subr.bf16.mxu0 0
    %583 = vmatpush1.bf16.msra.mxu0 0
    %584 = vmatprep.subr.bf16.mxu0 0
    %585 = vmatpush1.bf16.msra.mxu0 0
    %586 = vmatprep.subr.bf16.mxu0 0
    %587 = vmatpush1.bf16.msra.mxu0 0
    %588 = vmatprep.subr.bf16.mxu0 0
    %589 = vmatpush1.bf16.msra.mxu0 0
    %590 = vmatprep.subr.bf16.mxu0 0
    %591 = vmatpush1.bf16.msra.mxu0 0
    %592 = vmatprep.subr.bf16.mxu0 0
    %593 = vmatpush1.bf16.msra.mxu0 0
    %594 = vmatprep.subr.bf16.mxu0 0
    %595 = vmatpush1.bf16.msra.mxu0 0
    %596 = vmatprep.mubr.bf16.mxu0 0
    %597 = vmatmul.mubr.bf16.gmra.mrb[0].mxu0 %v559
    %v598 = vpop.f32.mrb[0].mxu0
    %v599 = vadd.f32 0.0, %v598
    %v600 = vpop.f32.mrb[0].mxu0
    %v601 = vpop.f32.mrb[0].mxu0
    %v602 = vadd.f32 0.0, %v601
    %v603 = vpop.f32.mrb[0].mxu0
    %604 = vmatprep.mubr.bf16.mxu0 0
    %605 = vmatmul.mubr.bf16.gmra.mrb[0].mxu0 %v562
    %v606 = vpop.f32.mrb[0].mxu0
    %v607 = vadd.f32 0.0, %v606
    %v608 = vpop.f32.mrb[0].mxu0
    %v609 = vpop.f32.mrb[0].mxu0
    %v610 = vadd.f32 0.0, %v609
    %v611 = vpop.f32.mrb[0].mxu0
    %612 = vdwg.mxu0
    %613 = vrot.lane.b32.xlu0 %v428, 120
    %v614 = vpop.permute.xlu0 %613
    %615 = vrot.lane.b32.xlu0 %v429, 120
    %v616 = vpop.permute.xlu0 %615
    %617 = vrot.lane.b32.xlu0 %v428, 88
    %v618 = vpop.permute.xlu0 %617
    %619 = vrot.lane.b32.xlu0 %v429, 88
    %v620 = vpop.permute.xlu0 %619
    %v622 = vsel %vm436, %v614, 0
    %v625 = vsel %vm436, %v616, 0
    %v628 = vsel %vm436, %v618, 0
    %v631 = vsel %vm436, %v620, 0
    %633 = vmatprep.subr.bf16.mxu0 0
    %634 = vmatpush1.bf16.xpose.msra.mxu0 %v628
    %635 = vmatprep.subr.bf16.mxu0 0
    %636 = vmatpush1.bf16.xpose.msra.mxu0 %v631
    %637 = vmatprep.subr.bf16.mxu0 0
    %638 = vmatpush1.bf16.xpose.msra.mxu0 0
    %639 = vmatprep.subr.bf16.mxu0 0
    %640 = vmatpush1.bf16.xpose.msra.mxu0 0
    %641 = vmatprep.subr.bf16.mxu0 0
    %642 = vmatpush1.bf16.xpose.msra.mxu0 0
    %643 = vmatprep.subr.bf16.mxu0 0
    %644 = vmatpush1.bf16.xpose.msra.mxu0 0
    %645 = vmatprep.subr.bf16.mxu0 0
    %646 = vmatpush1.bf16.xpose.msra.mxu0 0
    %647 = vmatprep.subr.bf16.mxu0 0
    %648 = vmatpush1.bf16.xpose.msra.mxu0 0
    %649 = vmatprep.subr.bf16.mxu0 0
    %650 = vmatpush1.bf16.xpose.msra.mxu0 0
    %651 = vmatprep.subr.bf16.mxu0 0
    %652 = vmatpush1.bf16.xpose.msra.mxu0 0
    %653 = vmatprep.subr.bf16.mxu0 0
    %654 = vmatpush1.bf16.xpose.msra.mxu0 0
    %655 = vmatprep.subr.bf16.mxu0 0
    %656 = vmatpush1.bf16.xpose.msra.mxu0 0
    %657 = vmatprep.subr.bf16.mxu0 0
    %658 = vmatpush1.bf16.xpose.msra.mxu0 0
    %659 = vmatprep.subr.bf16.mxu0 0
    %660 = vmatpush1.bf16.xpose.msra.mxu0 0
    %661 = vmatprep.subr.bf16.mxu0 0
    %662 = vmatpush1.bf16.xpose.msra.mxu0 0
    %663 = vmatprep.subr.bf16.mxu0 0
    %664 = vmatpush1.bf16.xpose.msra.mxu0 0
    %665 = vmatprep.mubr.bf16.mxu0 0
    %666 = vmatmul.mubr.bf16.gmra.mrb[0].mxu0 %v622
    %v667 = vpop.f32.mrb[0].mxu0
    %v668 = vadd.f32 0.0, %v667
    %v669 = vpop.f32.mrb[0].mxu0
    %v670 = vpop.f32.mrb[0].mxu0
    %v671 = vadd.f32 0.0, %v670
    %v672 = vpop.f32.mrb[0].mxu0
    %673 = vmatprep.mubr.bf16.mxu0 0
    %674 = vmatmul.mubr.bf16.gmra.mrb[0].mxu0 %v625
    %v675 = vpop.f32.mrb[0].mxu0
    %v676 = vadd.f32 0.0, %v675
    %v677 = vpop.f32.mrb[0].mxu0
    %v678 = vpop.f32.mrb[0].mxu0
    %v679 = vadd.f32 0.0, %v678
    %v680 = vpop.f32.mrb[0].mxu0
    %681 = vdwg.mxu0
    %v682 = vmul.f32 %v668, 0.35355338
    %v683 = vmul.f32 %v671, 0.35355338
    %v684 = vmul.f32 %v676, 0.35355338
    %v685 = vmul.f32 %v679, 0.35355338
    %v686 = vadd.f32 %v682, %v338
    %v687 = vadd.f32 %v683, %v339
    %v688 = vadd.f32 %v684, %v340
    %v689 = vadd.f32 %v685, %v341
    %v690 = vsel %vm367, %v686, -inf
    %691 = vmax.xlane.f32.xlu0 %v690
    %v692 = vpop.xlane.xlu0 %691
    %v693 = vsel %vm367, %v687, -inf
    %694 = vmax.xlane.f32.xlu0 %v693
    %v695 = vpop.xlane.xlu0 %694
    %v696 = vsel %vm367, %v688, -inf
    %697 = vmax.xlane.f32.xlu0 %v696
    %v698 = vpop.xlane.xlu0 %697
    %v699 = vsel %vm367, %v689, -inf
    %700 = vmax.xlane.f32.xlu0 %v699
    %v701 = vpop.xlane.xlu0 %700
    %v702 = vsub.f32 %v686, %v692
    %v703 = vsub.f32 %v687, %v695
    %v704 = vsub.f32 %v688, %v698
    %v705 = vsub.f32 %v689, %v701
    %v706 = vmul.f32 %v702, 1.442695
    %v707 = vpow.pop %v706
    %v708 = vmul.f32 %v703, 1.442695
    %v709 = vpow.pop %v708
    %v710 = vmul.f32 %v704, 1.442695
    %v711 = vpow.pop %v710
    %v712 = vmul.f32 %v705, 1.442695
    %v713 = vpow.pop %v712
    %v714 = vsel %vm367, %v707, 0.0
    %715 = vadd.xlane.f32.xlu0 %v714
    %v716 = vpop.xlane.xlu0 %715
    %v717 = vsel %vm367, %v709, 0.0
    %718 = vadd.xlane.f32.xlu0 %v717
    %v719 = vpop.xlane.xlu0 %718
    %v720 = vsel %vm367, %v711, 0.0
    %721 = vadd.xlane.f32.xlu0 %v720
    %v722 = vpop.xlane.xlu0 %721
    %v723 = vsel %vm367, %v713, 0.0
    %724 = vadd.xlane.f32.xlu0 %v723
    %v725 = vpop.xlane.xlu0 %724
    %v726 = vrcp.pop %v716
    %v727 = vrcp.pop %v719
    %v728 = vrcp.pop %v722
    %v729 = vrcp.pop %v725
    %v730 = vmul.f32 %v707, %v726
    %v731 = vmul.f32 %v709, %v727
    %v732 = vmul.f32 %v711, %v728
    %v733 = vmul.f32 %v713, %v729
    %v734 = vpack.c.bf16 %v731, %v730
    %v735 = vpack.c.bf16 %v733, %v732
    %736 = vrot.lane.b32.xlu0 %v428, 56
    %v737 = vpop.permute.xlu0 %736
    %738 = vrot.lane.b32.xlu0 %v429, 56
    %v739 = vpop.permute.xlu0 %738
    %v743 = vsel %vm367, %v734, 0
    %v746 = vsel %vm367, %v735, 0
    %748 = vmatprep.subr.bf16.mxu0 0
    %749 = vmatpush1.bf16.msra.mxu0 %v737
    %750 = vmatprep.subr.bf16.mxu0 0
    %751 = vmatpush1.bf16.msra.mxu0 %v739
    %752 = vmatprep.subr.bf16.mxu0 0
    %753 = vmatpush1.bf16.msra.mxu0 0
    %754 = vmatprep.subr.bf16.mxu0 0
    %755 = vmatpush1.bf16.msra.mxu0 0
    %756 = vmatprep.subr.bf16.mxu0 0
    %757 = vmatpush1.bf16.msra.mxu0 0
    %758 = vmatprep.subr.bf16.mxu0 0
    %759 = vmatpush1.bf16.msra.mxu0 0
    %760 = vmatprep.subr.bf16.mxu0 0
    %761 = vmatpush1.bf16.msra.mxu0 0
    %762 = vmatprep.subr.bf16.mxu0 0
    %763 = vmatpush1.bf16.msra.mxu0 0
    %764 = vmatprep.subr.bf16.mxu0 0
    %765 = vmatpush1.bf16.msra.mxu0 0
    %766 = vmatprep.subr.bf16.mxu0 0
    %767 = vmatpush1.bf16.msra.mxu0 0
    %768 = vmatprep.subr.bf16.mxu0 0
    %769 = vmatpush1.bf16.msra.mxu0 0
    %770 = vmatprep.subr.bf16.mxu0 0
    %771 = vmatpush1.bf16.msra.mxu0 0
    %772 = vmatprep.subr.bf16.mxu0 0
    %773 = vmatpush1.bf16.msra.mxu0 0
    %774 = vmatprep.subr.bf16.mxu0 0
    %775 = vmatpush1.bf16.msra.mxu0 0
    %776 = vmatprep.subr.bf16.mxu0 0
    %777 = vmatpush1.bf16.msra.mxu0 0
    %778 = vmatprep.subr.bf16.mxu0 0
    %779 = vmatpush1.bf16.msra.mxu0 0
    %780 = vmatprep.mubr.bf16.mxu0 0
    %781 = vmatmul.mubr.bf16.gmra.mrb[0].mxu0 %v743
    %v782 = vpop.f32.mrb[0].mxu0
    %v783 = vadd.f32 0.0, %v782
    %v784 = vpop.f32.mrb[0].mxu0
    %v785 = vpop.f32.mrb[0].mxu0
    %v786 = vadd.f32 0.0, %v785
    %v787 = vpop.f32.mrb[0].mxu0
    %788 = vmatprep.mubr.bf16.mxu0 0
    %789 = vmatmul.mubr.bf16.gmra.mrb[0].mxu0 %v746
    %v790 = vpop.f32.mrb[0].mxu0
    %v791 = vadd.f32 0.0, %v790
    %v792 = vpop.f32.mrb[0].mxu0
    %v793 = vpop.f32.mrb[0].mxu0
    %v794 = vadd.f32 0.0, %v793
    %v795 = vpop.f32.mrb[0].mxu0
    %796 = vdwg.mxu0
    %797 = vrot.lane.b32.xlu0 %v428, 112
    %v798 = vpop.permute.xlu0 %797
    %799 = vrot.lane.b32.xlu0 %v429, 112
    %v800 = vpop.permute.xlu0 %799
    %801 = vrot.lane.b32.xlu0 %v428, 80
    %v802 = vpop.permute.xlu0 %801
    %803 = vrot.lane.b32.xlu0 %v429, 80
    %v804 = vpop.permute.xlu0 %803
    %v806 = vsel %vm436, %v798, 0
    %v809 = vsel %vm436, %v800, 0
    %v812 = vsel %vm436, %v802, 0
    %v815 = vsel %vm436, %v804, 0
    %817 = vmatprep.subr.bf16.mxu0 0
    %818 = vmatpush1.bf16.xpose.msra.mxu0 %v812
    %819 = vmatprep.subr.bf16.mxu0 0
    %820 = vmatpush1.bf16.xpose.msra.mxu0 %v815
    %821 = vmatprep.subr.bf16.mxu0 0
    %822 = vmatpush1.bf16.xpose.msra.mxu0 0
    %823 = vmatprep.subr.bf16.mxu0 0
    %824 = vmatpush1.bf16.xpose.msra.mxu0 0
    %825 = vmatprep.subr.bf16.mxu0 0
    %826 = vmatpush1.bf16.xpose.msra.mxu0 0
    %827 = vmatprep.subr.bf16.mxu0 0
    %828 = vmatpush1.bf16.xpose.msra.mxu0 0
    %829 = vmatprep.subr.bf16.mxu0 0
    %830 = vmatpush1.bf16.xpose.msra.mxu0 0
    %831 = vmatprep.subr.bf16.mxu0 0
    %832 = vmatpush1.bf16.xpose.msra.mxu0 0
    %833 = vmatprep.subr.bf16.mxu0 0
    %834 = vmatpush1.bf16.xpose.msra.mxu0 0
    %835 = vmatprep.subr.bf16.mxu0 0
    %836 = vmatpush1.bf16.xpose.msra.mxu0 0
    %837 = vmatprep.subr.bf16.mxu0 0
    %838 = vmatpush1.bf16.xpose.msra.mxu0 0
    %839 = vmatprep.subr.bf16.mxu0 0
    %840 = vmatpush1.bf16.xpose.msra.mxu0 0
    %841 = vmatprep.subr.bf16.mxu0 0
    %842 = vmatpush1.bf16.xpose.msra.mxu0 0
    %843 = vmatprep.subr.bf16.mxu0 0
    %844 = vmatpush1.bf16.xpose.msra.mxu0 0
    %845 = vmatprep.subr.bf16.mxu0 0
    %846 = vmatpush1.bf16.xpose.msra.mxu0 0
    %847 = vmatprep.subr.bf16.mxu0 0
    %848 = vmatpush1.bf16.xpose.msra.mxu0 0
    %849 = vmatprep.mubr.bf16.mxu0 0
    %850 = vmatmul.mubr.bf16.gmra.mrb[0].mxu0 %v806
    %v851 = vpop.f32.mrb[0].mxu0
    %v852 = vadd.f32 0.0, %v851
    %v853 = vpop.f32.mrb[0].mxu0
    %v854 = vpop.f32.mrb[0].mxu0
    %v855 = vadd.f32 0.0, %v854
    %v856 = vpop.f32.mrb[0].mxu0
    %857 = vmatprep.mubr.bf16.mxu0 0
    %858 = vmatmul.mubr.bf16.gmra.mrb[0].mxu0 %v809
    %v859 = vpop.f32.mrb[0].mxu0
    %v860 = vadd.f32 0.0, %v859
    %v861 = vpop.f32.mrb[0].mxu0
    %v862 = vpop.f32.mrb[0].mxu0
    %v863 = vadd.f32 0.0, %v862
    %v864 = vpop.f32.mrb[0].mxu0
    %865 = vdwg.mxu0
    %v866 = vmul.f32 %v852, 0.35355338
    %v867 = vmul.f32 %v855, 0.35355338
    %v868 = vmul.f32 %v860, 0.35355338
    %v869 = vmul.f32 %v863, 0.35355338
    %v870 = vadd.f32 %v866, %v338
    %v871 = vadd.f32 %v867, %v339
    %v872 = vadd.f32 %v868, %v340
    %v873 = vadd.f32 %v869, %v341
    %v874 = vsel %vm367, %v870, -inf
    %875 = vmax.xlane.f32.xlu0 %v874
    %v876 = vpop.xlane.xlu0 %875
    %v877 = vsel %vm367, %v871, -inf
    %878 = vmax.xlane.f32.xlu0 %v877
    %v879 = vpop.xlane.xlu0 %878
    %v880 = vsel %vm367, %v872, -inf
    %881 = vmax.xlane.f32.xlu0 %v880
    %v882 = vpop.xlane.xlu0 %881
    %v883 = vsel %vm367, %v873, -inf
    %884 = vmax.xlane.f32.xlu0 %v883
    %v885 = vpop.xlane.xlu0 %884
    %v886 = vsub.f32 %v870, %v876
    %v887 = vsub.f32 %v871, %v879
    %v888 = vsub.f32 %v872, %v882
    %v889 = vsub.f32 %v873, %v885
    %v890 = vmul.f32 %v886, 1.442695
    %v891 = vpow.pop %v890
    %v892 = vmul.f32 %v887, 1.442695
    %v893 = vpow.pop %v892
    %v894 = vmul.f32 %v888, 1.442695
    %v895 = vpow.pop %v894
    %v896 = vmul.f32 %v889, 1.442695
    %v897 = vpow.pop %v896
    %v898 = vsel %vm367, %v891, 0.0
    %899 = vadd.xlane.f32.xlu0 %v898
    %v900 = vpop.xlane.xlu0 %899
    %v901 = vsel %vm367, %v893, 0.0
    %902 = vadd.xlane.f32.xlu0 %v901
    %v903 = vpop.xlane.xlu0 %902
    %v904 = vsel %vm367, %v895, 0.0
    %905 = vadd.xlane.f32.xlu0 %v904
    %v906 = vpop.xlane.xlu0 %905
    %v907 = vsel %vm367, %v897, 0.0
    %908 = vadd.xlane.f32.xlu0 %v907
    %v909 = vpop.xlane.xlu0 %908
    %v910 = vrcp.pop %v900
    %v911 = vrcp.pop %v903
    %v912 = vrcp.pop %v906
    %v913 = vrcp.pop %v909
    %v914 = vmul.f32 %v891, %v910
    %v915 = vmul.f32 %v893, %v911
    %v916 = vmul.f32 %v895, %v912
    %v917 = vmul.f32 %v897, %v913
    %v918 = vpack.c.bf16 %v915, %v914
    %v919 = vpack.c.bf16 %v917, %v916
    %920 = vrot.lane.b32.xlu0 %v428, 48
    %v921 = vpop.permute.xlu0 %920
    %922 = vrot.lane.b32.xlu0 %v429, 48
    %v923 = vpop.permute.xlu0 %922
    %v927 = vsel %vm367, %v918, 0
    %v930 = vsel %vm367, %v919, 0
    %932 = vmatprep.subr.bf16.mxu0 0
    %933 = vmatpush1.bf16.msra.mxu0 %v921
    %934 = vmatprep.subr.bf16.mxu0 0
    %935 = vmatpush1.bf16.msra.mxu0 %v923
    %936 = vmatprep.subr.bf16.mxu0 0
    %937 = vmatpush1.bf16.msra.mxu0 0
    %938 = vmatprep.subr.bf16.mxu0 0
    %939 = vmatpush1.bf16.msra.mxu0 0
    %940 = vmatprep.subr.bf16.mxu0 0
    %941 = vmatpush1.bf16.msra.mxu0 0
    %942 = vmatprep.subr.bf16.mxu0 0
    %943 = vmatpush1.bf16.msra.mxu0 0
    %944 = vmatprep.subr.bf16.mxu0 0
    %945 = vmatpush1.bf16.msra.mxu0 0
    %946 = vmatprep.subr.bf16.mxu0 0
    %947 = vmatpush1.bf16.msra.mxu0 0
    %948 = vmatprep.subr.bf16.mxu0 0
    %949 = vmatpush1.bf16.msra.mxu0 0
    %950 = vmatprep.subr.bf16.mxu0 0
    %951 = vmatpush1.bf16.msra.mxu0 0
    %952 = vmatprep.subr.bf16.mxu0 0
    %953 = vmatpush1.bf16.msra.mxu0 0
    %954 = vmatprep.subr.bf16.mxu0 0
    %955 = vmatpush1.bf16.msra.mxu0 0
    %956 = vmatprep.subr.bf16.mxu0 0
    %957 = vmatpush1.bf16.msra.mxu0 0
    %958 = vmatprep.subr.bf16.mxu0 0
    %959 = vmatpush1.bf16.msra.mxu0 0
    %960 = vmatprep.subr.bf16.mxu0 0
    %961 = vmatpush1.bf16.msra.mxu0 0
    %962 = vmatprep.subr.bf16.mxu0 0
    %963 = vmatpush1.bf16.msra.mxu0 0
    %964 = vmatprep.mubr.bf16.mxu0 0
    %965 = vmatmul.mubr.bf16.gmra.mrb[0].mxu0 %v927
    %v966 = vpop.f32.mrb[0].mxu0
    %v967 = vadd.f32 0.0, %v966
    %v968 = vpop.f32.mrb[0].mxu0
    %v969 = vpop.f32.mrb[0].mxu0
    %v970 = vadd.f32 0.0, %v969
    %v971 = vpop.f32.mrb[0].mxu0
    %972 = vmatprep.mubr.bf16.mxu0 0
    %973 = vmatmul.mubr.bf16.gmra.mrb[0].mxu0 %v930
    %v974 = vpop.f32.mrb[0].mxu0
    %v975 = vadd.f32 0.0, %v974
    %v976 = vpop.f32.mrb[0].mxu0
    %v977 = vpop.f32.mrb[0].mxu0
    %v978 = vadd.f32 0.0, %v977
    %v979 = vpop.f32.mrb[0].mxu0
    %980 = vdwg.mxu0
    %981 = vrot.lane.b32.xlu0 %v428, 104
    %v982 = vpop.permute.xlu0 %981
    %983 = vrot.lane.b32.xlu0 %v429, 104
    %v984 = vpop.permute.xlu0 %983
    %985 = vrot.lane.b32.xlu0 %v428, 72
    %v986 = vpop.permute.xlu0 %985
    %987 = vrot.lane.b32.xlu0 %v429, 72
    %v988 = vpop.permute.xlu0 %987
    %v990 = vsel %vm436, %v982, 0
    %v993 = vsel %vm436, %v984, 0
    %v996 = vsel %vm436, %v986, 0
    %v999 = vsel %vm436, %v988, 0
    %1001 = vmatprep.subr.bf16.mxu0 0
    %1002 = vmatpush1.bf16.xpose.msra.mxu0 %v996
    %1003 = vmatprep.subr.bf16.mxu0 0
    %1004 = vmatpush1.bf16.xpose.msra.mxu0 %v999
    %1005 = vmatprep.subr.bf16.mxu0 0
    %1006 = vmatpush1.bf16.xpose.msra.mxu0 0
    %1007 = vmatprep.subr.bf16.mxu0 0
    %1008 = vmatpush1.bf16.xpose.msra.mxu0 0
    %1009 = vmatprep.subr.bf16.mxu0 0
    %1010 = vmatpush1.bf16.xpose.msra.mxu0 0
    %1011 = vmatprep.subr.bf16.mxu0 0
    %1012 = vmatpush1.bf16.xpose.msra.mxu0 0
    %1013 = vmatprep.subr.bf16.mxu0 0
    %1014 = vmatpush1.bf16.xpose.msra.mxu0 0
    %1015 = vmatprep.subr.bf16.mxu0 0
    %1016 = vmatpush1.bf16.xpose.msra.mxu0 0
    %1017 = vmatprep.subr.bf16.mxu0 0
    %1018 = vmatpush1.bf16.xpose.msra.mxu0 0
    %1019 = vmatprep.subr.bf16.mxu0 0
    %1020 = vmatpush1.bf16.xpose.msra.mxu0 0
    %1021 = vmatprep.subr.bf16.mxu0 0
    %1022 = vmatpush1.bf16.xpose.msra.mxu0 0
    %1023 = vmatprep.subr.bf16.mxu0 0
    %1024 = vmatpush1.bf16.xpose.msra.mxu0 0
    %1025 = vmatprep.subr.bf16.mxu0 0
    %1026 = vmatpush1.bf16.xpose.msra.mxu0 0
    %1027 = vmatprep.subr.bf16.mxu0 0
    %1028 = vmatpush1.bf16.xpose.msra.mxu0 0
    %1029 = vmatprep.subr.bf16.mxu0 0
    %1030 = vmatpush1.bf16.xpose.msra.mxu0 0
    %1031 = vmatprep.subr.bf16.mxu0 0
    %1032 = vmatpush1.bf16.xpose.msra.mxu0 0
    %1033 = vmatprep.mubr.bf16.mxu0 0
    %1034 = vmatmul.mubr.bf16.gmra.mrb[0].mxu0 %v990
    %v1035 = vpop.f32.mrb[0].mxu0
    %v1036 = vadd.f32 0.0, %v1035
    %v1037 = vpop.f32.mrb[0].mxu0
    %v1038 = vpop.f32.mrb[0].mxu0
    %v1039 = vadd.f32 0.0, %v1038
    %v1040 = vpop.f32.mrb[0].mxu0
    %1041 = vmatprep.mubr.bf16.mxu0 0
    %1042 = vmatmul.mubr.bf16.gmra.mrb[0].mxu0 %v993
    %v1043 = vpop.f32.mrb[0].mxu0
    %v1044 = vadd.f32 0.0, %v1043
    %v1045 = vpop.f32.mrb[0].mxu0
    %v1046 = vpop.f32.mrb[0].mxu0
    %v1047 = vadd.f32 0.0, %v1046
    %v1048 = vpop.f32.mrb[0].mxu0
    %1049 = vdwg.mxu0
    %v1050 = vmul.f32 %v1036, 0.35355338
    %v1051 = vmul.f32 %v1039, 0.35355338
    %v1052 = vmul.f32 %v1044, 0.35355338
    %v1053 = vmul.f32 %v1047, 0.35355338
    %v1054 = vadd.f32 %v1050, %v338
    %v1055 = vadd.f32 %v1051, %v339
    %v1056 = vadd.f32 %v1052, %v340
    %v1057 = vadd.f32 %v1053, %v341
    %v1058 = vsel %vm367, %v1054, -inf
    %1059 = vmax.xlane.f32.xlu0 %v1058
    %v1060 = vpop.xlane.xlu0 %1059
    %v1061 = vsel %vm367, %v1055, -inf
    %1062 = vmax.xlane.f32.xlu0 %v1061
    %v1063 = vpop.xlane.xlu0 %1062
    %v1064 = vsel %vm367, %v1056, -inf
    %1065 = vmax.xlane.f32.xlu0 %v1064
    %v1066 = vpop.xlane.xlu0 %1065
    %v1067 = vsel %vm367, %v1057, -inf
    %1068 = vmax.xlane.f32.xlu0 %v1067
    %v1069 = vpop.xlane.xlu0 %1068
    %v1070 = vsub.f32 %v1054, %v1060
    %v1071 = vsub.f32 %v1055, %v1063
    %v1072 = vsub.f32 %v1056, %v1066
    %v1073 = vsub.f32 %v1057, %v1069
    %v1074 = vmul.f32 %v1070, 1.442695
    %v1075 = vpow.pop %v1074
    %v1076 = vmul.f32 %v1071, 1.442695
    %v1077 = vpow.pop %v1076
    %v1078 = vmul.f32 %v1072, 1.442695
    %v1079 = vpow.pop %v1078
    %v1080 = vmul.f32 %v1073, 1.442695
    %v1081 = vpow.pop %v1080
    %v1082 = vsel %vm367, %v1075, 0.0
    %1083 = vadd.xlane.f32.xlu0 %v1082
    %v1084 = vpop.xlane.xlu0 %1083
    %v1085 = vsel %vm367, %v1077, 0.0
    %1086 = vadd.xlane.f32.xlu0 %v1085
    %v1087 = vpop.xlane.xlu0 %1086
    %v1088 = vsel %vm367, %v1079, 0.0
    %1089 = vadd.xlane.f32.xlu0 %v1088
    %v1090 = vpop.xlane.xlu0 %1089
    %v1091 = vsel %vm367, %v1081, 0.0
    %1092 = vadd.xlane.f32.xlu0 %v1091
    %v1093 = vpop.xlane.xlu0 %1092
    %v1094 = vrcp.pop %v1084
    %v1095 = vrcp.pop %v1087
    %v1096 = vrcp.pop %v1090
    %v1097 = vrcp.pop %v1093
    %v1098 = vmul.f32 %v1075, %v1094
    %v1099 = vmul.f32 %v1077, %v1095
    %v1100 = vmul.f32 %v1079, %v1096
    %v1101 = vmul.f32 %v1081, %v1097
    %v1102 = vpack.c.bf16 %v1099, %v1098
    %v1103 = vpack.c.bf16 %v1101, %v1100
    %1104 = vrot.lane.b32.xlu0 %v428, 40
    %v1105 = vpop.permute.xlu0 %1104
    %1106 = vrot.lane.b32.xlu0 %v429, 40
    %v1107 = vpop.permute.xlu0 %1106
    %v1111 = vsel %vm367, %v1102, 0
    %v1114 = vsel %vm367, %v1103, 0
    %1116 = vmatprep.subr.bf16.mxu0 0
    %1117 = vmatpush1.bf16.msra.mxu0 %v1105
    %1118 = vmatprep.subr.bf16.mxu0 0
    %1119 = vmatpush1.bf16.msra.mxu0 %v1107
    %1120 = vmatprep.subr.bf16.mxu0 0
    %1121 = vmatpush1.bf16.msra.mxu0 0
    %1122 = vmatprep.subr.bf16.mxu0 0
    %1123 = vmatpush1.bf16.msra.mxu0 0
    %1124 = vmatprep.subr.bf16.mxu0 0
    %1125 = vmatpush1.bf16.msra.mxu0 0
    %1126 = vmatprep.subr.bf16.mxu0 0
    %1127 = vmatpush1.bf16.msra.mxu0 0
    %1128 = vmatprep.subr.bf16.mxu0 0
    %1129 = vmatpush1.bf16.msra.mxu0 0
    %1130 = vmatprep.subr.bf16.mxu0 0
    %1131 = vmatpush1.bf16.msra.mxu0 0
    %1132 = vmatprep.subr.bf16.mxu0 0
    %1133 = vmatpush1.bf16.msra.mxu0 0
    %1134 = vmatprep.subr.bf16.mxu0 0
    %1135 = vmatpush1.bf16.msra.mxu0 0
    %1136 = vmatprep.subr.bf16.mxu0 0
    %1137 = vmatpush1.bf16.msra.mxu0 0
    %1138 = vmatprep.subr.bf16.mxu0 0
    %1139 = vmatpush1.bf16.msra.mxu0 0
    %1140 = vmatprep.subr.bf16.mxu0 0
    %1141 = vmatpush1.bf16.msra.mxu0 0
    %1142 = vmatprep.subr.bf16.mxu0 0
    %1143 = vmatpush1.bf16.msra.mxu0 0
    %1144 = vmatprep.subr.bf16.mxu0 0
    %1145 = vmatpush1.bf16.msra.mxu0 0
    %1146 = vmatprep.subr.bf16.mxu0 0
    %1147 = vmatpush1.bf16.msra.mxu0 0
    %1148 = vmatprep.mubr.bf16.mxu0 0
    %1149 = vmatmul.mubr.bf16.gmra.mrb[0].mxu0 %v1111
    %v1150 = vpop.f32.mrb[0].mxu0
    %v1151 = vadd.f32 0.0, %v1150
    %v1152 = vpop.f32.mrb[0].mxu0
    %v1153 = vpop.f32.mrb[0].mxu0
    %v1154 = vadd.f32 0.0, %v1153
    %v1155 = vpop.f32.mrb[0].mxu0
    %1156 = vmatprep.mubr.bf16.mxu0 0
    %1157 = vmatmul.mubr.bf16.gmra.mrb[0].mxu0 %v1114
    %v1158 = vpop.f32.mrb[0].mxu0
    %v1159 = vadd.f32 0.0, %v1158
    %v1160 = vpop.f32.mrb[0].mxu0
    %v1161 = vpop.f32.mrb[0].mxu0
    %v1162 = vadd.f32 0.0, %v1161
    %v1163 = vpop.f32.mrb[0].mxu0
    %1164 = vdwg.mxu0
    %1169 = vrot.lane.b32.xlu0 %v783, 8
    %v1170 = vpop.permute.xlu0 %1169
    %1171 = vrot.lane.b32.xlu0 %v786, 8
    %v1172 = vpop.permute.xlu0 %1171
    %1173 = vrot.lane.b32.xlu0 %v791, 8
    %v1174 = vpop.permute.xlu0 %1173
    %1175 = vrot.lane.b32.xlu0 %v794, 8
    %v1176 = vpop.permute.xlu0 %1175
    %1185 = vrot.lane.b32.xlu0 %v967, 16
    %v1186 = vpop.permute.xlu0 %1185
    %1187 = vrot.lane.b32.xlu0 %v970, 16
    %v1188 = vpop.permute.xlu0 %1187
    %1189 = vrot.lane.b32.xlu0 %v975, 16
    %v1190 = vpop.permute.xlu0 %1189
    %1191 = vrot.lane.b32.xlu0 %v978, 16
    %v1192 = vpop.permute.xlu0 %1191
    %1201 = vrot.lane.b32.xlu0 %v1151, 24
    %v1202 = vpop.permute.xlu0 %1201
    %1203 = vrot.lane.b32.xlu0 %v1154, 24
    %v1204 = vpop.permute.xlu0 %1203
    %1205 = vrot.lane.b32.xlu0 %v1159, 24
    %v1206 = vpop.permute.xlu0 %1205
    %1207 = vrot.lane.b32.xlu0 %v1162, 24
    %v1208 = vpop.permute.xlu0 %1207
    %v1213 = vsel %vm436, %v599, %v1170
    %v1214 = vsel %vm436, %v602, %v1172
    %v1215 = vsel %vm436, %v607, %v1174
    %v1216 = vsel %vm436, %v610, %v1176
    %vm1217 = vcmask 130048
    %v1218 = vsel %vm1217, %v1213, %v1186
    %v1219 = vsel %vm1217, %v1214, %v1188
    %v1220 = vsel %vm1217, %v1215, %v1190
    %v1221 = vsel %vm1217, %v1216, %v1192
    %vm1222 = vcmask 195584
    %v1223 = vsel %vm1222, %v1218, %v1202
    %v1224 = vsel %vm1222, %v1219, %v1204
    %v1225 = vsel %vm1222, %v1220, %v1206
    %v1226 = vsel %vm1222, %v1221, %v1208
    %v1227 = vpack.c.bf16 %v1224, %v1223
    %v1228 = vpack.c.bf16 %v1226, %v1225
    %v1230 = vlaneseq
    %v1231 = vshrl.u32 %v1230, 7
    %v1232 = vsub.s32 0, %v1231
    %v1233 = vrot.slane %v427, %v1232
    %v1239 = vunpack.c.l.b16 %v423
    %v1240 = vunpack.c.l.b16 %v424
    %v1241 = vunpack.c.l.b16 %v425
    %v1242 = vunpack.c.l.b16 %v426
    %v1243 = vpack.c.b16 %v1240, %v1239
    %v1244 = vpack.c.b16 %v1242, %v1241
    %v1248 = vsel %vm367, %v1227, 0
    %v1251 = vsel %vm367, %v1228, 0
    %1253 = vmatprep.subr.bf16.mxu0 0
    %1254 = vmatpush1.bf16.msra.mxu0 %v1243
    %1255 = vmatprep.subr.bf16.mxu0 0
    %1256 = vmatpush1.bf16.msra.mxu0 %v1244
    %1257 = vmatprep.subr.bf16.mxu0 0
    %1258 = vmatpush1.bf16.msra.mxu0 0
    %1259 = vmatprep.subr.bf16.mxu0 0
    %1260 = vmatpush1.bf16.msra.mxu0 0
    %1261 = vmatprep.subr.bf16.mxu0 0
    %1262 = vmatpush1.bf16.msra.mxu0 0
    %1263 = vmatprep.subr.bf16.mxu0 0
    %1264 = vmatpush1.bf16.msra.mxu0 0
    %1265 = vmatprep.subr.bf16.mxu0 0
    %1266 = vmatpush1.bf16.msra.mxu0 0
    %1267 = vmatprep.subr.bf16.mxu0 0
    %1268 = vmatpush1.bf16.msra.mxu0 0
    %1269 = vmatprep.subr.bf16.mxu0 0
    %1270 = vmatpush1.bf16.msra.mxu0 0
    %1271 = vmatprep.subr.bf16.mxu0 0
    %1272 = vmatpush1.bf16.msra.mxu0 0
    %1273 = vmatprep.subr.bf16.mxu0 0
    %1274 = vmatpush1.bf16.msra.mxu0 0
    %1275 = vmatprep.subr.bf16.mxu0 0
    %1276 = vmatpush1.bf16.msra.mxu0 0
    %1277 = vmatprep.subr.bf16.mxu0 0
    %1278 = vmatpush1.bf16.msra.mxu0 0
    %1279 = vmatprep.subr.bf16.mxu0 0
    %1280 = vmatpush1.bf16.msra.mxu0 0
    %1281 = vmatprep.subr.bf16.mxu0 0
    %1282 = vmatpush1.bf16.msra.mxu0 0
    %1283 = vmatprep.subr.bf16.mxu0 0
    %1284 = vmatpush1.bf16.msra.mxu0 0
    %1285 = vmatprep.mubr.bf16.mxu0 0
    %1286 = vmatmul.mubr.bf16.gmra.mrb[0].mxu0 %v1248
    %v1287 = vpop.f32.mrb[0].mxu0
    %v1288 = vadd.f32 %v1233, %v1287
    %v1289 = vpop.f32.mrb[0].mxu0
    %v1290 = vpop.f32.mrb[0].mxu0
    %v1291 = vadd.f32 %v1233, %v1290
    %v1292 = vpop.f32.mrb[0].mxu0
    %1293 = vmatprep.mubr.bf16.mxu0 0
    %1294 = vmatmul.mubr.bf16.gmra.mrb[0].mxu0 %v1251
    %v1295 = vpop.f32.mrb[0].mxu0
    %v1296 = vadd.f32 %v1233, %v1295
    %v1297 = vpop.f32.mrb[0].mxu0
    %v1298 = vpop.f32.mrb[0].mxu0
    %v1299 = vadd.f32 %v1233, %v1298
    %v1300 = vpop.f32.mrb[0].mxu0
    %1301 = vdwg.mxu0
    %v1302 = vadd.f32 %v324, %v1288
    %v1303 = vadd.f32 %v327, %v1291
    %v1304 = vadd.f32 %v332, %v1296
    %v1305 = vadd.f32 %v335, %v1299
    %v1306 = vld [vmem:[%s27] sm:$0x1]
    %v1307 = vld [vmem:[%s29] sm:$0x1]
    %v1308 = vsel %vm367, %v1302, 0.0
    %1309 = vadd.xlane.f32.xlu0 %v1308
    %v1310 = vpop.xlane.xlu0 %1309
    %v1311 = vsel %vm367, %v1303, 0.0
    %1312 = vadd.xlane.f32.xlu0 %v1311
    %v1313 = vpop.xlane.xlu0 %1312
    %v1314 = vsel %vm367, %v1304, 0.0
    %1315 = vadd.xlane.f32.xlu0 %v1314
    %v1316 = vpop.xlane.xlu0 %1315
    %v1317 = vsel %vm367, %v1305, 0.0
    %1318 = vadd.xlane.f32.xlu0 %v1317
    %v1319 = vpop.xlane.xlu0 %1318
    %v1320 = vrcp.pop 32.0
    %v1321 = vmul.f32 %v1310, %v1320
    %v1322 = vmul.f32 %v1313, %v1320
    %v1323 = vmul.f32 %v1316, %v1320
    %v1324 = vmul.f32 %v1319, %v1320
    %v1325 = vsub.f32 %v1302, %v1321
    %v1326 = vsub.f32 %v1303, %v1322
    %v1327 = vsub.f32 %v1304, %v1323
    %v1328 = vsub.f32 %v1305, %v1324
    %v1329 = vmul.f32 %v1325, %v1325
    %v1330 = vmul.f32 %v1326, %v1326
    %v1331 = vmul.f32 %v1327, %v1327
    %v1332 = vmul.f32 %v1328, %v1328
    %v1333 = vsel %vm367, %v1329, 0.0
    %1334 = vadd.xlane.f32.xlu0 %v1333
    %v1335 = vpop.xlane.xlu0 %1334
    %v1336 = vsel %vm367, %v1330, 0.0
    %1337 = vadd.xlane.f32.xlu0 %v1336
    %v1338 = vpop.xlane.xlu0 %1337
    %v1339 = vsel %vm367, %v1331, 0.0
    %1340 = vadd.xlane.f32.xlu0 %v1339
    %v1341 = vpop.xlane.xlu0 %1340
    %v1342 = vsel %vm367, %v1332, 0.0
    %1343 = vadd.xlane.f32.xlu0 %v1342
    %v1344 = vpop.xlane.xlu0 %1343
    %v1345 = vmul.f32 %v1335, %v1320
    %v1346 = vmul.f32 %v1338, %v1320
    %v1347 = vmul.f32 %v1341, %v1320
    %v1348 = vmul.f32 %v1344, %v1320
    %v1349 = vadd.f32 %v1345, 1e-05
    %v1350 = vadd.f32 %v1346, 1e-05
    %v1351 = vadd.f32 %v1347, 1e-05
    %v1352 = vadd.f32 %v1348, 1e-05
    %v1353 = vrsqrt.pop %v1349
    %v1354 = vrsqrt.pop %v1350
    %v1355 = vrsqrt.pop %v1351
    %v1356 = vrsqrt.pop %v1352
    %v1357 = vmul.f32 %v1325, %v1353
    %v1358 = vmul.f32 %v1326, %v1354
    %v1359 = vmul.f32 %v1327, %v1355
    %v1360 = vmul.f32 %v1328, %v1356
    %v1362 = vlaneseq
    %v1363 = vshrl.u32 %v1362, 7
    %v1364 = vsub.s32 0, %v1363
    %v1365 = vrot.slane %v1306, %v1364
    %v1367 = vmul.f32 %v1357, %v1365
    %v1368 = vmul.f32 %v1358, %v1365
    %v1369 = vmul.f32 %v1359, %v1365
    %v1370 = vmul.f32 %v1360, %v1365
    %v1372 = vlaneseq
    %v1373 = vshrl.u32 %v1372, 7
    %v1374 = vsub.s32 0, %v1373
    %v1375 = vrot.slane %v1307, %v1374
    %v1377 = vadd.f32 %v1367, %v1375
    %v1378 = vadd.f32 %v1368, %v1375
    %v1379 = vadd.f32 %v1369, %v1375
    %v1380 = vadd.f32 %v1370, %v1375
    %v1381 = vpack.c.bf16 %v1378, %v1377
    %v1382 = vpack.c.bf16 %v1380, %v1379
    %v1383 = vld [vmem:[%s31] sm:$0xf]
    %v1384 = vld [vmem:[%s31 + $0x4] sm:$0xf]
    %v1385 = vld [vmem:[%s31 + $0x8] sm:$0xf]
    %v1386 = vld [vmem:[%s31 + $0xc] sm:$0xf]
    %v1387 = vld [vmem:[%s33] sm:$0x1]
    %v1389 = vlaneseq
    %v1390 = vshrl.u32 %v1389, 7
    %v1391 = vsub.s32 0, %v1390
    %v1392 = vrot.slane %v1387, %v1391
    %v1398 = vunpack.c.l.b16 %v1383
    %v1399 = vunpack.c.l.b16 %v1384
    %v1400 = vunpack.c.l.b16 %v1385
    %v1401 = vunpack.c.l.b16 %v1386
    %v1402 = vpack.c.b16 %v1399, %v1398
    %v1403 = vpack.c.b16 %v1401, %v1400
    %v1407 = vsel %vm367, %v1381, 0
    %v1410 = vsel %vm367, %v1382, 0
    %1412 = vmatprep.subr.bf16.mxu0 0
    %1413 = vmatpush1.bf16.msra.mxu0 %v1402
    %1414 = vmatprep.subr.bf16.mxu0 0
    %1415 = vmatpush1.bf16.msra.mxu0 %v1403
    %1416 = vmatprep.subr.bf16.mxu0 0
    %1417 = vmatpush1.bf16.msra.mxu0 0
    %1418 = vmatprep.subr.bf16.mxu0 0
    %1419 = vmatpush1.bf16.msra.mxu0 0
    %1420 = vmatprep.subr.bf16.mxu0 0
    %1421 = vmatpush1.bf16.msra.mxu0 0
    %1422 = vmatprep.subr.bf16.mxu0 0
    %1423 = vmatpush1.bf16.msra.mxu0 0
    %1424 = vmatprep.subr.bf16.mxu0 0
    %1425 = vmatpush1.bf16.msra.mxu0 0
    %1426 = vmatprep.subr.bf16.mxu0 0
    %1427 = vmatpush1.bf16.msra.mxu0 0
    %1428 = vmatprep.subr.bf16.mxu0 0
    %1429 = vmatpush1.bf16.msra.mxu0 0
    %1430 = vmatprep.subr.bf16.mxu0 0
    %1431 = vmatpush1.bf16.msra.mxu0 0
    %1432 = vmatprep.subr.bf16.mxu0 0
    %1433 = vmatpush1.bf16.msra.mxu0 0
    %1434 = vmatprep.subr.bf16.mxu0 0
    %1435 = vmatpush1.bf16.msra.mxu0 0
    %1436 = vmatprep.subr.bf16.mxu0 0
    %1437 = vmatpush1.bf16.msra.mxu0 0
    %1438 = vmatprep.subr.bf16.mxu0 0
    %1439 = vmatpush1.bf16.msra.mxu0 0
    %1440 = vmatprep.subr.bf16.mxu0 0
    %1441 = vmatpush1.bf16.msra.mxu0 0
    %1442 = vmatprep.subr.bf16.mxu0 0
    %1443 = vmatpush1.bf16.msra.mxu0 0
    %1444 = vmatprep.mubr.bf16.mxu0 0
    %1445 = vmatmul.mubr.bf16.gmra.mrb[0].mxu0 %v1407
    %v1446 = vpop.f32.mrb[0].mxu0
    %v1447 = vadd.f32 %v1392, %v1446
    %v1448 = vpop.f32.mrb[0].mxu0
    %v1449 = vpop.f32.mrb[0].mxu0
    %v1450 = vadd.f32 %v1392, %v1449
    %v1451 = vpop.f32.mrb[0].mxu0
    %1452 = vmatprep.mubr.bf16.mxu0 0
    %1453 = vmatmul.mubr.bf16.gmra.mrb[0].mxu0 %v1410
    %v1454 = vpop.f32.mrb[0].mxu0
    %v1455 = vadd.f32 %v1392, %v1454
    %v1456 = vpop.f32.mrb[0].mxu0
    %v1457 = vpop.f32.mrb[0].mxu0
    %v1458 = vadd.f32 %v1392, %v1457
    %v1459 = vpop.f32.mrb[0].mxu0
    %1460 = vdwg.mxu0
    %v1461 = vmul.f32 %v1447, 0.5
    %v1462 = vmul.f32 %v1450, 0.5
    %v1463 = vmul.f32 %v1455, 0.5
    %v1464 = vmul.f32 %v1458, 0.5
    %v1465 = vmul.f32 %v1447, 0.70710677
    %v1466 = vmul.f32 %v1450, 0.70710677
    %v1467 = vmul.f32 %v1455, 0.70710677
    %v1468 = vmul.f32 %v1458, 0.70710677
    %v1469 = verf.f32.pop %v1465
    %v1470 = verf.f32.pop %v1466
    %v1471 = verf.f32.pop %v1467
    %v1472 = verf.f32.pop %v1468
    %v1473 = vadd.f32 %v1469, 1.0
    %v1474 = vadd.f32 %v1470, 1.0
    %v1475 = vadd.f32 %v1471, 1.0
    %v1476 = vadd.f32 %v1472, 1.0
    %v1477 = vmul.f32 %v1461, %v1473
    %v1478 = vmul.f32 %v1462, %v1474
    %v1479 = vmul.f32 %v1463, %v1475
    %v1480 = vmul.f32 %v1464, %v1476
    %v1481 = vpack.c.bf16 %v1478, %v1477
    %v1482 = vpack.c.bf16 %v1480, %v1479
    %v1483 = vld [vmem:[%s35] sm:$0xf]
    %v1484 = vld [vmem:[%s35 + $0x4] sm:$0xf]
    %v1485 = vld [vmem:[%s35 + $0x8] sm:$0xf]
    %v1486 = vld [vmem:[%s35 + $0xc] sm:$0xf]
    %v1487 = vld [vmem:[%s37] sm:$0x1]
    %v1489 = vlaneseq
    %v1490 = vshrl.u32 %v1489, 7
    %v1491 = vsub.s32 0, %v1490
    %v1492 = vrot.slane %v1487, %v1491
    %v1498 = vunpack.c.l.b16 %v1483
    %v1499 = vunpack.c.l.b16 %v1484
    %v1500 = vunpack.c.l.b16 %v1485
    %v1501 = vunpack.c.l.b16 %v1486
    %v1502 = vpack.c.b16 %v1499, %v1498
    %v1503 = vpack.c.b16 %v1501, %v1500
    %v1507 = vsel %vm367, %v1481, 0
    %v1510 = vsel %vm367, %v1482, 0
    %1512 = vmatprep.subr.bf16.mxu0 0
    %1513 = vmatpush1.bf16.msra.mxu0 %v1502
    %1514 = vmatprep.subr.bf16.mxu0 0
    %1515 = vmatpush1.bf16.msra.mxu0 %v1503
    %1516 = vmatprep.subr.bf16.mxu0 0
    %1517 = vmatpush1.bf16.msra.mxu0 0
    %1518 = vmatprep.subr.bf16.mxu0 0
    %1519 = vmatpush1.bf16.msra.mxu0 0
    %1520 = vmatprep.subr.bf16.mxu0 0
    %1521 = vmatpush1.bf16.msra.mxu0 0
    %1522 = vmatprep.subr.bf16.mxu0 0
    %1523 = vmatpush1.bf16.msra.mxu0 0
    %1524 = vmatprep.subr.bf16.mxu0 0
    %1525 = vmatpush1.bf16.msra.mxu0 0
    %1526 = vmatprep.subr.bf16.mxu0 0
    %1527 = vmatpush1.bf16.msra.mxu0 0
    %1528 = vmatprep.subr.bf16.mxu0 0
    %1529 = vmatpush1.bf16.msra.mxu0 0
    %1530 = vmatprep.subr.bf16.mxu0 0
    %1531 = vmatpush1.bf16.msra.mxu0 0
    %1532 = vmatprep.subr.bf16.mxu0 0
    %1533 = vmatpush1.bf16.msra.mxu0 0
    %1534 = vmatprep.subr.bf16.mxu0 0
    %1535 = vmatpush1.bf16.msra.mxu0 0
    %1536 = vmatprep.subr.bf16.mxu0 0
    %1537 = vmatpush1.bf16.msra.mxu0 0
    %1538 = vmatprep.subr.bf16.mxu0 0
    %1539 = vmatpush1.bf16.msra.mxu0 0
    %1540 = vmatprep.subr.bf16.mxu0 0
    %1541 = vmatpush1.bf16.msra.mxu0 0
    %1542 = vmatprep.subr.bf16.mxu0 0
    %1543 = vmatpush1.bf16.msra.mxu0 0
    %1544 = vmatprep.mubr.bf16.mxu0 0
    %1545 = vmatmul.mubr.bf16.gmra.mrb[0].mxu0 %v1507
    %v1546 = vpop.f32.mrb[0].mxu0
    %v1547 = vadd.f32 %v1492, %v1546
    %v1548 = vpop.f32.mrb[0].mxu0
    %v1549 = vpop.f32.mrb[0].mxu0
    %v1550 = vadd.f32 %v1492, %v1549
    %v1551 = vpop.f32.mrb[0].mxu0
    %1552 = vmatprep.mubr.bf16.mxu0 0
    %1553 = vmatmul.mubr.bf16.gmra.mrb[0].mxu0 %v1510
    %v1554 = vpop.f32.mrb[0].mxu0
    %v1555 = vadd.f32 %v1492, %v1554
    %v1556 = vpop.f32.mrb[0].mxu0
    %v1557 = vpop.f32.mrb[0].mxu0
    %v1558 = vadd.f32 %v1492, %v1557
    %v1559 = vpop.f32.mrb[0].mxu0
    %1560 = vdwg.mxu0
    %v1561 = vadd.f32 %v1377, %v1547
    %v1562 = vadd.f32 %v1378, %v1550
    %v1563 = vadd.f32 %v1379, %v1555
    %v1564 = vadd.f32 %v1380, %v1558
    %v1565 = vld [vmem:[%s39] sm:$0x1]
    %v1566 = vld [vmem:[%s41] sm:$0x1]
    %v1567 = vsel %vm367, %v1561, 0.0
    %1568 = vadd.xlane.f32.xlu0 %v1567
    %v1569 = vpop.xlane.xlu0 %1568
    %v1570 = vsel %vm367, %v1562, 0.0
    %1571 = vadd.xlane.f32.xlu0 %v1570
    %v1572 = vpop.xlane.xlu0 %1571
    %v1573 = vsel %vm367, %v1563, 0.0
    %1574 = vadd.xlane.f32.xlu0 %v1573
    %v1575 = vpop.xlane.xlu0 %1574
    %v1576 = vsel %vm367, %v1564, 0.0
    %1577 = vadd.xlane.f32.xlu0 %v1576
    %v1578 = vpop.xlane.xlu0 %1577
    %v1579 = vmul.f32 %v1569, %v1320
    %v1580 = vmul.f32 %v1572, %v1320
    %v1581 = vmul.f32 %v1575, %v1320
    %v1582 = vmul.f32 %v1578, %v1320
    %v1583 = vsub.f32 %v1561, %v1579
    %v1584 = vsub.f32 %v1562, %v1580
    %v1585 = vsub.f32 %v1563, %v1581
    %v1586 = vsub.f32 %v1564, %v1582
    %v1587 = vmul.f32 %v1583, %v1583
    %v1588 = vmul.f32 %v1584, %v1584
    %v1589 = vmul.f32 %v1585, %v1585
    %v1590 = vmul.f32 %v1586, %v1586
    %v1591 = vsel %vm367, %v1587, 0.0
    %1592 = vadd.xlane.f32.xlu0 %v1591
    %v1593 = vpop.xlane.xlu0 %1592
    %v1594 = vsel %vm367, %v1588, 0.0
    %1595 = vadd.xlane.f32.xlu0 %v1594
    %v1596 = vpop.xlane.xlu0 %1595
    %v1597 = vsel %vm367, %v1589, 0.0
    %1598 = vadd.xlane.f32.xlu0 %v1597
    %v1599 = vpop.xlane.xlu0 %1598
    %v1600 = vsel %vm367, %v1590, 0.0
    %1601 = vadd.xlane.f32.xlu0 %v1600
    %v1602 = vpop.xlane.xlu0 %1601
    %v1603 = vmul.f32 %v1593, %v1320
    %v1604 = vmul.f32 %v1596, %v1320
    %v1605 = vmul.f32 %v1599, %v1320
    %v1606 = vmul.f32 %v1602, %v1320
    %v1607 = vadd.f32 %v1603, 1e-05
    %v1608 = vadd.f32 %v1604, 1e-05
    %v1609 = vadd.f32 %v1605, 1e-05
    %v1610 = vadd.f32 %v1606, 1e-05
    %v1611 = vrsqrt.pop %v1607
    %v1612 = vrsqrt.pop %v1608
    %v1613 = vrsqrt.pop %v1609
    %v1614 = vrsqrt.pop %v1610
    %v1615 = vmul.f32 %v1583, %v1611
    %v1616 = vmul.f32 %v1584, %v1612
    %v1617 = vmul.f32 %v1585, %v1613
    %v1618 = vmul.f32 %v1586, %v1614
    %v1620 = vlaneseq
    %v1621 = vshrl.u32 %v1620, 7
    %v1622 = vsub.s32 0, %v1621
    %v1623 = vrot.slane %v1565, %v1622
    %v1625 = vmul.f32 %v1615, %v1623
    %v1626 = vmul.f32 %v1616, %v1623
    %v1627 = vmul.f32 %v1617, %v1623
    %v1628 = vmul.f32 %v1618, %v1623
    %v1630 = vlaneseq
    %v1631 = vshrl.u32 %v1630, 7
    %v1632 = vsub.s32 0, %v1631
    %v1633 = vrot.slane %v1566, %v1632
    %v1635 = vadd.f32 %v1625, %v1633
    %v1636 = vadd.f32 %v1626, %v1633
    %v1637 = vadd.f32 %v1627, %v1633
    %v1638 = vadd.f32 %v1628, %v1633
    %v1639 = vpack.c.bf16 %v1636, %v1635
    %v1640 = vpack.c.bf16 %v1638, %v1637
    %s1641 = scalar_lea.vmem %s19, 16
    %v1642 = vld [vmem:[%s1641] sm:$0xf]
    %v1643 = vld [vmem:[%s1641 + $0x4] sm:$0xf]
    %v1644 = vld [vmem:[%s1641 + $0x8] sm:$0xf]
    %v1645 = vld [vmem:[%s1641 + $0xc] sm:$0xf]
    %s1646 = scalar_lea.vmem %s21, 1
    %v1647 = vld [vmem:[%s1646] sm:$0x1]
    %v1649 = vlaneseq
    %v1650 = vshrl.u32 %v1649, 7
    %v1651 = vsub.s32 0, %v1650
    %v1652 = vrot.slane %v1647, %v1651
    %v1658 = vunpack.c.l.b16 %v1642
    %v1659 = vunpack.c.l.b16 %v1643
    %v1660 = vunpack.c.l.b16 %v1644
    %v1661 = vunpack.c.l.b16 %v1645
    %v1662 = vpack.c.b16 %v1659, %v1658
    %v1663 = vpack.c.b16 %v1661, %v1660
    %v1667 = vsel %vm367, %v1639, 0
    %v1670 = vsel %vm367, %v1640, 0
    %1672 = vmatprep.subr.bf16.mxu0 0
    %1673 = vmatpush1.bf16.msra.mxu0 %v1662
    %1674 = vmatprep.subr.bf16.mxu0 0
    %1675 = vmatpush1.bf16.msra.mxu0 %v1663
    %1676 = vmatprep.subr.bf16.mxu0 0
    %1677 = vmatpush1.bf16.msra.mxu0 0
    %1678 = vmatprep.subr.bf16.mxu0 0
    %1679 = vmatpush1.bf16.msra.mxu0 0
    %1680 = vmatprep.subr.bf16.mxu0 0
    %1681 = vmatpush1.bf16.msra.mxu0 0
    %1682 = vmatprep.subr.bf16.mxu0 0
    %1683 = vmatpush1.bf16.msra.mxu0 0
    %1684 = vmatprep.subr.bf16.mxu0 0
    %1685 = vmatpush1.bf16.msra.mxu0 0
    %1686 = vmatprep.subr.bf16.mxu0 0
    %1687 = vmatpush1.bf16.msra.mxu0 0
    %1688 = vmatprep.subr.bf16.mxu0 0
    %1689 = vmatpush1.bf16.msra.mxu0 0
    %1690 = vmatprep.subr.bf16.mxu0 0
    %1691 = vmatpush1.bf16.msra.mxu0 0
    %1692 = vmatprep.subr.bf16.mxu0 0
    %1693 = vmatpush1.bf16.msra.mxu0 0
    %1694 = vmatprep.subr.bf16.mxu0 0
    %1695 = vmatpush1.bf16.msra.mxu0 0
    %1696 = vmatprep.subr.bf16.mxu0 0
    %1697 = vmatpush1.bf16.msra.mxu0 0
    %1698 = vmatprep.subr.bf16.mxu0 0
    %1699 = vmatpush1.bf16.msra.mxu0 0
    %1700 = vmatprep.subr.bf16.mxu0 0
    %1701 = vmatpush1.bf16.msra.mxu0 0
    %1702 = vmatprep.subr.bf16.mxu0 0
    %1703 = vmatpush1.bf16.msra.mxu0 0
    %1704 = vmatprep.mubr.bf16.mxu0 0
    %1705 = vmatmul.mubr.bf16.gmra.mrb[0].mxu0 %v1667
    %v1706 = vpop.f32.mrb[0].mxu0
    %v1707 = vadd.f32 %v1652, %v1706
    %v1708 = vpop.f32.mrb[0].mxu0
    %v1709 = vpop.f32.mrb[0].mxu0
    %v1710 = vadd.f32 %v1652, %v1709
    %v1711 = vpop.f32.mrb[0].mxu0
    %1712 = vmatprep.mubr.bf16.mxu0 0
    %1713 = vmatmul.mubr.bf16.gmra.mrb[0].mxu0 %v1670
    %v1714 = vpop.f32.mrb[0].mxu0
    %v1715 = vadd.f32 %v1652, %v1714
    %v1716 = vpop.f32.mrb[0].mxu0
    %v1717 = vpop.f32.mrb[0].mxu0
    %v1718 = vadd.f32 %v1652, %v1717
    %v1719 = vpop.f32.mrb[0].mxu0
    %1720 = vdwg.mxu0
    %s1721 = scalar_lea.vmem %s23, 16
    %v1722 = vld [vmem:[%s1721] sm:$0xf]
    %v1723 = vld [vmem:[%s1721 + $0x4] sm:$0xf]
    %v1724 = vld [vmem:[%s1721 + $0x8] sm:$0xf]
    %v1725 = vld [vmem:[%s1721 + $0xc] sm:$0xf]
    %s1726 = scalar_lea.vmem %s25, 1
    %v1727 = vld [vmem:[%s1726] sm:$0x1]
    %v1728 = vpack.c.bf16 %v1710, %v1707
    %v1729 = vpack.c.bf16 %v1718, %v1715
    %1732 = vrot.lane.b32.xlu0 %v1728, 96
    %v1733 = vpop.permute.xlu0 %1732
    %1734 = vrot.lane.b32.xlu0 %v1729, 96
    %v1735 = vpop.permute.xlu0 %1734
    %v1737 = vsel %vm436, %v1728, 0
    %v1740 = vsel %vm436, %v1729, 0
    %v1743 = vsel %vm436, %v1733, 0
    %v1746 = vsel %vm436, %v1735, 0
    %1748 = vmatprep.subr.bf16.mxu0 0
    %1749 = vmatpush1.bf16.xpose.msra.mxu0 %v1743
    %1750 = vmatprep.subr.bf16.mxu0 0
    %1751 = vmatpush1.bf16.xpose.msra.mxu0 %v1746
    %1752 = vmatprep.subr.bf16.mxu0 0
    %1753 = vmatpush1.bf16.xpose.msra.mxu0 0
    %1754 = vmatprep.subr.bf16.mxu0 0
    %1755 = vmatpush1.bf16.xpose.msra.mxu0 0
    %1756 = vmatprep.subr.bf16.mxu0 0
    %1757 = vmatpush1.bf16.xpose.msra.mxu0 0
    %1758 = vmatprep.subr.bf16.mxu0 0
    %1759 = vmatpush1.bf16.xpose.msra.mxu0 0
    %1760 = vmatprep.subr.bf16.mxu0 0
    %1761 = vmatpush1.bf16.xpose.msra.mxu0 0
    %1762 = vmatprep.subr.bf16.mxu0 0
    %1763 = vmatpush1.bf16.xpose.msra.mxu0 0
    %1764 = vmatprep.subr.bf16.mxu0 0
    %1765 = vmatpush1.bf16.xpose.msra.mxu0 0
    %1766 = vmatprep.subr.bf16.mxu0 0
    %1767 = vmatpush1.bf16.xpose.msra.mxu0 0
    %1768 = vmatprep.subr.bf16.mxu0 0
    %1769 = vmatpush1.bf16.xpose.msra.mxu0 0
    %1770 = vmatprep.subr.bf16.mxu0 0
    %1771 = vmatpush1.bf16.xpose.msra.mxu0 0
    %1772 = vmatprep.subr.bf16.mxu0 0
    %1773 = vmatpush1.bf16.xpose.msra.mxu0 0
    %1774 = vmatprep.subr.bf16.mxu0 0
    %1775 = vmatpush1.bf16.xpose.msra.mxu0 0
    %1776 = vmatprep.subr.bf16.mxu0 0
    %1777 = vmatpush1.bf16.xpose.msra.mxu0 0
    %1778 = vmatprep.subr.bf16.mxu0 0
    %1779 = vmatpush1.bf16.xpose.msra.mxu0 0
    %1780 = vmatprep.mubr.bf16.mxu0 0
    %1781 = vmatmul.mubr.bf16.gmra.mrb[0].mxu0 %v1737
    %v1782 = vpop.f32.mrb[0].mxu0
    %v1783 = vadd.f32 0.0, %v1782
    %v1784 = vpop.f32.mrb[0].mxu0
    %v1785 = vpop.f32.mrb[0].mxu0
    %v1786 = vadd.f32 0.0, %v1785
    %v1787 = vpop.f32.mrb[0].mxu0
    %1788 = vmatprep.mubr.bf16.mxu0 0
    %1789 = vmatmul.mubr.bf16.gmra.mrb[0].mxu0 %v1740
    %v1790 = vpop.f32.mrb[0].mxu0
    %v1791 = vadd.f32 0.0, %v1790
    %v1792 = vpop.f32.mrb[0].mxu0
    %v1793 = vpop.f32.mrb[0].mxu0
    %v1794 = vadd.f32 0.0, %v1793
    %v1795 = vpop.f32.mrb[0].mxu0
    %1796 = vdwg.mxu0
    %v1797 = vmul.f32 %v1783, 0.35355338
    %v1798 = vmul.f32 %v1786, 0.35355338
    %v1799 = vmul.f32 %v1791, 0.35355338
    %v1800 = vmul.f32 %v1794, 0.35355338
    %v1801 = vadd.f32 %v1797, %v338
    %v1802 = vadd.f32 %v1798, %v339
    %v1803 = vadd.f32 %v1799, %v340
    %v1804 = vadd.f32 %v1800, %v341
    %v1805 = vsel %vm367, %v1801, -inf
    %1806 = vmax.xlane.f32.xlu0 %v1805
    %v1807 = vpop.xlane.xlu0 %1806
    %v1808 = vsel %vm367, %v1802, -inf
    %1809 = vmax.xlane.f32.xlu0 %v1808
    %v1810 = vpop.xlane.xlu0 %1809
    %v1811 = vsel %vm367, %v1803, -inf
    %1812 = vmax.xlane.f32.xlu0 %v1811
    %v1813 = vpop.xlane.xlu0 %1812
    %v1814 = vsel %vm367, %v1804, -inf
    %1815 = vmax.xlane.f32.xlu0 %v1814
    %v1816 = vpop.xlane.xlu0 %1815
    %v1817 = vsub.f32 %v1801, %v1807
    %v1818 = vsub.f32 %v1802, %v1810
    %v1819 = vsub.f32 %v1803, %v1813
    %v1820 = vsub.f32 %v1804, %v1816
    %v1821 = vmul.f32 %v1817, 1.442695
    %v1822 = vpow.pop %v1821
    %v1823 = vmul.f32 %v1818, 1.442695
    %v1824 = vpow.pop %v1823
    %v1825 = vmul.f32 %v1819, 1.442695
    %v1826 = vpow.pop %v1825
    %v1827 = vmul.f32 %v1820, 1.442695
    %v1828 = vpow.pop %v1827
    %v1829 = vsel %vm367, %v1822, 0.0
    %1830 = vadd.xlane.f32.xlu0 %v1829
    %v1831 = vpop.xlane.xlu0 %1830
    %v1832 = vsel %vm367, %v1824, 0.0
    %1833 = vadd.xlane.f32.xlu0 %v1832
    %v1834 = vpop.xlane.xlu0 %1833
    %v1835 = vsel %vm367, %v1826, 0.0
    %1836 = vadd.xlane.f32.xlu0 %v1835
    %v1837 = vpop.xlane.xlu0 %1836
    %v1838 = vsel %vm367, %v1828, 0.0
    %1839 = vadd.xlane.f32.xlu0 %v1838
    %v1840 = vpop.xlane.xlu0 %1839
    %v1841 = vrcp.pop %v1831
    %v1842 = vrcp.pop %v1834
    %v1843 = vrcp.pop %v1837
    %v1844 = vrcp.pop %v1840
    %v1845 = vmul.f32 %v1822, %v1841
    %v1846 = vmul.f32 %v1824, %v1842
    %v1847 = vmul.f32 %v1826, %v1843
    %v1848 = vmul.f32 %v1828, %v1844
    %v1849 = vpack.c.bf16 %v1846, %v1845
    %v1850 = vpack.c.bf16 %v1848, %v1847
    %1851 = vrot.lane.b32.xlu0 %v1728, 64
    %v1852 = vpop.permute.xlu0 %1851
    %1853 = vrot.lane.b32.xlu0 %v1729, 64
    %v1854 = vpop.permute.xlu0 %1853
    %v1858 = vsel %vm367, %v1849, 0
    %v1861 = vsel %vm367, %v1850, 0
    %1863 = vmatprep.subr.bf16.mxu0 0
    %1864 = vmatpush1.bf16.msra.mxu0 %v1852
    %1865 = vmatprep.subr.bf16.mxu0 0
    %1866 = vmatpush1.bf16.msra.mxu0 %v1854
    %1867 = vmatprep.subr.bf16.mxu0 0
    %1868 = vmatpush1.bf16.msra.mxu0 0
    %1869 = vmatprep.subr.bf16.mxu0 0
    %1870 = vmatpush1.bf16.msra.mxu0 0
    %1871 = vmatprep.subr.bf16.mxu0 0
    %1872 = vmatpush1.bf16.msra.mxu0 0
    %1873 = vmatprep.subr.bf16.mxu0 0
    %1874 = vmatpush1.bf16.msra.mxu0 0
    %1875 = vmatprep.subr.bf16.mxu0 0
    %1876 = vmatpush1.bf16.msra.mxu0 0
    %1877 = vmatprep.subr.bf16.mxu0 0
    %1878 = vmatpush1.bf16.msra.mxu0 0
    %1879 = vmatprep.subr.bf16.mxu0 0
    %1880 = vmatpush1.bf16.msra.mxu0 0
    %1881 = vmatprep.subr.bf16.mxu0 0
    %1882 = vmatpush1.bf16.msra.mxu0 0
    %1883 = vmatprep.subr.bf16.mxu0 0
    %1884 = vmatpush1.bf16.msra.mxu0 0
    %1885 = vmatprep.subr.bf16.mxu0 0
    %1886 = vmatpush1.bf16.msra.mxu0 0
    %1887 = vmatprep.subr.bf16.mxu0 0
    %1888 = vmatpush1.bf16.msra.mxu0 0
    %1889 = vmatprep.subr.bf16.mxu0 0
    %1890 = vmatpush1.bf16.msra.mxu0 0
    %1891 = vmatprep.subr.bf16.mxu0 0
    %1892 = vmatpush1.bf16.msra.mxu0 0
    %1893 = vmatprep.subr.bf16.mxu0 0
    %1894 = vmatpush1.bf16.msra.mxu0 0
    %1895 = vmatprep.mubr.bf16.mxu0 0
    %1896 = vmatmul.mubr.bf16.gmra.mrb[0].mxu0 %v1858
    %v1897 = vpop.f32.mrb[0].mxu0
    %v1898 = vadd.f32 0.0, %v1897
    %v1899 = vpop.f32.mrb[0].mxu0
    %v1900 = vpop.f32.mrb[0].mxu0
    %v1901 = vadd.f32 0.0, %v1900
    %v1902 = vpop.f32.mrb[0].mxu0
    %1903 = vmatprep.mubr.bf16.mxu0 0
    %1904 = vmatmul.mubr.bf16.gmra.mrb[0].mxu0 %v1861
    %v1905 = vpop.f32.mrb[0].mxu0
    %v1906 = vadd.f32 0.0, %v1905
    %v1907 = vpop.f32.mrb[0].mxu0
    %v1908 = vpop.f32.mrb[0].mxu0
    %v1909 = vadd.f32 0.0, %v1908
    %v1910 = vpop.f32.mrb[0].mxu0
    %1911 = vdwg.mxu0
    %1912 = vrot.lane.b32.xlu0 %v1728, 120
    %v1913 = vpop.permute.xlu0 %1912
    %1914 = vrot.lane.b32.xlu0 %v1729, 120
    %v1915 = vpop.permute.xlu0 %1914
    %1916 = vrot.lane.b32.xlu0 %v1728, 88
    %v1917 = vpop.permute.xlu0 %1916
    %1918 = vrot.lane.b32.xlu0 %v1729, 88
    %v1919 = vpop.permute.xlu0 %1918
    %v1921 = vsel %vm436, %v1913, 0
    %v1924 = vsel %vm436, %v1915, 0
    %v1927 = vsel %vm436, %v1917, 0
    %v1930 = vsel %vm436, %v1919, 0
    %1932 = vmatprep.subr.bf16.mxu0 0
    %1933 = vmatpush1.bf16.xpose.msra.mxu0 %v1927
    %1934 = vmatprep.subr.bf16.mxu0 0
    %1935 = vmatpush1.bf16.xpose.msra.mxu0 %v1930
    %1936 = vmatprep.subr.bf16.mxu0 0
    %1937 = vmatpush1.bf16.xpose.msra.mxu0 0
    %1938 = vmatprep.subr.bf16.mxu0 0
    %1939 = vmatpush1.bf16.xpose.msra.mxu0 0
    %1940 = vmatprep.subr.bf16.mxu0 0
    %1941 = vmatpush1.bf16.xpose.msra.mxu0 0
    %1942 = vmatprep.subr.bf16.mxu0 0
    %1943 = vmatpush1.bf16.xpose.msra.mxu0 0
    %1944 = vmatprep.subr.bf16.mxu0 0
    %1945 = vmatpush1.bf16.xpose.msra.mxu0 0
    %1946 = vmatprep.subr.bf16.mxu0 0
    %1947 = vmatpush1.bf16.xpose.msra.mxu0 0
    %1948 = vmatprep.subr.bf16.mxu0 0
    %1949 = vmatpush1.bf16.xpose.msra.mxu0 0
    %1950 = vmatprep.subr.bf16.mxu0 0
    %1951 = vmatpush1.bf16.xpose.msra.mxu0 0
    %1952 = vmatprep.subr.bf16.mxu0 0
    %1953 = vmatpush1.bf16.xpose.msra.mxu0 0
    %1954 = vmatprep.subr.bf16.mxu0 0
    %1955 = vmatpush1.bf16.xpose.msra.mxu0 0
    %1956 = vmatprep.subr.bf16.mxu0 0
    %1957 = vmatpush1.bf16.xpose.msra.mxu0 0
    %1958 = vmatprep.subr.bf16.mxu0 0
    %1959 = vmatpush1.bf16.xpose.msra.mxu0 0
    %1960 = vmatprep.subr.bf16.mxu0 0
    %1961 = vmatpush1.bf16.xpose.msra.mxu0 0
    %1962 = vmatprep.subr.bf16.mxu0 0
    %1963 = vmatpush1.bf16.xpose.msra.mxu0 0
    %1964 = vmatprep.mubr.bf16.mxu0 0
    %1965 = vmatmul.mubr.bf16.gmra.mrb[0].mxu0 %v1921
    %v1966 = vpop.f32.mrb[0].mxu0
    %v1967 = vadd.f32 0.0, %v1966
    %v1968 = vpop.f32.mrb[0].mxu0
    %v1969 = vpop.f32.mrb[0].mxu0
    %v1970 = vadd.f32 0.0, %v1969
    %v1971 = vpop.f32.mrb[0].mxu0
    %1972 = vmatprep.mubr.bf16.mxu0 0
    %1973 = vmatmul.mubr.bf16.gmra.mrb[0].mxu0 %v1924
    %v1974 = vpop.f32.mrb[0].mxu0
    %v1975 = vadd.f32 0.0, %v1974
    %v1976 = vpop.f32.mrb[0].mxu0
    %v1977 = vpop.f32.mrb[0].mxu0
    %v1978 = vadd.f32 0.0, %v1977
    %v1979 = vpop.f32.mrb[0].mxu0
    %1980 = vdwg.mxu0
    %v1981 = vmul.f32 %v1967, 0.35355338
    %v1982 = vmul.f32 %v1970, 0.35355338
    %v1983 = vmul.f32 %v1975, 0.35355338
    %v1984 = vmul.f32 %v1978, 0.35355338
    %v1985 = vadd.f32 %v1981, %v338
    %v1986 = vadd.f32 %v1982, %v339
    %v1987 = vadd.f32 %v1983, %v340
    %v1988 = vadd.f32 %v1984, %v341
    %v1989 = vsel %vm367, %v1985, -inf
    %1990 = vmax.xlane.f32.xlu0 %v1989
    %v1991 = vpop.xlane.xlu0 %1990
    %v1992 = vsel %vm367, %v1986, -inf
    %1993 = vmax.xlane.f32.xlu0 %v1992
    %v1994 = vpop.xlane.xlu0 %1993
    %v1995 = vsel %vm367, %v1987, -inf
    %1996 = vmax.xlane.f32.xlu0 %v1995
    %v1997 = vpop.xlane.xlu0 %1996
    %v1998 = vsel %vm367, %v1988, -inf
    %1999 = vmax.xlane.f32.xlu0 %v1998
    %v2000 = vpop.xlane.xlu0 %1999
    %v2001 = vsub.f32 %v1985, %v1991
    %v2002 = vsub.f32 %v1986, %v1994
    %v2003 = vsub.f32 %v1987, %v1997
    %v2004 = vsub.f32 %v1988, %v2000
    %v2005 = vmul.f32 %v2001, 1.442695
    %v2006 = vpow.pop %v2005
    %v2007 = vmul.f32 %v2002, 1.442695
    %v2008 = vpow.pop %v2007
    %v2009 = vmul.f32 %v2003, 1.442695
    %v2010 = vpow.pop %v2009
    %v2011 = vmul.f32 %v2004, 1.442695
    %v2012 = vpow.pop %v2011
    %v2013 = vsel %vm367, %v2006, 0.0
    %2014 = vadd.xlane.f32.xlu0 %v2013
    %v2015 = vpop.xlane.xlu0 %2014
    %v2016 = vsel %vm367, %v2008, 0.0
    %2017 = vadd.xlane.f32.xlu0 %v2016
    %v2018 = vpop.xlane.xlu0 %2017
    %v2019 = vsel %vm367, %v2010, 0.0
    %2020 = vadd.xlane.f32.xlu0 %v2019
    %v2021 = vpop.xlane.xlu0 %2020
    %v2022 = vsel %vm367, %v2012, 0.0
    %2023 = vadd.xlane.f32.xlu0 %v2022
    %v2024 = vpop.xlane.xlu0 %2023
    %v2025 = vrcp.pop %v2015
    %v2026 = vrcp.pop %v2018
    %v2027 = vrcp.pop %v2021
    %v2028 = vrcp.pop %v2024
    %v2029 = vmul.f32 %v2006, %v2025
    %v2030 = vmul.f32 %v2008, %v2026
    %v2031 = vmul.f32 %v2010, %v2027
    %v2032 = vmul.f32 %v2012, %v2028
    %v2033 = vpack.c.bf16 %v2030, %v2029
    %v2034 = vpack.c.bf16 %v2032, %v2031
    %2035 = vrot.lane.b32.xlu0 %v1728, 56
    %v2036 = vpop.permute.xlu0 %2035
    %2037 = vrot.lane.b32.xlu0 %v1729, 56
    %v2038 = vpop.permute.xlu0 %2037
    %v2042 = vsel %vm367, %v2033, 0
    %v2045 = vsel %vm367, %v2034, 0
    %2047 = vmatprep.subr.bf16.mxu0 0
    %2048 = vmatpush1.bf16.msra.mxu0 %v2036
    %2049 = vmatprep.subr.bf16.mxu0 0
    %2050 = vmatpush1.bf16.msra.mxu0 %v2038
    %2051 = vmatprep.subr.bf16.mxu0 0
    %2052 = vmatpush1.bf16.msra.mxu0 0
    %2053 = vmatprep.subr.bf16.mxu0 0
    %2054 = vmatpush1.bf16.msra.mxu0 0
    %2055 = vmatprep.subr.bf16.mxu0 0
    %2056 = vmatpush1.bf16.msra.mxu0 0
    %2057 = vmatprep.subr.bf16.mxu0 0
    %2058 = vmatpush1.bf16.msra.mxu0 0
    %2059 = vmatprep.subr.bf16.mxu0 0
    %2060 = vmatpush1.bf16.msra.mxu0 0
    %2061 = vmatprep.subr.bf16.mxu0 0
    %2062 = vmatpush1.bf16.msra.mxu0 0
    %2063 = vmatprep.subr.bf16.mxu0 0
    %2064 = vmatpush1.bf16.msra.mxu0 0
    %2065 = vmatprep.subr.bf16.mxu0 0
    %2066 = vmatpush1.bf16.msra.mxu0 0
    %2067 = vmatprep.subr.bf16.mxu0 0
    %2068 = vmatpush1.bf16.msra.mxu0 0
    %2069 = vmatprep.subr.bf16.mxu0 0
    %2070 = vmatpush1.bf16.msra.mxu0 0
    %2071 = vmatprep.subr.bf16.mxu0 0
    %2072 = vmatpush1.bf16.msra.mxu0 0
    %2073 = vmatprep.subr.bf16.mxu0 0
    %2074 = vmatpush1.bf16.msra.mxu0 0
    %2075 = vmatprep.subr.bf16.mxu0 0
    %2076 = vmatpush1.bf16.msra.mxu0 0
    %2077 = vmatprep.subr.bf16.mxu0 0
    %2078 = vmatpush1.bf16.msra.mxu0 0
    %2079 = vmatprep.mubr.bf16.mxu0 0
    %2080 = vmatmul.mubr.bf16.gmra.mrb[0].mxu0 %v2042
    %v2081 = vpop.f32.mrb[0].mxu0
    %v2082 = vadd.f32 0.0, %v2081
    %v2083 = vpop.f32.mrb[0].mxu0
    %v2084 = vpop.f32.mrb[0].mxu0
    %v2085 = vadd.f32 0.0, %v2084
    %v2086 = vpop.f32.mrb[0].mxu0
    %2087 = vmatprep.mubr.bf16.mxu0 0
    %2088 = vmatmul.mubr.bf16.gmra.mrb[0].mxu0 %v2045
    %v2089 = vpop.f32.mrb[0].mxu0
    %v2090 = vadd.f32 0.0, %v2089
    %v2091 = vpop.f32.mrb[0].mxu0
    %v2092 = vpop.f32.mrb[0].mxu0
    %v2093 = vadd.f32 0.0, %v2092
    %v2094 = vpop.f32.mrb[0].mxu0
    %2095 = vdwg.mxu0
    %2096 = vrot.lane.b32.xlu0 %v1728, 112
    %v2097 = vpop.permute.xlu0 %2096
    %2098 = vrot.lane.b32.xlu0 %v1729, 112
    %v2099 = vpop.permute.xlu0 %2098
    %2100 = vrot.lane.b32.xlu0 %v1728, 80
    %v2101 = vpop.permute.xlu0 %2100
    %2102 = vrot.lane.b32.xlu0 %v1729, 80
    %v2103 = vpop.permute.xlu0 %2102
    %v2105 = vsel %vm436, %v2097, 0
    %v2108 = vsel %vm436, %v2099, 0
    %v2111 = vsel %vm436, %v2101, 0
    %v2114 = vsel %vm436, %v2103, 0
    %2116 = vmatprep.subr.bf16.mxu0 0
    %2117 = vmatpush1.bf16.xpose.msra.mxu0 %v2111
    %2118 = vmatprep.subr.bf16.mxu0 0
    %2119 = vmatpush1.bf16.xpose.msra.mxu0 %v2114
    %2120 = vmatprep.subr.bf16.mxu0 0
    %2121 = vmatpush1.bf16.xpose.msra.mxu0 0
    %2122 = vmatprep.subr.bf16.mxu0 0
    %2123 = vmatpush1.bf16.xpose.msra.mxu0 0
    %2124 = vmatprep.subr.bf16.mxu0 0
    %2125 = vmatpush1.bf16.xpose.msra.mxu0 0
    %2126 = vmatprep.subr.bf16.mxu0 0
    %2127 = vmatpush1.bf16.xpose.msra.mxu0 0
    %2128 = vmatprep.subr.bf16.mxu0 0
    %2129 = vmatpush1.bf16.xpose.msra.mxu0 0
    %2130 = vmatprep.subr.bf16.mxu0 0
    %2131 = vmatpush1.bf16.xpose.msra.mxu0 0
    %2132 = vmatprep.subr.bf16.mxu0 0
    %2133 = vmatpush1.bf16.xpose.msra.mxu0 0
    %2134 = vmatprep.subr.bf16.mxu0 0
    %2135 = vmatpush1.bf16.xpose.msra.mxu0 0
    %2136 = vmatprep.subr.bf16.mxu0 0
    %2137 = vmatpush1.bf16.xpose.msra.mxu0 0
    %2138 = vmatprep.subr.bf16.mxu0 0
    %2139 = vmatpush1.bf16.xpose.msra.mxu0 0
    %2140 = vmatprep.subr.bf16.mxu0 0
    %2141 = vmatpush1.bf16.xpose.msra.mxu0 0
    %2142 = vmatprep.subr.bf16.mxu0 0
    %2143 = vmatpush1.bf16.xpose.msra.mxu0 0
    %2144 = vmatprep.subr.bf16.mxu0 0
    %2145 = vmatpush1.bf16.xpose.msra.mxu0 0
    %2146 = vmatprep.subr.bf16.mxu0 0
    %2147 = vmatpush1.bf16.xpose.msra.mxu0 0
    %2148 = vmatprep.mubr.bf16.mxu0 0
    %2149 = vmatmul.mubr.bf16.gmra.mrb[0].mxu0 %v2105
    %v2150 = vpop.f32.mrb[0].mxu0
    %v2151 = vadd.f32 0.0, %v2150
    %v2152 = vpop.f32.mrb[0].mxu0
    %v2153 = vpop.f32.mrb[0].mxu0
    %v2154 = vadd.f32 0.0, %v2153
    %v2155 = vpop.f32.mrb[0].mxu0
    %2156 = vmatprep.mubr.bf16.mxu0 0
    %2157 = vmatmul.mubr.bf16.gmra.mrb[0].mxu0 %v2108
    %v2158 = vpop.f32.mrb[0].mxu0
    %v2159 = vadd.f32 0.0, %v2158
    %v2160 = vpop.f32.mrb[0].mxu0
    %v2161 = vpop.f32.mrb[0].mxu0
    %v2162 = vadd.f32 0.0, %v2161
    %v2163 = vpop.f32.mrb[0].mxu0
    %2164 = vdwg.mxu0
    %v2165 = vmul.f32 %v2151, 0.35355338
    %v2166 = vmul.f32 %v2154, 0.35355338
    %v2167 = vmul.f32 %v2159, 0.35355338
    %v2168 = vmul.f32 %v2162, 0.35355338
    %v2169 = vadd.f32 %v2165, %v338
    %v2170 = vadd.f32 %v2166, %v339
    %v2171 = vadd.f32 %v2167, %v340
    %v2172 = vadd.f32 %v2168, %v341
    %v2173 = vsel %vm367, %v2169, -inf
    %2174 = vmax.xlane.f32.xlu0 %v2173
    %v2175 = vpop.xlane.xlu0 %2174
    %v2176 = vsel %vm367, %v2170, -inf
    %2177 = vmax.xlane.f32.xlu0 %v2176
    %v2178 = vpop.xlane.xlu0 %2177
    %v2179 = vsel %vm367, %v2171, -inf
    %2180 = vmax.xlane.f32.xlu0 %v2179
    %v2181 = vpop.xlane.xlu0 %2180
    %v2182 = vsel %vm367, %v2172, -inf
    %2183 = vmax.xlane.f32.xlu0 %v2182
    %v2184 = vpop.xlane.xlu0 %2183
    %v2185 = vsub.f32 %v2169, %v2175
    %v2186 = vsub.f32 %v2170, %v2178
    %v2187 = vsub.f32 %v2171, %v2181
    %v2188 = vsub.f32 %v2172, %v2184
    %v2189 = vmul.f32 %v2185, 1.442695
    %v2190 = vpow.pop %v2189
    %v2191 = vmul.f32 %v2186, 1.442695
    %v2192 = vpow.pop %v2191
    %v2193 = vmul.f32 %v2187, 1.442695
    %v2194 = vpow.pop %v2193
    %v2195 = vmul.f32 %v2188, 1.442695
    %v2196 = vpow.pop %v2195
    %v2197 = vsel %vm367, %v2190, 0.0
    %2198 = vadd.xlane.f32.xlu0 %v2197
    %v2199 = vpop.xlane.xlu0 %2198
    %v2200 = vsel %vm367, %v2192, 0.0
    %2201 = vadd.xlane.f32.xlu0 %v2200
    %v2202 = vpop.xlane.xlu0 %2201
    %v2203 = vsel %vm367, %v2194, 0.0
    %2204 = vadd.xlane.f32.xlu0 %v2203
    %v2205 = vpop.xlane.xlu0 %2204
    %v2206 = vsel %vm367, %v2196, 0.0
    %2207 = vadd.xlane.f32.xlu0 %v2206
    %v2208 = vpop.xlane.xlu0 %2207
    %v2209 = vrcp.pop %v2199
    %v2210 = vrcp.pop %v2202
    %v2211 = vrcp.pop %v2205
    %v2212 = vrcp.pop %v2208
    %v2213 = vmul.f32 %v2190, %v2209
    %v2214 = vmul.f32 %v2192, %v2210
    %v2215 = vmul.f32 %v2194, %v2211
    %v2216 = vmul.f32 %v2196, %v2212
    %v2217 = vpack.c.bf16 %v2214, %v2213
    %v2218 = vpack.c.bf16 %v2216, %v2215
    %2219 = vrot.lane.b32.xlu0 %v1728, 48
    %v2220 = vpop.permute.xlu0 %2219
    %2221 = vrot.lane.b32.xlu0 %v1729, 48
    %v2222 = vpop.permute.xlu0 %2221
    %v2226 = vsel %vm367, %v2217, 0
    %v2229 = vsel %vm367, %v2218, 0
    %2231 = vmatprep.subr.bf16.mxu0 0
    %2232 = vmatpush1.bf16.msra.mxu0 %v2220
    %2233 = vmatprep.subr.bf16.mxu0 0
    %2234 = vmatpush1.bf16.msra.mxu0 %v2222
    %2235 = vmatprep.subr.bf16.mxu0 0
    %2236 = vmatpush1.bf16.msra.mxu0 0
    %2237 = vmatprep.subr.bf16.mxu0 0
    %2238 = vmatpush1.bf16.msra.mxu0 0
    %2239 = vmatprep.subr.bf16.mxu0 0
    %2240 = vmatpush1.bf16.msra.mxu0 0
    %2241 = vmatprep.subr.bf16.mxu0 0
    %2242 = vmatpush1.bf16.msra.mxu0 0
    %2243 = vmatprep.subr.bf16.mxu0 0
    %2244 = vmatpush1.bf16.msra.mxu0 0
    %2245 = vmatprep.subr.bf16.mxu0 0
    %2246 = vmatpush1.bf16.msra.mxu0 0
    %2247 = vmatprep.subr.bf16.mxu0 0
    %2248 = vmatpush1.bf16.msra.mxu0 0
    %2249 = vmatprep.subr.bf16.mxu0 0
    %2250 = vmatpush1.bf16.msra.mxu0 0
    %2251 = vmatprep.subr.bf16.mxu0 0
    %2252 = vmatpush1.bf16.msra.mxu0 0
    %2253 = vmatprep.subr.bf16.mxu0 0
    %2254 = vmatpush1.bf16.msra.mxu0 0
    %2255 = vmatprep.subr.bf16.mxu0 0
    %2256 = vmatpush1.bf16.msra.mxu0 0
    %2257 = vmatprep.subr.bf16.mxu0 0
    %2258 = vmatpush1.bf16.msra.mxu0 0
    %2259 = vmatprep.subr.bf16.mxu0 0
    %2260 = vmatpush1.bf16.msra.mxu0 0
    %2261 = vmatprep.subr.bf16.mxu0 0
    %2262 = vmatpush1.bf16.msra.mxu0 0
    %2263 = vmatprep.mubr.bf16.mxu0 0
    %2264 = vmatmul.mubr.bf16.gmra.mrb[0].mxu0 %v2226
    %v2265 = vpop.f32.mrb[0].mxu0
    %v2266 = vadd.f32 0.0, %v2265
    %v2267 = vpop.f32.mrb[0].mxu0
    %v2268 = vpop.f32.mrb[0].mxu0
    %v2269 = vadd.f32 0.0, %v2268
    %v2270 = vpop.f32.mrb[0].mxu0
    %2271 = vmatprep.mubr.bf16.mxu0 0
    %2272 = vmatmul.mubr.bf16.gmra.mrb[0].mxu0 %v2229
    %v2273 = vpop.f32.mrb[0].mxu0
    %v2274 = vadd.f32 0.0, %v2273
    %v2275 = vpop.f32.mrb[0].mxu0
    %v2276 = vpop.f32.mrb[0].mxu0
    %v2277 = vadd.f32 0.0, %v2276
    %v2278 = vpop.f32.mrb[0].mxu0
    %2279 = vdwg.mxu0
    %2280 = vrot.lane.b32.xlu0 %v1728, 104
    %v2281 = vpop.permute.xlu0 %2280
    %2282 = vrot.lane.b32.xlu0 %v1729, 104
    %v2283 = vpop.permute.xlu0 %2282
    %2284 = vrot.lane.b32.xlu0 %v1728, 72
    %v2285 = vpop.permute.xlu0 %2284
    %2286 = vrot.lane.b32.xlu0 %v1729, 72
    %v2287 = vpop.permute.xlu0 %2286
    %v2289 = vsel %vm436, %v2281, 0
    %v2292 = vsel %vm436, %v2283, 0
    %v2295 = vsel %vm436, %v2285, 0
    %v2298 = vsel %vm436, %v2287, 0
    %2300 = vmatprep.subr.bf16.mxu0 0
    %2301 = vmatpush1.bf16.xpose.msra.mxu0 %v2295
    %2302 = vmatprep.subr.bf16.mxu0 0
    %2303 = vmatpush1.bf16.xpose.msra.mxu0 %v2298
    %2304 = vmatprep.subr.bf16.mxu0 0
    %2305 = vmatpush1.bf16.xpose.msra.mxu0 0
    %2306 = vmatprep.subr.bf16.mxu0 0
    %2307 = vmatpush1.bf16.xpose.msra.mxu0 0
    %2308 = vmatprep.subr.bf16.mxu0 0
    %2309 = vmatpush1.bf16.xpose.msra.mxu0 0
    %2310 = vmatprep.subr.bf16.mxu0 0
    %2311 = vmatpush1.bf16.xpose.msra.mxu0 0
    %2312 = vmatprep.subr.bf16.mxu0 0
    %2313 = vmatpush1.bf16.xpose.msra.mxu0 0
    %2314 = vmatprep.subr.bf16.mxu0 0
    %2315 = vmatpush1.bf16.xpose.msra.mxu0 0
    %2316 = vmatprep.subr.bf16.mxu0 0
    %2317 = vmatpush1.bf16.xpose.msra.mxu0 0
    %2318 = vmatprep.subr.bf16.mxu0 0
    %2319 = vmatpush1.bf16.xpose.msra.mxu0 0
    %2320 = vmatprep.subr.bf16.mxu0 0
    %2321 = vmatpush1.bf16.xpose.msra.mxu0 0
    %2322 = vmatprep.subr.bf16.mxu0 0
    %2323 = vmatpush1.bf16.xpose.msra.mxu0 0
    %2324 = vmatprep.subr.bf16.mxu0 0
    %2325 = vmatpush1.bf16.xpose.msra.mxu0 0
    %2326 = vmatprep.subr.bf16.mxu0 0
    %2327 = vmatpush1.bf16.xpose.msra.mxu0 0
    %2328 = vmatprep.subr.bf16.mxu0 0
    %2329 = vmatpush1.bf16.xpose.msra.mxu0 0
    %2330 = vmatprep.subr.bf16.mxu0 0
    %2331 = vmatpush1.bf16.xpose.msra.mxu0 0
    %2332 = vmatprep.mubr.bf16.mxu0 0
    %2333 = vmatmul.mubr.bf16.gmra.mrb[0].mxu0 %v2289
    %v2334 = vpop.f32.mrb[0].mxu0
    %v2335 = vadd.f32 0.0, %v2334
    %v2336 = vpop.f32.mrb[0].mxu0
    %v2337 = vpop.f32.mrb[0].mxu0
    %v2338 = vadd.f32 0.0, %v2337
    %v2339 = vpop.f32.mrb[0].mxu0
    %2340 = vmatprep.mubr.bf16.mxu0 0
    %2341 = vmatmul.mubr.bf16.gmra.mrb[0].mxu0 %v2292
    %v2342 = vpop.f32.mrb[0].mxu0
    %v2343 = vadd.f32 0.0, %v2342
    %v2344 = vpop.f32.mrb[0].mxu0
    %v2345 = vpop.f32.mrb[0].mxu0
    %v2346 = vadd.f32 0.0, %v2345
    %v2347 = vpop.f32.mrb[0].mxu0
    %2348 = vdwg.mxu0
    %v2349 = vmul.f32 %v2335, 0.35355338
    %v2350 = vmul.f32 %v2338, 0.35355338
    %v2351 = vmul.f32 %v2343, 0.35355338
    %v2352 = vmul.f32 %v2346, 0.35355338
    %v2353 = vadd.f32 %v2349, %v338
    %v2354 = vadd.f32 %v2350, %v339
    %v2355 = vadd.f32 %v2351, %v340
    %v2356 = vadd.f32 %v2352, %v341
    %v2357 = vsel %vm367, %v2353, -inf
    %2358 = vmax.xlane.f32.xlu0 %v2357
    %v2359 = vpop.xlane.xlu0 %2358
    %v2360 = vsel %vm367, %v2354, -inf
    %2361 = vmax.xlane.f32.xlu0 %v2360
    %v2362 = vpop.xlane.xlu0 %2361
    %v2363 = vsel %vm367, %v2355, -inf
    %2364 = vmax.xlane.f32.xlu0 %v2363
    %v2365 = vpop.xlane.xlu0 %2364
    %v2366 = vsel %vm367, %v2356, -inf
    %2367 = vmax.xlane.f32.xlu0 %v2366
    %v2368 = vpop.xlane.xlu0 %2367
    %v2369 = vsub.f32 %v2353, %v2359
    %v2370 = vsub.f32 %v2354, %v2362
    %v2371 = vsub.f32 %v2355, %v2365
    %v2372 = vsub.f32 %v2356, %v2368
    %v2373 = vmul.f32 %v2369, 1.442695
    %v2374 = vpow.pop %v2373
    %v2375 = vmul.f32 %v2370, 1.442695
    %v2376 = vpow.pop %v2375
    %v2377 = vmul.f32 %v2371, 1.442695
    %v2378 = vpow.pop %v2377
    %v2379 = vmul.f32 %v2372, 1.442695
    %v2380 = vpow.pop %v2379
    %v2381 = vsel %vm367, %v2374, 0.0
    %2382 = vadd.xlane.f32.xlu0 %v2381
    %v2383 = vpop.xlane.xlu0 %2382
    %v2384 = vsel %vm367, %v2376, 0.0
    %2385 = vadd.xlane.f32.xlu0 %v2384
    %v2386 = vpop.xlane.xlu0 %2385
    %v2387 = vsel %vm367, %v2378, 0.0
    %2388 = vadd.xlane.f32.xlu0 %v2387
    %v2389 = vpop.xlane.xlu0 %2388
    %v2390 = vsel %vm367, %v2380, 0.0
    %2391 = vadd.xlane.f32.xlu0 %v2390
    %v2392 = vpop.xlane.xlu0 %2391
    %v2393 = vrcp.pop %v2383
    %v2394 = vrcp.pop %v2386
    %v2395 = vrcp.pop %v2389
    %v2396 = vrcp.pop %v2392
    %v2397 = vmul.f32 %v2374, %v2393
    %v2398 = vmul.f32 %v2376, %v2394
    %v2399 = vmul.f32 %v2378, %v2395
    %v2400 = vmul.f32 %v2380, %v2396
    %v2401 = vpack.c.bf16 %v2398, %v2397
    %v2402 = vpack.c.bf16 %v2400, %v2399
    %2403 = vrot.lane.b32.xlu0 %v1728, 40
    %v2404 = vpop.permute.xlu0 %2403
    %2405 = vrot.lane.b32.xlu0 %v1729, 40
    %v2406 = vpop.permute.xlu0 %2405
    %v2410 = vsel %vm367, %v2401, 0
    %v2413 = vsel %vm367, %v2402, 0
    %2415 = vmatprep.subr.bf16.mxu0 0
    %2416 = vmatpush1.bf16.msra.mxu0 %v2404
    %2417 = vmatprep.subr.bf16.mxu0 0
    %2418 = vmatpush1.bf16.msra.mxu0 %v2406
    %2419 = vmatprep.subr.bf16.mxu0 0
    %2420 = vmatpush1.bf16.msra.mxu0 0
    %2421 = vmatprep.subr.bf16.mxu0 0
    %2422 = vmatpush1.bf16.msra.mxu0 0
    %2423 = vmatprep.subr.bf16.mxu0 0
    %2424 = vmatpush1.bf16.msra.mxu0 0
    %2425 = vmatprep.subr.bf16.mxu0 0
    %2426 = vmatpush1.bf16.msra.mxu0 0
    %2427 = vmatprep.subr.bf16.mxu0 0
    %2428 = vmatpush1.bf16.msra.mxu0 0
    %2429 = vmatprep.subr.bf16.mxu0 0
    %2430 = vmatpush1.bf16.msra.mxu0 0
    %2431 = vmatprep.subr.bf16.mxu0 0
    %2432 = vmatpush1.bf16.msra.mxu0 0
    %2433 = vmatprep.subr.bf16.mxu0 0
    %2434 = vmatpush1.bf16.msra.mxu0 0
    %2435 = vmatprep.subr.bf16.mxu0 0
    %2436 = vmatpush1.bf16.msra.mxu0 0
    %2437 = vmatprep.subr.bf16.mxu0 0
    %2438 = vmatpush1.bf16.msra.mxu0 0
    %2439 = vmatprep.subr.bf16.mxu0 0
    %2440 = vmatpush1.bf16.msra.mxu0 0
    %2441 = vmatprep.subr.bf16.mxu0 0
    %2442 = vmatpush1.bf16.msra.mxu0 0
    %2443 = vmatprep.subr.bf16.mxu0 0
    %2444 = vmatpush1.bf16.msra.mxu0 0
    %2445 = vmatprep.subr.bf16.mxu0 0
    %2446 = vmatpush1.bf16.msra.mxu0 0
    %2447 = vmatprep.mubr.bf16.mxu0 0
    %2448 = vmatmul.mubr.bf16.gmra.mrb[0].mxu0 %v2410
    %v2449 = vpop.f32.mrb[0].mxu0
    %v2450 = vadd.f32 0.0, %v2449
    %v2451 = vpop.f32.mrb[0].mxu0
    %v2452 = vpop.f32.mrb[0].mxu0
    %v2453 = vadd.f32 0.0, %v2452
    %v2454 = vpop.f32.mrb[0].mxu0
    %2455 = vmatprep.mubr.bf16.mxu0 0
    %2456 = vmatmul.mubr.bf16.gmra.mrb[0].mxu0 %v2413
    %v2457 = vpop.f32.mrb[0].mxu0
    %v2458 = vadd.f32 0.0, %v2457
    %v2459 = vpop.f32.mrb[0].mxu0
    %v2460 = vpop.f32.mrb[0].mxu0
    %v2461 = vadd.f32 0.0, %v2460
    %v2462 = vpop.f32.mrb[0].mxu0
    %2463 = vdwg.mxu0
    %2468 = vrot.lane.b32.xlu0 %v2082, 8
    %v2469 = vpop.permute.xlu0 %2468
    %2470 = vrot.lane.b32.xlu0 %v2085, 8
    %v2471 = vpop.permute.xlu0 %2470
    %2472 = vrot.lane.b32.xlu0 %v2090, 8
    %v2473 = vpop.permute.xlu0 %2472
    %2474 = vrot.lane.b32.xlu0 %v2093, 8
    %v2475 = vpop.permute.xlu0 %2474
    %2484 = vrot.lane.b32.xlu0 %v2266, 16
    %v2485 = vpop.permute.xlu0 %2484
    %2486 = vrot.lane.b32.xlu0 %v2269, 16
    %v2487 = vpop.permute.xlu0 %2486
    %2488 = vrot.lane.b32.xlu0 %v2274, 16
    %v2489 = vpop.permute.xlu0 %2488
    %2490 = vrot.lane.b32.xlu0 %v2277, 16
    %v2491 = vpop.permute.xlu0 %2490
    %2500 = vrot.lane.b32.xlu0 %v2450, 24
    %v2501 = vpop.permute.xlu0 %2500
    %2502 = vrot.lane.b32.xlu0 %v2453, 24
    %v2503 = vpop.permute.xlu0 %2502
    %2504 = vrot.lane.b32.xlu0 %v2458, 24
    %v2505 = vpop.permute.xlu0 %2504
    %2506 = vrot.lane.b32.xlu0 %v2461, 24
    %v2507 = vpop.permute.xlu0 %2506
    %v2512 = vsel %vm436, %v1898, %v2469
    %v2513 = vsel %vm436, %v1901, %v2471
    %v2514 = vsel %vm436, %v1906, %v2473
    %v2515 = vsel %vm436, %v1909, %v2475
    %v2516 = vsel %vm1217, %v2512, %v2485
    %v2517 = vsel %vm1217, %v2513, %v2487
    %v2518 = vsel %vm1217, %v2514, %v2489
    %v2519 = vsel %vm1217, %v2515, %v2491
    %v2520 = vsel %vm1222, %v2516, %v2501
    %v2521 = vsel %vm1222, %v2517, %v2503
    %v2522 = vsel %vm1222, %v2518, %v2505
    %v2523 = vsel %vm1222, %v2519, %v2507
    %v2524 = vpack.c.bf16 %v2521, %v2520
    %v2525 = vpack.c.bf16 %v2523, %v2522
    %v2527 = vlaneseq
    %v2528 = vshrl.u32 %v2527, 7
    %v2529 = vsub.s32 0, %v2528
    %v2530 = vrot.slane %v1727, %v2529
    %v2536 = vunpack.c.l.b16 %v1722
    %v2537 = vunpack.c.l.b16 %v1723
    %v2538 = vunpack.c.l.b16 %v1724
    %v2539 = vunpack.c.l.b16 %v1725
    %v2540 = vpack.c.b16 %v2537, %v2536
    %v2541 = vpack.c.b16 %v2539, %v2538
    %v2545 = vsel %vm367, %v2524, 0
    %v2548 = vsel %vm367, %v2525, 0
    %2550 = vmatprep.subr.bf16.mxu0 0
    %2551 = vmatpush1.bf16.msra.mxu0 %v2540
    %2552 = vmatprep.subr.bf16.mxu0 0
    %2553 = vmatpush1.bf16.msra.mxu0 %v2541
    %2554 = vmatprep.subr.bf16.mxu0 0
    %2555 = vmatpush1.bf16.msra.mxu0 0
    %2556 = vmatprep.subr.bf16.mxu0 0
    %2557 = vmatpush1.bf16.msra.mxu0 0
    %2558 = vmatprep.subr.bf16.mxu0 0
    %2559 = vmatpush1.bf16.msra.mxu0 0
    %2560 = vmatprep.subr.bf16.mxu0 0
    %2561 = vmatpush1.bf16.msra.mxu0 0
    %2562 = vmatprep.subr.bf16.mxu0 0
    %2563 = vmatpush1.bf16.msra.mxu0 0
    %2564 = vmatprep.subr.bf16.mxu0 0
    %2565 = vmatpush1.bf16.msra.mxu0 0
    %2566 = vmatprep.subr.bf16.mxu0 0
    %2567 = vmatpush1.bf16.msra.mxu0 0
    %2568 = vmatprep.subr.bf16.mxu0 0
    %2569 = vmatpush1.bf16.msra.mxu0 0
    %2570 = vmatprep.subr.bf16.mxu0 0
    %2571 = vmatpush1.bf16.msra.mxu0 0
    %2572 = vmatprep.subr.bf16.mxu0 0
    %2573 = vmatpush1.bf16.msra.mxu0 0
    %2574 = vmatprep.subr.bf16.mxu0 0
    %2575 = vmatpush1.bf16.msra.mxu0 0
    %2576 = vmatprep.subr.bf16.mxu0 0
    %2577 = vmatpush1.bf16.msra.mxu0 0
    %2578 = vmatprep.subr.bf16.mxu0 0
    %2579 = vmatpush1.bf16.msra.mxu0 0
    %2580 = vmatprep.subr.bf16.mxu0 0
    %2581 = vmatpush1.bf16.msra.mxu0 0
    %2582 = vmatprep.mubr.bf16.mxu0 0
    %2583 = vmatmul.mubr.bf16.gmra.mrb[0].mxu0 %v2545
    %v2584 = vpop.f32.mrb[0].mxu0
    %v2585 = vadd.f32 %v2530, %v2584
    %v2586 = vpop.f32.mrb[0].mxu0
    %v2587 = vpop.f32.mrb[0].mxu0
    %v2588 = vadd.f32 %v2530, %v2587
    %v2589 = vpop.f32.mrb[0].mxu0
    %2590 = vmatprep.mubr.bf16.mxu0 0
    %2591 = vmatmul.mubr.bf16.gmra.mrb[0].mxu0 %v2548
    %v2592 = vpop.f32.mrb[0].mxu0
    %v2593 = vadd.f32 %v2530, %v2592
    %v2594 = vpop.f32.mrb[0].mxu0
    %v2595 = vpop.f32.mrb[0].mxu0
    %v2596 = vadd.f32 %v2530, %v2595
    %v2597 = vpop.f32.mrb[0].mxu0
    %2598 = vdwg.mxu0
    %v2599 = vadd.f32 %v1635, %v2585
    %v2600 = vadd.f32 %v1636, %v2588
    %v2601 = vadd.f32 %v1637, %v2593
    %v2602 = vadd.f32 %v1638, %v2596
    %s2603 = scalar_lea.vmem %s27, 1
    %v2604 = vld [vmem:[%s2603] sm:$0x1]
    %s2605 = scalar_lea.vmem %s29, 1
    %v2606 = vld [vmem:[%s2605] sm:$0x1]
    %v2607 = vsel %vm367, %v2599, 0.0
    %2608 = vadd.xlane.f32.xlu0 %v2607
    %v2609 = vpop.xlane.xlu0 %2608
    %v2610 = vsel %vm367, %v2600, 0.0
    %2611 = vadd.xlane.f32.xlu0 %v2610
    %v2612 = vpop.xlane.xlu0 %2611
    %v2613 = vsel %vm367, %v2601, 0.0
    %2614 = vadd.xlane.f32.xlu0 %v2613
    %v2615 = vpop.xlane.xlu0 %2614
    %v2616 = vsel %vm367, %v2602, 0.0
    %2617 = vadd.xlane.f32.xlu0 %v2616
    %v2618 = vpop.xlane.xlu0 %2617
    %v2619 = vmul.f32 %v2609, %v1320
    %v2620 = vmul.f32 %v2612, %v1320
    %v2621 = vmul.f32 %v2615, %v1320
    %v2622 = vmul.f32 %v2618, %v1320
    %v2623 = vsub.f32 %v2599, %v2619
    %v2624 = vsub.f32 %v2600, %v2620
    %v2625 = vsub.f32 %v2601, %v2621
    %v2626 = vsub.f32 %v2602, %v2622
    %v2627 = vmul.f32 %v2623, %v2623
    %v2628 = vmul.f32 %v2624, %v2624
    %v2629 = vmul.f32 %v2625, %v2625
    %v2630 = vmul.f32 %v2626, %v2626
    %v2631 = vsel %vm367, %v2627, 0.0
    %2632 = vadd.xlane.f32.xlu0 %v2631
    %v2633 = vpop.xlane.xlu0 %2632
    %v2634 = vsel %vm367, %v2628, 0.0
    %2635 = vadd.xlane.f32.xlu0 %v2634
    %v2636 = vpop.xlane.xlu0 %2635
    %v2637 = vsel %vm367, %v2629, 0.0
    %2638 = vadd.xlane.f32.xlu0 %v2637
    %v2639 = vpop.xlane.xlu0 %2638
    %v2640 = vsel %vm367, %v2630, 0.0
    %2641 = vadd.xlane.f32.xlu0 %v2640
    %v2642 = vpop.xlane.xlu0 %2641
    %v2643 = vmul.f32 %v2633, %v1320
    %v2644 = vmul.f32 %v2636, %v1320
    %v2645 = vmul.f32 %v2639, %v1320
    %v2646 = vmul.f32 %v2642, %v1320
    %v2647 = vadd.f32 %v2643, 1e-05
    %v2648 = vadd.f32 %v2644, 1e-05
    %v2649 = vadd.f32 %v2645, 1e-05
    %v2650 = vadd.f32 %v2646, 1e-05
    %v2651 = vrsqrt.pop %v2647
    %v2652 = vrsqrt.pop %v2648
    %v2653 = vrsqrt.pop %v2649
    %v2654 = vrsqrt.pop %v2650
    %v2655 = vmul.f32 %v2623, %v2651
    %v2656 = vmul.f32 %v2624, %v2652
    %v2657 = vmul.f32 %v2625, %v2653
    %v2658 = vmul.f32 %v2626, %v2654
    %v2660 = vlaneseq
    %v2661 = vshrl.u32 %v2660, 7
    %v2662 = vsub.s32 0, %v2661
    %v2663 = vrot.slane %v2604, %v2662
    %v2665 = vmul.f32 %v2655, %v2663
    %v2666 = vmul.f32 %v2656, %v2663
    %v2667 = vmul.f32 %v2657, %v2663
    %v2668 = vmul.f32 %v2658, %v2663
    %v2670 = vlaneseq
    %v2671 = vshrl.u32 %v2670, 7
    %v2672 = vsub.s32 0, %v2671
    %v2673 = vrot.slane %v2606, %v2672
    %v2675 = vadd.f32 %v2665, %v2673
    %v2676 = vadd.f32 %v2666, %v2673
    %v2677 = vadd.f32 %v2667, %v2673
    %v2678 = vadd.f32 %v2668, %v2673
    %v2679 = vpack.c.bf16 %v2676, %v2675
    %v2680 = vpack.c.bf16 %v2678, %v2677
    %s2681 = scalar_lea.vmem %s31, 16
    %v2682 = vld [vmem:[%s2681] sm:$0xf]
    %v2683 = vld [vmem:[%s2681 + $0x4] sm:$0xf]
    %v2684 = vld [vmem:[%s2681 + $0x8] sm:$0xf]
    %v2685 = vld [vmem:[%s2681 + $0xc] sm:$0xf]
    %s2686 = scalar_lea.vmem %s33, 1
    %v2687 = vld [vmem:[%s2686] sm:$0x1]
    %v2689 = vlaneseq
    %v2690 = vshrl.u32 %v2689, 7
    %v2691 = vsub.s32 0, %v2690
    %v2692 = vrot.slane %v2687, %v2691
    %v2698 = vunpack.c.l.b16 %v2682
    %v2699 = vunpack.c.l.b16 %v2683
    %v2700 = vunpack.c.l.b16 %v2684
    %v2701 = vunpack.c.l.b16 %v2685
    %v2702 = vpack.c.b16 %v2699, %v2698
    %v2703 = vpack.c.b16 %v2701, %v2700
    %v2707 = vsel %vm367, %v2679, 0
    %v2710 = vsel %vm367, %v2680, 0
    %2712 = vmatprep.subr.bf16.mxu0 0
    %2713 = vmatpush1.bf16.msra.mxu0 %v2702
    %2714 = vmatprep.subr.bf16.mxu0 0
    %2715 = vmatpush1.bf16.msra.mxu0 %v2703
    %2716 = vmatprep.subr.bf16.mxu0 0
    %2717 = vmatpush1.bf16.msra.mxu0 0
    %2718 = vmatprep.subr.bf16.mxu0 0
    %2719 = vmatpush1.bf16.msra.mxu0 0
    %2720 = vmatprep.subr.bf16.mxu0 0
    %2721 = vmatpush1.bf16.msra.mxu0 0
    %2722 = vmatprep.subr.bf16.mxu0 0
    %2723 = vmatpush1.bf16.msra.mxu0 0
    %2724 = vmatprep.subr.bf16.mxu0 0
    %2725 = vmatpush1.bf16.msra.mxu0 0
    %2726 = vmatprep.subr.bf16.mxu0 0
    %2727 = vmatpush1.bf16.msra.mxu0 0
    %2728 = vmatprep.subr.bf16.mxu0 0
    %2729 = vmatpush1.bf16.msra.mxu0 0
    %2730 = vmatprep.subr.bf16.mxu0 0
    %2731 = vmatpush1.bf16.msra.mxu0 0
    %2732 = vmatprep.subr.bf16.mxu0 0
    %2733 = vmatpush1.bf16.msra.mxu0 0
    %2734 = vmatprep.subr.bf16.mxu0 0
    %2735 = vmatpush1.bf16.msra.mxu0 0
    %2736 = vmatprep.subr.bf16.mxu0 0
    %2737 = vmatpush1.bf16.msra.mxu0 0
    %2738 = vmatprep.subr.bf16.mxu0 0
    %2739 = vmatpush1.bf16.msra.mxu0 0
    %2740 = vmatprep.subr.bf16.mxu0 0
    %2741 = vmatpush1.bf16.msra.mxu0 0
    %2742 = vmatprep.subr.bf16.mxu0 0
    %2743 = vmatpush1.bf16.msra.mxu0 0
    %2744 = vmatprep.mubr.bf16.mxu0 0
    %2745 = vmatmul.mubr.bf16.gmra.mrb[0].mxu0 %v2707
    %v2746 = vpop.f32.mrb[0].mxu0
    %v2747 = vadd.f32 %v2692, %v2746
    %v2748 = vpop.f32.mrb[0].mxu0
    %v2749 = vpop.f32.mrb[0].mxu0
    %v2750 = vadd.f32 %v2692, %v2749
    %v2751 = vpop.f32.mrb[0].mxu0
    %2752 = vmatprep.mubr.bf16.mxu0 0
    %2753 = vmatmul.mubr.bf16.gmra.mrb[0].mxu0 %v2710
    %v2754 = vpop.f32.mrb[0].mxu0
    %v2755 = vadd.f32 %v2692, %v2754
    %v2756 = vpop.f32.mrb[0].mxu0
    %v2757 = vpop.f32.mrb[0].mxu0
    %v2758 = vadd.f32 %v2692, %v2757
    %v2759 = vpop.f32.mrb[0].mxu0
    %2760 = vdwg.mxu0
    %v2761 = vmul.f32 %v2747, 0.5
    %v2762 = vmul.f32 %v2750, 0.5
    %v2763 = vmul.f32 %v2755, 0.5
    %v2764 = vmul.f32 %v2758, 0.5
    %v2765 = vmul.f32 %v2747, 0.70710677
    %v2766 = vmul.f32 %v2750, 0.70710677
    %v2767 = vmul.f32 %v2755, 0.70710677
    %v2768 = vmul.f32 %v2758, 0.70710677
    %v2769 = verf.f32.pop %v2765
    %v2770 = verf.f32.pop %v2766
    %v2771 = verf.f32.pop %v2767
    %v2772 = verf.f32.pop %v2768
    %v2773 = vadd.f32 %v2769, 1.0
    %v2774 = vadd.f32 %v2770, 1.0
    %v2775 = vadd.f32 %v2771, 1.0
    %v2776 = vadd.f32 %v2772, 1.0
    %v2777 = vmul.f32 %v2761, %v2773
    %v2778 = vmul.f32 %v2762, %v2774
    %v2779 = vmul.f32 %v2763, %v2775
    %v2780 = vmul.f32 %v2764, %v2776
    %v2781 = vpack.c.bf16 %v2778, %v2777
    %v2782 = vpack.c.bf16 %v2780, %v2779
    %s2783 = scalar_lea.vmem %s35, 16
    %v2784 = vld [vmem:[%s2783] sm:$0xf]
    %v2785 = vld [vmem:[%s2783 + $0x4] sm:$0xf]
    %v2786 = vld [vmem:[%s2783 + $0x8] sm:$0xf]
    %v2787 = vld [vmem:[%s2783 + $0xc] sm:$0xf]
    %s2788 = scalar_lea.vmem %s37, 1
    %v2789 = vld [vmem:[%s2788] sm:$0x1]
    %v2791 = vlaneseq
    %v2792 = vshrl.u32 %v2791, 7
    %v2793 = vsub.s32 0, %v2792
    %v2794 = vrot.slane %v2789, %v2793
    %v2800 = vunpack.c.l.b16 %v2784
    %v2801 = vunpack.c.l.b16 %v2785
    %v2802 = vunpack.c.l.b16 %v2786
    %v2803 = vunpack.c.l.b16 %v2787
    %v2804 = vpack.c.b16 %v2801, %v2800
    %v2805 = vpack.c.b16 %v2803, %v2802
    %v2809 = vsel %vm367, %v2781, 0
    %v2812 = vsel %vm367, %v2782, 0
    %2814 = vmatprep.subr.bf16.mxu0 0
    %2815 = vmatpush1.bf16.msra.mxu0 %v2804
    %2816 = vmatprep.subr.bf16.mxu0 0
    %2817 = vmatpush1.bf16.msra.mxu0 %v2805
    %2818 = vmatprep.subr.bf16.mxu0 0
    %2819 = vmatpush1.bf16.msra.mxu0 0
    %2820 = vmatprep.subr.bf16.mxu0 0
    %2821 = vmatpush1.bf16.msra.mxu0 0
    %2822 = vmatprep.subr.bf16.mxu0 0
    %2823 = vmatpush1.bf16.msra.mxu0 0
    %2824 = vmatprep.subr.bf16.mxu0 0
    %2825 = vmatpush1.bf16.msra.mxu0 0
    %2826 = vmatprep.subr.bf16.mxu0 0
    %2827 = vmatpush1.bf16.msra.mxu0 0
    %2828 = vmatprep.subr.bf16.mxu0 0
    %2829 = vmatpush1.bf16.msra.mxu0 0
    %2830 = vmatprep.subr.bf16.mxu0 0
    %2831 = vmatpush1.bf16.msra.mxu0 0
    %2832 = vmatprep.subr.bf16.mxu0 0
    %2833 = vmatpush1.bf16.msra.mxu0 0
    %2834 = vmatprep.subr.bf16.mxu0 0
    %2835 = vmatpush1.bf16.msra.mxu0 0
    %2836 = vmatprep.subr.bf16.mxu0 0
    %2837 = vmatpush1.bf16.msra.mxu0 0
    %2838 = vmatprep.subr.bf16.mxu0 0
    %2839 = vmatpush1.bf16.msra.mxu0 0
    %2840 = vmatprep.subr.bf16.mxu0 0
    %2841 = vmatpush1.bf16.msra.mxu0 0
    %2842 = vmatprep.subr.bf16.mxu0 0
    %2843 = vmatpush1.bf16.msra.mxu0 0
    %2844 = vmatprep.subr.bf16.mxu0 0
    %2845 = vmatpush1.bf16.msra.mxu0 0
    %2846 = vmatprep.mubr.bf16.mxu0 0
    %2847 = vmatmul.mubr.bf16.gmra.mrb[0].mxu0 %v2809
    %v2848 = vpop.f32.mrb[0].mxu0
    %v2849 = vadd.f32 %v2794, %v2848
    %v2850 = vpop.f32.mrb[0].mxu0
    %v2851 = vpop.f32.mrb[0].mxu0
    %v2852 = vadd.f32 %v2794, %v2851
    %v2853 = vpop.f32.mrb[0].mxu0
    %2854 = vmatprep.mubr.bf16.mxu0 0
    %2855 = vmatmul.mubr.bf16.gmra.mrb[0].mxu0 %v2812
    %v2856 = vpop.f32.mrb[0].mxu0
    %v2857 = vadd.f32 %v2794, %v2856
    %v2858 = vpop.f32.mrb[0].mxu0
    %v2859 = vpop.f32.mrb[0].mxu0
    %v2860 = vadd.f32 %v2794, %v2859
    %v2861 = vpop.f32.mrb[0].mxu0
    %2862 = vdwg.mxu0
    %v2863 = vadd.f32 %v2675, %v2849
    %v2864 = vadd.f32 %v2676, %v2852
    %v2865 = vadd.f32 %v2677, %v2857
    %v2866 = vadd.f32 %v2678, %v2860
    %s2867 = scalar_lea.vmem %s39, 1
    %v2868 = vld [vmem:[%s2867] sm:$0x1]
    %s2869 = scalar_lea.vmem %s41, 1
    %v2870 = vld [vmem:[%s2869] sm:$0x1]
    %v2871 = vsel %vm367, %v2863, 0.0
    %2872 = vadd.xlane.f32.xlu0 %v2871
    %v2873 = vpop.xlane.xlu0 %2872
    %v2874 = vsel %vm367, %v2864, 0.0
    %2875 = vadd.xlane.f32.xlu0 %v2874
    %v2876 = vpop.xlane.xlu0 %2875
    %v2877 = vsel %vm367, %v2865, 0.0
    %2878 = vadd.xlane.f32.xlu0 %v2877
    %v2879 = vpop.xlane.xlu0 %2878
    %v2880 = vsel %vm367, %v2866, 0.0
    %2881 = vadd.xlane.f32.xlu0 %v2880
    %v2882 = vpop.xlane.xlu0 %2881
    %v2883 = vmul.f32 %v2873, %v1320
    %v2884 = vmul.f32 %v2876, %v1320
    %v2885 = vmul.f32 %v2879, %v1320
    %v2886 = vmul.f32 %v2882, %v1320
    %v2887 = vsub.f32 %v2863, %v2883
    %v2888 = vsub.f32 %v2864, %v2884
    %v2889 = vsub.f32 %v2865, %v2885
    %v2890 = vsub.f32 %v2866, %v2886
    %v2891 = vmul.f32 %v2887, %v2887
    %v2892 = vmul.f32 %v2888, %v2888
    %v2893 = vmul.f32 %v2889, %v2889
    %v2894 = vmul.f32 %v2890, %v2890
    %v2895 = vsel %vm367, %v2891, 0.0
    %2896 = vadd.xlane.f32.xlu0 %v2895
    %v2897 = vpop.xlane.xlu0 %2896
    %v2898 = vsel %vm367, %v2892, 0.0
    %2899 = vadd.xlane.f32.xlu0 %v2898
    %v2900 = vpop.xlane.xlu0 %2899
    %v2901 = vsel %vm367, %v2893, 0.0
    %2902 = vadd.xlane.f32.xlu0 %v2901
    %v2903 = vpop.xlane.xlu0 %2902
    %v2904 = vsel %vm367, %v2894, 0.0
    %2905 = vadd.xlane.f32.xlu0 %v2904
    %v2906 = vpop.xlane.xlu0 %2905
    %v2907 = vmul.f32 %v2897, %v1320
    %v2908 = vmul.f32 %v2900, %v1320
    %v2909 = vmul.f32 %v2903, %v1320
    %v2910 = vmul.f32 %v2906, %v1320
    %v2911 = vadd.f32 %v2907, 1e-05
    %v2912 = vadd.f32 %v2908, 1e-05
    %v2913 = vadd.f32 %v2909, 1e-05
    %v2914 = vadd.f32 %v2910, 1e-05
    %v2915 = vrsqrt.pop %v2911
    %v2916 = vrsqrt.pop %v2912
    %v2917 = vrsqrt.pop %v2913
    %v2918 = vrsqrt.pop %v2914
    %v2919 = vmul.f32 %v2887, %v2915
    %v2920 = vmul.f32 %v2888, %v2916
    %v2921 = vmul.f32 %v2889, %v2917
    %v2922 = vmul.f32 %v2890, %v2918
    %v2924 = vlaneseq
    %v2925 = vshrl.u32 %v2924, 7
    %v2926 = vsub.s32 0, %v2925
    %v2927 = vrot.slane %v2868, %v2926
    %v2929 = vmul.f32 %v2919, %v2927
    %v2930 = vmul.f32 %v2920, %v2927
    %v2931 = vmul.f32 %v2921, %v2927
    %v2932 = vmul.f32 %v2922, %v2927
    %v2934 = vlaneseq
    %v2935 = vshrl.u32 %v2934, 7
    %v2936 = vsub.s32 0, %v2935
    %v2937 = vrot.slane %v2870, %v2936
    %v2939 = vadd.f32 %v2929, %v2937
    %v2940 = vadd.f32 %v2930, %v2937
    %v2941 = vadd.f32 %v2931, %v2937
    %v2942 = vadd.f32 %v2932, %v2937
    %v2943 = vld [vmem:[%s43] sm:$0x1]
    %v2944 = vld [vmem:[%s45] sm:$0x1]
    %v2945 = vsel %vm367, %v2939, 0.0
    %2946 = vadd.xlane.f32.xlu0 %v2945
    %v2947 = vpop.xlane.xlu0 %2946
    %v2948 = vsel %vm367, %v2940, 0.0
    %2949 = vadd.xlane.f32.xlu0 %v2948
    %v2950 = vpop.xlane.xlu0 %2949
    %v2951 = vsel %vm367, %v2941, 0.0
    %2952 = vadd.xlane.f32.xlu0 %v2951
    %v2953 = vpop.xlane.xlu0 %2952
    %v2954 = vsel %vm367, %v2942, 0.0
    %2955 = vadd.xlane.f32.xlu0 %v2954
    %v2956 = vpop.xlane.xlu0 %2955
    %v2957 = vmul.f32 %v2947, %v1320
    %v2958 = vmul.f32 %v2950, %v1320
    %v2959 = vmul.f32 %v2953, %v1320
    %v2960 = vmul.f32 %v2956, %v1320
    %v2961 = vsub.f32 %v2939, %v2957
    %v2962 = vsub.f32 %v2940, %v2958
    %v2963 = vsub.f32 %v2941, %v2959
    %v2964 = vsub.f32 %v2942, %v2960
    %v2965 = vmul.f32 %v2961, %v2961
    %v2966 = vmul.f32 %v2962, %v2962
    %v2967 = vmul.f32 %v2963, %v2963
    %v2968 = vmul.f32 %v2964, %v2964
    %v2969 = vsel %vm367, %v2965, 0.0
    %2970 = vadd.xlane.f32.xlu0 %v2969
    %v2971 = vpop.xlane.xlu0 %2970
    %v2972 = vsel %vm367, %v2966, 0.0
    %2973 = vadd.xlane.f32.xlu0 %v2972
    %v2974 = vpop.xlane.xlu0 %2973
    %v2975 = vsel %vm367, %v2967, 0.0
    %2976 = vadd.xlane.f32.xlu0 %v2975
    %v2977 = vpop.xlane.xlu0 %2976
    %v2978 = vsel %vm367, %v2968, 0.0
    %2979 = vadd.xlane.f32.xlu0 %v2978
    %v2980 = vpop.xlane.xlu0 %2979
    %v2981 = vmul.f32 %v2971, %v1320
    %v2982 = vmul.f32 %v2974, %v1320
    %v2983 = vmul.f32 %v2977, %v1320
    %v2984 = vmul.f32 %v2980, %v1320
    %v2985 = vadd.f32 %v2981, 1e-05
    %v2986 = vadd.f32 %v2982, 1e-05
    %v2987 = vadd.f32 %v2983, 1e-05
    %v2988 = vadd.f32 %v2984, 1e-05
    %v2989 = vrsqrt.pop %v2985
    %v2990 = vrsqrt.pop %v2986
    %v2991 = vrsqrt.pop %v2987
    %v2992 = vrsqrt.pop %v2988
    %v2993 = vmul.f32 %v2961, %v2989
    %v2994 = vmul.f32 %v2962, %v2990
    %v2995 = vmul.f32 %v2963, %v2991
    %v2996 = vmul.f32 %v2964, %v2992
    %v2998 = vlaneseq
    %v2999 = vshrl.u32 %v2998, 7
    %v3000 = vsub.s32 0, %v2999
    %v3001 = vrot.slane %v2943, %v3000
    %v3003 = vmul.f32 %v2993, %v3001
    %v3004 = vmul.f32 %v2994, %v3001
    %v3005 = vmul.f32 %v2995, %v3001
    %v3006 = vmul.f32 %v2996, %v3001
    %v3008 = vlaneseq
    %v3009 = vshrl.u32 %v3008, 7
    %v3010 = vsub.s32 0, %v3009
    %v3011 = vrot.slane %v2944, %v3010
    %v3013 = vadd.f32 %v3003, %v3011
    %v3014 = vadd.f32 %v3004, %v3011
    %v3015 = vadd.f32 %v3005, %v3011
    %v3016 = vadd.f32 %v3006, %v3011
    %v3017 = vpack.c.bf16 %v3014, %v3013
    %v3018 = vpack.c.bf16 %v3016, %v3015
    %v3019 = vld [vmem:[%s7] sm:$0xf]
    %v3020 = vld [vmem:[%s7 + $0x4] sm:$0xf]
    %v3021 = vld [vmem:[%s7 + $0x8] sm:$0xf]
    %v3022 = vld [vmem:[%s7 + $0xc] sm:$0xf]
    %v3023 = vld [vmem:[%s11] sm:$0xf]
    %v3024 = vld [vmem:[%s11 + $0x4] sm:$0x3]
    %v3025 = vld [vmem:[%s9] sm:$0xff]
    %v3026 = vld [vmem:[%s9 + $0x8] sm:$0xff]
    %v3027 = vld [vmem:[%s9 + $0x10] sm:$0xff]
    %v3028 = vld [vmem:[%s9 + $0x18] sm:$0xff]
    %v3033 = vunpack.c.l.b16 %v3019
    %v3034 = vunpack.c.l.b16 %v3020
    %v3035 = vunpack.c.l.b16 %v3021
    %v3036 = vunpack.c.l.b16 %v3022
    %v3037 = vpack.c.b16 %v3034, %v3033
    %v3038 = vpack.c.b16 %v3036, %v3035
    %v3041 = vunpack.c.l.b16 %v3023
    %v3042 = vunpack.c.l.b16 %v3024
    %v3043 = vpack.c.b16 %v3042, %v3041
    %v3045 = vsel %vm278, %v3037, 0
    %v3048 = vsel %vm278, %v3038, 0
    %v3051 = vsel %vm285, %v3043, 0
    %3053 = vmatprep.subr.bf16.mxu0 0
    %3054 = vmatpush1.bf16.msra.mxu0 %v3051
    %3055 = vmatprep.subr.bf16.mxu0 0
    %3056 = vmatpush1.bf16.msra.mxu0 0
    %3057 = vmatprep.subr.bf16.mxu0 0
    %3058 = vmatpush1.bf16.msra.mxu0 0
    %3059 = vmatprep.subr.bf16.mxu0 0
    %3060 = vmatpush1.bf16.msra.mxu0 0
    %3061 = vmatprep.subr.bf16.mxu0 0
    %3062 = vmatpush1.bf16.msra.mxu0 0
    %3063 = vmatprep.subr.bf16.mxu0 0
    %3064 = vmatpush1.bf16.msra.mxu0 0
    %3065 = vmatprep.subr.bf16.mxu0 0
    %3066 = vmatpush1.bf16.msra.mxu0 0
    %3067 = vmatprep.subr.bf16.mxu0 0
    %3068 = vmatpush1.bf16.msra.mxu0 0
    %3069 = vmatprep.subr.bf16.mxu0 0
    %3070 = vmatpush1.bf16.msra.mxu0 0
    %3071 = vmatprep.subr.bf16.mxu0 0
    %3072 = vmatpush1.bf16.msra.mxu0 0
    %3073 = vmatprep.subr.bf16.mxu0 0
    %3074 = vmatpush1.bf16.msra.mxu0 0
    %3075 = vmatprep.subr.bf16.mxu0 0
    %3076 = vmatpush1.bf16.msra.mxu0 0
    %3077 = vmatprep.subr.bf16.mxu0 0
    %3078 = vmatpush1.bf16.msra.mxu0 0
    %3079 = vmatprep.subr.bf16.mxu0 0
    %3080 = vmatpush1.bf16.msra.mxu0 0
    %3081 = vmatprep.subr.bf16.mxu0 0
    %3082 = vmatpush1.bf16.msra.mxu0 0
    %3083 = vmatprep.subr.bf16.mxu0 0
    %3084 = vmatpush1.bf16.msra.mxu0 0
    %3085 = vmatprep.mubr.bf16.mxu0 0
    %3086 = vmatmul.mubr.bf16.gmra.mrb[0].mxu0 %v3045
    %v3087 = vpop.f32.mrb[0].mxu0
    %v3088 = vadd.f32 %v3025, %v3087
    %v3089 = vpop.f32.mrb[0].mxu0
    %v3090 = vpop.f32.mrb[0].mxu0
    %v3091 = vadd.f32 %v3026, %v3090
    %v3092 = vpop.f32.mrb[0].mxu0
    %3093 = vmatprep.mubr.bf16.mxu0 0
    %3094 = vmatmul.mubr.bf16.gmra.mrb[0].mxu0 %v3048
    %v3095 = vpop.f32.mrb[0].mxu0
    %v3096 = vadd.f32 %v3027, %v3095
    %v3097 = vpop.f32.mrb[0].mxu0
    %v3098 = vpop.f32.mrb[0].mxu0
    %v3099 = vadd.f32 %v3028, %v3098
    %v3100 = vpop.f32.mrb[0].mxu0
    %3101 = vdwg.mxu0
    %v3102 = vld [vmem:[%s15] sm:$0xff]
    %v3103 = vld [vmem:[%s15 + $0x8] sm:$0xff]
    %v3104 = vld [vmem:[%s15 + $0x10] sm:$0xff]
    %v3105 = vld [vmem:[%s15 + $0x18] sm:$0xff]
    %v3106 = vld [vmem:[%s17] sm:$0xff]
    %v3107 = vld [vmem:[%s17 + $0x8] sm:$0xff]
    %v3108 = vld [vmem:[%s17 + $0x10] sm:$0xff]
    %v3109 = vld [vmem:[%s17 + $0x18] sm:$0xff]
    %v3110 = vpack.c.bf16 %v3091, %v3088
    %v3111 = vpack.c.bf16 %v3099, %v3096
    %v3112 = vld [vmem:[%s47] sm:$0xf]
    %v3113 = vld [vmem:[%s47 + $0x4] sm:$0xf]
    %v3114 = vld [vmem:[%s47 + $0x8] sm:$0xf]
    %v3115 = vld [vmem:[%s47 + $0xc] sm:$0xf]
    %v3116 = vld [vmem:[%s49] sm:$0x1]
    %v3118 = vlaneseq
    %v3119 = vshrl.u32 %v3118, 7
    %v3120 = vsub.s32 0, %v3119
    %v3121 = vrot.slane %v3116, %v3120
    %v3127 = vunpack.c.l.b16 %v3112
    %v3128 = vunpack.c.l.b16 %v3113
    %v3129 = vunpack.c.l.b16 %v3114
    %v3130 = vunpack.c.l.b16 %v3115
    %v3131 = vpack.c.b16 %v3128, %v3127
    %v3132 = vpack.c.b16 %v3130, %v3129
    %v3136 = vsel %vm367, %v3110, 0
    %v3139 = vsel %vm367, %v3111, 0
    %3141 = vmatprep.subr.bf16.mxu0 0
    %3142 = vmatpush1.bf16.msra.mxu0 %v3131
    %3143 = vmatprep.subr.bf16.mxu0 0
    %3144 = vmatpush1.bf16.msra.mxu0 %v3132
    %3145 = vmatprep.subr.bf16.mxu0 0
    %3146 = vmatpush1.bf16.msra.mxu0 0
    %3147 = vmatprep.subr.bf16.mxu0 0
    %3148 = vmatpush1.bf16.msra.mxu0 0
    %3149 = vmatprep.subr.bf16.mxu0 0
    %3150 = vmatpush1.bf16.msra.mxu0 0
    %3151 = vmatprep.subr.bf16.mxu0 0
    %3152 = vmatpush1.bf16.msra.mxu0 0
    %3153 = vmatprep.subr.bf16.mxu0 0
    %3154 = vmatpush1.bf16.msra.mxu0 0
    %3155 = vmatprep.subr.bf16.mxu0 0
    %3156 = vmatpush1.bf16.msra.mxu0 0
    %3157 = vmatprep.subr.bf16.mxu0 0
    %3158 = vmatpush1.bf16.msra.mxu0 0
    %3159 = vmatprep.subr.bf16.mxu0 0
    %3160 = vmatpush1.bf16.msra.mxu0 0
    %3161 = vmatprep.subr.bf16.mxu0 0
    %3162 = vmatpush1.bf16.msra.mxu0 0
    %3163 = vmatprep.subr.bf16.mxu0 0
    %3164 = vmatpush1.bf16.msra.mxu0 0
    %3165 = vmatprep.subr.bf16.mxu0 0
    %3166 = vmatpush1.bf16.msra.mxu0 0
    %3167 = vmatprep.subr.bf16.mxu0 0
    %3168 = vmatpush1.bf16.msra.mxu0 0
    %3169 = vmatprep.subr.bf16.mxu0 0
    %3170 = vmatpush1.bf16.msra.mxu0 0
    %3171 = vmatprep.subr.bf16.mxu0 0
    %3172 = vmatpush1.bf16.msra.mxu0 0
    %3173 = vmatprep.mubr.bf16.mxu0 0
    %3174 = vmatmul.mubr.bf16.gmra.mrb[0].mxu0 %v3136
    %v3175 = vpop.f32.mrb[0].mxu0
    %v3176 = vadd.f32 %v3121, %v3175
    %v3177 = vpop.f32.mrb[0].mxu0
    %v3178 = vpop.f32.mrb[0].mxu0
    %v3179 = vadd.f32 %v3121, %v3178
    %v3180 = vpop.f32.mrb[0].mxu0
    %3181 = vmatprep.mubr.bf16.mxu0 0
    %3182 = vmatmul.mubr.bf16.gmra.mrb[0].mxu0 %v3139
    %v3183 = vpop.f32.mrb[0].mxu0
    %v3184 = vadd.f32 %v3121, %v3183
    %v3185 = vpop.f32.mrb[0].mxu0
    %v3186 = vpop.f32.mrb[0].mxu0
    %v3187 = vadd.f32 %v3121, %v3186
    %v3188 = vpop.f32.mrb[0].mxu0
    %3189 = vdwg.mxu0
    %v3190 = vld [vmem:[%s51] sm:$0xf]
    %v3191 = vld [vmem:[%s51 + $0x4] sm:$0xf]
    %v3192 = vld [vmem:[%s51 + $0x8] sm:$0xf]
    %v3193 = vld [vmem:[%s51 + $0xc] sm:$0xf]
    %v3194 = vld [vmem:[%s53] sm:$0x1]
    %v3195 = vpack.c.bf16 %v3179, %v3176
    %v3196 = vpack.c.bf16 %v3187, %v3184
    %3199 = vrot.lane.b32.xlu0 %v3195, 96
    %v3200 = vpop.permute.xlu0 %3199
    %3201 = vrot.lane.b32.xlu0 %v3196, 96
    %v3202 = vpop.permute.xlu0 %3201
    %v3204 = vsel %vm436, %v3195, 0
    %v3207 = vsel %vm436, %v3196, 0
    %v3210 = vsel %vm436, %v3200, 0
    %v3213 = vsel %vm436, %v3202, 0
    %3215 = vmatprep.subr.bf16.mxu0 0
    %3216 = vmatpush1.bf16.xpose.msra.mxu0 %v3210
    %3217 = vmatprep.subr.bf16.mxu0 0
    %3218 = vmatpush1.bf16.xpose.msra.mxu0 %v3213
    %3219 = vmatprep.subr.bf16.mxu0 0
    %3220 = vmatpush1.bf16.xpose.msra.mxu0 0
    %3221 = vmatprep.subr.bf16.mxu0 0
    %3222 = vmatpush1.bf16.xpose.msra.mxu0 0
    %3223 = vmatprep.subr.bf16.mxu0 0
    %3224 = vmatpush1.bf16.xpose.msra.mxu0 0
    %3225 = vmatprep.subr.bf16.mxu0 0
    %3226 = vmatpush1.bf16.xpose.msra.mxu0 0
    %3227 = vmatprep.subr.bf16.mxu0 0
    %3228 = vmatpush1.bf16.xpose.msra.mxu0 0
    %3229 = vmatprep.subr.bf16.mxu0 0
    %3230 = vmatpush1.bf16.xpose.msra.mxu0 0
    %3231 = vmatprep.subr.bf16.mxu0 0
    %3232 = vmatpush1.bf16.xpose.msra.mxu0 0
    %3233 = vmatprep.subr.bf16.mxu0 0
    %3234 = vmatpush1.bf16.xpose.msra.mxu0 0
    %3235 = vmatprep.subr.bf16.mxu0 0
    %3236 = vmatpush1.bf16.xpose.msra.mxu0 0
    %3237 = vmatprep.subr.bf16.mxu0 0
    %3238 = vmatpush1.bf16.xpose.msra.mxu0 0
    %3239 = vmatprep.subr.bf16.mxu0 0
    %3240 = vmatpush1.bf16.xpose.msra.mxu0 0
    %3241 = vmatprep.subr.bf16.mxu0 0
    %3242 = vmatpush1.bf16.xpose.msra.mxu0 0
    %3243 = vmatprep.subr.bf16.mxu0 0
    %3244 = vmatpush1.bf16.xpose.msra.mxu0 0
    %3245 = vmatprep.subr.bf16.mxu0 0
    %3246 = vmatpush1.bf16.xpose.msra.mxu0 0
    %3247 = vmatprep.mubr.bf16.mxu0 0
    %3248 = vmatmul.mubr.bf16.gmra.mrb[0].mxu0 %v3204
    %v3249 = vpop.f32.mrb[0].mxu0
    %v3250 = vadd.f32 0.0, %v3249
    %v3251 = vpop.f32.mrb[0].mxu0
    %v3252 = vpop.f32.mrb[0].mxu0
    %v3253 = vadd.f32 0.0, %v3252
    %v3254 = vpop.f32.mrb[0].mxu0
    %3255 = vmatprep.mubr.bf16.mxu0 0
    %3256 = vmatmul.mubr.bf16.gmra.mrb[0].mxu0 %v3207
    %v3257 = vpop.f32.mrb[0].mxu0
    %v3258 = vadd.f32 0.0, %v3257
    %v3259 = vpop.f32.mrb[0].mxu0
    %v3260 = vpop.f32.mrb[0].mxu0
    %v3261 = vadd.f32 0.0, %v3260
    %v3262 = vpop.f32.mrb[0].mxu0
    %3263 = vdwg.mxu0
    %v3264 = vmul.f32 %v3250, 0.35355338
    %v3265 = vmul.f32 %v3253, 0.35355338
    %v3266 = vmul.f32 %v3258, 0.35355338
    %v3267 = vmul.f32 %v3261, 0.35355338
    %v3268 = vadd.f32 %v3264, %v3102
    %v3269 = vadd.f32 %v3265, %v3103
    %v3270 = vadd.f32 %v3266, %v3104
    %v3271 = vadd.f32 %v3267, %v3105
    %v3272 = vsel %vm367, %v3268, -inf
    %3273 = vmax.xlane.f32.xlu0 %v3272
    %v3274 = vpop.xlane.xlu0 %3273
    %v3275 = vsel %vm367, %v3269, -inf
    %3276 = vmax.xlane.f32.xlu0 %v3275
    %v3277 = vpop.xlane.xlu0 %3276
    %v3278 = vsel %vm367, %v3270, -inf
    %3279 = vmax.xlane.f32.xlu0 %v3278
    %v3280 = vpop.xlane.xlu0 %3279
    %v3281 = vsel %vm367, %v3271, -inf
    %3282 = vmax.xlane.f32.xlu0 %v3281
    %v3283 = vpop.xlane.xlu0 %3282
    %v3284 = vsub.f32 %v3268, %v3274
    %v3285 = vsub.f32 %v3269, %v3277
    %v3286 = vsub.f32 %v3270, %v3280
    %v3287 = vsub.f32 %v3271, %v3283
    %v3288 = vmul.f32 %v3284, 1.442695
    %v3289 = vpow.pop %v3288
    %v3290 = vmul.f32 %v3285, 1.442695
    %v3291 = vpow.pop %v3290
    %v3292 = vmul.f32 %v3286, 1.442695
    %v3293 = vpow.pop %v3292
    %v3294 = vmul.f32 %v3287, 1.442695
    %v3295 = vpow.pop %v3294
    %v3296 = vsel %vm367, %v3289, 0.0
    %3297 = vadd.xlane.f32.xlu0 %v3296
    %v3298 = vpop.xlane.xlu0 %3297
    %v3299 = vsel %vm367, %v3291, 0.0
    %3300 = vadd.xlane.f32.xlu0 %v3299
    %v3301 = vpop.xlane.xlu0 %3300
    %v3302 = vsel %vm367, %v3293, 0.0
    %3303 = vadd.xlane.f32.xlu0 %v3302
    %v3304 = vpop.xlane.xlu0 %3303
    %v3305 = vsel %vm367, %v3295, 0.0
    %3306 = vadd.xlane.f32.xlu0 %v3305
    %v3307 = vpop.xlane.xlu0 %3306
    %v3308 = vrcp.pop %v3298
    %v3309 = vrcp.pop %v3301
    %v3310 = vrcp.pop %v3304
    %v3311 = vrcp.pop %v3307
    %v3312 = vmul.f32 %v3289, %v3308
    %v3313 = vmul.f32 %v3291, %v3309
    %v3314 = vmul.f32 %v3293, %v3310
    %v3315 = vmul.f32 %v3295, %v3311
    %v3316 = vpack.c.bf16 %v3313, %v3312
    %v3317 = vpack.c.bf16 %v3315, %v3314
    %3318 = vrot.lane.b32.xlu0 %v3195, 64
    %v3319 = vpop.permute.xlu0 %3318
    %3320 = vrot.lane.b32.xlu0 %v3196, 64
    %v3321 = vpop.permute.xlu0 %3320
    %v3325 = vsel %vm367, %v3316, 0
    %v3328 = vsel %vm367, %v3317, 0
    %3330 = vmatprep.subr.bf16.mxu0 0
    %3331 = vmatpush1.bf16.msra.mxu0 %v3319
    %3332 = vmatprep.subr.bf16.mxu0 0
    %3333 = vmatpush1.bf16.msra.mxu0 %v3321
    %3334 = vmatprep.subr.bf16.mxu0 0
    %3335 = vmatpush1.bf16.msra.mxu0 0
    %3336 = vmatprep.subr.bf16.mxu0 0
    %3337 = vmatpush1.bf16.msra.mxu0 0
    %3338 = vmatprep.subr.bf16.mxu0 0
    %3339 = vmatpush1.bf16.msra.mxu0 0
    %3340 = vmatprep.subr.bf16.mxu0 0
    %3341 = vmatpush1.bf16.msra.mxu0 0
    %3342 = vmatprep.subr.bf16.mxu0 0
    %3343 = vmatpush1.bf16.msra.mxu0 0
    %3344 = vmatprep.subr.bf16.mxu0 0
    %3345 = vmatpush1.bf16.msra.mxu0 0
    %3346 = vmatprep.subr.bf16.mxu0 0
    %3347 = vmatpush1.bf16.msra.mxu0 0
    %3348 = vmatprep.subr.bf16.mxu0 0
    %3349 = vmatpush1.bf16.msra.mxu0 0
    %3350 = vmatprep.subr.bf16.mxu0 0
    %3351 = vmatpush1.bf16.msra.mxu0 0
    %3352 = vmatprep.subr.bf16.mxu0 0
    %3353 = vmatpush1.bf16.msra.mxu0 0
    %3354 = vmatprep.subr.bf16.mxu0 0
    %3355 = vmatpush1.bf16.msra.mxu0 0
    %3356 = vmatprep.subr.bf16.mxu0 0
    %3357 = vmatpush1.bf16.msra.mxu0 0
    %3358 = vmatprep.subr.bf16.mxu0 0
    %3359 = vmatpush1.bf16.msra.mxu0 0
    %3360 = vmatprep.subr.bf16.mxu0 0
    %3361 = vmatpush1.bf16.msra.mxu0 0
    %3362 = vmatprep.mubr.bf16.mxu0 0
    %3363 = vmatmul.mubr.bf16.gmra.mrb[0].mxu0 %v3325
    %v3364 = vpop.f32.mrb[0].mxu0
    %v3365 = vadd.f32 0.0, %v3364
    %v3366 = vpop.f32.mrb[0].mxu0
    %v3367 = vpop.f32.mrb[0].mxu0
    %v3368 = vadd.f32 0.0, %v3367
    %v3369 = vpop.f32.mrb[0].mxu0
    %3370 = vmatprep.mubr.bf16.mxu0 0
    %3371 = vmatmul.mubr.bf16.gmra.mrb[0].mxu0 %v3328
    %v3372 = vpop.f32.mrb[0].mxu0
    %v3373 = vadd.f32 0.0, %v3372
    %v3374 = vpop.f32.mrb[0].mxu0
    %v3375 = vpop.f32.mrb[0].mxu0
    %v3376 = vadd.f32 0.0, %v3375
    %v3377 = vpop.f32.mrb[0].mxu0
    %3378 = vdwg.mxu0
    %3379 = vrot.lane.b32.xlu0 %v3195, 120
    %v3380 = vpop.permute.xlu0 %3379
    %3381 = vrot.lane.b32.xlu0 %v3196, 120
    %v3382 = vpop.permute.xlu0 %3381
    %3383 = vrot.lane.b32.xlu0 %v3195, 88
    %v3384 = vpop.permute.xlu0 %3383
    %3385 = vrot.lane.b32.xlu0 %v3196, 88
    %v3386 = vpop.permute.xlu0 %3385
    %v3388 = vsel %vm436, %v3380, 0
    %v3391 = vsel %vm436, %v3382, 0
    %v3394 = vsel %vm436, %v3384, 0
    %v3397 = vsel %vm436, %v3386, 0
    %3399 = vmatprep.subr.bf16.mxu0 0
    %3400 = vmatpush1.bf16.xpose.msra.mxu0 %v3394
    %3401 = vmatprep.subr.bf16.mxu0 0
    %3402 = vmatpush1.bf16.xpose.msra.mxu0 %v3397
    %3403 = vmatprep.subr.bf16.mxu0 0
    %3404 = vmatpush1.bf16.xpose.msra.mxu0 0
    %3405 = vmatprep.subr.bf16.mxu0 0
    %3406 = vmatpush1.bf16.xpose.msra.mxu0 0
    %3407 = vmatprep.subr.bf16.mxu0 0
    %3408 = vmatpush1.bf16.xpose.msra.mxu0 0
    %3409 = vmatprep.subr.bf16.mxu0 0
    %3410 = vmatpush1.bf16.xpose.msra.mxu0 0
    %3411 = vmatprep.subr.bf16.mxu0 0
    %3412 = vmatpush1.bf16.xpose.msra.mxu0 0
    %3413 = vmatprep.subr.bf16.mxu0 0
    %3414 = vmatpush1.bf16.xpose.msra.mxu0 0
    %3415 = vmatprep.subr.bf16.mxu0 0
    %3416 = vmatpush1.bf16.xpose.msra.mxu0 0
    %3417 = vmatprep.subr.bf16.mxu0 0
    %3418 = vmatpush1.bf16.xpose.msra.mxu0 0
    %3419 = vmatprep.subr.bf16.mxu0 0
    %3420 = vmatpush1.bf16.xpose.msra.mxu0 0
    %3421 = vmatprep.subr.bf16.mxu0 0
    %3422 = vmatpush1.bf16.xpose.msra.mxu0 0
    %3423 = vmatprep.subr.bf16.mxu0 0
    %3424 = vmatpush1.bf16.xpose.msra.mxu0 0
    %3425 = vmatprep.subr.bf16.mxu0 0
    %3426 = vmatpush1.bf16.xpose.msra.mxu0 0
    %3427 = vmatprep.subr.bf16.mxu0 0
    %3428 = vmatpush1.bf16.xpose.msra.mxu0 0
    %3429 = vmatprep.subr.bf16.mxu0 0
    %3430 = vmatpush1.bf16.xpose.msra.mxu0 0
    %3431 = vmatprep.mubr.bf16.mxu0 0
    %3432 = vmatmul.mubr.bf16.gmra.mrb[0].mxu0 %v3388
    %v3433 = vpop.f32.mrb[0].mxu0
    %v3434 = vadd.f32 0.0, %v3433
    %v3435 = vpop.f32.mrb[0].mxu0
    %v3436 = vpop.f32.mrb[0].mxu0
    %v3437 = vadd.f32 0.0, %v3436
    %v3438 = vpop.f32.mrb[0].mxu0
    %3439 = vmatprep.mubr.bf16.mxu0 0
    %3440 = vmatmul.mubr.bf16.gmra.mrb[0].mxu0 %v3391
    %v3441 = vpop.f32.mrb[0].mxu0
    %v3442 = vadd.f32 0.0, %v3441
    %v3443 = vpop.f32.mrb[0].mxu0
    %v3444 = vpop.f32.mrb[0].mxu0
    %v3445 = vadd.f32 0.0, %v3444
    %v3446 = vpop.f32.mrb[0].mxu0
    %3447 = vdwg.mxu0
    %v3448 = vmul.f32 %v3434, 0.35355338
    %v3449 = vmul.f32 %v3437, 0.35355338
    %v3450 = vmul.f32 %v3442, 0.35355338
    %v3451 = vmul.f32 %v3445, 0.35355338
    %v3452 = vadd.f32 %v3448, %v3102
    %v3453 = vadd.f32 %v3449, %v3103
    %v3454 = vadd.f32 %v3450, %v3104
    %v3455 = vadd.f32 %v3451, %v3105
    %v3456 = vsel %vm367, %v3452, -inf
    %3457 = vmax.xlane.f32.xlu0 %v3456
    %v3458 = vpop.xlane.xlu0 %3457
    %v3459 = vsel %vm367, %v3453, -inf
    %3460 = vmax.xlane.f32.xlu0 %v3459
    %v3461 = vpop.xlane.xlu0 %3460
    %v3462 = vsel %vm367, %v3454, -inf
    %3463 = vmax.xlane.f32.xlu0 %v3462
    %v3464 = vpop.xlane.xlu0 %3463
    %v3465 = vsel %vm367, %v3455, -inf
    %3466 = vmax.xlane.f32.xlu0 %v3465
    %v3467 = vpop.xlane.xlu0 %3466
    %v3468 = vsub.f32 %v3452, %v3458
    %v3469 = vsub.f32 %v3453, %v3461
    %v3470 = vsub.f32 %v3454, %v3464
    %v3471 = vsub.f32 %v3455, %v3467
    %v3472 = vmul.f32 %v3468, 1.442695
    %v3473 = vpow.pop %v3472
    %v3474 = vmul.f32 %v3469, 1.442695
    %v3475 = vpow.pop %v3474
    %v3476 = vmul.f32 %v3470, 1.442695
    %v3477 = vpow.pop %v3476
    %v3478 = vmul.f32 %v3471, 1.442695
    %v3479 = vpow.pop %v3478
    %v3480 = vsel %vm367, %v3473, 0.0
    %3481 = vadd.xlane.f32.xlu0 %v3480
    %v3482 = vpop.xlane.xlu0 %3481
    %v3483 = vsel %vm367, %v3475, 0.0
    %3484 = vadd.xlane.f32.xlu0 %v3483
    %v3485 = vpop.xlane.xlu0 %3484
    %v3486 = vsel %vm367, %v3477, 0.0
    %3487 = vadd.xlane.f32.xlu0 %v3486
    %v3488 = vpop.xlane.xlu0 %3487
    %v3489 = vsel %vm367, %v3479, 0.0
    %3490 = vadd.xlane.f32.xlu0 %v3489
    %v3491 = vpop.xlane.xlu0 %3490
    %v3492 = vrcp.pop %v3482
    %v3493 = vrcp.pop %v3485
    %v3494 = vrcp.pop %v3488
    %v3495 = vrcp.pop %v3491
    %v3496 = vmul.f32 %v3473, %v3492
    %v3497 = vmul.f32 %v3475, %v3493
    %v3498 = vmul.f32 %v3477, %v3494
    %v3499 = vmul.f32 %v3479, %v3495
    %v3500 = vpack.c.bf16 %v3497, %v3496
    %v3501 = vpack.c.bf16 %v3499, %v3498
    %3502 = vrot.lane.b32.xlu0 %v3195, 56
    %v3503 = vpop.permute.xlu0 %3502
    %3504 = vrot.lane.b32.xlu0 %v3196, 56
    %v3505 = vpop.permute.xlu0 %3504
    %v3509 = vsel %vm367, %v3500, 0
    %v3512 = vsel %vm367, %v3501, 0
    %3514 = vmatprep.subr.bf16.mxu0 0
    %3515 = vmatpush1.bf16.msra.mxu0 %v3503
    %3516 = vmatprep.subr.bf16.mxu0 0
    %3517 = vmatpush1.bf16.msra.mxu0 %v3505
    %3518 = vmatprep.subr.bf16.mxu0 0
    %3519 = vmatpush1.bf16.msra.mxu0 0
    %3520 = vmatprep.subr.bf16.mxu0 0
    %3521 = vmatpush1.bf16.msra.mxu0 0
    %3522 = vmatprep.subr.bf16.mxu0 0
    %3523 = vmatpush1.bf16.msra.mxu0 0
    %3524 = vmatprep.subr.bf16.mxu0 0
    %3525 = vmatpush1.bf16.msra.mxu0 0
    %3526 = vmatprep.subr.bf16.mxu0 0
    %3527 = vmatpush1.bf16.msra.mxu0 0
    %3528 = vmatprep.subr.bf16.mxu0 0
    %3529 = vmatpush1.bf16.msra.mxu0 0
    %3530 = vmatprep.subr.bf16.mxu0 0
    %3531 = vmatpush1.bf16.msra.mxu0 0
    %3532 = vmatprep.subr.bf16.mxu0 0
    %3533 = vmatpush1.bf16.msra.mxu0 0
    %3534 = vmatprep.subr.bf16.mxu0 0
    %3535 = vmatpush1.bf16.msra.mxu0 0
    %3536 = vmatprep.subr.bf16.mxu0 0
    %3537 = vmatpush1.bf16.msra.mxu0 0
    %3538 = vmatprep.subr.bf16.mxu0 0
    %3539 = vmatpush1.bf16.msra.mxu0 0
    %3540 = vmatprep.subr.bf16.mxu0 0
    %3541 = vmatpush1.bf16.msra.mxu0 0
    %3542 = vmatprep.subr.bf16.mxu0 0
    %3543 = vmatpush1.bf16.msra.mxu0 0
    %3544 = vmatprep.subr.bf16.mxu0 0
    %3545 = vmatpush1.bf16.msra.mxu0 0
    %3546 = vmatprep.mubr.bf16.mxu0 0
    %3547 = vmatmul.mubr.bf16.gmra.mrb[0].mxu0 %v3509
    %v3548 = vpop.f32.mrb[0].mxu0
    %v3549 = vadd.f32 0.0, %v3548
    %v3550 = vpop.f32.mrb[0].mxu0
    %v3551 = vpop.f32.mrb[0].mxu0
    %v3552 = vadd.f32 0.0, %v3551
    %v3553 = vpop.f32.mrb[0].mxu0
    %3554 = vmatprep.mubr.bf16.mxu0 0
    %3555 = vmatmul.mubr.bf16.gmra.mrb[0].mxu0 %v3512
    %v3556 = vpop.f32.mrb[0].mxu0
    %v3557 = vadd.f32 0.0, %v3556
    %v3558 = vpop.f32.mrb[0].mxu0
    %v3559 = vpop.f32.mrb[0].mxu0
    %v3560 = vadd.f32 0.0, %v3559
    %v3561 = vpop.f32.mrb[0].mxu0
    %3562 = vdwg.mxu0
    %3563 = vrot.lane.b32.xlu0 %v3195, 112
    %v3564 = vpop.permute.xlu0 %3563
    %3565 = vrot.lane.b32.xlu0 %v3196, 112
    %v3566 = vpop.permute.xlu0 %3565
    %3567 = vrot.lane.b32.xlu0 %v3195, 80
    %v3568 = vpop.permute.xlu0 %3567
    %3569 = vrot.lane.b32.xlu0 %v3196, 80
    %v3570 = vpop.permute.xlu0 %3569
    %v3572 = vsel %vm436, %v3564, 0
    %v3575 = vsel %vm436, %v3566, 0
    %v3578 = vsel %vm436, %v3568, 0
    %v3581 = vsel %vm436, %v3570, 0
    %3583 = vmatprep.subr.bf16.mxu0 0
    %3584 = vmatpush1.bf16.xpose.msra.mxu0 %v3578
    %3585 = vmatprep.subr.bf16.mxu0 0
    %3586 = vmatpush1.bf16.xpose.msra.mxu0 %v3581
    %3587 = vmatprep.subr.bf16.mxu0 0
    %3588 = vmatpush1.bf16.xpose.msra.mxu0 0
    %3589 = vmatprep.subr.bf16.mxu0 0
    %3590 = vmatpush1.bf16.xpose.msra.mxu0 0
    %3591 = vmatprep.subr.bf16.mxu0 0
    %3592 = vmatpush1.bf16.xpose.msra.mxu0 0
    %3593 = vmatprep.subr.bf16.mxu0 0
    %3594 = vmatpush1.bf16.xpose.msra.mxu0 0
    %3595 = vmatprep.subr.bf16.mxu0 0
    %3596 = vmatpush1.bf16.xpose.msra.mxu0 0
    %3597 = vmatprep.subr.bf16.mxu0 0
    %3598 = vmatpush1.bf16.xpose.msra.mxu0 0
    %3599 = vmatprep.subr.bf16.mxu0 0
    %3600 = vmatpush1.bf16.xpose.msra.mxu0 0
    %3601 = vmatprep.subr.bf16.mxu0 0
    %3602 = vmatpush1.bf16.xpose.msra.mxu0 0
    %3603 = vmatprep.subr.bf16.mxu0 0
    %3604 = vmatpush1.bf16.xpose.msra.mxu0 0
    %3605 = vmatprep.subr.bf16.mxu0 0
    %3606 = vmatpush1.bf16.xpose.msra.mxu0 0
    %3607 = vmatprep.subr.bf16.mxu0 0
    %3608 = vmatpush1.bf16.xpose.msra.mxu0 0
    %3609 = vmatprep.subr.bf16.mxu0 0
    %3610 = vmatpush1.bf16.xpose.msra.mxu0 0
    %3611 = vmatprep.subr.bf16.mxu0 0
    %3612 = vmatpush1.bf16.xpose.msra.mxu0 0
    %3613 = vmatprep.subr.bf16.mxu0 0
    %3614 = vmatpush1.bf16.xpose.msra.mxu0 0
    %3615 = vmatprep.mubr.bf16.mxu0 0
    %3616 = vmatmul.mubr.bf16.gmra.mrb[0].mxu0 %v3572
    %v3617 = vpop.f32.mrb[0].mxu0
    %v3618 = vadd.f32 0.0, %v3617
    %v3619 = vpop.f32.mrb[0].mxu0
    %v3620 = vpop.f32.mrb[0].mxu0
    %v3621 = vadd.f32 0.0, %v3620
    %v3622 = vpop.f32.mrb[0].mxu0
    %3623 = vmatprep.mubr.bf16.mxu0 0
    %3624 = vmatmul.mubr.bf16.gmra.mrb[0].mxu0 %v3575
    %v3625 = vpop.f32.mrb[0].mxu0
    %v3626 = vadd.f32 0.0, %v3625
    %v3627 = vpop.f32.mrb[0].mxu0
    %v3628 = vpop.f32.mrb[0].mxu0
    %v3629 = vadd.f32 0.0, %v3628
    %v3630 = vpop.f32.mrb[0].mxu0
    %3631 = vdwg.mxu0
    %v3632 = vmul.f32 %v3618, 0.35355338
    %v3633 = vmul.f32 %v3621, 0.35355338
    %v3634 = vmul.f32 %v3626, 0.35355338
    %v3635 = vmul.f32 %v3629, 0.35355338
    %v3636 = vadd.f32 %v3632, %v3102
    %v3637 = vadd.f32 %v3633, %v3103
    %v3638 = vadd.f32 %v3634, %v3104
    %v3639 = vadd.f32 %v3635, %v3105
    %v3640 = vsel %vm367, %v3636, -inf
    %3641 = vmax.xlane.f32.xlu0 %v3640
    %v3642 = vpop.xlane.xlu0 %3641
    %v3643 = vsel %vm367, %v3637, -inf
    %3644 = vmax.xlane.f32.xlu0 %v3643
    %v3645 = vpop.xlane.xlu0 %3644
    %v3646 = vsel %vm367, %v3638, -inf
    %3647 = vmax.xlane.f32.xlu0 %v3646
    %v3648 = vpop.xlane.xlu0 %3647
    %v3649 = vsel %vm367, %v3639, -inf
    %3650 = vmax.xlane.f32.xlu0 %v3649
    %v3651 = vpop.xlane.xlu0 %3650
    %v3652 = vsub.f32 %v3636, %v3642
    %v3653 = vsub.f32 %v3637, %v3645
    %v3654 = vsub.f32 %v3638, %v3648
    %v3655 = vsub.f32 %v3639, %v3651
    %v3656 = vmul.f32 %v3652, 1.442695
    %v3657 = vpow.pop %v3656
    %v3658 = vmul.f32 %v3653, 1.442695
    %v3659 = vpow.pop %v3658
    %v3660 = vmul.f32 %v3654, 1.442695
    %v3661 = vpow.pop %v3660
    %v3662 = vmul.f32 %v3655, 1.442695
    %v3663 = vpow.pop %v3662
    %v3664 = vsel %vm367, %v3657, 0.0
    %3665 = vadd.xlane.f32.xlu0 %v3664
    %v3666 = vpop.xlane.xlu0 %3665
    %v3667 = vsel %vm367, %v3659, 0.0
    %3668 = vadd.xlane.f32.xlu0 %v3667
    %v3669 = vpop.xlane.xlu0 %3668
    %v3670 = vsel %vm367, %v3661, 0.0
    %3671 = vadd.xlane.f32.xlu0 %v3670
    %v3672 = vpop.xlane.xlu0 %3671
    %v3673 = vsel %vm367, %v3663, 0.0
    %3674 = vadd.xlane.f32.xlu0 %v3673
    %v3675 = vpop.xlane.xlu0 %3674
    %v3676 = vrcp.pop %v3666
    %v3677 = vrcp.pop %v3669
    %v3678 = vrcp.pop %v3672
    %v3679 = vrcp.pop %v3675
    %v3680 = vmul.f32 %v3657, %v3676
    %v3681 = vmul.f32 %v3659, %v3677
    %v3682 = vmul.f32 %v3661, %v3678
    %v3683 = vmul.f32 %v3663, %v3679
    %v3684 = vpack.c.bf16 %v3681, %v3680
    %v3685 = vpack.c.bf16 %v3683, %v3682
    %3686 = vrot.lane.b32.xlu0 %v3195, 48
    %v3687 = vpop.permute.xlu0 %3686
    %3688 = vrot.lane.b32.xlu0 %v3196, 48
    %v3689 = vpop.permute.xlu0 %3688
    %v3693 = vsel %vm367, %v3684, 0
    %v3696 = vsel %vm367, %v3685, 0
    %3698 = vmatprep.subr.bf16.mxu0 0
    %3699 = vmatpush1.bf16.msra.mxu0 %v3687
    %3700 = vmatprep.subr.bf16.mxu0 0
    %3701 = vmatpush1.bf16.msra.mxu0 %v3689
    %3702 = vmatprep.subr.bf16.mxu0 0
    %3703 = vmatpush1.bf16.msra.mxu0 0
    %3704 = vmatprep.subr.bf16.mxu0 0
    %3705 = vmatpush1.bf16.msra.mxu0 0
    %3706 = vmatprep.subr.bf16.mxu0 0
    %3707 = vmatpush1.bf16.msra.mxu0 0
    %3708 = vmatprep.subr.bf16.mxu0 0
    %3709 = vmatpush1.bf16.msra.mxu0 0
    %3710 = vmatprep.subr.bf16.mxu0 0
    %3711 = vmatpush1.bf16.msra.mxu0 0
    %3712 = vmatprep.subr.bf16.mxu0 0
    %3713 = vmatpush1.bf16.msra.mxu0 0
    %3714 = vmatprep.subr.bf16.mxu0 0
    %3715 = vmatpush1.bf16.msra.mxu0 0
    %3716 = vmatprep.subr.bf16.mxu0 0
    %3717 = vmatpush1.bf16.msra.mxu0 0
    %3718 = vmatprep.subr.bf16.mxu0 0
    %3719 = vmatpush1.bf16.msra.mxu0 0
    %3720 = vmatprep.subr.bf16.mxu0 0
    %3721 = vmatpush1.bf16.msra.mxu0 0
    %3722 = vmatprep.subr.bf16.mxu0 0
    %3723 = vmatpush1.bf16.msra.mxu0 0
    %3724 = vmatprep.subr.bf16.mxu0 0
    %3725 = vmatpush1.bf16.msra.mxu0 0
    %3726 = vmatprep.subr.bf16.mxu0 0
    %3727 = vmatpush1.bf16.msra.mxu0 0
    %3728 = vmatprep.subr.bf16.mxu0 0
    %3729 = vmatpush1.bf16.msra.mxu0 0
    %3730 = vmatprep.mubr.bf16.mxu0 0
    %3731 = vmatmul.mubr.bf16.gmra.mrb[0].mxu0 %v3693
    %v3732 = vpop.f32.mrb[0].mxu0
    %v3733 = vadd.f32 0.0, %v3732
    %v3734 = vpop.f32.mrb[0].mxu0
    %v3735 = vpop.f32.mrb[0].mxu0
    %v3736 = vadd.f32 0.0, %v3735
    %v3737 = vpop.f32.mrb[0].mxu0
    %3738 = vmatprep.mubr.bf16.mxu0 0
    %3739 = vmatmul.mubr.bf16.gmra.mrb[0].mxu0 %v3696
    %v3740 = vpop.f32.mrb[0].mxu0
    %v3741 = vadd.f32 0.0, %v3740
    %v3742 = vpop.f32.mrb[0].mxu0
    %v3743 = vpop.f32.mrb[0].mxu0
    %v3744 = vadd.f32 0.0, %v3743
    %v3745 = vpop.f32.mrb[0].mxu0
    %3746 = vdwg.mxu0
    %3747 = vrot.lane.b32.xlu0 %v3195, 104
    %v3748 = vpop.permute.xlu0 %3747
    %3749 = vrot.lane.b32.xlu0 %v3196, 104
    %v3750 = vpop.permute.xlu0 %3749
    %3751 = vrot.lane.b32.xlu0 %v3195, 72
    %v3752 = vpop.permute.xlu0 %3751
    %3753 = vrot.lane.b32.xlu0 %v3196, 72
    %v3754 = vpop.permute.xlu0 %3753
    %v3756 = vsel %vm436, %v3748, 0
    %v3759 = vsel %vm436, %v3750, 0
    %v3762 = vsel %vm436, %v3752, 0
    %v3765 = vsel %vm436, %v3754, 0
    %3767 = vmatprep.subr.bf16.mxu0 0
    %3768 = vmatpush1.bf16.xpose.msra.mxu0 %v3762
    %3769 = vmatprep.subr.bf16.mxu0 0
    %3770 = vmatpush1.bf16.xpose.msra.mxu0 %v3765
    %3771 = vmatprep.subr.bf16.mxu0 0
    %3772 = vmatpush1.bf16.xpose.msra.mxu0 0
    %3773 = vmatprep.subr.bf16.mxu0 0
    %3774 = vmatpush1.bf16.xpose.msra.mxu0 0
    %3775 = vmatprep.subr.bf16.mxu0 0
    %3776 = vmatpush1.bf16.xpose.msra.mxu0 0
    %3777 = vmatprep.subr.bf16.mxu0 0
    %3778 = vmatpush1.bf16.xpose.msra.mxu0 0
    %3779 = vmatprep.subr.bf16.mxu0 0
    %3780 = vmatpush1.bf16.xpose.msra.mxu0 0
    %3781 = vmatprep.subr.bf16.mxu0 0
    %3782 = vmatpush1.bf16.xpose.msra.mxu0 0
    %3783 = vmatprep.subr.bf16.mxu0 0
    %3784 = vmatpush1.bf16.xpose.msra.mxu0 0
    %3785 = vmatprep.subr.bf16.mxu0 0
    %3786 = vmatpush1.bf16.xpose.msra.mxu0 0
    %3787 = vmatprep.subr.bf16.mxu0 0
    %3788 = vmatpush1.bf16.xpose.msra.mxu0 0
    %3789 = vmatprep.subr.bf16.mxu0 0
    %3790 = vmatpush1.bf16.xpose.msra.mxu0 0
    %3791 = vmatprep.subr.bf16.mxu0 0
    %3792 = vmatpush1.bf16.xpose.msra.mxu0 0
    %3793 = vmatprep.subr.bf16.mxu0 0
    %3794 = vmatpush1.bf16.xpose.msra.mxu0 0
    %3795 = vmatprep.subr.bf16.mxu0 0
    %3796 = vmatpush1.bf16.xpose.msra.mxu0 0
    %3797 = vmatprep.subr.bf16.mxu0 0
    %3798 = vmatpush1.bf16.xpose.msra.mxu0 0
    %3799 = vmatprep.mubr.bf16.mxu0 0
    %3800 = vmatmul.mubr.bf16.gmra.mrb[0].mxu0 %v3756
    %v3801 = vpop.f32.mrb[0].mxu0
    %v3802 = vadd.f32 0.0, %v3801
    %v3803 = vpop.f32.mrb[0].mxu0
    %v3804 = vpop.f32.mrb[0].mxu0
    %v3805 = vadd.f32 0.0, %v3804
    %v3806 = vpop.f32.mrb[0].mxu0
    %3807 = vmatprep.mubr.bf16.mxu0 0
    %3808 = vmatmul.mubr.bf16.gmra.mrb[0].mxu0 %v3759
    %v3809 = vpop.f32.mrb[0].mxu0
    %v3810 = vadd.f32 0.0, %v3809
    %v3811 = vpop.f32.mrb[0].mxu0
    %v3812 = vpop.f32.mrb[0].mxu0
    %v3813 = vadd.f32 0.0, %v3812
    %v3814 = vpop.f32.mrb[0].mxu0
    %3815 = vdwg.mxu0
    %v3816 = vmul.f32 %v3802, 0.35355338
    %v3817 = vmul.f32 %v3805, 0.35355338
    %v3818 = vmul.f32 %v3810, 0.35355338
    %v3819 = vmul.f32 %v3813, 0.35355338
    %v3820 = vadd.f32 %v3816, %v3102
    %v3821 = vadd.f32 %v3817, %v3103
    %v3822 = vadd.f32 %v3818, %v3104
    %v3823 = vadd.f32 %v3819, %v3105
    %v3824 = vsel %vm367, %v3820, -inf
    %3825 = vmax.xlane.f32.xlu0 %v3824
    %v3826 = vpop.xlane.xlu0 %3825
    %v3827 = vsel %vm367, %v3821, -inf
    %3828 = vmax.xlane.f32.xlu0 %v3827
    %v3829 = vpop.xlane.xlu0 %3828
    %v3830 = vsel %vm367, %v3822, -inf
    %3831 = vmax.xlane.f32.xlu0 %v3830
    %v3832 = vpop.xlane.xlu0 %3831
    %v3833 = vsel %vm367, %v3823, -inf
    %3834 = vmax.xlane.f32.xlu0 %v3833
    %v3835 = vpop.xlane.xlu0 %3834
    %v3836 = vsub.f32 %v3820, %v3826
    %v3837 = vsub.f32 %v3821, %v3829
    %v3838 = vsub.f32 %v3822, %v3832
    %v3839 = vsub.f32 %v3823, %v3835
    %v3840 = vmul.f32 %v3836, 1.442695
    %v3841 = vpow.pop %v3840
    %v3842 = vmul.f32 %v3837, 1.442695
    %v3843 = vpow.pop %v3842
    %v3844 = vmul.f32 %v3838, 1.442695
    %v3845 = vpow.pop %v3844
    %v3846 = vmul.f32 %v3839, 1.442695
    %v3847 = vpow.pop %v3846
    %v3848 = vsel %vm367, %v3841, 0.0
    %3849 = vadd.xlane.f32.xlu0 %v3848
    %v3850 = vpop.xlane.xlu0 %3849
    %v3851 = vsel %vm367, %v3843, 0.0
    %3852 = vadd.xlane.f32.xlu0 %v3851
    %v3853 = vpop.xlane.xlu0 %3852
    %v3854 = vsel %vm367, %v3845, 0.0
    %3855 = vadd.xlane.f32.xlu0 %v3854
    %v3856 = vpop.xlane.xlu0 %3855
    %v3857 = vsel %vm367, %v3847, 0.0
    %3858 = vadd.xlane.f32.xlu0 %v3857
    %v3859 = vpop.xlane.xlu0 %3858
    %v3860 = vrcp.pop %v3850
    %v3861 = vrcp.pop %v3853
    %v3862 = vrcp.pop %v3856
    %v3863 = vrcp.pop %v3859
    %v3864 = vmul.f32 %v3841, %v3860
    %v3865 = vmul.f32 %v3843, %v3861
    %v3866 = vmul.f32 %v3845, %v3862
    %v3867 = vmul.f32 %v3847, %v3863
    %v3868 = vpack.c.bf16 %v3865, %v3864
    %v3869 = vpack.c.bf16 %v3867, %v3866
    %3870 = vrot.lane.b32.xlu0 %v3195, 40
    %v3871 = vpop.permute.xlu0 %3870
    %3872 = vrot.lane.b32.xlu0 %v3196, 40
    %v3873 = vpop.permute.xlu0 %3872
    %v3877 = vsel %vm367, %v3868, 0
    %v3880 = vsel %vm367, %v3869, 0
    %3882 = vmatprep.subr.bf16.mxu0 0
    %3883 = vmatpush1.bf16.msra.mxu0 %v3871
    %3884 = vmatprep.subr.bf16.mxu0 0
    %3885 = vmatpush1.bf16.msra.mxu0 %v3873
    %3886 = vmatprep.subr.bf16.mxu0 0
    %3887 = vmatpush1.bf16.msra.mxu0 0
    %3888 = vmatprep.subr.bf16.mxu0 0
    %3889 = vmatpush1.bf16.msra.mxu0 0
    %3890 = vmatprep.subr.bf16.mxu0 0
    %3891 = vmatpush1.bf16.msra.mxu0 0
    %3892 = vmatprep.subr.bf16.mxu0 0
    %3893 = vmatpush1.bf16.msra.mxu0 0
    %3894 = vmatprep.subr.bf16.mxu0 0
    %3895 = vmatpush1.bf16.msra.mxu0 0
    %3896 = vmatprep.subr.bf16.mxu0 0
    %3897 = vmatpush1.bf16.msra.mxu0 0
    %3898 = vmatprep.subr.bf16.mxu0 0
    %3899 = vmatpush1.bf16.msra.mxu0 0
    %3900 = vmatprep.subr.bf16.mxu0 0
    %3901 = vmatpush1.bf16.msra.mxu0 0
    %3902 = vmatprep.subr.bf16.mxu0 0
    %3903 = vmatpush1.bf16.msra.mxu0 0
    %3904 = vmatprep.subr.bf16.mxu0 0
    %3905 = vmatpush1.bf16.msra.mxu0 0
    %3906 = vmatprep.subr.bf16.mxu0 0
    %3907 = vmatpush1.bf16.msra.mxu0 0
    %3908 = vmatprep.subr.bf16.mxu0 0
    %3909 = vmatpush1.bf16.msra.mxu0 0
    %3910 = vmatprep.subr.bf16.mxu0 0
    %3911 = vmatpush1.bf16.msra.mxu0 0
    %3912 = vmatprep.subr.bf16.mxu0 0
    %3913 = vmatpush1.bf16.msra.mxu0 0
    %3914 = vmatprep.mubr.bf16.mxu0 0
    %3915 = vmatmul.mubr.bf16.gmra.mrb[0].mxu0 %v3877
    %v3916 = vpop.f32.mrb[0].mxu0
    %v3917 = vadd.f32 0.0, %v3916
    %v3918 = vpop.f32.mrb[0].mxu0
    %v3919 = vpop.f32.mrb[0].mxu0
    %v3920 = vadd.f32 0.0, %v3919
    %v3921 = vpop.f32.mrb[0].mxu0
    %3922 = vmatprep.mubr.bf16.mxu0 0
    %3923 = vmatmul.mubr.bf16.gmra.mrb[0].mxu0 %v3880
    %v3924 = vpop.f32.mrb[0].mxu0
    %v3925 = vadd.f32 0.0, %v3924
    %v3926 = vpop.f32.mrb[0].mxu0
    %v3927 = vpop.f32.mrb[0].mxu0
    %v3928 = vadd.f32 0.0, %v3927
    %v3929 = vpop.f32.mrb[0].mxu0
    %3930 = vdwg.mxu0
    %3935 = vrot.lane.b32.xlu0 %v3549, 8
    %v3936 = vpop.permute.xlu0 %3935
    %3937 = vrot.lane.b32.xlu0 %v3552, 8
    %v3938 = vpop.permute.xlu0 %3937
    %3939 = vrot.lane.b32.xlu0 %v3557, 8
    %v3940 = vpop.permute.xlu0 %3939
    %3941 = vrot.lane.b32.xlu0 %v3560, 8
    %v3942 = vpop.permute.xlu0 %3941
    %3951 = vrot.lane.b32.xlu0 %v3733, 16
    %v3952 = vpop.permute.xlu0 %3951
    %3953 = vrot.lane.b32.xlu0 %v3736, 16
    %v3954 = vpop.permute.xlu0 %3953
    %3955 = vrot.lane.b32.xlu0 %v3741, 16
    %v3956 = vpop.permute.xlu0 %3955
    %3957 = vrot.lane.b32.xlu0 %v3744, 16
    %v3958 = vpop.permute.xlu0 %3957
    %3967 = vrot.lane.b32.xlu0 %v3917, 24
    %v3968 = vpop.permute.xlu0 %3967
    %3969 = vrot.lane.b32.xlu0 %v3920, 24
    %v3970 = vpop.permute.xlu0 %3969
    %3971 = vrot.lane.b32.xlu0 %v3925, 24
    %v3972 = vpop.permute.xlu0 %3971
    %3973 = vrot.lane.b32.xlu0 %v3928, 24
    %v3974 = vpop.permute.xlu0 %3973
    %v3979 = vsel %vm436, %v3365, %v3936
    %v3980 = vsel %vm436, %v3368, %v3938
    %v3981 = vsel %vm436, %v3373, %v3940
    %v3982 = vsel %vm436, %v3376, %v3942
    %v3983 = vsel %vm1217, %v3979, %v3952
    %v3984 = vsel %vm1217, %v3980, %v3954
    %v3985 = vsel %vm1217, %v3981, %v3956
    %v3986 = vsel %vm1217, %v3982, %v3958
    %v3987 = vsel %vm1222, %v3983, %v3968
    %v3988 = vsel %vm1222, %v3984, %v3970
    %v3989 = vsel %vm1222, %v3985, %v3972
    %v3990 = vsel %vm1222, %v3986, %v3974
    %v3991 = vpack.c.bf16 %v3988, %v3987
    %v3992 = vpack.c.bf16 %v3990, %v3989
    %v3994 = vlaneseq
    %v3995 = vshrl.u32 %v3994, 7
    %v3996 = vsub.s32 0, %v3995
    %v3997 = vrot.slane %v3194, %v3996
    %v4003 = vunpack.c.l.b16 %v3190
    %v4004 = vunpack.c.l.b16 %v3191
    %v4005 = vunpack.c.l.b16 %v3192
    %v4006 = vunpack.c.l.b16 %v3193
    %v4007 = vpack.c.b16 %v4004, %v4003
    %v4008 = vpack.c.b16 %v4006, %v4005
    %v4012 = vsel %vm367, %v3991, 0
    %v4015 = vsel %vm367, %v3992, 0
    %4017 = vmatprep.subr.bf16.mxu0 0
    %4018 = vmatpush1.bf16.msra.mxu0 %v4007
    %4019 = vmatprep.subr.bf16.mxu0 0
    %4020 = vmatpush1.bf16.msra.mxu0 %v4008
    %4021 = vmatprep.subr.bf16.mxu0 0
    %4022 = vmatpush1.bf16.msra.mxu0 0
    %4023 = vmatprep.subr.bf16.mxu0 0
    %4024 = vmatpush1.bf16.msra.mxu0 0
    %4025 = vmatprep.subr.bf16.mxu0 0
    %4026 = vmatpush1.bf16.msra.mxu0 0
    %4027 = vmatprep.subr.bf16.mxu0 0
    %4028 = vmatpush1.bf16.msra.mxu0 0
    %4029 = vmatprep.subr.bf16.mxu0 0
    %4030 = vmatpush1.bf16.msra.mxu0 0
    %4031 = vmatprep.subr.bf16.mxu0 0
    %4032 = vmatpush1.bf16.msra.mxu0 0
    %4033 = vmatprep.subr.bf16.mxu0 0
    %4034 = vmatpush1.bf16.msra.mxu0 0
    %4035 = vmatprep.subr.bf16.mxu0 0
    %4036 = vmatpush1.bf16.msra.mxu0 0
    %4037 = vmatprep.subr.bf16.mxu0 0
    %4038 = vmatpush1.bf16.msra.mxu0 0
    %4039 = vmatprep.subr.bf16.mxu0 0
    %4040 = vmatpush1.bf16.msra.mxu0 0
    %4041 = vmatprep.subr.bf16.mxu0 0
    %4042 = vmatpush1.bf16.msra.mxu0 0
    %4043 = vmatprep.subr.bf16.mxu0 0
    %4044 = vmatpush1.bf16.msra.mxu0 0
    %4045 = vmatprep.subr.bf16.mxu0 0
    %4046 = vmatpush1.bf16.msra.mxu0 0
    %4047 = vmatprep.subr.bf16.mxu0 0
    %4048 = vmatpush1.bf16.msra.mxu0 0
    %4049 = vmatprep.mubr.bf16.mxu0 0
    %4050 = vmatmul.mubr.bf16.gmra.mrb[0].mxu0 %v4012
    %v4051 = vpop.f32.mrb[0].mxu0
    %v4052 = vadd.f32 %v3997, %v4051
    %v4053 = vpop.f32.mrb[0].mxu0
    %v4054 = vpop.f32.mrb[0].mxu0
    %v4055 = vadd.f32 %v3997, %v4054
    %v4056 = vpop.f32.mrb[0].mxu0
    %4057 = vmatprep.mubr.bf16.mxu0 0
    %4058 = vmatmul.mubr.bf16.gmra.mrb[0].mxu0 %v4015
    %v4059 = vpop.f32.mrb[0].mxu0
    %v4060 = vadd.f32 %v3997, %v4059
    %v4061 = vpop.f32.mrb[0].mxu0
    %v4062 = vpop.f32.mrb[0].mxu0
    %v4063 = vadd.f32 %v3997, %v4062
    %v4064 = vpop.f32.mrb[0].mxu0
    %4065 = vdwg.mxu0
    %v4066 = vadd.f32 %v3088, %v4052
    %v4067 = vadd.f32 %v3091, %v4055
    %v4068 = vadd.f32 %v3096, %v4060
    %v4069 = vadd.f32 %v3099, %v4063
    %v4070 = vld [vmem:[%s55] sm:$0x1]
    %v4071 = vld [vmem:[%s57] sm:$0x1]
    %v4072 = vsel %vm367, %v4066, 0.0
    %4073 = vadd.xlane.f32.xlu0 %v4072
    %v4074 = vpop.xlane.xlu0 %4073
    %v4075 = vsel %vm367, %v4067, 0.0
    %4076 = vadd.xlane.f32.xlu0 %v4075
    %v4077 = vpop.xlane.xlu0 %4076
    %v4078 = vsel %vm367, %v4068, 0.0
    %4079 = vadd.xlane.f32.xlu0 %v4078
    %v4080 = vpop.xlane.xlu0 %4079
    %v4081 = vsel %vm367, %v4069, 0.0
    %4082 = vadd.xlane.f32.xlu0 %v4081
    %v4083 = vpop.xlane.xlu0 %4082
    %v4084 = vmul.f32 %v4074, %v1320
    %v4085 = vmul.f32 %v4077, %v1320
    %v4086 = vmul.f32 %v4080, %v1320
    %v4087 = vmul.f32 %v4083, %v1320
    %v4088 = vsub.f32 %v4066, %v4084
    %v4089 = vsub.f32 %v4067, %v4085
    %v4090 = vsub.f32 %v4068, %v4086
    %v4091 = vsub.f32 %v4069, %v4087
    %v4092 = vmul.f32 %v4088, %v4088
    %v4093 = vmul.f32 %v4089, %v4089
    %v4094 = vmul.f32 %v4090, %v4090
    %v4095 = vmul.f32 %v4091, %v4091
    %v4096 = vsel %vm367, %v4092, 0.0
    %4097 = vadd.xlane.f32.xlu0 %v4096
    %v4098 = vpop.xlane.xlu0 %4097
    %v4099 = vsel %vm367, %v4093, 0.0
    %4100 = vadd.xlane.f32.xlu0 %v4099
    %v4101 = vpop.xlane.xlu0 %4100
    %v4102 = vsel %vm367, %v4094, 0.0
    %4103 = vadd.xlane.f32.xlu0 %v4102
    %v4104 = vpop.xlane.xlu0 %4103
    %v4105 = vsel %vm367, %v4095, 0.0
    %4106 = vadd.xlane.f32.xlu0 %v4105
    %v4107 = vpop.xlane.xlu0 %4106
    %v4108 = vmul.f32 %v4098, %v1320
    %v4109 = vmul.f32 %v4101, %v1320
    %v4110 = vmul.f32 %v4104, %v1320
    %v4111 = vmul.f32 %v4107, %v1320
    %v4112 = vadd.f32 %v4108, 1e-05
    %v4113 = vadd.f32 %v4109, 1e-05
    %v4114 = vadd.f32 %v4110, 1e-05
    %v4115 = vadd.f32 %v4111, 1e-05
    %v4116 = vrsqrt.pop %v4112
    %v4117 = vrsqrt.pop %v4113
    %v4118 = vrsqrt.pop %v4114
    %v4119 = vrsqrt.pop %v4115
    %v4120 = vmul.f32 %v4088, %v4116
    %v4121 = vmul.f32 %v4089, %v4117
    %v4122 = vmul.f32 %v4090, %v4118
    %v4123 = vmul.f32 %v4091, %v4119
    %v4125 = vlaneseq
    %v4126 = vshrl.u32 %v4125, 7
    %v4127 = vsub.s32 0, %v4126
    %v4128 = vrot.slane %v4070, %v4127
    %v4130 = vmul.f32 %v4120, %v4128
    %v4131 = vmul.f32 %v4121, %v4128
    %v4132 = vmul.f32 %v4122, %v4128
    %v4133 = vmul.f32 %v4123, %v4128
    %v4135 = vlaneseq
    %v4136 = vshrl.u32 %v4135, 7
    %v4137 = vsub.s32 0, %v4136
    %v4138 = vrot.slane %v4071, %v4137
    %v4140 = vadd.f32 %v4130, %v4138
    %v4141 = vadd.f32 %v4131, %v4138
    %v4142 = vadd.f32 %v4132, %v4138
    %v4143 = vadd.f32 %v4133, %v4138
    %v4144 = vpack.c.bf16 %v4141, %v4140
    %v4145 = vpack.c.bf16 %v4143, %v4142
    %v4146 = vld [vmem:[%s59] sm:$0xf]
    %v4147 = vld [vmem:[%s59 + $0x4] sm:$0xf]
    %v4148 = vld [vmem:[%s59 + $0x8] sm:$0xf]
    %v4149 = vld [vmem:[%s59 + $0xc] sm:$0xf]
    %v4150 = vld [vmem:[%s61] sm:$0x1]
    %v4152 = vlaneseq
    %v4153 = vshrl.u32 %v4152, 7
    %v4154 = vsub.s32 0, %v4153
    %v4155 = vrot.slane %v4150, %v4154
    %v4161 = vunpack.c.l.b16 %v4146
    %v4162 = vunpack.c.l.b16 %v4147
    %v4163 = vunpack.c.l.b16 %v4148
    %v4164 = vunpack.c.l.b16 %v4149
    %v4165 = vpack.c.b16 %v4162, %v4161
    %v4166 = vpack.c.b16 %v4164, %v4163
    %v4170 = vsel %vm367, %v4144, 0
    %v4173 = vsel %vm367, %v4145, 0
    %4175 = vmatprep.subr.bf16.mxu0 0
    %4176 = vmatpush1.bf16.msra.mxu0 %v4165
    %4177 = vmatprep.subr.bf16.mxu0 0
    %4178 = vmatpush1.bf16.msra.mxu0 %v4166
    %4179 = vmatprep.subr.bf16.mxu0 0
    %4180 = vmatpush1.bf16.msra.mxu0 0
    %4181 = vmatprep.subr.bf16.mxu0 0
    %4182 = vmatpush1.bf16.msra.mxu0 0
    %4183 = vmatprep.subr.bf16.mxu0 0
    %4184 = vmatpush1.bf16.msra.mxu0 0
    %4185 = vmatprep.subr.bf16.mxu0 0
    %4186 = vmatpush1.bf16.msra.mxu0 0
    %4187 = vmatprep.subr.bf16.mxu0 0
    %4188 = vmatpush1.bf16.msra.mxu0 0
    %4189 = vmatprep.subr.bf16.mxu0 0
    %4190 = vmatpush1.bf16.msra.mxu0 0
    %4191 = vmatprep.subr.bf16.mxu0 0
    %4192 = vmatpush1.bf16.msra.mxu0 0
    %4193 = vmatprep.subr.bf16.mxu0 0
    %4194 = vmatpush1.bf16.msra.mxu0 0
    %4195 = vmatprep.subr.bf16.mxu0 0
    %4196 = vmatpush1.bf16.msra.mxu0 0
    %4197 = vmatprep.subr.bf16.mxu0 0
    %4198 = vmatpush1.bf16.msra.mxu0 0
    %4199 = vmatprep.subr.bf16.mxu0 0
    %4200 = vmatpush1.bf16.msra.mxu0 0
    %4201 = vmatprep.subr.bf16.mxu0 0
    %4202 = vmatpush1.bf16.msra.mxu0 0
    %4203 = vmatprep.subr.bf16.mxu0 0
    %4204 = vmatpush1.bf16.msra.mxu0 0
    %4205 = vmatprep.subr.bf16.mxu0 0
    %4206 = vmatpush1.bf16.msra.mxu0 0
    %4207 = vmatprep.mubr.bf16.mxu0 0
    %4208 = vmatmul.mubr.bf16.gmra.mrb[0].mxu0 %v4170
    %v4209 = vpop.f32.mrb[0].mxu0
    %v4210 = vadd.f32 %v4155, %v4209
    %v4211 = vpop.f32.mrb[0].mxu0
    %v4212 = vpop.f32.mrb[0].mxu0
    %v4213 = vadd.f32 %v4155, %v4212
    %v4214 = vpop.f32.mrb[0].mxu0
    %4215 = vmatprep.mubr.bf16.mxu0 0
    %4216 = vmatmul.mubr.bf16.gmra.mrb[0].mxu0 %v4173
    %v4217 = vpop.f32.mrb[0].mxu0
    %v4218 = vadd.f32 %v4155, %v4217
    %v4219 = vpop.f32.mrb[0].mxu0
    %v4220 = vpop.f32.mrb[0].mxu0
    %v4221 = vadd.f32 %v4155, %v4220
    %v4222 = vpop.f32.mrb[0].mxu0
    %4223 = vdwg.mxu0
    %v4224 = vld [vmem:[%s63] sm:$0xf]
    %v4225 = vld [vmem:[%s63 + $0x4] sm:$0xf]
    %v4226 = vld [vmem:[%s63 + $0x8] sm:$0xf]
    %v4227 = vld [vmem:[%s63 + $0xc] sm:$0xf]
    %v4228 = vld [vmem:[%s65] sm:$0x1]
    %v4230 = vlaneseq
    %v4231 = vshrl.u32 %v4230, 7
    %v4232 = vsub.s32 0, %v4231
    %v4233 = vrot.slane %v4228, %v4232
    %v4239 = vunpack.c.l.b16 %v4224
    %v4240 = vunpack.c.l.b16 %v4225
    %v4241 = vunpack.c.l.b16 %v4226
    %v4242 = vunpack.c.l.b16 %v4227
    %v4243 = vpack.c.b16 %v4240, %v4239
    %v4244 = vpack.c.b16 %v4242, %v4241
    %v4248 = vsel %vm367, %v3017, 0
    %v4251 = vsel %vm367, %v3018, 0
    %4253 = vmatprep.subr.bf16.mxu0 0
    %4254 = vmatpush1.bf16.msra.mxu0 %v4243
    %4255 = vmatprep.subr.bf16.mxu0 0
    %4256 = vmatpush1.bf16.msra.mxu0 %v4244
    %4257 = vmatprep.subr.bf16.mxu0 0
    %4258 = vmatpush1.bf16.msra.mxu0 0
    %4259 = vmatprep.subr.bf16.mxu0 0
    %4260 = vmatpush1.bf16.msra.mxu0 0
    %4261 = vmatprep.subr.bf16.mxu0 0
    %4262 = vmatpush1.bf16.msra.mxu0 0
    %4263 = vmatprep.subr.bf16.mxu0 0
    %4264 = vmatpush1.bf16.msra.mxu0 0
    %4265 = vmatprep.subr.bf16.mxu0 0
    %4266 = vmatpush1.bf16.msra.mxu0 0
    %4267 = vmatprep.subr.bf16.mxu0 0
    %4268 = vmatpush1.bf16.msra.mxu0 0
    %4269 = vmatprep.subr.bf16.mxu0 0
    %4270 = vmatpush1.bf16.msra.mxu0 0
    %4271 = vmatprep.subr.bf16.mxu0 0
    %4272 = vmatpush1.bf16.msra.mxu0 0
    %4273 = vmatprep.subr.bf16.mxu0 0
    %4274 = vmatpush1.bf16.msra.mxu0 0
    %4275 = vmatprep.subr.bf16.mxu0 0
    %4276 = vmatpush1.bf16.msra.mxu0 0
    %4277 = vmatprep.subr.bf16.mxu0 0
    %4278 = vmatpush1.bf16.msra.mxu0 0
    %4279 = vmatprep.subr.bf16.mxu0 0
    %4280 = vmatpush1.bf16.msra.mxu0 0
    %4281 = vmatprep.subr.bf16.mxu0 0
    %4282 = vmatpush1.bf16.msra.mxu0 0
    %4283 = vmatprep.subr.bf16.mxu0 0
    %4284 = vmatpush1.bf16.msra.mxu0 0
    %4285 = vmatprep.mubr.bf16.mxu0 0
    %4286 = vmatmul.mubr.bf16.gmra.mrb[0].mxu0 %v4248
    %v4287 = vpop.f32.mrb[0].mxu0
    %v4288 = vadd.f32 %v4233, %v4287
    %v4289 = vpop.f32.mrb[0].mxu0
    %v4290 = vpop.f32.mrb[0].mxu0
    %v4291 = vadd.f32 %v4233, %v4290
    %v4292 = vpop.f32.mrb[0].mxu0
    %4293 = vmatprep.mubr.bf16.mxu0 0
    %4294 = vmatmul.mubr.bf16.gmra.mrb[0].mxu0 %v4251
    %v4295 = vpop.f32.mrb[0].mxu0
    %v4296 = vadd.f32 %v4233, %v4295
    %v4297 = vpop.f32.mrb[0].mxu0
    %v4298 = vpop.f32.mrb[0].mxu0
    %v4299 = vadd.f32 %v4233, %v4298
    %v4300 = vpop.f32.mrb[0].mxu0
    %4301 = vdwg.mxu0
    %v4302 = vld [vmem:[%s67] sm:$0xf]
    %v4303 = vld [vmem:[%s67 + $0x4] sm:$0xf]
    %v4304 = vld [vmem:[%s67 + $0x8] sm:$0xf]
    %v4305 = vld [vmem:[%s67 + $0xc] sm:$0xf]
    %v4306 = vld [vmem:[%s69] sm:$0x1]
    %v4307 = vpack.c.bf16 %v4213, %v4210
    %v4308 = vpack.c.bf16 %v4221, %v4218
    %v4309 = vpack.c.bf16 %v4291, %v4288
    %v4310 = vpack.c.bf16 %v4299, %v4296
    %v4312 = vsel %vm436, %v4307, 0
    %v4315 = vsel %vm436, %v4308, 0
    %v4318 = vsel %vm436, %v4309, 0
    %v4321 = vsel %vm436, %v4310, 0
    %4323 = vmatprep.subr.bf16.mxu0 0
    %4324 = vmatpush1.bf16.xpose.msra.mxu0 %v4318
    %4325 = vmatprep.subr.bf16.mxu0 0
    %4326 = vmatpush1.bf16.xpose.msra.mxu0 %v4321
    %4327 = vmatprep.subr.bf16.mxu0 0
    %4328 = vmatpush1.bf16.xpose.msra.mxu0 0
    %4329 = vmatprep.subr.bf16.mxu0 0
    %4330 = vmatpush1.bf16.xpose.msra.mxu0 0
    %4331 = vmatprep.subr.bf16.mxu0 0
    %4332 = vmatpush1.bf16.xpose.msra.mxu0 0
    %4333 = vmatprep.subr.bf16.mxu0 0
    %4334 = vmatpush1.bf16.xpose.msra.mxu0 0
    %4335 = vmatprep.subr.bf16.mxu0 0
    %4336 = vmatpush1.bf16.xpose.msra.mxu0 0
    %4337 = vmatprep.subr.bf16.mxu0 0
    %4338 = vmatpush1.bf16.xpose.msra.mxu0 0
    %4339 = vmatprep.subr.bf16.mxu0 0
    %4340 = vmatpush1.bf16.xpose.msra.mxu0 0
    %4341 = vmatprep.subr.bf16.mxu0 0
    %4342 = vmatpush1.bf16.xpose.msra.mxu0 0
    %4343 = vmatprep.subr.bf16.mxu0 0
    %4344 = vmatpush1.bf16.xpose.msra.mxu0 0
    %4345 = vmatprep.subr.bf16.mxu0 0
    %4346 = vmatpush1.bf16.xpose.msra.mxu0 0
    %4347 = vmatprep.subr.bf16.mxu0 0
    %4348 = vmatpush1.bf16.xpose.msra.mxu0 0
    %4349 = vmatprep.subr.bf16.mxu0 0
    %4350 = vmatpush1.bf16.xpose.msra.mxu0 0
    %4351 = vmatprep.subr.bf16.mxu0 0
    %4352 = vmatpush1.bf16.xpose.msra.mxu0 0
    %4353 = vmatprep.subr.bf16.mxu0 0
    %4354 = vmatpush1.bf16.xpose.msra.mxu0 0
    %4355 = vmatprep.mubr.bf16.mxu0 0
    %4356 = vmatmul.mubr.bf16.gmra.mrb[0].mxu0 %v4312
    %v4357 = vpop.f32.mrb[0].mxu0
    %v4358 = vadd.f32 0.0, %v4357
    %v4359 = vpop.f32.mrb[0].mxu0
    %v4360 = vpop.f32.mrb[0].mxu0
    %v4361 = vadd.f32 0.0, %v4360
    %v4362 = vpop.f32.mrb[0].mxu0
    %4363 = vmatprep.mubr.bf16.mxu0 0
    %4364 = vmatmul.mubr.bf16.gmra.mrb[0].mxu0 %v4315
    %v4365 = vpop.f32.mrb[0].mxu0
    %v4366 = vadd.f32 0.0, %v4365
    %v4367 = vpop.f32.mrb[0].mxu0
    %v4368 = vpop.f32.mrb[0].mxu0
    %v4369 = vadd.f32 0.0, %v4368
    %v4370 = vpop.f32.mrb[0].mxu0
    %4371 = vdwg.mxu0
    %v4372 = vmul.f32 %v4358, 0.35355338
    %v4373 = vmul.f32 %v4361, 0.35355338
    %v4374 = vmul.f32 %v4366, 0.35355338
    %v4375 = vmul.f32 %v4369, 0.35355338
    %v4376 = vadd.f32 %v4372, %v3106
    %v4377 = vadd.f32 %v4373, %v3107
    %v4378 = vadd.f32 %v4374, %v3108
    %v4379 = vadd.f32 %v4375, %v3109
    %v4380 = vsel %vm367, %v4376, -inf
    %4381 = vmax.xlane.f32.xlu0 %v4380
    %v4382 = vpop.xlane.xlu0 %4381
    %v4383 = vsel %vm367, %v4377, -inf
    %4384 = vmax.xlane.f32.xlu0 %v4383
    %v4385 = vpop.xlane.xlu0 %4384
    %v4386 = vsel %vm367, %v4378, -inf
    %4387 = vmax.xlane.f32.xlu0 %v4386
    %v4388 = vpop.xlane.xlu0 %4387
    %v4389 = vsel %vm367, %v4379, -inf
    %4390 = vmax.xlane.f32.xlu0 %v4389
    %v4391 = vpop.xlane.xlu0 %4390
    %v4392 = vsub.f32 %v4376, %v4382
    %v4393 = vsub.f32 %v4377, %v4385
    %v4394 = vsub.f32 %v4378, %v4388
    %v4395 = vsub.f32 %v4379, %v4391
    %v4396 = vmul.f32 %v4392, 1.442695
    %v4397 = vpow.pop %v4396
    %v4398 = vmul.f32 %v4393, 1.442695
    %v4399 = vpow.pop %v4398
    %v4400 = vmul.f32 %v4394, 1.442695
    %v4401 = vpow.pop %v4400
    %v4402 = vmul.f32 %v4395, 1.442695
    %v4403 = vpow.pop %v4402
    %v4404 = vsel %vm367, %v4397, 0.0
    %4405 = vadd.xlane.f32.xlu0 %v4404
    %v4406 = vpop.xlane.xlu0 %4405
    %v4407 = vsel %vm367, %v4399, 0.0
    %4408 = vadd.xlane.f32.xlu0 %v4407
    %v4409 = vpop.xlane.xlu0 %4408
    %v4410 = vsel %vm367, %v4401, 0.0
    %4411 = vadd.xlane.f32.xlu0 %v4410
    %v4412 = vpop.xlane.xlu0 %4411
    %v4413 = vsel %vm367, %v4403, 0.0
    %4414 = vadd.xlane.f32.xlu0 %v4413
    %v4415 = vpop.xlane.xlu0 %4414
    %v4416 = vrcp.pop %v4406
    %v4417 = vrcp.pop %v4409
    %v4418 = vrcp.pop %v4412
    %v4419 = vrcp.pop %v4415
    %v4420 = vmul.f32 %v4397, %v4416
    %v4421 = vmul.f32 %v4399, %v4417
    %v4422 = vmul.f32 %v4401, %v4418
    %v4423 = vmul.f32 %v4403, %v4419
    %v4424 = vpack.c.bf16 %v4421, %v4420
    %v4425 = vpack.c.bf16 %v4423, %v4422
    %4428 = vrot.lane.b32.xlu0 %v4309, 96
    %v4429 = vpop.permute.xlu0 %4428
    %4430 = vrot.lane.b32.xlu0 %v4310, 96
    %v4431 = vpop.permute.xlu0 %4430
    %v4435 = vsel %vm367, %v4424, 0
    %v4438 = vsel %vm367, %v4425, 0
    %4440 = vmatprep.subr.bf16.mxu0 0
    %4441 = vmatpush1.bf16.msra.mxu0 %v4429
    %4442 = vmatprep.subr.bf16.mxu0 0
    %4443 = vmatpush1.bf16.msra.mxu0 %v4431
    %4444 = vmatprep.subr.bf16.mxu0 0
    %4445 = vmatpush1.bf16.msra.mxu0 0
    %4446 = vmatprep.subr.bf16.mxu0 0
    %4447 = vmatpush1.bf16.msra.mxu0 0
    %4448 = vmatprep.subr.bf16.mxu0 0
    %4449 = vmatpush1.bf16.msra.mxu0 0
    %4450 = vmatprep.subr.bf16.mxu0 0
    %4451 = vmatpush1.bf16.msra.mxu0 0
    %4452 = vmatprep.subr.bf16.mxu0 0
    %4453 = vmatpush1.bf16.msra.mxu0 0
    %4454 = vmatprep.subr.bf16.mxu0 0
    %4455 = vmatpush1.bf16.msra.mxu0 0
    %4456 = vmatprep.subr.bf16.mxu0 0
    %4457 = vmatpush1.bf16.msra.mxu0 0
    %4458 = vmatprep.subr.bf16.mxu0 0
    %4459 = vmatpush1.bf16.msra.mxu0 0
    %4460 = vmatprep.subr.bf16.mxu0 0
    %4461 = vmatpush1.bf16.msra.mxu0 0
    %4462 = vmatprep.subr.bf16.mxu0 0
    %4463 = vmatpush1.bf16.msra.mxu0 0
    %4464 = vmatprep.subr.bf16.mxu0 0
    %4465 = vmatpush1.bf16.msra.mxu0 0
    %4466 = vmatprep.subr.bf16.mxu0 0
    %4467 = vmatpush1.bf16.msra.mxu0 0
    %4468 = vmatprep.subr.bf16.mxu0 0
    %4469 = vmatpush1.bf16.msra.mxu0 0
    %4470 = vmatprep.subr.bf16.mxu0 0
    %4471 = vmatpush1.bf16.msra.mxu0 0
    %4472 = vmatprep.mubr.bf16.mxu0 0
    %4473 = vmatmul.mubr.bf16.gmra.mrb[0].mxu0 %v4435
    %v4474 = vpop.f32.mrb[0].mxu0
    %v4475 = vadd.f32 0.0, %v4474
    %v4476 = vpop.f32.mrb[0].mxu0
    %v4477 = vpop.f32.mrb[0].mxu0
    %v4478 = vadd.f32 0.0, %v4477
    %v4479 = vpop.f32.mrb[0].mxu0
    %4480 = vmatprep.mubr.bf16.mxu0 0
    %4481 = vmatmul.mubr.bf16.gmra.mrb[0].mxu0 %v4438
    %v4482 = vpop.f32.mrb[0].mxu0
    %v4483 = vadd.f32 0.0, %v4482
    %v4484 = vpop.f32.mrb[0].mxu0
    %v4485 = vpop.f32.mrb[0].mxu0
    %v4486 = vadd.f32 0.0, %v4485
    %v4487 = vpop.f32.mrb[0].mxu0
    %4488 = vdwg.mxu0
    %4491 = vrot.lane.b32.xlu0 %v4307, 120
    %v4492 = vpop.permute.xlu0 %4491
    %4493 = vrot.lane.b32.xlu0 %v4308, 120
    %v4494 = vpop.permute.xlu0 %4493
    %4495 = vrot.lane.b32.xlu0 %v4309, 120
    %v4496 = vpop.permute.xlu0 %4495
    %4497 = vrot.lane.b32.xlu0 %v4310, 120
    %v4498 = vpop.permute.xlu0 %4497
    %v4500 = vsel %vm436, %v4492, 0
    %v4503 = vsel %vm436, %v4494, 0
    %v4506 = vsel %vm436, %v4496, 0
    %v4509 = vsel %vm436, %v4498, 0
    %4511 = vmatprep.subr.bf16.mxu0 0
    %4512 = vmatpush1.bf16.xpose.msra.mxu0 %v4506
    %4513 = vmatprep.subr.bf16.mxu0 0
    %4514 = vmatpush1.bf16.xpose.msra.mxu0 %v4509
    %4515 = vmatprep.subr.bf16.mxu0 0
    %4516 = vmatpush1.bf16.xpose.msra.mxu0 0
    %4517 = vmatprep.subr.bf16.mxu0 0
    %4518 = vmatpush1.bf16.xpose.msra.mxu0 0
    %4519 = vmatprep.subr.bf16.mxu0 0
    %4520 = vmatpush1.bf16.xpose.msra.mxu0 0
    %4521 = vmatprep.subr.bf16.mxu0 0
    %4522 = vmatpush1.bf16.xpose.msra.mxu0 0
    %4523 = vmatprep.subr.bf16.mxu0 0
    %4524 = vmatpush1.bf16.xpose.msra.mxu0 0
    %4525 = vmatprep.subr.bf16.mxu0 0
    %4526 = vmatpush1.bf16.xpose.msra.mxu0 0
    %4527 = vmatprep.subr.bf16.mxu0 0
    %4528 = vmatpush1.bf16.xpose.msra.mxu0 0
    %4529 = vmatprep.subr.bf16.mxu0 0
    %4530 = vmatpush1.bf16.xpose.msra.mxu0 0
    %4531 = vmatprep.subr.bf16.mxu0 0
    %4532 = vmatpush1.bf16.xpose.msra.mxu0 0
    %4533 = vmatprep.subr.bf16.mxu0 0
    %4534 = vmatpush1.bf16.xpose.msra.mxu0 0
    %4535 = vmatprep.subr.bf16.mxu0 0
    %4536 = vmatpush1.bf16.xpose.msra.mxu0 0
    %4537 = vmatprep.subr.bf16.mxu0 0
    %4538 = vmatpush1.bf16.xpose.msra.mxu0 0
    %4539 = vmatprep.subr.bf16.mxu0 0
    %4540 = vmatpush1.bf16.xpose.msra.mxu0 0
    %4541 = vmatprep.subr.bf16.mxu0 0
    %4542 = vmatpush1.bf16.xpose.msra.mxu0 0
    %4543 = vmatprep.mubr.bf16.mxu0 0
    %4544 = vmatmul.mubr.bf16.gmra.mrb[0].mxu0 %v4500
    %v4545 = vpop.f32.mrb[0].mxu0
    %v4546 = vadd.f32 0.0, %v4545
    %v4547 = vpop.f32.mrb[0].mxu0
    %v4548 = vpop.f32.mrb[0].mxu0
    %v4549 = vadd.f32 0.0, %v4548
    %v4550 = vpop.f32.mrb[0].mxu0
    %4551 = vmatprep.mubr.bf16.mxu0 0
    %4552 = vmatmul.mubr.bf16.gmra.mrb[0].mxu0 %v4503
    %v4553 = vpop.f32.mrb[0].mxu0
    %v4554 = vadd.f32 0.0, %v4553
    %v4555 = vpop.f32.mrb[0].mxu0
    %v4556 = vpop.f32.mrb[0].mxu0
    %v4557 = vadd.f32 0.0, %v4556
    %v4558 = vpop.f32.mrb[0].mxu0
    %4559 = vdwg.mxu0
    %v4560 = vmul.f32 %v4546, 0.35355338
    %v4561 = vmul.f32 %v4549, 0.35355338
    %v4562 = vmul.f32 %v4554, 0.35355338
    %v4563 = vmul.f32 %v4557, 0.35355338
    %v4564 = vadd.f32 %v4560, %v3106
    %v4565 = vadd.f32 %v4561, %v3107
    %v4566 = vadd.f32 %v4562, %v3108
    %v4567 = vadd.f32 %v4563, %v3109
    %v4568 = vsel %vm367, %v4564, -inf
    %4569 = vmax.xlane.f32.xlu0 %v4568
    %v4570 = vpop.xlane.xlu0 %4569
    %v4571 = vsel %vm367, %v4565, -inf
    %4572 = vmax.xlane.f32.xlu0 %v4571
    %v4573 = vpop.xlane.xlu0 %4572
    %v4574 = vsel %vm367, %v4566, -inf
    %4575 = vmax.xlane.f32.xlu0 %v4574
    %v4576 = vpop.xlane.xlu0 %4575
    %v4577 = vsel %vm367, %v4567, -inf
    %4578 = vmax.xlane.f32.xlu0 %v4577
    %v4579 = vpop.xlane.xlu0 %4578
    %v4580 = vsub.f32 %v4564, %v4570
    %v4581 = vsub.f32 %v4565, %v4573
    %v4582 = vsub.f32 %v4566, %v4576
    %v4583 = vsub.f32 %v4567, %v4579
    %v4584 = vmul.f32 %v4580, 1.442695
    %v4585 = vpow.pop %v4584
    %v4586 = vmul.f32 %v4581, 1.442695
    %v4587 = vpow.pop %v4586
    %v4588 = vmul.f32 %v4582, 1.442695
    %v4589 = vpow.pop %v4588
    %v4590 = vmul.f32 %v4583, 1.442695
    %v4591 = vpow.pop %v4590
    %v4592 = vsel %vm367, %v4585, 0.0
    %4593 = vadd.xlane.f32.xlu0 %v4592
    %v4594 = vpop.xlane.xlu0 %4593
    %v4595 = vsel %vm367, %v4587, 0.0
    %4596 = vadd.xlane.f32.xlu0 %v4595
    %v4597 = vpop.xlane.xlu0 %4596
    %v4598 = vsel %vm367, %v4589, 0.0
    %4599 = vadd.xlane.f32.xlu0 %v4598
    %v4600 = vpop.xlane.xlu0 %4599
    %v4601 = vsel %vm367, %v4591, 0.0
    %4602 = vadd.xlane.f32.xlu0 %v4601
    %v4603 = vpop.xlane.xlu0 %4602
    %v4604 = vrcp.pop %v4594
    %v4605 = vrcp.pop %v4597
    %v4606 = vrcp.pop %v4600
    %v4607 = vrcp.pop %v4603
    %v4608 = vmul.f32 %v4585, %v4604
    %v4609 = vmul.f32 %v4587, %v4605
    %v4610 = vmul.f32 %v4589, %v4606
    %v4611 = vmul.f32 %v4591, %v4607
    %v4612 = vpack.c.bf16 %v4609, %v4608
    %v4613 = vpack.c.bf16 %v4611, %v4610
    %4614 = vrot.lane.b32.xlu0 %v4309, 88
    %v4615 = vpop.permute.xlu0 %4614
    %4616 = vrot.lane.b32.xlu0 %v4310, 88
    %v4617 = vpop.permute.xlu0 %4616
    %v4621 = vsel %vm367, %v4612, 0
    %v4624 = vsel %vm367, %v4613, 0
    %4626 = vmatprep.subr.bf16.mxu0 0
    %4627 = vmatpush1.bf16.msra.mxu0 %v4615
    %4628 = vmatprep.subr.bf16.mxu0 0
    %4629 = vmatpush1.bf16.msra.mxu0 %v4617
    %4630 = vmatprep.subr.bf16.mxu0 0
    %4631 = vmatpush1.bf16.msra.mxu0 0
    %4632 = vmatprep.subr.bf16.mxu0 0
    %4633 = vmatpush1.bf16.msra.mxu0 0
    %4634 = vmatprep.subr.bf16.mxu0 0
    %4635 = vmatpush1.bf16.msra.mxu0 0
    %4636 = vmatprep.subr.bf16.mxu0 0
    %4637 = vmatpush1.bf16.msra.mxu0 0
    %4638 = vmatprep.subr.bf16.mxu0 0
    %4639 = vmatpush1.bf16.msra.mxu0 0
    %4640 = vmatprep.subr.bf16.mxu0 0
    %4641 = vmatpush1.bf16.msra.mxu0 0
    %4642 = vmatprep.subr.bf16.mxu0 0
    %4643 = vmatpush1.bf16.msra.mxu0 0
    %4644 = vmatprep.subr.bf16.mxu0 0
    %4645 = vmatpush1.bf16.msra.mxu0 0
    %4646 = vmatprep.subr.bf16.mxu0 0
    %4647 = vmatpush1.bf16.msra.mxu0 0
    %4648 = vmatprep.subr.bf16.mxu0 0
    %4649 = vmatpush1.bf16.msra.mxu0 0
    %4650 = vmatprep.subr.bf16.mxu0 0
    %4651 = vmatpush1.bf16.msra.mxu0 0
    %4652 = vmatprep.subr.bf16.mxu0 0
    %4653 = vmatpush1.bf16.msra.mxu0 0
    %4654 = vmatprep.subr.bf16.mxu0 0
    %4655 = vmatpush1.bf16.msra.mxu0 0
    %4656 = vmatprep.subr.bf16.mxu0 0
    %4657 = vmatpush1.bf16.msra.mxu0 0
    %4658 = vmatprep.mubr.bf16.mxu0 0
    %4659 = vmatmul.mubr.bf16.gmra.mrb[0].mxu0 %v4621
    %v4660 = vpop.f32.mrb[0].mxu0
    %v4661 = vadd.f32 0.0, %v4660
    %v4662 = vpop.f32.mrb[0].mxu0
    %v4663 = vpop.f32.mrb[0].mxu0
    %v4664 = vadd.f32 0.0, %v4663
    %v4665 = vpop.f32.mrb[0].mxu0
    %4666 = vmatprep.mubr.bf16.mxu0 0
    %4667 = vmatmul.mubr.bf16.gmra.mrb[0].mxu0 %v4624
    %v4668 = vpop.f32.mrb[0].mxu0
    %v4669 = vadd.f32 0.0, %v4668
    %v4670 = vpop.f32.mrb[0].mxu0
    %v4671 = vpop.f32.mrb[0].mxu0
    %v4672 = vadd.f32 0.0, %v4671
    %v4673 = vpop.f32.mrb[0].mxu0
    %4674 = vdwg.mxu0
    %4675 = vrot.lane.b32.xlu0 %v4307, 112
    %v4676 = vpop.permute.xlu0 %4675
    %4677 = vrot.lane.b32.xlu0 %v4308, 112
    %v4678 = vpop.permute.xlu0 %4677
    %4679 = vrot.lane.b32.xlu0 %v4309, 112
    %v4680 = vpop.permute.xlu0 %4679
    %4681 = vrot.lane.b32.xlu0 %v4310, 112
    %v4682 = vpop.permute.xlu0 %4681
    %v4684 = vsel %vm436, %v4676, 0
    %v4687 = vsel %vm436, %v4678, 0
    %v4690 = vsel %vm436, %v4680, 0
    %v4693 = vsel %vm436, %v4682, 0
    %4695 = vmatprep.subr.bf16.mxu0 0
    %4696 = vmatpush1.bf16.xpose.msra.mxu0 %v4690
    %4697 = vmatprep.subr.bf16.mxu0 0
    %4698 = vmatpush1.bf16.xpose.msra.mxu0 %v4693
    %4699 = vmatprep.subr.bf16.mxu0 0
    %4700 = vmatpush1.bf16.xpose.msra.mxu0 0
    %4701 = vmatprep.subr.bf16.mxu0 0
    %4702 = vmatpush1.bf16.xpose.msra.mxu0 0
    %4703 = vmatprep.subr.bf16.mxu0 0
    %4704 = vmatpush1.bf16.xpose.msra.mxu0 0
    %4705 = vmatprep.subr.bf16.mxu0 0
    %4706 = vmatpush1.bf16.xpose.msra.mxu0 0
    %4707 = vmatprep.subr.bf16.mxu0 0
    %4708 = vmatpush1.bf16.xpose.msra.mxu0 0
    %4709 = vmatprep.subr.bf16.mxu0 0
    %4710 = vmatpush1.bf16.xpose.msra.mxu0 0
    %4711 = vmatprep.subr.bf16.mxu0 0
    %4712 = vmatpush1.bf16.xpose.msra.mxu0 0
    %4713 = vmatprep.subr.bf16.mxu0 0
    %4714 = vmatpush1.bf16.xpose.msra.mxu0 0
    %4715 = vmatprep.subr.bf16.mxu0 0
    %4716 = vmatpush1.bf16.xpose.msra.mxu0 0
    %4717 = vmatprep.subr.bf16.mxu0 0
    %4718 = vmatpush1.bf16.xpose.msra.mxu0 0
    %4719 = vmatprep.subr.bf16.mxu0 0
    %4720 = vmatpush1.bf16.xpose.msra.mxu0 0
    %4721 = vmatprep.subr.bf16.mxu0 0
    %4722 = vmatpush1.bf16.xpose.msra.mxu0 0
    %4723 = vmatprep.subr.bf16.mxu0 0
    %4724 = vmatpush1.bf16.xpose.msra.mxu0 0
    %4725 = vmatprep.subr.bf16.mxu0 0
    %4726 = vmatpush1.bf16.xpose.msra.mxu0 0
    %4727 = vmatprep.mubr.bf16.mxu0 0
    %4728 = vmatmul.mubr.bf16.gmra.mrb[0].mxu0 %v4684
    %v4729 = vpop.f32.mrb[0].mxu0
    %v4730 = vadd.f32 0.0, %v4729
    %v4731 = vpop.f32.mrb[0].mxu0
    %v4732 = vpop.f32.mrb[0].mxu0
    %v4733 = vadd.f32 0.0, %v4732
    %v4734 = vpop.f32.mrb[0].mxu0
    %4735 = vmatprep.mubr.bf16.mxu0 0
    %4736 = vmatmul.mubr.bf16.gmra.mrb[0].mxu0 %v4687
    %v4737 = vpop.f32.mrb[0].mxu0
    %v4738 = vadd.f32 0.0, %v4737
    %v4739 = vpop.f32.mrb[0].mxu0
    %v4740 = vpop.f32.mrb[0].mxu0
    %v4741 = vadd.f32 0.0, %v4740
    %v4742 = vpop.f32.mrb[0].mxu0
    %4743 = vdwg.mxu0
    %v4744 = vmul.f32 %v4730, 0.35355338
    %v4745 = vmul.f32 %v4733, 0.35355338
    %v4746 = vmul.f32 %v4738, 0.35355338
    %v4747 = vmul.f32 %v4741, 0.35355338
    %v4748 = vadd.f32 %v4744, %v3106
    %v4749 = vadd.f32 %v4745, %v3107
    %v4750 = vadd.f32 %v4746, %v3108
    %v4751 = vadd.f32 %v4747, %v3109
    %v4752 = vsel %vm367, %v4748, -inf
    %4753 = vmax.xlane.f32.xlu0 %v4752
    %v4754 = vpop.xlane.xlu0 %4753
    %v4755 = vsel %vm367, %v4749, -inf
    %4756 = vmax.xlane.f32.xlu0 %v4755
    %v4757 = vpop.xlane.xlu0 %4756
    %v4758 = vsel %vm367, %v4750, -inf
    %4759 = vmax.xlane.f32.xlu0 %v4758
    %v4760 = vpop.xlane.xlu0 %4759
    %v4761 = vsel %vm367, %v4751, -inf
    %4762 = vmax.xlane.f32.xlu0 %v4761
    %v4763 = vpop.xlane.xlu0 %4762
    %v4764 = vsub.f32 %v4748, %v4754
    %v4765 = vsub.f32 %v4749, %v4757
    %v4766 = vsub.f32 %v4750, %v4760
    %v4767 = vsub.f32 %v4751, %v4763
    %v4768 = vmul.f32 %v4764, 1.442695
    %v4769 = vpow.pop %v4768
    %v4770 = vmul.f32 %v4765, 1.442695
    %v4771 = vpow.pop %v4770
    %v4772 = vmul.f32 %v4766, 1.442695
    %v4773 = vpow.pop %v4772
    %v4774 = vmul.f32 %v4767, 1.442695
    %v4775 = vpow.pop %v4774
    %v4776 = vsel %vm367, %v4769, 0.0
    %4777 = vadd.xlane.f32.xlu0 %v4776
    %v4778 = vpop.xlane.xlu0 %4777
    %v4779 = vsel %vm367, %v4771, 0.0
    %4780 = vadd.xlane.f32.xlu0 %v4779
    %v4781 = vpop.xlane.xlu0 %4780
    %v4782 = vsel %vm367, %v4773, 0.0
    %4783 = vadd.xlane.f32.xlu0 %v4782
    %v4784 = vpop.xlane.xlu0 %4783
    %v4785 = vsel %vm367, %v4775, 0.0
    %4786 = vadd.xlane.f32.xlu0 %v4785
    %v4787 = vpop.xlane.xlu0 %4786
    %v4788 = vrcp.pop %v4778
    %v4789 = vrcp.pop %v4781
    %v4790 = vrcp.pop %v4784
    %v4791 = vrcp.pop %v4787
    %v4792 = vmul.f32 %v4769, %v4788
    %v4793 = vmul.f32 %v4771, %v4789
    %v4794 = vmul.f32 %v4773, %v4790
    %v4795 = vmul.f32 %v4775, %v4791
    %v4796 = vpack.c.bf16 %v4793, %v4792
    %v4797 = vpack.c.bf16 %v4795, %v4794
    %4798 = vrot.lane.b32.xlu0 %v4309, 80
    %v4799 = vpop.permute.xlu0 %4798
    %4800 = vrot.lane.b32.xlu0 %v4310, 80
    %v4801 = vpop.permute.xlu0 %4800
    %v4805 = vsel %vm367, %v4796, 0
    %v4808 = vsel %vm367, %v4797, 0
    %4810 = vmatprep.subr.bf16.mxu0 0
    %4811 = vmatpush1.bf16.msra.mxu0 %v4799
    %4812 = vmatprep.subr.bf16.mxu0 0
    %4813 = vmatpush1.bf16.msra.mxu0 %v4801
    %4814 = vmatprep.subr.bf16.mxu0 0
    %4815 = vmatpush1.bf16.msra.mxu0 0
    %4816 = vmatprep.subr.bf16.mxu0 0
    %4817 = vmatpush1.bf16.msra.mxu0 0
    %4818 = vmatprep.subr.bf16.mxu0 0
    %4819 = vmatpush1.bf16.msra.mxu0 0
    %4820 = vmatprep.subr.bf16.mxu0 0
    %4821 = vmatpush1.bf16.msra.mxu0 0
    %4822 = vmatprep.subr.bf16.mxu0 0
    %4823 = vmatpush1.bf16.msra.mxu0 0
    %4824 = vmatprep.subr.bf16.mxu0 0
    %4825 = vmatpush1.bf16.msra.mxu0 0
    %4826 = vmatprep.subr.bf16.mxu0 0
    %4827 = vmatpush1.bf16.msra.mxu0 0
    %4828 = vmatprep.subr.bf16.mxu0 0
    %4829 = vmatpush1.bf16.msra.mxu0 0
    %4830 = vmatprep.subr.bf16.mxu0 0
    %4831 = vmatpush1.bf16.msra.mxu0 0
    %4832 = vmatprep.subr.bf16.mxu0 0
    %4833 = vmatpush1.bf16.msra.mxu0 0
    %4834 = vmatprep.subr.bf16.mxu0 0
    %4835 = vmatpush1.bf16.msra.mxu0 0
    %4836 = vmatprep.subr.bf16.mxu0 0
    %4837 = vmatpush1.bf16.msra.mxu0 0
    %4838 = vmatprep.subr.bf16.mxu0 0
    %4839 = vmatpush1.bf16.msra.mxu0 0
    %4840 = vmatprep.subr.bf16.mxu0 0
    %4841 = vmatpush1.bf16.msra.mxu0 0
    %4842 = vmatprep.mubr.bf16.mxu0 0
    %4843 = vmatmul.mubr.bf16.gmra.mrb[0].mxu0 %v4805
    %v4844 = vpop.f32.mrb[0].mxu0
    %v4845 = vadd.f32 0.0, %v4844
    %v4846 = vpop.f32.mrb[0].mxu0
    %v4847 = vpop.f32.mrb[0].mxu0
    %v4848 = vadd.f32 0.0, %v4847
    %v4849 = vpop.f32.mrb[0].mxu0
    %4850 = vmatprep.mubr.bf16.mxu0 0
    %4851 = vmatmul.mubr.bf16.gmra.mrb[0].mxu0 %v4808
    %v4852 = vpop.f32.mrb[0].mxu0
    %v4853 = vadd.f32 0.0, %v4852
    %v4854 = vpop.f32.mrb[0].mxu0
    %v4855 = vpop.f32.mrb[0].mxu0
    %v4856 = vadd.f32 0.0, %v4855
    %v4857 = vpop.f32.mrb[0].mxu0
    %4858 = vdwg.mxu0
    %4859 = vrot.lane.b32.xlu0 %v4307, 104
    %v4860 = vpop.permute.xlu0 %4859
    %4861 = vrot.lane.b32.xlu0 %v4308, 104
    %v4862 = vpop.permute.xlu0 %4861
    %4863 = vrot.lane.b32.xlu0 %v4309, 104
    %v4864 = vpop.permute.xlu0 %4863
    %4865 = vrot.lane.b32.xlu0 %v4310, 104
    %v4866 = vpop.permute.xlu0 %4865
    %v4868 = vsel %vm436, %v4860, 0
    %v4871 = vsel %vm436, %v4862, 0
    %v4874 = vsel %vm436, %v4864, 0
    %v4877 = vsel %vm436, %v4866, 0
    %4879 = vmatprep.subr.bf16.mxu0 0
    %4880 = vmatpush1.bf16.xpose.msra.mxu0 %v4874
    %4881 = vmatprep.subr.bf16.mxu0 0
    %4882 = vmatpush1.bf16.xpose.msra.mxu0 %v4877
    %4883 = vmatprep.subr.bf16.mxu0 0
    %4884 = vmatpush1.bf16.xpose.msra.mxu0 0
    %4885 = vmatprep.subr.bf16.mxu0 0
    %4886 = vmatpush1.bf16.xpose.msra.mxu0 0
    %4887 = vmatprep.subr.bf16.mxu0 0
    %4888 = vmatpush1.bf16.xpose.msra.mxu0 0
    %4889 = vmatprep.subr.bf16.mxu0 0
    %4890 = vmatpush1.bf16.xpose.msra.mxu0 0
    %4891 = vmatprep.subr.bf16.mxu0 0
    %4892 = vmatpush1.bf16.xpose.msra.mxu0 0
    %4893 = vmatprep.subr.bf16.mxu0 0
    %4894 = vmatpush1.bf16.xpose.msra.mxu0 0
    %4895 = vmatprep.subr.bf16.mxu0 0
    %4896 = vmatpush1.bf16.xpose.msra.mxu0 0
    %4897 = vmatprep.subr.bf16.mxu0 0
    %4898 = vmatpush1.bf16.xpose.msra.mxu0 0
    %4899 = vmatprep.subr.bf16.mxu0 0
    %4900 = vmatpush1.bf16.xpose.msra.mxu0 0
    %4901 = vmatprep.subr.bf16.mxu0 0
    %4902 = vmatpush1.bf16.xpose.msra.mxu0 0
    %4903 = vmatprep.subr.bf16.mxu0 0
    %4904 = vmatpush1.bf16.xpose.msra.mxu0 0
    %4905 = vmatprep.subr.bf16.mxu0 0
    %4906 = vmatpush1.bf16.xpose.msra.mxu0 0
    %4907 = vmatprep.subr.bf16.mxu0 0
    %4908 = vmatpush1.bf16.xpose.msra.mxu0 0
    %4909 = vmatprep.subr.bf16.mxu0 0
    %4910 = vmatpush1.bf16.xpose.msra.mxu0 0
    %4911 = vmatprep.mubr.bf16.mxu0 0
    %4912 = vmatmul.mubr.bf16.gmra.mrb[0].mxu0 %v4868
    %v4913 = vpop.f32.mrb[0].mxu0
    %v4914 = vadd.f32 0.0, %v4913
    %v4915 = vpop.f32.mrb[0].mxu0
    %v4916 = vpop.f32.mrb[0].mxu0
    %v4917 = vadd.f32 0.0, %v4916
    %v4918 = vpop.f32.mrb[0].mxu0
    %4919 = vmatprep.mubr.bf16.mxu0 0
    %4920 = vmatmul.mubr.bf16.gmra.mrb[0].mxu0 %v4871
    %v4921 = vpop.f32.mrb[0].mxu0
    %v4922 = vadd.f32 0.0, %v4921
    %v4923 = vpop.f32.mrb[0].mxu0
    %v4924 = vpop.f32.mrb[0].mxu0
    %v4925 = vadd.f32 0.0, %v4924
    %v4926 = vpop.f32.mrb[0].mxu0
    %4927 = vdwg.mxu0
    %v4928 = vmul.f32 %v4914, 0.35355338
    %v4929 = vmul.f32 %v4917, 0.35355338
    %v4930 = vmul.f32 %v4922, 0.35355338
    %v4931 = vmul.f32 %v4925, 0.35355338
    %v4932 = vadd.f32 %v4928, %v3106
    %v4933 = vadd.f32 %v4929, %v3107
    %v4934 = vadd.f32 %v4930, %v3108
    %v4935 = vadd.f32 %v4931, %v3109
    %v4936 = vsel %vm367, %v4932, -inf
    %4937 = vmax.xlane.f32.xlu0 %v4936
    %v4938 = vpop.xlane.xlu0 %4937
    %v4939 = vsel %vm367, %v4933, -inf
    %4940 = vmax.xlane.f32.xlu0 %v4939
    %v4941 = vpop.xlane.xlu0 %4940
    %v4942 = vsel %vm367, %v4934, -inf
    %4943 = vmax.xlane.f32.xlu0 %v4942
    %v4944 = vpop.xlane.xlu0 %4943
    %v4945 = vsel %vm367, %v4935, -inf
    %4946 = vmax.xlane.f32.xlu0 %v4945
    %v4947 = vpop.xlane.xlu0 %4946
    %v4948 = vsub.f32 %v4932, %v4938
    %v4949 = vsub.f32 %v4933, %v4941
    %v4950 = vsub.f32 %v4934, %v4944
    %v4951 = vsub.f32 %v4935, %v4947
    %v4952 = vmul.f32 %v4948, 1.442695
    %v4953 = vpow.pop %v4952
    %v4954 = vmul.f32 %v4949, 1.442695
    %v4955 = vpow.pop %v4954
    %v4956 = vmul.f32 %v4950, 1.442695
    %v4957 = vpow.pop %v4956
    %v4958 = vmul.f32 %v4951, 1.442695
    %v4959 = vpow.pop %v4958
    %v4960 = vsel %vm367, %v4953, 0.0
    %4961 = vadd.xlane.f32.xlu0 %v4960
    %v4962 = vpop.xlane.xlu0 %4961
    %v4963 = vsel %vm367, %v4955, 0.0
    %4964 = vadd.xlane.f32.xlu0 %v4963
    %v4965 = vpop.xlane.xlu0 %4964
    %v4966 = vsel %vm367, %v4957, 0.0
    %4967 = vadd.xlane.f32.xlu0 %v4966
    %v4968 = vpop.xlane.xlu0 %4967
    %v4969 = vsel %vm367, %v4959, 0.0
    %4970 = vadd.xlane.f32.xlu0 %v4969
    %v4971 = vpop.xlane.xlu0 %4970
    %v4972 = vrcp.pop %v4962
    %v4973 = vrcp.pop %v4965
    %v4974 = vrcp.pop %v4968
    %v4975 = vrcp.pop %v4971
    %v4976 = vmul.f32 %v4953, %v4972
    %v4977 = vmul.f32 %v4955, %v4973
    %v4978 = vmul.f32 %v4957, %v4974
    %v4979 = vmul.f32 %v4959, %v4975
    %v4980 = vpack.c.bf16 %v4977, %v4976
    %v4981 = vpack.c.bf16 %v4979, %v4978
    %4982 = vrot.lane.b32.xlu0 %v4309, 72
    %v4983 = vpop.permute.xlu0 %4982
    %4984 = vrot.lane.b32.xlu0 %v4310, 72
    %v4985 = vpop.permute.xlu0 %4984
    %v4989 = vsel %vm367, %v4980, 0
    %v4992 = vsel %vm367, %v4981, 0
    %4994 = vmatprep.subr.bf16.mxu0 0
    %4995 = vmatpush1.bf16.msra.mxu0 %v4983
    %4996 = vmatprep.subr.bf16.mxu0 0
    %4997 = vmatpush1.bf16.msra.mxu0 %v4985
    %4998 = vmatprep.subr.bf16.mxu0 0
    %4999 = vmatpush1.bf16.msra.mxu0 0
    %5000 = vmatprep.subr.bf16.mxu0 0
    %5001 = vmatpush1.bf16.msra.mxu0 0
    %5002 = vmatprep.subr.bf16.mxu0 0
    %5003 = vmatpush1.bf16.msra.mxu0 0
    %5004 = vmatprep.subr.bf16.mxu0 0
    %5005 = vmatpush1.bf16.msra.mxu0 0
    %5006 = vmatprep.subr.bf16.mxu0 0
    %5007 = vmatpush1.bf16.msra.mxu0 0
    %5008 = vmatprep.subr.bf16.mxu0 0
    %5009 = vmatpush1.bf16.msra.mxu0 0
    %5010 = vmatprep.subr.bf16.mxu0 0
    %5011 = vmatpush1.bf16.msra.mxu0 0
    %5012 = vmatprep.subr.bf16.mxu0 0
    %5013 = vmatpush1.bf16.msra.mxu0 0
    %5014 = vmatprep.subr.bf16.mxu0 0
    %5015 = vmatpush1.bf16.msra.mxu0 0
    %5016 = vmatprep.subr.bf16.mxu0 0
    %5017 = vmatpush1.bf16.msra.mxu0 0
    %5018 = vmatprep.subr.bf16.mxu0 0
    %5019 = vmatpush1.bf16.msra.mxu0 0
    %5020 = vmatprep.subr.bf16.mxu0 0
    %5021 = vmatpush1.bf16.msra.mxu0 0
    %5022 = vmatprep.subr.bf16.mxu0 0
    %5023 = vmatpush1.bf16.msra.mxu0 0
    %5024 = vmatprep.subr.bf16.mxu0 0
    %5025 = vmatpush1.bf16.msra.mxu0 0
    %5026 = vmatprep.mubr.bf16.mxu0 0
    %5027 = vmatmul.mubr.bf16.gmra.mrb[0].mxu0 %v4989
    %v5028 = vpop.f32.mrb[0].mxu0
    %v5029 = vadd.f32 0.0, %v5028
    %v5030 = vpop.f32.mrb[0].mxu0
    %v5031 = vpop.f32.mrb[0].mxu0
    %v5032 = vadd.f32 0.0, %v5031
    %v5033 = vpop.f32.mrb[0].mxu0
    %5034 = vmatprep.mubr.bf16.mxu0 0
    %5035 = vmatmul.mubr.bf16.gmra.mrb[0].mxu0 %v4992
    %v5036 = vpop.f32.mrb[0].mxu0
    %v5037 = vadd.f32 0.0, %v5036
    %v5038 = vpop.f32.mrb[0].mxu0
    %v5039 = vpop.f32.mrb[0].mxu0
    %v5040 = vadd.f32 0.0, %v5039
    %v5041 = vpop.f32.mrb[0].mxu0
    %5042 = vdwg.mxu0
    %5047 = vrot.lane.b32.xlu0 %v4661, 8
    %v5048 = vpop.permute.xlu0 %5047
    %5049 = vrot.lane.b32.xlu0 %v4664, 8
    %v5050 = vpop.permute.xlu0 %5049
    %5051 = vrot.lane.b32.xlu0 %v4669, 8
    %v5052 = vpop.permute.xlu0 %5051
    %5053 = vrot.lane.b32.xlu0 %v4672, 8
    %v5054 = vpop.permute.xlu0 %5053
    %5063 = vrot.lane.b32.xlu0 %v4845, 16
    %v5064 = vpop.permute.xlu0 %5063
    %5065 = vrot.lane.b32.xlu0 %v4848, 16
    %v5066 = vpop.permute.xlu0 %5065
    %5067 = vrot.lane.b32.xlu0 %v4853, 16
    %v5068 = vpop.permute.xlu0 %5067
    %5069 = vrot.lane.b32.xlu0 %v4856, 16
    %v5070 = vpop.permute.xlu0 %5069
    %5079 = vrot.lane.b32.xlu0 %v5029, 24
    %v5080 = vpop.permute.xlu0 %5079
    %5081 = vrot.lane.b32.xlu0 %v5032, 24
    %v5082 = vpop.permute.xlu0 %5081
    %5083 = vrot.lane.b32.xlu0 %v5037, 24
    %v5084 = vpop.permute.xlu0 %5083
    %5085 = vrot.lane.b32.xlu0 %v5040, 24
    %v5086 = vpop.permute.xlu0 %5085
    %v5091 = vsel %vm436, %v4475, %v5048
    %v5092 = vsel %vm436, %v4478, %v5050
    %v5093 = vsel %vm436, %v4483, %v5052
    %v5094 = vsel %vm436, %v4486, %v5054
    %v5095 = vsel %vm1217, %v5091, %v5064
    %v5096 = vsel %vm1217, %v5092, %v5066
    %v5097 = vsel %vm1217, %v5093, %v5068
    %v5098 = vsel %vm1217, %v5094, %v5070
    %v5099 = vsel %vm1222, %v5095, %v5080
    %v5100 = vsel %vm1222, %v5096, %v5082
    %v5101 = vsel %vm1222, %v5097, %v5084
    %v5102 = vsel %vm1222, %v5098, %v5086
    %v5103 = vpack.c.bf16 %v5100, %v5099
    %v5104 = vpack.c.bf16 %v5102, %v5101
    %v5106 = vlaneseq
    %v5107 = vshrl.u32 %v5106, 7
    %v5108 = vsub.s32 0, %v5107
    %v5109 = vrot.slane %v4306, %v5108
    %v5115 = vunpack.c.l.b16 %v4302
    %v5116 = vunpack.c.l.b16 %v4303
    %v5117 = vunpack.c.l.b16 %v4304
    %v5118 = vunpack.c.l.b16 %v4305
    %v5119 = vpack.c.b16 %v5116, %v5115
    %v5120 = vpack.c.b16 %v5118, %v5117
    %v5124 = vsel %vm367, %v5103, 0
    %v5127 = vsel %vm367, %v5104, 0
    %5129 = vmatprep.subr.bf16.mxu0 0
    %5130 = vmatpush1.bf16.msra.mxu0 %v5119
    %5131 = vmatprep.subr.bf16.mxu0 0
    %5132 = vmatpush1.bf16.msra.mxu0 %v5120
    %5133 = vmatprep.subr.bf16.mxu0 0
    %5134 = vmatpush1.bf16.msra.mxu0 0
    %5135 = vmatprep.subr.bf16.mxu0 0
    %5136 = vmatpush1.bf16.msra.mxu0 0
    %5137 = vmatprep.subr.bf16.mxu0 0
    %5138 = vmatpush1.bf16.msra.mxu0 0
    %5139 = vmatprep.subr.bf16.mxu0 0
    %5140 = vmatpush1.bf16.msra.mxu0 0
    %5141 = vmatprep.subr.bf16.mxu0 0
    %5142 = vmatpush1.bf16.msra.mxu0 0
    %5143 = vmatprep.subr.bf16.mxu0 0
    %5144 = vmatpush1.bf16.msra.mxu0 0
    %5145 = vmatprep.subr.bf16.mxu0 0
    %5146 = vmatpush1.bf16.msra.mxu0 0
    %5147 = vmatprep.subr.bf16.mxu0 0
    %5148 = vmatpush1.bf16.msra.mxu0 0
    %5149 = vmatprep.subr.bf16.mxu0 0
    %5150 = vmatpush1.bf16.msra.mxu0 0
    %5151 = vmatprep.subr.bf16.mxu0 0
    %5152 = vmatpush1.bf16.msra.mxu0 0
    %5153 = vmatprep.subr.bf16.mxu0 0
    %5154 = vmatpush1.bf16.msra.mxu0 0
    %5155 = vmatprep.subr.bf16.mxu0 0
    %5156 = vmatpush1.bf16.msra.mxu0 0
    %5157 = vmatprep.subr.bf16.mxu0 0
    %5158 = vmatpush1.bf16.msra.mxu0 0
    %5159 = vmatprep.subr.bf16.mxu0 0
    %5160 = vmatpush1.bf16.msra.mxu0 0
    %5161 = vmatprep.mubr.bf16.mxu0 0
    %5162 = vmatmul.mubr.bf16.gmra.mrb[0].mxu0 %v5124
    %v5163 = vpop.f32.mrb[0].mxu0
    %v5164 = vadd.f32 %v5109, %v5163
    %v5165 = vpop.f32.mrb[0].mxu0
    %v5166 = vpop.f32.mrb[0].mxu0
    %v5167 = vadd.f32 %v5109, %v5166
    %v5168 = vpop.f32.mrb[0].mxu0
    %5169 = vmatprep.mubr.bf16.mxu0 0
    %5170 = vmatmul.mubr.bf16.gmra.mrb[0].mxu0 %v5127
    %v5171 = vpop.f32.mrb[0].mxu0
    %v5172 = vadd.f32 %v5109, %v5171
    %v5173 = vpop.f32.mrb[0].mxu0
    %v5174 = vpop.f32.mrb[0].mxu0
    %v5175 = vadd.f32 %v5109, %v5174
    %v5176 = vpop.f32.mrb[0].mxu0
    %5177 = vdwg.mxu0
    %v5178 = vadd.f32 %v4140, %v5164
    %v5179 = vadd.f32 %v4141, %v5167
    %v5180 = vadd.f32 %v4142, %v5172
    %v5181 = vadd.f32 %v4143, %v5175
    %v5182 = vld [vmem:[%s71] sm:$0x1]
    %v5183 = vld [vmem:[%s73] sm:$0x1]
    %v5184 = vsel %vm367, %v5178, 0.0
    %5185 = vadd.xlane.f32.xlu0 %v5184
    %v5186 = vpop.xlane.xlu0 %5185
    %v5187 = vsel %vm367, %v5179, 0.0
    %5188 = vadd.xlane.f32.xlu0 %v5187
    %v5189 = vpop.xlane.xlu0 %5188
    %v5190 = vsel %vm367, %v5180, 0.0
    %5191 = vadd.xlane.f32.xlu0 %v5190
    %v5192 = vpop.xlane.xlu0 %5191
    %v5193 = vsel %vm367, %v5181, 0.0
    %5194 = vadd.xlane.f32.xlu0 %v5193
    %v5195 = vpop.xlane.xlu0 %5194
    %v5196 = vmul.f32 %v5186, %v1320
    %v5197 = vmul.f32 %v5189, %v1320
    %v5198 = vmul.f32 %v5192, %v1320
    %v5199 = vmul.f32 %v5195, %v1320
    %v5200 = vsub.f32 %v5178, %v5196
    %v5201 = vsub.f32 %v5179, %v5197
    %v5202 = vsub.f32 %v5180, %v5198
    %v5203 = vsub.f32 %v5181, %v5199
    %v5204 = vmul.f32 %v5200, %v5200
    %v5205 = vmul.f32 %v5201, %v5201
    %v5206 = vmul.f32 %v5202, %v5202
    %v5207 = vmul.f32 %v5203, %v5203
    %v5208 = vsel %vm367, %v5204, 0.0
    %5209 = vadd.xlane.f32.xlu0 %v5208
    %v5210 = vpop.xlane.xlu0 %5209
    %v5211 = vsel %vm367, %v5205, 0.0
    %5212 = vadd.xlane.f32.xlu0 %v5211
    %v5213 = vpop.xlane.xlu0 %5212
    %v5214 = vsel %vm367, %v5206, 0.0
    %5215 = vadd.xlane.f32.xlu0 %v5214
    %v5216 = vpop.xlane.xlu0 %5215
    %v5217 = vsel %vm367, %v5207, 0.0
    %5218 = vadd.xlane.f32.xlu0 %v5217
    %v5219 = vpop.xlane.xlu0 %5218
    %v5220 = vmul.f32 %v5210, %v1320
    %v5221 = vmul.f32 %v5213, %v1320
    %v5222 = vmul.f32 %v5216, %v1320
    %v5223 = vmul.f32 %v5219, %v1320
    %v5224 = vadd.f32 %v5220, 1e-05
    %v5225 = vadd.f32 %v5221, 1e-05
    %v5226 = vadd.f32 %v5222, 1e-05
    %v5227 = vadd.f32 %v5223, 1e-05
    %v5228 = vrsqrt.pop %v5224
    %v5229 = vrsqrt.pop %v5225
    %v5230 = vrsqrt.pop %v5226
    %v5231 = vrsqrt.pop %v5227
    %v5232 = vmul.f32 %v5200, %v5228
    %v5233 = vmul.f32 %v5201, %v5229
    %v5234 = vmul.f32 %v5202, %v5230
    %v5235 = vmul.f32 %v5203, %v5231
    %v5237 = vlaneseq
    %v5238 = vshrl.u32 %v5237, 7
    %v5239 = vsub.s32 0, %v5238
    %v5240 = vrot.slane %v5182, %v5239
    %v5242 = vmul.f32 %v5232, %v5240
    %v5243 = vmul.f32 %v5233, %v5240
    %v5244 = vmul.f32 %v5234, %v5240
    %v5245 = vmul.f32 %v5235, %v5240
    %v5247 = vlaneseq
    %v5248 = vshrl.u32 %v5247, 7
    %v5249 = vsub.s32 0, %v5248
    %v5250 = vrot.slane %v5183, %v5249
    %v5252 = vadd.f32 %v5242, %v5250
    %v5253 = vadd.f32 %v5243, %v5250
    %v5254 = vadd.f32 %v5244, %v5250
    %v5255 = vadd.f32 %v5245, %v5250
    %v5256 = vpack.c.bf16 %v5253, %v5252
    %v5257 = vpack.c.bf16 %v5255, %v5254
    %v5258 = vld [vmem:[%s75] sm:$0xf]
    %v5259 = vld [vmem:[%s75 + $0x4] sm:$0xf]
    %v5260 = vld [vmem:[%s75 + $0x8] sm:$0xf]
    %v5261 = vld [vmem:[%s75 + $0xc] sm:$0xf]
    %v5262 = vld [vmem:[%s77] sm:$0x1]
    %v5264 = vlaneseq
    %v5265 = vshrl.u32 %v5264, 7
    %v5266 = vsub.s32 0, %v5265
    %v5267 = vrot.slane %v5262, %v5266
    %v5273 = vunpack.c.l.b16 %v5258
    %v5274 = vunpack.c.l.b16 %v5259
    %v5275 = vunpack.c.l.b16 %v5260
    %v5276 = vunpack.c.l.b16 %v5261
    %v5277 = vpack.c.b16 %v5274, %v5273
    %v5278 = vpack.c.b16 %v5276, %v5275
    %v5282 = vsel %vm367, %v5256, 0
    %v5285 = vsel %vm367, %v5257, 0
    %5287 = vmatprep.subr.bf16.mxu0 0
    %5288 = vmatpush1.bf16.msra.mxu0 %v5277
    %5289 = vmatprep.subr.bf16.mxu0 0
    %5290 = vmatpush1.bf16.msra.mxu0 %v5278
    %5291 = vmatprep.subr.bf16.mxu0 0
    %5292 = vmatpush1.bf16.msra.mxu0 0
    %5293 = vmatprep.subr.bf16.mxu0 0
    %5294 = vmatpush1.bf16.msra.mxu0 0
    %5295 = vmatprep.subr.bf16.mxu0 0
    %5296 = vmatpush1.bf16.msra.mxu0 0
    %5297 = vmatprep.subr.bf16.mxu0 0
    %5298 = vmatpush1.bf16.msra.mxu0 0
    %5299 = vmatprep.subr.bf16.mxu0 0
    %5300 = vmatpush1.bf16.msra.mxu0 0
    %5301 = vmatprep.subr.bf16.mxu0 0
    %5302 = vmatpush1.bf16.msra.mxu0 0
    %5303 = vmatprep.subr.bf16.mxu0 0
    %5304 = vmatpush1.bf16.msra.mxu0 0
    %5305 = vmatprep.subr.bf16.mxu0 0
    %5306 = vmatpush1.bf16.msra.mxu0 0
    %5307 = vmatprep.subr.bf16.mxu0 0
    %5308 = vmatpush1.bf16.msra.mxu0 0
    %5309 = vmatprep.subr.bf16.mxu0 0
    %5310 = vmatpush1.bf16.msra.mxu0 0
    %5311 = vmatprep.subr.bf16.mxu0 0
    %5312 = vmatpush1.bf16.msra.mxu0 0
    %5313 = vmatprep.subr.bf16.mxu0 0
    %5314 = vmatpush1.bf16.msra.mxu0 0
    %5315 = vmatprep.subr.bf16.mxu0 0
    %5316 = vmatpush1.bf16.msra.mxu0 0
    %5317 = vmatprep.subr.bf16.mxu0 0
    %5318 = vmatpush1.bf16.msra.mxu0 0
    %5319 = vmatprep.mubr.bf16.mxu0 0
    %5320 = vmatmul.mubr.bf16.gmra.mrb[0].mxu0 %v5282
    %v5321 = vpop.f32.mrb[0].mxu0
    %v5322 = vadd.f32 %v5267, %v5321
    %v5323 = vpop.f32.mrb[0].mxu0
    %v5324 = vpop.f32.mrb[0].mxu0
    %v5325 = vadd.f32 %v5267, %v5324
    %v5326 = vpop.f32.mrb[0].mxu0
    %5327 = vmatprep.mubr.bf16.mxu0 0
    %5328 = vmatmul.mubr.bf16.gmra.mrb[0].mxu0 %v5285
    %v5329 = vpop.f32.mrb[0].mxu0
    %v5330 = vadd.f32 %v5267, %v5329
    %v5331 = vpop.f32.mrb[0].mxu0
    %v5332 = vpop.f32.mrb[0].mxu0
    %v5333 = vadd.f32 %v5267, %v5332
    %v5334 = vpop.f32.mrb[0].mxu0
    %5335 = vdwg.mxu0
    %v5336 = vmul.f32 %v5322, 0.5
    %v5337 = vmul.f32 %v5325, 0.5
    %v5338 = vmul.f32 %v5330, 0.5
    %v5339 = vmul.f32 %v5333, 0.5
    %v5340 = vmul.f32 %v5322, 0.70710677
    %v5341 = vmul.f32 %v5325, 0.70710677
    %v5342 = vmul.f32 %v5330, 0.70710677
    %v5343 = vmul.f32 %v5333, 0.70710677
    %v5344 = verf.f32.pop %v5340
    %v5345 = verf.f32.pop %v5341
    %v5346 = verf.f32.pop %v5342
    %v5347 = verf.f32.pop %v5343
    %v5348 = vadd.f32 %v5344, 1.0
    %v5349 = vadd.f32 %v5345, 1.0
    %v5350 = vadd.f32 %v5346, 1.0
    %v5351 = vadd.f32 %v5347, 1.0
    %v5352 = vmul.f32 %v5336, %v5348
    %v5353 = vmul.f32 %v5337, %v5349
    %v5354 = vmul.f32 %v5338, %v5350
    %v5355 = vmul.f32 %v5339, %v5351
    %v5356 = vpack.c.bf16 %v5353, %v5352
    %v5357 = vpack.c.bf16 %v5355, %v5354
    %v5358 = vld [vmem:[%s79] sm:$0xf]
    %v5359 = vld [vmem:[%s79 + $0x4] sm:$0xf]
    %v5360 = vld [vmem:[%s79 + $0x8] sm:$0xf]
    %v5361 = vld [vmem:[%s79 + $0xc] sm:$0xf]
    %v5362 = vld [vmem:[%s81] sm:$0x1]
    %v5364 = vlaneseq
    %v5365 = vshrl.u32 %v5364, 7
    %v5366 = vsub.s32 0, %v5365
    %v5367 = vrot.slane %v5362, %v5366
    %v5373 = vunpack.c.l.b16 %v5358
    %v5374 = vunpack.c.l.b16 %v5359
    %v5375 = vunpack.c.l.b16 %v5360
    %v5376 = vunpack.c.l.b16 %v5361
    %v5377 = vpack.c.b16 %v5374, %v5373
    %v5378 = vpack.c.b16 %v5376, %v5375
    %v5382 = vsel %vm367, %v5356, 0
    %v5385 = vsel %vm367, %v5357, 0
    %5387 = vmatprep.subr.bf16.mxu0 0
    %5388 = vmatpush1.bf16.msra.mxu0 %v5377
    %5389 = vmatprep.subr.bf16.mxu0 0
    %5390 = vmatpush1.bf16.msra.mxu0 %v5378
    %5391 = vmatprep.subr.bf16.mxu0 0
    %5392 = vmatpush1.bf16.msra.mxu0 0
    %5393 = vmatprep.subr.bf16.mxu0 0
    %5394 = vmatpush1.bf16.msra.mxu0 0
    %5395 = vmatprep.subr.bf16.mxu0 0
    %5396 = vmatpush1.bf16.msra.mxu0 0
    %5397 = vmatprep.subr.bf16.mxu0 0
    %5398 = vmatpush1.bf16.msra.mxu0 0
    %5399 = vmatprep.subr.bf16.mxu0 0
    %5400 = vmatpush1.bf16.msra.mxu0 0
    %5401 = vmatprep.subr.bf16.mxu0 0
    %5402 = vmatpush1.bf16.msra.mxu0 0
    %5403 = vmatprep.subr.bf16.mxu0 0
    %5404 = vmatpush1.bf16.msra.mxu0 0
    %5405 = vmatprep.subr.bf16.mxu0 0
    %5406 = vmatpush1.bf16.msra.mxu0 0
    %5407 = vmatprep.subr.bf16.mxu0 0
    %5408 = vmatpush1.bf16.msra.mxu0 0
    %5409 = vmatprep.subr.bf16.mxu0 0
    %5410 = vmatpush1.bf16.msra.mxu0 0
    %5411 = vmatprep.subr.bf16.mxu0 0
    %5412 = vmatpush1.bf16.msra.mxu0 0
    %5413 = vmatprep.subr.bf16.mxu0 0
    %5414 = vmatpush1.bf16.msra.mxu0 0
    %5415 = vmatprep.subr.bf16.mxu0 0
    %5416 = vmatpush1.bf16.msra.mxu0 0
    %5417 = vmatprep.subr.bf16.mxu0 0
    %5418 = vmatpush1.bf16.msra.mxu0 0
    %5419 = vmatprep.mubr.bf16.mxu0 0
    %5420 = vmatmul.mubr.bf16.gmra.mrb[0].mxu0 %v5382
    %v5421 = vpop.f32.mrb[0].mxu0
    %v5422 = vadd.f32 %v5367, %v5421
    %v5423 = vpop.f32.mrb[0].mxu0
    %v5424 = vpop.f32.mrb[0].mxu0
    %v5425 = vadd.f32 %v5367, %v5424
    %v5426 = vpop.f32.mrb[0].mxu0
    %5427 = vmatprep.mubr.bf16.mxu0 0
    %5428 = vmatmul.mubr.bf16.gmra.mrb[0].mxu0 %v5385
    %v5429 = vpop.f32.mrb[0].mxu0
    %v5430 = vadd.f32 %v5367, %v5429
    %v5431 = vpop.f32.mrb[0].mxu0
    %v5432 = vpop.f32.mrb[0].mxu0
    %v5433 = vadd.f32 %v5367, %v5432
    %v5434 = vpop.f32.mrb[0].mxu0
    %5435 = vdwg.mxu0
    %v5436 = vadd.f32 %v5252, %v5422
    %v5437 = vadd.f32 %v5253, %v5425
    %v5438 = vadd.f32 %v5254, %v5430
    %v5439 = vadd.f32 %v5255, %v5433
    %v5440 = vld [vmem:[#allocation2] sm:$0x1]
    %v5441 = vld [vmem:[#allocation4] sm:$0x1]
    %v5442 = vsel %vm367, %v5436, 0.0
    %5443 = vadd.xlane.f32.xlu0 %v5442
    %v5444 = vpop.xlane.xlu0 %5443
    %v5445 = vsel %vm367, %v5437, 0.0
    %5446 = vadd.xlane.f32.xlu0 %v5445
    %v5447 = vpop.xlane.xlu0 %5446
    %v5448 = vsel %vm367, %v5438, 0.0
    %5449 = vadd.xlane.f32.xlu0 %v5448
    %v5450 = vpop.xlane.xlu0 %5449
    %v5451 = vsel %vm367, %v5439, 0.0
    %5452 = vadd.xlane.f32.xlu0 %v5451
    %v5453 = vpop.xlane.xlu0 %5452
    %v5454 = vmul.f32 %v5444, %v1320
    %v5455 = vmul.f32 %v5447, %v1320
    %v5456 = vmul.f32 %v5450, %v1320
    %v5457 = vmul.f32 %v5453, %v1320
    %v5458 = vsub.f32 %v5436, %v5454
    %v5459 = vsub.f32 %v5437, %v5455
    %v5460 = vsub.f32 %v5438, %v5456
    %v5461 = vsub.f32 %v5439, %v5457
    %v5462 = vmul.f32 %v5458, %v5458
    %v5463 = vmul.f32 %v5459, %v5459
    %v5464 = vmul.f32 %v5460, %v5460
    %v5465 = vmul.f32 %v5461, %v5461
    %v5466 = vsel %vm367, %v5462, 0.0
    %5467 = vadd.xlane.f32.xlu0 %v5466
    %v5468 = vpop.xlane.xlu0 %5467
    %v5469 = vsel %vm367, %v5463, 0.0
    %5470 = vadd.xlane.f32.xlu0 %v5469
    %v5471 = vpop.xlane.xlu0 %5470
    %v5472 = vsel %vm367, %v5464, 0.0
    %5473 = vadd.xlane.f32.xlu0 %v5472
    %v5474 = vpop.xlane.xlu0 %5473
    %v5475 = vsel %vm367, %v5465, 0.0
    %5476 = vadd.xlane.f32.xlu0 %v5475
    %v5477 = vpop.xlane.xlu0 %5476
    %v5478 = vmul.f32 %v5468, %v1320
    %v5479 = vmul.f32 %v5471, %v1320
    %v5480 = vmul.f32 %v5474, %v1320
    %v5481 = vmul.f32 %v5477, %v1320
    %v5482 = vadd.f32 %v5478, 1e-05
    %v5483 = vadd.f32 %v5479, 1e-05
    %v5484 = vadd.f32 %v5480, 1e-05
    %v5485 = vadd.f32 %v5481, 1e-05
    %v5486 = vrsqrt.pop %v5482
    %v5487 = vrsqrt.pop %v5483
    %v5488 = vrsqrt.pop %v5484
    %v5489 = vrsqrt.pop %v5485
    %v5490 = vmul.f32 %v5458, %v5486
    %v5491 = vmul.f32 %v5459, %v5487
    %v5492 = vmul.f32 %v5460, %v5488
    %v5493 = vmul.f32 %v5461, %v5489
    %v5495 = vlaneseq
    %v5496 = vshrl.u32 %v5495, 7
    %v5497 = vsub.s32 0, %v5496
    %v5498 = vrot.slane %v5440, %v5497
    %v5500 = vmul.f32 %v5490, %v5498
    %v5501 = vmul.f32 %v5491, %v5498
    %v5502 = vmul.f32 %v5492, %v5498
    %v5503 = vmul.f32 %v5493, %v5498
    %v5505 = vlaneseq
    %v5506 = vshrl.u32 %v5505, 7
    %v5507 = vsub.s32 0, %v5506
    %v5508 = vrot.slane %v5441, %v5507
    %v5510 = vadd.f32 %v5500, %v5508
    %v5511 = vadd.f32 %v5501, %v5508
    %v5512 = vadd.f32 %v5502, %v5508
    %v5513 = vadd.f32 %v5503, %v5508
    %v5514 = vld [vmem:[#allocation6] sm:$0x1]
    %v5515 = vld [vmem:[#allocation7] sm:$0x1]
    %v5516 = vsel %vm367, %v5510, 0.0
    %5517 = vadd.xlane.f32.xlu0 %v5516
    %v5518 = vpop.xlane.xlu0 %5517
    %v5519 = vsel %vm367, %v5511, 0.0
    %5520 = vadd.xlane.f32.xlu0 %v5519
    %v5521 = vpop.xlane.xlu0 %5520
    %v5522 = vsel %vm367, %v5512, 0.0
    %5523 = vadd.xlane.f32.xlu0 %v5522
    %v5524 = vpop.xlane.xlu0 %5523
    %v5525 = vsel %vm367, %v5513, 0.0
    %5526 = vadd.xlane.f32.xlu0 %v5525
    %v5527 = vpop.xlane.xlu0 %5526
    %v5528 = vmul.f32 %v5518, %v1320
    %v5529 = vmul.f32 %v5521, %v1320
    %v5530 = vmul.f32 %v5524, %v1320
    %v5531 = vmul.f32 %v5527, %v1320
    %v5532 = vsub.f32 %v5510, %v5528
    %v5533 = vsub.f32 %v5511, %v5529
    %v5534 = vsub.f32 %v5512, %v5530
    %v5535 = vsub.f32 %v5513, %v5531
    %v5536 = vmul.f32 %v5532, %v5532
    %v5537 = vmul.f32 %v5533, %v5533
    %v5538 = vmul.f32 %v5534, %v5534
    %v5539 = vmul.f32 %v5535, %v5535
    %v5540 = vsel %vm367, %v5536, 0.0
    %5541 = vadd.xlane.f32.xlu0 %v5540
    %v5542 = vpop.xlane.xlu0 %5541
    %v5543 = vsel %vm367, %v5537, 0.0
    %5544 = vadd.xlane.f32.xlu0 %v5543
    %v5545 = vpop.xlane.xlu0 %5544
    %v5546 = vsel %vm367, %v5538, 0.0
    %5547 = vadd.xlane.f32.xlu0 %v5546
    %v5548 = vpop.xlane.xlu0 %5547
    %v5549 = vsel %vm367, %v5539, 0.0
    %5550 = vadd.xlane.f32.xlu0 %v5549
    %v5551 = vpop.xlane.xlu0 %5550
    %v5552 = vmul.f32 %v5542, %v1320
    %v5553 = vmul.f32 %v5545, %v1320
    %v5554 = vmul.f32 %v5548, %v1320
    %v5555 = vmul.f32 %v5551, %v1320
    %v5556 = vadd.f32 %v5552, 1e-05
    %v5557 = vadd.f32 %v5553, 1e-05
    %v5558 = vadd.f32 %v5554, 1e-05
    %v5559 = vadd.f32 %v5555, 1e-05
    %v5560 = vrsqrt.pop %v5556
    %v5561 = vrsqrt.pop %v5557
    %v5562 = vrsqrt.pop %v5558
    %v5563 = vrsqrt.pop %v5559
    %v5564 = vmul.f32 %v5532, %v5560
    %v5565 = vmul.f32 %v5533, %v5561
    %v5566 = vmul.f32 %v5534, %v5562
    %v5567 = vmul.f32 %v5535, %v5563
    %v5569 = vlaneseq
    %v5570 = vshrl.u32 %v5569, 7
    %v5571 = vsub.s32 0, %v5570
    %v5572 = vrot.slane %v5514, %v5571
    %v5574 = vmul.f32 %v5564, %v5572
    %v5575 = vmul.f32 %v5565, %v5572
    %v5576 = vmul.f32 %v5566, %v5572
    %v5577 = vmul.f32 %v5567, %v5572
    %v5579 = vlaneseq
    %v5580 = vshrl.u32 %v5579, 7
    %v5581 = vsub.s32 0, %v5580
    %v5582 = vrot.slane %v5515, %v5581
    %v5584 = vadd.f32 %v5574, %v5582
    %v5585 = vadd.f32 %v5575, %v5582
    %v5586 = vadd.f32 %v5576, %v5582
    %v5587 = vadd.f32 %v5577, %v5582
    %v5588 = vpack.c.bf16 %v5585, %v5584
    %v5589 = vpack.c.bf16 %v5587, %v5586
    %v5590 = vld [vmem:[%s91] sm:$0xf]
    %v5591 = vld [vmem:[%s91 + $0x4] sm:$0xf]
    %v5592 = vld [vmem:[%s91 + $0x8] sm:$0xf]
    %v5593 = vld [vmem:[%s91 + $0xc] sm:$0xf]
    %v5594 = vld [vmem:[#allocation9] sm:$0x1]
    %v5596 = vlaneseq
    %v5597 = vshrl.u32 %v5596, 7
    %v5598 = vsub.s32 0, %v5597
    %v5599 = vrot.slane %v5594, %v5598
    %v5605 = vunpack.c.l.b16 %v5590
    %v5606 = vunpack.c.l.b16 %v5591
    %v5607 = vunpack.c.l.b16 %v5592
    %v5608 = vunpack.c.l.b16 %v5593
    %v5609 = vpack.c.b16 %v5606, %v5605
    %v5610 = vpack.c.b16 %v5608, %v5607
    %v5614 = vsel %vm367, %v5588, 0
    %v5617 = vsel %vm367, %v5589, 0
    %5619 = vmatprep.subr.bf16.mxu0 0
    %5620 = vmatpush1.bf16.msra.mxu0 %v5609
    %5621 = vmatprep.subr.bf16.mxu0 0
    %5622 = vmatpush1.bf16.msra.mxu0 %v5610
    %5623 = vmatprep.subr.bf16.mxu0 0
    %5624 = vmatpush1.bf16.msra.mxu0 0
    %5625 = vmatprep.subr.bf16.mxu0 0
    %5626 = vmatpush1.bf16.msra.mxu0 0
    %5627 = vmatprep.subr.bf16.mxu0 0
    %5628 = vmatpush1.bf16.msra.mxu0 0
    %5629 = vmatprep.subr.bf16.mxu0 0
    %5630 = vmatpush1.bf16.msra.mxu0 0
    %5631 = vmatprep.subr.bf16.mxu0 0
    %5632 = vmatpush1.bf16.msra.mxu0 0
    %5633 = vmatprep.subr.bf16.mxu0 0
    %5634 = vmatpush1.bf16.msra.mxu0 0
    %5635 = vmatprep.subr.bf16.mxu0 0
    %5636 = vmatpush1.bf16.msra.mxu0 0
    %5637 = vmatprep.subr.bf16.mxu0 0
    %5638 = vmatpush1.bf16.msra.mxu0 0
    %5639 = vmatprep.subr.bf16.mxu0 0
    %5640 = vmatpush1.bf16.msra.mxu0 0
    %5641 = vmatprep.subr.bf16.mxu0 0
    %5642 = vmatpush1.bf16.msra.mxu0 0
    %5643 = vmatprep.subr.bf16.mxu0 0
    %5644 = vmatpush1.bf16.msra.mxu0 0
    %5645 = vmatprep.subr.bf16.mxu0 0
    %5646 = vmatpush1.bf16.msra.mxu0 0
    %5647 = vmatprep.subr.bf16.mxu0 0
    %5648 = vmatpush1.bf16.msra.mxu0 0
    %5649 = vmatprep.subr.bf16.mxu0 0
    %5650 = vmatpush1.bf16.msra.mxu0 0
    %5651 = vmatprep.mubr.bf16.mxu0 0
    %5652 = vmatmul.mubr.bf16.gmra.mrb[0].mxu0 %v5614
    %v5653 = vpop.f32.mrb[0].mxu0
    %v5654 = vadd.f32 %v5599, %v5653
    %v5655 = vpop.f32.mrb[0].mxu0
    %v5656 = vpop.f32.mrb[0].mxu0
    %v5657 = vadd.f32 %v5599, %v5656
    %v5658 = vpop.f32.mrb[0].mxu0
    %5659 = vmatprep.mubr.bf16.mxu0 0
    %5660 = vmatmul.mubr.bf16.gmra.mrb[0].mxu0 %v5617
    %v5661 = vpop.f32.mrb[0].mxu0
    %v5662 = vadd.f32 %v5599, %v5661
    %v5663 = vpop.f32.mrb[0].mxu0
    %v5664 = vpop.f32.mrb[0].mxu0
    %v5665 = vadd.f32 %v5599, %v5664
    %v5666 = vpop.f32.mrb[0].mxu0
    %5667 = vdwg.mxu0
    %5668 = vst [vmem:[%s95] sm:$0xff] %v5654
    %5669 = vst [vmem:[%s95 + $0x8] sm:$0xff] %v5657
    %5670 = vst [vmem:[%s95 + $0x10] sm:$0xff] %v5662
    %5671 = vst [vmem:[%s95 + $0x18] sm:$0xff] %v5665
    // Predicated region
    $region210: #{_lambda_.1} parent=1 // pred_check
      _
    $region211: #{_lambda_.1} parent=1 // pred_check_branch
      %5673 = sbr.rel (0) target = $region213
    $region212: #{_lambda_.1} parent=1 // pred_region
      _
    $region213: #{_lambda_.1} parent=1 // pred_fallthru
      _
    // Predicated region
    $region214: #{_lambda_.1} parent=1 // pred_check
      _
    $region215: #{_lambda_.1} parent=1 // pred_check_branch
      %5675 = sbr.rel (0) target = $region217
    $region216: #{_lambda_.1} parent=1 // pred_region
      _
    $region217: #{_lambda_.1} parent=1 // pred_fallthru
      _
    %5676 = vsyncpa [#allocation3], 1
    %5677 = vsyncpa [#allocation5], 1
    %5678 = vsyncpa [#allocation8], 1

</llo_original>
